<compile_context>
chip_gen: v6e
topology: v6e:2x2x1
jax: 0.10.0
libtpu: 0.0.40
codegen_flags: <defaults>
</compile_context>

<pallas_src>
import functools

import jax
import jax.numpy as jnp
import numpy as np
from jax.experimental import pallas as pl
from jax.experimental.pallas import tpu as pltpu

EPS = 1e-5
LANES = 128
_VMEM_SMALL = 32 * 1024 * 1024   # 1x1-conv / elementwise kernels
_VMEM_CONV = 48 * 1024 * 1024    # 3x3-conv kernel (scratch heavy)


def _round_up(x, m):
    return (x + m - 1) // m * m


def _pick_rows_block(nrows, bytes_per_row, budget=8 << 20):
    """Largest row block (<=2048, multiple of 8, ~<=budget streamed bytes)
    that divides nrows."""
    cap = min(2048, max(8, budget // max(bytes_per_row, 1)))
    cap -= cap % 8
    cap = max(cap, 8)
    if nrows <= cap:
        return nrows
    if nrows % 8:
        # TODO(synk): masked-tail handling for row counts not divisible by 8;
        # falls back to a single block (correct, but no pipelining).
        return nrows
    t = cap
    while nrows % t:
        t -= 8
    return t


def _bn_scale_shift(ssum_ref, ssq_ref, g_ref, b_ref, inv_count):
    """Fold training-mode BN (batch stats) into per-channel scale/shift."""
    mean = ssum_ref[...] * inv_count                      # (1, C)
    var = jnp.maximum(ssq_ref[...] * inv_count - mean * mean, 0.0)
    scale = g_ref[...] * jax.lax.rsqrt(var + EPS)         # EUP rsqrt
    shift = b_ref[...] - mean * scale
    return scale, shift


# ---------------- kernel 1: conv1 (1x1) + per-block partial stats -----------
def _k_conv1x1_stats(x_ref, w_ref, h_ref, ssum_ref, ssq_ref):
    h = jnp.dot(x_ref[...].astype(jnp.bfloat16), w_ref[...],
                preferred_element_type=jnp.float32)
    h_ref[...] = h.astype(h_ref.dtype)                      # bf16 store to HBM
    ssum_ref[...] = jnp.sum(h, axis=0, keepdims=True).reshape(ssum_ref.shape)
    ssq_ref[...] = jnp.sum(h * h, axis=0, keepdims=True).reshape(ssq_ref.shape)


# -------- kernel 2: bn1 + relu + 3x3 conv (9 accumulated taps) + stats ------
def _k_bn_relu_conv3x3_stats(inv_count, h1_ref, s1_ref, q1_ref, g_ref, b_ref,
                             w_ref, h2_ref, s2_ref, q2_ref, pad_ref, acc_ref):
    _, H, W, P = h1_ref.shape  # block = (1, H, W, P)

    scale, shift = _bn_scale_shift(s1_ref, q1_ref, g_ref, b_ref, inv_count)
    a = jnp.maximum(h1_ref[...].astype(jnp.float32) * scale.reshape(1, 1, 1, P)
                    + shift.reshape(1, 1, 1, P), 0.0)

    # Zero halo rewritten every step (cheap, and per-core-scratch safe under
    # "parallel"/megacore); interior gets the normalized activation.
    zrow = jnp.zeros((1, 1, W + 2, P), jnp.float32)
    zcol = jnp.zeros((1, H, 1, P), jnp.float32)
    pad_ref[:, 0:1, :, :] = zrow
    pad_ref[:, H + 1:H + 2, :, :] = zrow
    pad_ref[:, 1:H + 1, 0:1, :] = zcol
    pad_ref[:, 1:H + 1, W + 1:W + 2, :] = zcol
    pad_ref[:, 1:H + 1, 1:W + 1, :] = a

    # 3x3 conv as 9 accumulated K=P matmuls (no im2col buffer).
    for t in range(9):
        dy, dx = t // 3, t % 3
        tap = (pad_ref[:, dy:dy + H, dx:dx + W, :]
               .reshape(H * W, P).astype(jnp.bfloat16))
        contrib = jnp.dot(tap, w_ref[t * P:(t + 1) * P, :],
                          preferred_element_type=jnp.float32)
        if t == 0:
            acc_ref[...] = contrib
        else:
            acc_ref[...] += contrib

    h2 = acc_ref[...]
    h2_ref[...] = h2.reshape(1, H, W, P).astype(h2_ref.dtype)
    s2_ref[...] = jnp.sum(h2, axis=0, keepdims=True).reshape(s2_ref.shape)
    q2_ref[...] = jnp.sum(h2 * h2, axis=0, keepdims=True).reshape(q2_ref.shape)


# ------------- kernel 3: bn2 + relu + conv3 (1x1) + partial stats -----------
def _k_bn_relu_conv1x1_stats(inv_count, h_ref, s_in_ref, q_in_ref, g_ref,
                             b_ref, w_ref, o_ref, s_out_ref, q_out_ref):
    scale, shift = _bn_scale_shift(s_in_ref, q_in_ref, g_ref, b_ref, inv_count)
    a = jnp.maximum(h_ref[...].astype(jnp.float32) * scale + shift, 0.0)
    h = jnp.dot(a.astype(jnp.bfloat16), w_ref[...],
                preferred_element_type=jnp.float32)
    o_ref[...] = h.astype(o_ref.dtype)
    s_out_ref[...] = jnp.sum(h, axis=0, keepdims=True).reshape(s_out_ref.shape)
    q_out_ref[...] = jnp.sum(h * h, axis=0,
                             keepdims=True).reshape(q_out_ref.shape)


# ----------------- kernel 4: bn3 + residual add + relu ----------------------
def _k_bn_add_relu(inv_count, h_ref, s_ref, q_ref, g_ref, b_ref, res_ref,
                   out_ref):
    scale, shift = _bn_scale_shift(s_ref, q_ref, g_ref, b_ref, inv_count)
    out_ref[...] = jnp.maximum(
        h_ref[...].astype(jnp.float32) * scale + shift + res_ref[...], 0.0)


# ------------------------------ wrappers ------------------------------------
def bottleneck_forward_nhwc(x_nhwc, params):
    """x_nhwc: (N, H, W, C) float32 with C == planes * 4 (no downsample)."""
    N, H, W, C = x_nhwc.shape
    P = params["w1"].shape[1]
    Cp = _round_up(C, LANES)
    Pp = _round_up(P, LANES)
    rows = N * H * W
    inv_count = 1.0 / float(rows)
    f32, bf16 = jnp.float32, jnp.bfloat16

    # Row block for the streaming (1x1 conv / elementwise) kernels: largest
    # block dividing rows under a double-buffered ~8 MiB streaming budget.
    bytes_per_row = 2 * (4 * Cp + 4 * Cp + 2 * Cp + 2 * Pp)
    tm = _pick_rows_block(rows, bytes_per_row)
    nblk = rows // tm

    # Pad channel dims to 128 lanes.  Padded gamma/beta = 0 so padded channels
    # stay exactly zero through every BN / conv / residual add.
    x_p = jnp.zeros((N, H, W, Cp), f32).at[..., :C].set(x_nhwc.astype(f32))
    w1 = jnp.zeros((Cp, Pp), f32).at[:C, :P].set(params["w1"]).astype(bf16)
    w2 = (jnp.zeros((9, Pp, Pp), f32).at[:, :P, :P].set(params["w2"])
          .reshape(9 * Pp, Pp).astype(bf16))
    w3 = jnp.zeros((Pp, Cp), f32).at[:P, :C].set(params["w3"]).astype(bf16)

    def padvec(v, n):
        return jnp.zeros((1, n), f32).at[:, :v.shape[-1]].set(v.reshape(1, -1))

    g1, b1 = padvec(params["g1"], Pp), padvec(params["b1"], Pp)
    g2, b2 = padvec(params["g2"], Pp), padvec(params["b2"], Pp)
    g3, b3 = padvec(params["g3"], Cp), padvec(params["b3"], Cp)

    x_flat = x_p.reshape(rows, Cp)

    vec_spec_p = pl.BlockSpec((1, Pp), lambda i: (0, 0))
    vec_spec_c = pl.BlockSpec((1, Cp), lambda i: (0, 0))
    stat_out_p = pl.BlockSpec((1, 1, Pp), lambda i: (i, 0, 0))
    stat_out_c = pl.BlockSpec((1, 1, Cp), lambda i: (i, 0, 0))

    # --- kernel 1: conv1 + per-block partial stats (parallel row blocks) ----
    h1_flat, s1p, q1p = pl.pallas_call(
        _k_conv1x1_stats,
        grid=(nblk,),
        in_specs=[pl.BlockSpec((tm, Cp), lambda i: (i, 0)),
                  pl.BlockSpec((Cp, Pp), lambda i: (0, 0))],
        out_specs=(pl.BlockSpec((tm, Pp), lambda i: (i, 0)),
                   stat_out_p, stat_out_p),
        out_shape=(jax.ShapeDtypeStruct((rows, Pp), bf16),
                   jax.ShapeDtypeStruct((nblk, 1, Pp), f32),
                   jax.ShapeDtypeStruct((nblk, 1, Pp), f32)),
        compiler_params=pltpu.CompilerParams(
            dimension_semantics=("parallel",),
            vmem_limit_bytes=_VMEM_SMALL),
    )(x_flat, w1)
    s1 = jnp.sum(s1p, axis=0)        # (1, Pp) — tiny reduce in XLA
    q1 = jnp.sum(q1p, axis=0)

    # --- kernel 2: bn1 + relu + 3x3 conv + partial stats (grid over N) ------
    h1_4d = h1_flat.reshape(N, H, W, Pp)
    h2_4d, s2p, q2p = pl.pallas_call(
        functools.partial(_k_bn_relu_conv3x3_stats, inv_count),
        grid=(N,),
        in_specs=[pl.BlockSpec((1, H, W, Pp), lambda n: (n, 0, 0, 0)),
                  vec_spec_p, vec_spec_p, vec_spec_p, vec_spec_p,
                  pl.BlockSpec((9 * Pp, Pp), lambda n: (0, 0))],
        out_specs=(pl.BlockSpec((1, H, W, Pp), lambda n: (n, 0, 0, 0)),
                   pl.BlockSpec((1, 1, Pp), lambda n: (n, 0, 0)),
                   pl.BlockSpec((1, 1, Pp), lambda n: (n, 0, 0))),
        out_shape=(jax.ShapeDtypeStruct((N, H, W, Pp), bf16),
                   jax.ShapeDtypeStruct((N, 1, Pp), f32),
                   jax.ShapeDtypeStruct((N, 1, Pp), f32)),
        scratch_shapes=[pltpu.VMEM((1, H + 2, W + 2, Pp), f32),
                        pltpu.VMEM((H * W, Pp), f32)],
        compiler_params=pltpu.CompilerParams(
            dimension_semantics=("parallel",),
            vmem_limit_bytes=_VMEM_CONV),
    )(h1_4d, s1, q1, g1, b1, w2)
    s2 = jnp.sum(s2p, axis=0)
    q2 = jnp.sum(q2p, axis=0)

    # --- kernel 3: bn2 + relu + conv3 + partial stats (parallel row blocks) -
    h2_flat = h2_4d.reshape(rows, Pp)
    h3_flat, s3p, q3p = pl.pallas_call(
        functools.partial(_k_bn_relu_conv1x1_stats, inv_count),
        grid=(nblk,),
        in_specs=[pl.BlockSpec((tm, Pp), lambda i: (i, 0)),
                  vec_spec_p, vec_spec_p, vec_spec_p, vec_spec_p,
                  pl.BlockSpec((Pp, Cp), lambda i: (0, 0))],
        out_specs=(pl.BlockSpec((tm, Cp), lambda i: (i, 0)),
                   stat_out_c, stat_out_c),
        out_shape=(jax.ShapeDtypeStruct((rows, Cp), bf16),
                   jax.ShapeDtypeStruct((nblk, 1, Cp), f32),
                   jax.ShapeDtypeStruct((nblk, 1, Cp), f32)),
        compiler_params=pltpu.CompilerParams(
            dimension_semantics=("parallel",),
            vmem_limit_bytes=_VMEM_SMALL),
    )(h2_flat, s2, q2, g2, b2, w3)
    s3 = jnp.sum(s3p, axis=0)
    q3 = jnp.sum(q3p, axis=0)

    # --- kernel 4: bn3 + residual + relu; output aliases the residual buf ---
    out_flat = pl.pallas_call(
        functools.partial(_k_bn_add_relu, inv_count),
        grid=(nblk,),
        in_specs=[pl.BlockSpec((tm, Cp), lambda i: (i, 0)),
                  vec_spec_c, vec_spec_c, vec_spec_c, vec_spec_c,
                  pl.BlockSpec((tm, Cp), lambda i: (i, 0))],
        out_specs=pl.BlockSpec((tm, Cp), lambda i: (i, 0)),
        out_shape=jax.ShapeDtypeStruct((rows, Cp), f32),
        input_output_aliases={5: 0},   # overwrite the padded residual buffer
        compiler_params=pltpu.CompilerParams(
            dimension_semantics=("parallel",),
            vmem_limit_bytes=_VMEM_SMALL),
    )(h3_flat, s3, q3, g3, b3, x_flat)

    # For multi-block networks, keep this padded (rows, Cp) NHWC layout and
    # only un-pad / transpose once at the end of the network.
    return out_flat.reshape(N, H, W, Cp)[..., :C]


@jax.jit
def bottleneck_forward(x_nchw, params):
    # One-time NCHW <-> NHWC conversion at the PyTorch-convention boundary.
    x = jnp.transpose(x_nchw, (0, 2, 3, 1))
    y = bottleneck_forward_nhwc(x, params)
    return jnp.transpose(y, (0, 3, 1, 2))


# --------------------------- params & reference -----------------------------
def init_params(key, inplanes, planes):
    k = jax.random.split(key, 9)
    return dict(
        # conv weights stored as (C_in, C_out) / (tap, C_in, C_out): equivalent
        # to PyTorch's (C_out, C_in, kH, kW) with axes reorganised for matmul.
        w1=jax.random.normal(k[0], (inplanes, planes), jnp.float32) * 0.2,
        w2=jax.random.normal(k[1], (9, planes, planes), jnp.float32) * 0.2,
        w3=jax.random.normal(k[2], (planes, planes * 4), jnp.float32) * 0.2,
        g1=1.0 + 0.1 * jax.random.normal(k[3], (1, planes), jnp.float32),
        b1=0.1 * jax.random.normal(k[4], (1, planes), jnp.float32),
        g2=1.0 + 0.1 * jax.random.normal(k[5], (1, planes), jnp.float32),
        b2=0.1 * jax.random.normal(k[6], (1, planes), jnp.float32),
        g3=1.0 + 0.1 * jax.random.normal(k[7], (1, planes * 4), jnp.float32),
        b3=0.1 * jax.random.normal(k[8], (1, planes * 4), jnp.float32),
    )


def bottleneck_ref(x_nchw, p):
    """Pure-JAX f32 reference (same math as the PyTorch module, training mode)."""
    x = jnp.transpose(x_nchw, (0, 2, 3, 1))
    C = x.shape[-1]
    P = p["w1"].shape[1]
    dn = ("NHWC", "HWIO", "NHWC")
    hi = jax.lax.Precision.HIGHEST

    def bn(h, g, b):
        m = jnp.mean(h, axis=(0, 1, 2), keepdims=True)
        v = jnp.mean((h - m) ** 2, axis=(0, 1, 2), keepdims=True)
        return ((h - m) / jnp.sqrt(v + EPS)) * g.reshape(1, 1, 1, -1) \
            + b.reshape(1, 1, 1, -1)

    h = jax.lax.conv_general_dilated(x, p["w1"].reshape(1, 1, C, P), (1, 1),
                                     "VALID", dimension_numbers=dn,
                                     precision=hi)
    h = jax.nn.relu(bn(h, p["g1"], p["b1"]))
    h = jax.lax.conv_general_dilated(h, p["w2"].reshape(3, 3, P, P), (1, 1),
                                     ((1, 1), (1, 1)), dimension_numbers=dn,
                                     precision=hi)
    h = jax.nn.relu(bn(h, p["g2"], p["b2"]))
    h = jax.lax.conv_general_dilated(h, p["w3"].reshape(1, 1, P, 4 * P), (1, 1),
                                     "VALID", dimension_numbers=dn,
                                     precision=hi)
    h = bn(h, p["g3"], p["b3"])
    out = jax.nn.relu(h + x)
    return jnp.transpose(out, (0, 3, 1, 2))


if __name__ == "__main__":
    key = jax.random.PRNGKey(0)
    kx, kp = jax.random.split(key)

    planes = 4
    inplanes = planes * 4   # expansion=4 -> residual add needs no downsample
    N, H, W = 2, 16, 16

    x = jax.random.normal(kx, (N, inplanes, H, W), jnp.float32)  # NCHW
    params = init_params(kp, inplanes, planes)

    y = jax.block_until_ready(bottleneck_forward(x, params))
    y_ref = bottleneck_ref(x, params)

    np.testing.assert_allclose(np.asarray(y), np.asarray(y_ref),
                               rtol=5e-2, atol=5e-2)
    print("KERNEL_OK")
</pallas_src>

<mosaic_0001>
module attributes {stable_mosaic.version = 11 : i64} {
  func.func @_k_conv1x1_stats(%arg0: i32, %arg1: memref<512x128xf32, #tpu.memory_space<vmem>>, %arg2: memref<128x128xbf16, #tpu.memory_space<vmem>>, %arg3: memref<512x128xbf16, #tpu.memory_space<vmem>>, %arg4: memref<1x1x128xf32, #tpu.memory_space<vmem>>, %arg5: memref<1x1x128xf32, #tpu.memory_space<vmem>>) attributes {dimension_semantics = [#tpu.dimension_semantics<parallel>], iteration_bounds = array<i64: 1>, scalar_prefetch = 0 : i64, scratch_operands = 0 : i64, tpu.core_type = #tpu.core_type<tc>, window_params = [{transform_indices = @transform_0, window_bounds = array<i64: 512, 128>}, {pipeline_mode = #tpu.pipeline_mode<synchronous>, transform_indices = @transform_1, window_bounds = array<i64: 128, 128>}, {transform_indices = @transform_2, window_bounds = array<i64: 512, 128>}, {transform_indices = @transform_3, window_bounds = array<i64: 1, 1, 128>}, {transform_indices = @transform_4, window_bounds = array<i64: 1, 1, 128>}]} {
    %c0 = arith.constant 0 : index
    %c0_0 = arith.constant 0 : index
    %0 = vector.load %arg1[%c0, %c0_0] : memref<512x128xf32, #tpu.memory_space<vmem>>, vector<512x128xf32>
    %1 = arith.truncf %0 : vector<512x128xf32> to vector<512x128xbf16>
    %c0_1 = arith.constant 0 : index
    %c0_2 = arith.constant 0 : index
    %2 = vector.load %arg2[%c0_1, %c0_2] : memref<128x128xbf16, #tpu.memory_space<vmem>>, vector<128x128xbf16>
    %cst = arith.constant dense<0.000000e+00> : vector<512x128xf32>
    %3 = tpu.matmul %1, %2, %cst {dimension_numbers = #tpu.dot_dimension_numbers<[1], [0], [0], [1], [0, 0, 1, 1], [], []>} : vector<512x128xbf16>, vector<128x128xbf16>, vector<512x128xf32> -> vector<512x128xf32>
    %4 = arith.truncf %3 : vector<512x128xf32> to vector<512x128xbf16>
    %c0_3 = arith.constant 0 : index
    %c0_4 = arith.constant 0 : index
    %5 = vector.load %arg3[%c0_3, %c0_4] : memref<512x128xbf16, #tpu.memory_space<vmem>>, vector<512x128xbf16>
    tpu.vector_store %arg3[%c0_3, %c0_4], %4 {strides = array<i32>} : memref<512x128xbf16, #tpu.memory_space<vmem>>, vector<512x128xbf16>,
    %cst_5 = arith.constant dense<0.000000e+00> : vector<128xf32>
    %6 = vector.multi_reduction <add>, %3, %cst_5 [0] : vector<512x128xf32> to vector<128xf32>
    %7 = vector.shape_cast %6 : vector<128xf32> to vector<1x128xf32>
    %8 = vector.shape_cast %7 : vector<1x128xf32> to vector<1x1x128xf32>
    %c0_6 = arith.constant 0 : index
    %c0_7 = arith.constant 0 : index
    %c0_8 = arith.constant 0 : index
    %9 = vector.load %arg4[%c0_6, %c0_7, %c0_8] : memref<1x1x128xf32, #tpu.memory_space<vmem>>, vector<1x1x128xf32>
    tpu.vector_store %arg4[%c0_6, %c0_7, %c0_8], %8 {strides = array<i32>} : memref<1x1x128xf32, #tpu.memory_space<vmem>>, vector<1x1x128xf32>,
    %10 = arith.mulf %3, %3 : vector<512x128xf32>
    %cst_9 = arith.constant dense<0.000000e+00> : vector<128xf32>
    %11 = vector.multi_reduction <add>, %10, %cst_9 [0] : vector<512x128xf32> to vector<128xf32>
    %12 = vector.shape_cast %11 : vector<128xf32> to vector<1x128xf32>
    %13 = vector.shape_cast %12 : vector<1x128xf32> to vector<1x1x128xf32>
    %c0_10 = arith.constant 0 : index
    %c0_11 = arith.constant 0 : index
    %c0_12 = arith.constant 0 : index
    %14 = vector.load %arg5[%c0_10, %c0_11, %c0_12] : memref<1x1x128xf32, #tpu.memory_space<vmem>>, vector<1x1x128xf32>
    tpu.vector_store %arg5[%c0_10, %c0_11, %c0_12], %13 {strides = array<i32>} : memref<1x1x128xf32, #tpu.memory_space<vmem>>, vector<1x1x128xf32>,
    return
  }
  func.func @transform_0(%arg0: i32) -> (i32, i32) {
    %c0_i32 = arith.constant 0 : i32
    %c0_i32_0 = arith.constant 0 : i32
    return %arg0, %c0_i32 : i32, i32
  }
  func.func @transform_1(%arg0: i32) -> (i32, i32) {
    %c0_i32 = arith.constant 0 : i32
    %c0_i32_0 = arith.constant 0 : i32
    %c0_i32_1 = arith.constant 0 : i32
    return %c0_i32, %c0_i32_0 : i32, i32
  }
  func.func @transform_2(%arg0: i32) -> (i32, i32) {
    %c0_i32 = arith.constant 0 : i32
    %c0_i32_0 = arith.constant 0 : i32
    return %arg0, %c0_i32 : i32, i32
  }
  func.func @transform_3(%arg0: i32) -> (i32, i32, i32) {
    %c0_i32 = arith.constant 0 : i32
    %c0_i32_0 = arith.constant 0 : i32
    %c0_i32_1 = arith.constant 0 : i32
    return %arg0, %c0_i32, %c0_i32_0 : i32, i32, i32
  }
  func.func @transform_4(%arg0: i32) -> (i32, i32, i32) {
    %c0_i32 = arith.constant 0 : i32
    %c0_i32_0 = arith.constant 0 : i32
    %c0_i32_1 = arith.constant 0 : i32
    return %arg0, %c0_i32, %c0_i32_0 : i32, i32, i32
  }
}

module attributes {stable_mosaic.version = 11 : i64} {
  func.func @_k_bn_relu_conv1x1_stats(%arg0: i32, %arg1: memref<512x128xbf16, #tpu.memory_space<vmem>>, %arg2: memref<1x128xf32, #tpu.memory_space<vmem>>, %arg3: memref<1x128xf32, #tpu.memory_space<vmem>>, %arg4: memref<1x128xf32, #tpu.memory_space<vmem>>, %arg5: memref<1x128xf32, #tpu.memory_space<vmem>>, %arg6: memref<128x128xbf16, #tpu.memory_space<vmem>>, %arg7: memref<512x128xbf16, #tpu.memory_space<vmem>>, %arg8: memref<1x1x128xf32, #tpu.memory_space<vmem>>, %arg9: memref<1x1x128xf32, #tpu.memory_space<vmem>>) attributes {dimension_semantics = [#tpu.dimension_semantics<parallel>], iteration_bounds = array<i64: 1>, scalar_prefetch = 0 : i64, scratch_operands = 0 : i64, tpu.core_type = #tpu.core_type<tc>, window_params = [{transform_indices = @transform_0, window_bounds = array<i64: 512, 128>}, {pipeline_mode = #tpu.pipeline_mode<synchronous>, transform_indices = @transform_1, window_bounds = array<i64: 1, 128>}, {pipeline_mode = #tpu.pipeline_mode<synchronous>, transform_indices = @transform_2, window_bounds = array<i64: 1, 128>}, {pipeline_mode = #tpu.pipeline_mode<synchronous>, transform_indices = @transform_3, window_bounds = array<i64: 1, 128>}, {pipeline_mode = #tpu.pipeline_mode<synchronous>, transform_indices = @transform_4, window_bounds = array<i64: 1, 128>}, {pipeline_mode = #tpu.pipeline_mode<synchronous>, transform_indices = @transform_5, window_bounds = array<i64: 128, 128>}, {transform_indices = @transform_6, window_bounds = array<i64: 512, 128>}, {transform_indices = @transform_7, window_bounds = array<i64: 1, 1, 128>}, {transform_indices = @transform_8, window_bounds = array<i64: 1, 1, 128>}]} {
    %c0 = arith.constant 0 : index
    %c0_0 = arith.constant 0 : index
    %0 = vector.load %arg2[%c0, %c0_0] : memref<1x128xf32, #tpu.memory_space<vmem>>, vector<1x128xf32>
    %cst = arith.constant 0.001953125 : f32
    %1 = vector.broadcast %cst : f32 to vector<1x128xf32>
    %2 = arith.mulf %0, %1 : vector<1x128xf32>
    %c0_1 = arith.constant 0 : index
    %c0_2 = arith.constant 0 : index
    %3 = vector.load %arg3[%c0_1, %c0_2] : memref<1x128xf32, #tpu.memory_space<vmem>>, vector<1x128xf32>
    %cst_3 = arith.constant 0.001953125 : f32
    %4 = vector.broadcast %cst_3 : f32 to vector<1x128xf32>
    %5 = arith.mulf %3, %4 : vector<1x128xf32>
    %6 = arith.mulf %2, %2 : vector<1x128xf32>
    %7 = arith.subf %5, %6 : vector<1x128xf32>
    %cst_4 = arith.constant 0.000000e+00 : f32
    %8 = vector.broadcast %cst_4 : f32 to vector<1x128xf32>
    %9 = arith.maximumf %7, %8 : vector<1x128xf32>
    %c0_5 = arith.constant 0 : index
    %c0_6 = arith.constant 0 : index
    %10 = vector.load %arg4[%c0_5, %c0_6] : memref<1x128xf32, #tpu.memory_space<vmem>>, vector<1x128xf32>
    %cst_7 = arith.constant 9.99999974E-6 : f32
    %11 = vector.broadcast %cst_7 : f32 to vector<1x128xf32>
    %12 = arith.addf %9, %11 : vector<1x128xf32>
    %13 = math.rsqrt %12 : vector<1x128xf32>
    %14 = arith.mulf %10, %13 : vector<1x128xf32>
    %c0_8 = arith.constant 0 : index
    %c0_9 = arith.constant 0 : index
    %15 = vector.load %arg5[%c0_8, %c0_9] : memref<1x128xf32, #tpu.memory_space<vmem>>, vector<1x128xf32>
    %16 = arith.mulf %2, %14 : vector<1x128xf32>
    %17 = arith.subf %15, %16 : vector<1x128xf32>
    %c0_10 = arith.constant 0 : index
    %c0_11 = arith.constant 0 : index
    %18 = vector.load %arg1[%c0_10, %c0_11] : memref<512x128xbf16, #tpu.memory_space<vmem>>, vector<512x128xbf16>
    %19 = arith.extf %18 : vector<512x128xbf16> to vector<512x128xf32>
    %20 = vector.broadcast %14 : vector<1x128xf32> to vector<512x128xf32>
    %21 = arith.mulf %19, %20 : vector<512x128xf32>
    %22 = vector.broadcast %17 : vector<1x128xf32> to vector<512x128xf32>
    %23 = arith.addf %21, %22 : vector<512x128xf32>
    %cst_12 = arith.constant 0.000000e+00 : f32
    %24 = vector.broadcast %cst_12 : f32 to vector<512x128xf32>
    %25 = arith.maximumf %23, %24 : vector<512x128xf32>
    %26 = arith.truncf %25 : vector<512x128xf32> to vector<512x128xbf16>
    %c0_13 = arith.constant 0 : index
    %c0_14 = arith.constant 0 : index
    %27 = vector.load %arg6[%c0_13, %c0_14] : memref<128x128xbf16, #tpu.memory_space<vmem>>, vector<128x128xbf16>
    %cst_15 = arith.constant dense<0.000000e+00> : vector<512x128xf32>
    %28 = tpu.matmul %26, %27, %cst_15 {dimension_numbers = #tpu.dot_dimension_numbers<[1], [0], [0], [1], [0, 0, 1, 1], [], []>} : vector<512x128xbf16>, vector<128x128xbf16>, vector<512x128xf32> -> vector<512x128xf32>
    %29 = arith.truncf %28 : vector<512x128xf32> to vector<512x128xbf16>
    %c0_16 = arith.constant 0 : index
    %c0_17 = arith.constant 0 : index
    %30 = vector.load %arg7[%c0_16, %c0_17] : memref<512x128xbf16, #tpu.memory_space<vmem>>, vector<512x128xbf16>
    tpu.vector_store %arg7[%c0_16, %c0_17], %29 {strides = array<i32>} : memref<512x128xbf16, #tpu.memory_space<vmem>>, vector<512x128xbf16>,
    %cst_18 = arith.constant dense<0.000000e+00> : vector<128xf32>
    %31 = vector.multi_reduction <add>, %28, %cst_18 [0] : vector<512x128xf32> to vector<128xf32>
    %32 = vector.shape_cast %31 : vector<128xf32> to vector<1x128xf32>
    %33 = vector.shape_cast %32 : vector<1x128xf32> to vector<1x1x128xf32>
    %c0_19 = arith.constant 0 : index
    %c0_20 = arith.constant 0 : index
    %c0_21 = arith.constant 0 : index
    %34 = vector.load %arg8[%c0_19, %c0_20, %c0_21] : memref<1x1x128xf32, #tpu.memory_space<vmem>>, vector<1x1x128xf32>
    tpu.vector_store %arg8[%c0_19, %c0_20, %c0_21], %33 {strides = array<i32>} : memref<1x1x128xf32, #tpu.memory_space<vmem>>, vector<1x1x128xf32>,
    %35 = arith.mulf %28, %28 : vector<512x128xf32>
    %cst_22 = arith.constant dense<0.000000e+00> : vector<128xf32>
    %36 = vector.multi_reduction <add>, %35, %cst_22 [0] : vector<512x128xf32> to vector<128xf32>
    %37 = vector.shape_cast %36 : vector<128xf32> to vector<1x128xf32>
    %38 = vector.shape_cast %37 : vector<1x128xf32> to vector<1x1x128xf32>
    %c0_23 = arith.constant 0 : index
    %c0_24 = arith.constant 0 : index
    %c0_25 = arith.constant 0 : index
    %39 = vector.load %arg9[%c0_23, %c0_24, %c0_25] : memref<1x1x128xf32, #tpu.memory_space<vmem>>, vector<1x1x128xf32>
    tpu.vector_store %arg9[%c0_23, %c0_24, %c0_25], %38 {strides = array<i32>} : memref<1x1x128xf32, #tpu.memory_space<vmem>>, vector<1x1x128xf32>,
    return
  }
  func.func @transform_0(%arg0: i32) -> (i32, i32) {
    %c0_i32 = arith.constant 0 : i32
    %c0_i32_0 = arith.constant 0 : i32
    return %arg0, %c0_i32 : i32, i32
  }
  func.func @transform_1(%arg0: i32) -> (i32, i32) {
    %c0_i32 = arith.constant 0 : i32
    %c0_i32_0 = arith.constant 0 : i32
    %c0_i32_1 = arith.constant 0 : i32
    return %c0_i32, %c0_i32_0 : i32, i32
  }
  func.func @transform_2(%arg0: i32) -> (i32, i32) {
    %c0_i32 = arith.constant 0 : i32
    %c0_i32_0 = arith.constant 0 : i32
    %c0_i32_1 = arith.constant 0 : i32
    return %c0_i32, %c0_i32_0 : i32, i32
  }
  func.func @transform_3(%arg0: i32) -> (i32, i32) {
    %c0_i32 = arith.constant 0 : i32
    %c0_i32_0 = arith.constant 0 : i32
    %c0_i32_1 = arith.constant 0 : i32
    return %c0_i32, %c0_i32_0 : i32, i32
  }
  func.func @transform_4(%arg0: i32) -> (i32, i32) {
    %c0_i32 = arith.constant 0 : i32
    %c0_i32_0 = arith.constant 0 : i32
    %c0_i32_1 = arith.constant 0 : i32
    return %c0_i32, %c0_i32_0 : i32, i32
  }
  func.func @transform_5(%arg0: i32) -> (i32, i32) {
    %c0_i32 = arith.constant 0 : i32
    %c0_i32_0 = arith.constant 0 : i32
    %c0_i32_1 = arith.constant 0 : i32
    return %c0_i32, %c0_i32_0 : i32, i32
  }
  func.func @transform_6(%arg0: i32) -> (i32, i32) {
    %c0_i32 = arith.constant 0 : i32
    %c0_i32_0 = arith.constant 0 : i32
    return %arg0, %c0_i32 : i32, i32
  }
  func.func @transform_7(%arg0: i32) -> (i32, i32, i32) {
    %c0_i32 = arith.constant 0 : i32
    %c0_i32_0 = arith.constant 0 : i32
    %c0_i32_1 = arith.constant 0 : i32
    return %arg0, %c0_i32, %c0_i32_0 : i32, i32, i32
  }
  func.func @transform_8(%arg0: i32) -> (i32, i32, i32) {
    %c0_i32 = arith.constant 0 : i32
    %c0_i32_0 = arith.constant 0 : i32
    %c0_i32_1 = arith.constant 0 : i32
    return %arg0, %c0_i32, %c0_i32_0 : i32, i32, i32
  }
}

module attributes {stable_mosaic.version = 11 : i64} {
  func.func @_k_bn_relu_conv3x3_stats(%arg0: i32, %arg1: memref<1x16x16x128xbf16, #tpu.memory_space<vmem>>, %arg2: memref<1x128xf32, #tpu.memory_space<vmem>>, %arg3: memref<1x128xf32, #tpu.memory_space<vmem>>, %arg4: memref<1x128xf32, #tpu.memory_space<vmem>>, %arg5: memref<1x128xf32, #tpu.memory_space<vmem>>, %arg6: memref<1152x128xbf16, #tpu.memory_space<vmem>>, %arg7: memref<1x16x16x128xbf16, #tpu.memory_space<vmem>>, %arg8: memref<1x1x128xf32, #tpu.memory_space<vmem>>, %arg9: memref<1x1x128xf32, #tpu.memory_space<vmem>>, %arg10: memref<1x18x18x128xf32, #tpu.memory_space<vmem>>, %arg11: memref<256x128xf32, #tpu.memory_space<vmem>>) attributes {dimension_semantics = [#tpu.dimension_semantics<parallel>], iteration_bounds = array<i64: 2>, scalar_prefetch = 0 : i64, scratch_operands = 2 : i64, tpu.core_type = #tpu.core_type<tc>, window_params = [{transform_indices = @transform_0, window_bounds = array<i64: 1, 16, 16, 128>}, {pipeline_mode = #tpu.pipeline_mode<synchronous>, transform_indices = @transform_1, window_bounds = array<i64: 1, 128>}, {pipeline_mode = #tpu.pipeline_mode<synchronous>, transform_indices = @transform_2, window_bounds = array<i64: 1, 128>}, {pipeline_mode = #tpu.pipeline_mode<synchronous>, transform_indices = @transform_3, window_bounds = array<i64: 1, 128>}, {pipeline_mode = #tpu.pipeline_mode<synchronous>, transform_indices = @transform_4, window_bounds = array<i64: 1, 128>}, {pipeline_mode = #tpu.pipeline_mode<synchronous>, transform_indices = @transform_5, window_bounds = array<i64: 1152, 128>}, {transform_indices = @transform_6, window_bounds = array<i64: 1, 16, 16, 128>}, {transform_indices = @transform_7, window_bounds = array<i64: 1, 1, 128>}, {transform_indices = @transform_8, window_bounds = array<i64: 1, 1, 128>}]} {
    %c0 = arith.constant 0 : index
    %c0_0 = arith.constant 0 : index
    %0 = vector.load %arg2[%c0, %c0_0] : memref<1x128xf32, #tpu.memory_space<vmem>>, vector<1x128xf32>
    %cst = arith.constant 0.001953125 : f32
    %1 = vector.broadcast %cst : f32 to vector<1x128xf32>
    %2 = arith.mulf %0, %1 : vector<1x128xf32>
    %c0_1 = arith.constant 0 : index
    %c0_2 = arith.constant 0 : index
    %3 = vector.load %arg3[%c0_1, %c0_2] : memref<1x128xf32, #tpu.memory_space<vmem>>, vector<1x128xf32>
    %cst_3 = arith.constant 0.001953125 : f32
    %4 = vector.broadcast %cst_3 : f32 to vector<1x128xf32>
    %5 = arith.mulf %3, %4 : vector<1x128xf32>
    %6 = arith.mulf %2, %2 : vector<1x128xf32>
    %7 = arith.subf %5, %6 : vector<1x128xf32>
    %cst_4 = arith.constant 0.000000e+00 : f32
    %8 = vector.broadcast %cst_4 : f32 to vector<1x128xf32>
    %9 = arith.maximumf %7, %8 : vector<1x128xf32>
    %c0_5 = arith.constant 0 : index
    %c0_6 = arith.constant 0 : index
    %10 = vector.load %arg4[%c0_5, %c0_6] : memref<1x128xf32, #tpu.memory_space<vmem>>, vector<1x128xf32>
    %cst_7 = arith.constant 9.99999974E-6 : f32
    %11 = vector.broadcast %cst_7 : f32 to vector<1x128xf32>
    %12 = arith.addf %9, %11 : vector<1x128xf32>
    %13 = math.rsqrt %12 : vector<1x128xf32>
    %14 = arith.mulf %10, %13 : vector<1x128xf32>
    %c0_8 = arith.constant 0 : index
    %c0_9 = arith.constant 0 : index
    %15 = vector.load %arg5[%c0_8, %c0_9] : memref<1x128xf32, #tpu.memory_space<vmem>>, vector<1x128xf32>
    %16 = arith.mulf %2, %14 : vector<1x128xf32>
    %17 = arith.subf %15, %16 : vector<1x128xf32>
    %c0_10 = arith.constant 0 : index
    %c0_11 = arith.constant 0 : index
    %c0_12 = arith.constant 0 : index
    %c0_13 = arith.constant 0 : index
    %18 = vector.load %arg1[%c0_10, %c0_11, %c0_12, %c0_13] : memref<1x16x16x128xbf16, #tpu.memory_space<vmem>>, vector<1x16x16x128xbf16>
    %19 = arith.extf %18 : vector<1x16x16x128xbf16> to vector<1x16x16x128xf32>
    %20 = vector.shape_cast %14 : vector<1x128xf32> to vector<1x1x1x128xf32>
    %21 = vector.broadcast %20 : vector<1x1x1x128xf32> to vector<1x16x16x128xf32>
    %22 = arith.mulf %19, %21 : vector<1x16x16x128xf32>
    %23 = vector.shape_cast %17 : vector<1x128xf32> to vector<1x1x1x128xf32>
    %24 = vector.broadcast %23 : vector<1x1x1x128xf32> to vector<1x16x16x128xf32>
    %25 = arith.addf %22, %24 : vector<1x16x16x128xf32>
    %cst_14 = arith.constant 0.000000e+00 : f32
    %26 = vector.broadcast %cst_14 : f32 to vector<1x16x16x128xf32>
    %27 = arith.maximumf %25, %26 : vector<1x16x16x128xf32>
    %cst_15 = arith.constant 0.000000e+00 : f32
    %28 = vector.broadcast %cst_15 : f32 to vector<1x1x18x128xf32>
    %cst_16 = arith.constant 0.000000e+00 : f32
    %29 = vector.broadcast %cst_16 : f32 to vector<1x16x1x128xf32>
    %c0_17 = arith.constant 0 : index
    %c0_18 = arith.constant 0 : index
    %c0_19 = arith.constant 0 : index
    %c0_20 = arith.constant 0 : index
    %30 = vector.load %arg10[%c0_17, %c0_18, %c0_19, %c0_20] : memref<1x18x18x128xf32, #tpu.memory_space<vmem>>, vector<1x1x18x128xf32>
    tpu.vector_store %arg10[%c0_17, %c0_18, %c0_19, %c0_20], %28 {strides = array<i32>} : memref<1x18x18x128xf32, #tpu.memory_space<vmem>>, vector<1x1x18x128xf32>,
    %c0_21 = arith.constant 0 : index
    %c17 = arith.constant 17 : index
    %c0_22 = arith.constant 0 : index
    %c0_23 = arith.constant 0 : index
    %31 = vector.load %arg10[%c0_21, %c17, %c0_22, %c0_23] : memref<1x18x18x128xf32, #tpu.memory_space<vmem>>, vector<1x1x18x128xf32>
    tpu.vector_store %arg10[%c0_21, %c17, %c0_22, %c0_23], %28 {strides = array<i32>} : memref<1x18x18x128xf32, #tpu.memory_space<vmem>>, vector<1x1x18x128xf32>,
    %c0_24 = arith.constant 0 : index
    %c1 = arith.constant 1 : index
    %c0_25 = arith.constant 0 : index
    %c0_26 = arith.constant 0 : index
    %32 = vector.load %arg10[%c0_24, %c1, %c0_25, %c0_26] : memref<1x18x18x128xf32, #tpu.memory_space<vmem>>, vector<1x16x1x128xf32>
    tpu.vector_store %arg10[%c0_24, %c1, %c0_25, %c0_26], %29 {strides = array<i32>} : memref<1x18x18x128xf32, #tpu.memory_space<vmem>>, vector<1x16x1x128xf32>,
    %c0_27 = arith.constant 0 : index
    %c1_28 = arith.constant 1 : index
    %c17_29 = arith.constant 17 : index
    %c0_30 = arith.constant 0 : index
    %33 = vector.load %arg10[%c0_27, %c1_28, %c17_29, %c0_30] : memref<1x18x18x128xf32, #tpu.memory_space<vmem>>, vector<1x16x1x128xf32>
    tpu.vector_store %arg10[%c0_27, %c1_28, %c17_29, %c0_30], %29 {strides = array<i32>} : memref<1x18x18x128xf32, #tpu.memory_space<vmem>>, vector<1x16x1x128xf32>,
    %c0_31 = arith.constant 0 : index
    %c1_32 = arith.constant 1 : index
    %c1_33 = arith.constant 1 : index
    %c0_34 = arith.constant 0 : index
    %34 = vector.load %arg10[%c0_31, %c1_32, %c1_33, %c0_34] : memref<1x18x18x128xf32, #tpu.memory_space<vmem>>, vector<1x16x16x128xf32>
    tpu.vector_store %arg10[%c0_31, %c1_32, %c1_33, %c0_34], %27 {strides = array<i32>} : memref<1x18x18x128xf32, #tpu.memory_space<vmem>>, vector<1x16x16x128xf32>,
    %c0_35 = arith.constant 0 : index
    %c0_36 = arith.constant 0 : index
    %c0_37 = arith.constant 0 : index
    %c0_38 = arith.constant 0 : index
    %35 = vector.load %arg10[%c0_35, %c0_36, %c0_37, %c0_38] : memref<1x18x18x128xf32, #tpu.memory_space<vmem>>, vector<1x16x16x128xf32>
    %36 = vector.shape_cast %35 : vector<1x16x16x128xf32> to vector<256x128xf32>
    %37 = arith.truncf %36 : vector<256x128xf32> to vector<256x128xbf16>
    %c0_39 = arith.constant 0 : index
    %c0_40 = arith.constant 0 : index
    %38 = vector.load %arg6[%c0_39, %c0_40] : memref<1152x128xbf16, #tpu.memory_space<vmem>>, vector<128x128xbf16>
    %cst_41 = arith.constant dense<0.000000e+00> : vector<256x128xf32>
    %39 = tpu.matmul %37, %38, %cst_41 {dimension_numbers = #tpu.dot_dimension_numbers<[1], [0], [0], [1], [0, 0, 1, 1], [], []>} : vector<256x128xbf16>, vector<128x128xbf16>, vector<256x128xf32> -> vector<256x128xf32>
    %c0_42 = arith.constant 0 : index
    %c0_43 = arith.constant 0 : index
    %40 = vector.load %arg11[%c0_42, %c0_43] : memref<256x128xf32, #tpu.memory_space<vmem>>, vector<256x128xf32>
    tpu.vector_store %arg11[%c0_42, %c0_43], %39 {strides = array<i32>} : memref<256x128xf32, #tpu.memory_space<vmem>>, vector<256x128xf32>,
    %c0_44 = arith.constant 0 : index
    %c0_45 = arith.constant 0 : index
    %c1_46 = arith.constant 1 : index
    %c0_47 = arith.constant 0 : index
    %41 = vector.load %arg10[%c0_44, %c0_45, %c1_46, %c0_47] : memref<1x18x18x128xf32, #tpu.memory_space<vmem>>, vector<1x16x16x128xf32>
    %42 = vector.shape_cast %41 : vector<1x16x16x128xf32> to vector<256x128xf32>
    %43 = arith.truncf %42 : vector<256x128xf32> to vector<256x128xbf16>
    %c128 = arith.constant 128 : index
    %c0_48 = arith.constant 0 : index
    %44 = vector.load %arg6[%c128, %c0_48] : memref<1152x128xbf16, #tpu.memory_space<vmem>>, vector<128x128xbf16>
    %cst_49 = arith.constant dense<0.000000e+00> : vector<256x128xf32>
    %45 = tpu.matmul %43, %44, %cst_49 {dimension_numbers = #tpu.dot_dimension_numbers<[1], [0], [0], [1], [0, 0, 1, 1], [], []>} : vector<256x128xbf16>, vector<128x128xbf16>, vector<256x128xf32> -> vector<256x128xf32>
    %c0_50 = arith.constant 0 : index
    %c0_51 = arith.constant 0 : index
    %46 = vector.load %arg11[%c0_50, %c0_51] : memref<256x128xf32, #tpu.memory_space<vmem>>, vector<256x128xf32>
    %47 = arith.addf %46, %45 : vector<256x128xf32>
    %c0_52 = arith.constant 0 : index
    %c0_53 = arith.constant 0 : index
    %48 = vector.load %arg11[%c0_52, %c0_53] : memref<256x128xf32, #tpu.memory_space<vmem>>, vector<256x128xf32>
    tpu.vector_store %arg11[%c0_52, %c0_53], %47 {strides = array<i32>} : memref<256x128xf32, #tpu.memory_space<vmem>>, vector<256x128xf32>,
    %c0_54 = arith.constant 0 : index
    %c0_55 = arith.constant 0 : index
    %c2 = arith.constant 2 : index
    %c0_56 = arith.constant 0 : index
    %49 = vector.load %arg10[%c0_54, %c0_55, %c2, %c0_56] : memref<1x18x18x128xf32, #tpu.memory_space<vmem>>, vector<1x16x16x128xf32>
    %50 = vector.shape_cast %49 : vector<1x16x16x128xf32> to vector<256x128xf32>
    %51 = arith.truncf %50 : vector<256x128xf32> to vector<256x128xbf16>
    %c256 = arith.constant 256 : index
    %c0_57 = arith.constant 0 : index
    %52 = vector.load %arg6[%c256, %c0_57] : memref<1152x128xbf16, #tpu.memory_space<vmem>>, vector<128x128xbf16>
    %cst_58 = arith.constant dense<0.000000e+00> : vector<256x128xf32>
    %53 = tpu.matmul %51, %52, %cst_58 {dimension_numbers = #tpu.dot_dimension_numbers<[1], [0], [0], [1], [0, 0, 1, 1], [], []>} : vector<256x128xbf16>, vector<128x128xbf16>, vector<256x128xf32> -> vector<256x128xf32>
    %c0_59 = arith.constant 0 : index
    %c0_60 = arith.constant 0 : index
    %54 = vector.load %arg11[%c0_59, %c0_60] : memref<256x128xf32, #tpu.memory_space<vmem>>, vector<256x128xf32>
    %55 = arith.addf %54, %53 : vector<256x128xf32>
    %c0_61 = arith.constant 0 : index
    %c0_62 = arith.constant 0 : index
    %56 = vector.load %arg11[%c0_61, %c0_62] : memref<256x128xf32, #tpu.memory_space<vmem>>, vector<256x128xf32>
    tpu.vector_store %arg11[%c0_61, %c0_62], %55 {strides = array<i32>} : memref<256x128xf32, #tpu.memory_space<vmem>>, vector<256x128xf32>,
    %c0_63 = arith.constant 0 : index
    %c1_64 = arith.constant 1 : index
    %c0_65 = arith.constant 0 : index
    %c0_66 = arith.constant 0 : index
    %57 = vector.load %arg10[%c0_63, %c1_64, %c0_65, %c0_66] : memref<1x18x18x128xf32, #tpu.memory_space<vmem>>, vector<1x16x16x128xf32>
    %58 = vector.shape_cast %57 : vector<1x16x16x128xf32> to vector<256x128xf32>
    %59 = arith.truncf %58 : vector<256x128xf32> to vector<256x128xbf16>
    %c384 = arith.constant 384 : index
    %c0_67 = arith.constant 0 : index
    %60 = vector.load %arg6[%c384, %c0_67] : memref<1152x128xbf16, #tpu.memory_space<vmem>>, vector<128x128xbf16>
    %cst_68 = arith.constant dense<0.000000e+00> : vector<256x128xf32>
    %61 = tpu.matmul %59, %60, %cst_68 {dimension_numbers = #tpu.dot_dimension_numbers<[1], [0], [0], [1], [0, 0, 1, 1], [], []>} : vector<256x128xbf16>, vector<128x128xbf16>, vector<256x128xf32> -> vector<256x128xf32>
    %c0_69 = arith.constant 0 : index
    %c0_70 = arith.constant 0 : index
    %62 = vector.load %arg11[%c0_69, %c0_70] : memref<256x128xf32, #tpu.memory_space<vmem>>, vector<256x128xf32>
    %63 = arith.addf %62, %61 : vector<256x128xf32>
    %c0_71 = arith.constant 0 : index
    %c0_72 = arith.constant 0 : index
    %64 = vector.load %arg11[%c0_71, %c0_72] : memref<256x128xf32, #tpu.memory_space<vmem>>, vector<256x128xf32>
    tpu.vector_store %arg11[%c0_71, %c0_72], %63 {strides = array<i32>} : memref<256x128xf32, #tpu.memory_space<vmem>>, vector<256x128xf32>,
    %c0_73 = arith.constant 0 : index
    %c1_74 = arith.constant 1 : index
    %c1_75 = arith.constant 1 : index
    %c0_76 = arith.constant 0 : index
    %65 = vector.load %arg10[%c0_73, %c1_74, %c1_75, %c0_76] : memref<1x18x18x128xf32, #tpu.memory_space<vmem>>, vector<1x16x16x128xf32>
    %66 = vector.shape_cast %65 : vector<1x16x16x128xf32> to vector<256x128xf32>
    %67 = arith.truncf %66 : vector<256x128xf32> to vector<256x128xbf16>
    %c512 = arith.constant 512 : index
    %c0_77 = arith.constant 0 : index
    %68 = vector.load %arg6[%c512, %c0_77] : memref<1152x128xbf16, #tpu.memory_space<vmem>>, vector<128x128xbf16>
    %cst_78 = arith.constant dense<0.000000e+00> : vector<256x128xf32>
    %69 = tpu.matmul %67, %68, %cst_78 {dimension_numbers = #tpu.dot_dimension_numbers<[1], [0], [0], [1], [0, 0, 1, 1], [], []>} : vector<256x128xbf16>, vector<128x128xbf16>, vector<256x128xf32> -> vector<256x128xf32>
    %c0_79 = arith.constant 0 : index
    %c0_80 = arith.constant 0 : index
    %70 = vector.load %arg11[%c0_79, %c0_80] : memref<256x128xf32, #tpu.memory_space<vmem>>, vector<256x128xf32>
    %71 = arith.addf %70, %69 : vector<256x128xf32>
    %c0_81 = arith.constant 0 : index
    %c0_82 = arith.constant 0 : index
    %72 = vector.load %arg11[%c0_81, %c0_82] : memref<256x128xf32, #tpu.memory_space<vmem>>, vector<256x128xf32>
    tpu.vector_store %arg11[%c0_81, %c0_82], %71 {strides = array<i32>} : memref<256x128xf32, #tpu.memory_space<vmem>>, vector<256x128xf32>,
    %c0_83 = arith.constant 0 : index
    %c1_84 = arith.constant 1 : index
    %c2_85 = arith.constant 2 : index
    %c0_86 = arith.constant 0 : index
    %73 = vector.load %arg10[%c0_83, %c1_84, %c2_85, %c0_86] : memref<1x18x18x128xf32, #tpu.memory_space<vmem>>, vector<1x16x16x128xf32>
    %74 = vector.shape_cast %73 : vector<1x16x16x128xf32> to vector<256x128xf32>
    %75 = arith.truncf %74 : vector<256x128xf32> to vector<256x128xbf16>
    %c640 = arith.constant 640 : index
    %c0_87 = arith.constant 0 : index
    %76 = vector.load %arg6[%c640, %c0_87] : memref<1152x128xbf16, #tpu.memory_space<vmem>>, vector<128x128xbf16>
    %cst_88 = arith.constant dense<0.000000e+00> : vector<256x128xf32>
    %77 = tpu.matmul %75, %76, %cst_88 {dimension_numbers = #tpu.dot_dimension_numbers<[1], [0], [0], [1], [0, 0, 1, 1], [], []>} : vector<256x128xbf16>, vector<128x128xbf16>, vector<256x128xf32> -> vector<256x128xf32>
    %c0_89 = arith.constant 0 : index
    %c0_90 = arith.constant 0 : index
    %78 = vector.load %arg11[%c0_89, %c0_90] : memref<256x128xf32, #tpu.memory_space<vmem>>, vector<256x128xf32>
    %79 = arith.addf %78, %77 : vector<256x128xf32>
    %c0_91 = arith.constant 0 : index
    %c0_92 = arith.constant 0 : index
    %80 = vector.load %arg11[%c0_91, %c0_92] : memref<256x128xf32, #tpu.memory_space<vmem>>, vector<256x128xf32>
    tpu.vector_store %arg11[%c0_91, %c0_92], %79 {strides = array<i32>} : memref<256x128xf32, #tpu.memory_space<vmem>>, vector<256x128xf32>,
    %c0_93 = arith.constant 0 : index
    %c2_94 = arith.constant 2 : index
    %c0_95 = arith.constant 0 : index
    %c0_96 = arith.constant 0 : index
    %81 = vector.load %arg10[%c0_93, %c2_94, %c0_95, %c0_96] : memref<1x18x18x128xf32, #tpu.memory_space<vmem>>, vector<1x16x16x128xf32>
    %82 = vector.shape_cast %81 : vector<1x16x16x128xf32> to vector<256x128xf32>
    %83 = arith.truncf %82 : vector<256x128xf32> to vector<256x128xbf16>
    %c768 = arith.constant 768 : index
    %c0_97 = arith.constant 0 : index
    %84 = vector.load %arg6[%c768, %c0_97] : memref<1152x128xbf16, #tpu.memory_space<vmem>>, vector<128x128xbf16>
    %cst_98 = arith.constant dense<0.000000e+00> : vector<256x128xf32>
    %85 = tpu.matmul %83, %84, %cst_98 {dimension_numbers = #tpu.dot_dimension_numbers<[1], [0], [0], [1], [0, 0, 1, 1], [], []>} : vector<256x128xbf16>, vector<128x128xbf16>, vector<256x128xf32> -> vector<256x128xf32>
    %c0_99 = arith.constant 0 : index
    %c0_100 = arith.constant 0 : index
    %86 = vector.load %arg11[%c0_99, %c0_100] : memref<256x128xf32, #tpu.memory_space<vmem>>, vector<256x128xf32>
    %87 = arith.addf %86, %85 : vector<256x128xf32>
    %c0_101 = arith.constant 0 : index
    %c0_102 = arith.constant 0 : index
    %88 = vector.load %arg11[%c0_101, %c0_102] : memref<256x128xf32, #tpu.memory_space<vmem>>, vector<256x128xf32>
    tpu.vector_store %arg11[%c0_101, %c0_102], %87 {strides = array<i32>} : memref<256x128xf32, #tpu.memory_space<vmem>>, vector<256x128xf32>,
    %c0_103 = arith.constant 0 : index
    %c2_104 = arith.constant 2 : index
    %c1_105 = arith.constant 1 : index
    %c0_106 = arith.constant 0 : index
    %89 = vector.load %arg10[%c0_103, %c2_104, %c1_105, %c0_106] : memref<1x18x18x128xf32, #tpu.memory_space<vmem>>, vector<1x16x16x128xf32>
    %90 = vector.shape_cast %89 : vector<1x16x16x128xf32> to vector<256x128xf32>
    %91 = arith.truncf %90 : vector<256x128xf32> to vector<256x128xbf16>
    %c896 = arith.constant 896 : index
    %c0_107 = arith.constant 0 : index
    %92 = vector.load %arg6[%c896, %c0_107] : memref<1152x128xbf16, #tpu.memory_space<vmem>>, vector<128x128xbf16>
    %cst_108 = arith.constant dense<0.000000e+00> : vector<256x128xf32>
    %93 = tpu.matmul %91, %92, %cst_108 {dimension_numbers = #tpu.dot_dimension_numbers<[1], [0], [0], [1], [0, 0, 1, 1], [], []>} : vector<256x128xbf16>, vector<128x128xbf16>, vector<256x128xf32> -> vector<256x128xf32>
    %c0_109 = arith.constant 0 : index
    %c0_110 = arith.constant 0 : index
    %94 = vector.load %arg11[%c0_109, %c0_110] : memref<256x128xf32, #tpu.memory_space<vmem>>, vector<256x128xf32>
    %95 = arith.addf %94, %93 : vector<256x128xf32>
    %c0_111 = arith.constant 0 : index
    %c0_112 = arith.constant 0 : index
    %96 = vector.load %arg11[%c0_111, %c0_112] : memref<256x128xf32, #tpu.memory_space<vmem>>, vector<256x128xf32>
    tpu.vector_store %arg11[%c0_111, %c0_112], %95 {strides = array<i32>} : memref<256x128xf32, #tpu.memory_space<vmem>>, vector<256x128xf32>,
    %c0_113 = arith.constant 0 : index
    %c2_114 = arith.constant 2 : index
    %c2_115 = arith.constant 2 : index
    %c0_116 = arith.constant 0 : index
    %97 = vector.load %arg10[%c0_113, %c2_114, %c2_115, %c0_116] : memref<1x18x18x128xf32, #tpu.memory_space<vmem>>, vector<1x16x16x128xf32>
    %98 = vector.shape_cast %97 : vector<1x16x16x128xf32> to vector<256x128xf32>
    %99 = arith.truncf %98 : vector<256x128xf32> to vector<256x128xbf16>
    %c1024 = arith.constant 1024 : index
    %c0_117 = arith.constant 0 : index
    %100 = vector.load %arg6[%c1024, %c0_117] : memref<1152x128xbf16, #tpu.memory_space<vmem>>, vector<128x128xbf16>
    %cst_118 = arith.constant dense<0.000000e+00> : vector<256x128xf32>
    %101 = tpu.matmul %99, %100, %cst_118 {dimension_numbers = #tpu.dot_dimension_numbers<[1], [0], [0], [1], [0, 0, 1, 1], [], []>} : vector<256x128xbf16>, vector<128x128xbf16>, vector<256x128xf32> -> vector<256x128xf32>
    %c0_119 = arith.constant 0 : index
    %c0_120 = arith.constant 0 : index
    %102 = vector.load %arg11[%c0_119, %c0_120] : memref<256x128xf32, #tpu.memory_space<vmem>>, vector<256x128xf32>
    %103 = arith.addf %102, %101 : vector<256x128xf32>
    %c0_121 = arith.constant 0 : index
    %c0_122 = arith.constant 0 : index
    %104 = vector.load %arg11[%c0_121, %c0_122] : memref<256x128xf32, #tpu.memory_space<vmem>>, vector<256x128xf32>
    tpu.vector_store %arg11[%c0_121, %c0_122], %103 {strides = array<i32>} : memref<256x128xf32, #tpu.memory_space<vmem>>, vector<256x128xf32>,
    %c0_123 = arith.constant 0 : index
    %c0_124 = arith.constant 0 : index
    %105 = vector.load %arg11[%c0_123, %c0_124] : memref<256x128xf32, #tpu.memory_space<vmem>>, vector<256x128xf32>
    %106 = vector.shape_cast %105 : vector<256x128xf32> to vector<1x16x16x128xf32>
    %107 = arith.truncf %106 : vector<1x16x16x128xf32> to vector<1x16x16x128xbf16>
    %c0_125 = arith.constant 0 : index
    %c0_126 = arith.constant 0 : index
    %c0_127 = arith.constant 0 : index
    %c0_128 = arith.constant 0 : index
    %108 = vector.load %arg7[%c0_125, %c0_126, %c0_127, %c0_128] : memref<1x16x16x128xbf16, #tpu.memory_space<vmem>>, vector<1x16x16x128xbf16>
    tpu.vector_store %arg7[%c0_125, %c0_126, %c0_127, %c0_128], %107 {strides = array<i32>} : memref<1x16x16x128xbf16, #tpu.memory_space<vmem>>, vector<1x16x16x128xbf16>,
    %cst_129 = arith.constant dense<0.000000e+00> : vector<128xf32>
    %109 = vector.multi_reduction <add>, %105, %cst_129 [0] : vector<256x128xf32> to vector<128xf32>
    %110 = vector.shape_cast %109 : vector<128xf32> to vector<1x128xf32>
    %111 = vector.shape_cast %110 : vector<1x128xf32> to vector<1x1x128xf32>
    %c0_130 = arith.constant 0 : index
    %c0_131 = arith.constant 0 : index
    %c0_132 = arith.constant 0 : index
    %112 = vector.load %arg8[%c0_130, %c0_131, %c0_132] : memref<1x1x128xf32, #tpu.memory_space<vmem>>, vector<1x1x128xf32>
    tpu.vector_store %arg8[%c0_130, %c0_131, %c0_132], %111 {strides = array<i32>} : memref<1x1x128xf32, #tpu.memory_space<vmem>>, vector<1x1x128xf32>,
    %113 = arith.mulf %105, %105 : vector<256x128xf32>
    %cst_133 = arith.constant dense<0.000000e+00> : vector<128xf32>
    %114 = vector.multi_reduction <add>, %113, %cst_133 [0] : vector<256x128xf32> to vector<128xf32>
    %115 = vector.shape_cast %114 : vector<128xf32> to vector<1x128xf32>
    %116 = vector.shape_cast %115 : vector<1x128xf32> to vector<1x1x128xf32>
    %c0_134 = arith.constant 0 : index
    %c0_135 = arith.constant 0 : index
    %c0_136 = arith.constant 0 : index
    %117 = vector.load %arg9[%c0_134, %c0_135, %c0_136] : memref<1x1x128xf32, #tpu.memory_space<vmem>>, vector<1x1x128xf32>
    tpu.vector_store %arg9[%c0_134, %c0_135, %c0_136], %116 {strides = array<i32>} : memref<1x1x128xf32, #tpu.memory_space<vmem>>, vector<1x1x128xf32>,
    return
  }
  func.func @transform_0(%arg0: i32) -> (i32, i32, i32, i32) {
    %c0_i32 = arith.constant 0 : i32
    %c0_i32_0 = arith.constant 0 : i32
    %c0_i32_1 = arith.constant 0 : i32
    %c0_i32_2 = arith.constant 0 : i32
    return %arg0, %c0_i32, %c0_i32_0, %c0_i32_1 : i32, i32, i32, i32
  }
  func.func @transform_1(%arg0: i32) -> (i32, i32) {
    %c0_i32 = arith.constant 0 : i32
    %c0_i32_0 = arith.constant 0 : i32
    %c0_i32_1 = arith.constant 0 : i32
    return %c0_i32, %c0_i32_0 : i32, i32
  }
  func.func @transform_2(%arg0: i32) -> (i32, i32) {
    %c0_i32 = arith.constant 0 : i32
    %c0_i32_0 = arith.constant 0 : i32
    %c0_i32_1 = arith.constant 0 : i32
    return %c0_i32, %c0_i32_0 : i32, i32
  }
  func.func @transform_3(%arg0: i32) -> (i32, i32) {
    %c0_i32 = arith.constant 0 : i32
    %c0_i32_0 = arith.constant 0 : i32
    %c0_i32_1 = arith.constant 0 : i32
    return %c0_i32, %c0_i32_0 : i32, i32
  }
  func.func @transform_4(%arg0: i32) -> (i32, i32) {
    %c0_i32 = arith.constant 0 : i32
    %c0_i32_0 = arith.constant 0 : i32
    %c0_i32_1 = arith.constant 0 : i32
    return %c0_i32, %c0_i32_0 : i32, i32
  }
  func.func @transform_5(%arg0: i32) -> (i32, i32) {
    %c0_i32 = arith.constant 0 : i32
    %c0_i32_0 = arith.constant 0 : i32
    %c0_i32_1 = arith.constant 0 : i32
    return %c0_i32, %c0_i32_0 : i32, i32
  }
  func.func @transform_6(%arg0: i32) -> (i32, i32, i32, i32) {
    %c0_i32 = arith.constant 0 : i32
    %c0_i32_0 = arith.constant 0 : i32
    %c0_i32_1 = arith.constant 0 : i32
    %c0_i32_2 = arith.constant 0 : i32
    return %arg0, %c0_i32, %c0_i32_0, %c0_i32_1 : i32, i32, i32, i32
  }
  func.func @transform_7(%arg0: i32) -> (i32, i32, i32) {
    %c0_i32 = arith.constant 0 : i32
    %c0_i32_0 = arith.constant 0 : i32
    %c0_i32_1 = arith.constant 0 : i32
    return %arg0, %c0_i32, %c0_i32_0 : i32, i32, i32
  }
  func.func @transform_8(%arg0: i32) -> (i32, i32, i32) {
    %c0_i32 = arith.constant 0 : i32
    %c0_i32_0 = arith.constant 0 : i32
    %c0_i32_1 = arith.constant 0 : i32
    return %arg0, %c0_i32, %c0_i32_0 : i32, i32, i32
  }
}

module attributes {stable_mosaic.version = 11 : i64} {
  func.func @_k_bn_add_relu(%arg0: i32, %arg1: memref<512x128xbf16, #tpu.memory_space<vmem>>, %arg2: memref<1x128xf32, #tpu.memory_space<vmem>>, %arg3: memref<1x128xf32, #tpu.memory_space<vmem>>, %arg4: memref<1x128xf32, #tpu.memory_space<vmem>>, %arg5: memref<1x128xf32, #tpu.memory_space<vmem>>, %arg6: memref<512x128xf32, #tpu.memory_space<vmem>>, %arg7: memref<512x128xf32, #tpu.memory_space<vmem>>) attributes {dimension_semantics = [#tpu.dimension_semantics<parallel>], iteration_bounds = array<i64: 1>, scalar_prefetch = 0 : i64, scratch_operands = 0 : i64, tpu.core_type = #tpu.core_type<tc>, window_params = [{transform_indices = @transform_0, window_bounds = array<i64: 512, 128>}, {pipeline_mode = #tpu.pipeline_mode<synchronous>, transform_indices = @transform_1, window_bounds = array<i64: 1, 128>}, {pipeline_mode = #tpu.pipeline_mode<synchronous>, transform_indices = @transform_2, window_bounds = array<i64: 1, 128>}, {pipeline_mode = #tpu.pipeline_mode<synchronous>, transform_indices = @transform_3, window_bounds = array<i64: 1, 128>}, {pipeline_mode = #tpu.pipeline_mode<synchronous>, transform_indices = @transform_4, window_bounds = array<i64: 1, 128>}, {transform_indices = @transform_5, window_bounds = array<i64: 512, 128>}, {transform_indices = @transform_6, window_bounds = array<i64: 512, 128>}]} {
    %c0 = arith.constant 0 : index
    %c0_0 = arith.constant 0 : index
    %0 = vector.load %arg2[%c0, %c0_0] : memref<1x128xf32, #tpu.memory_space<vmem>>, vector<1x128xf32>
    %cst = arith.constant 0.001953125 : f32
    %1 = vector.broadcast %cst : f32 to vector<1x128xf32>
    %2 = arith.mulf %0, %1 : vector<1x128xf32>
    %c0_1 = arith.constant 0 : index
    %c0_2 = arith.constant 0 : index
    %3 = vector.load %arg3[%c0_1, %c0_2] : memref<1x128xf32, #tpu.memory_space<vmem>>, vector<1x128xf32>
    %cst_3 = arith.constant 0.001953125 : f32
    %4 = vector.broadcast %cst_3 : f32 to vector<1x128xf32>
    %5 = arith.mulf %3, %4 : vector<1x128xf32>
    %6 = arith.mulf %2, %2 : vector<1x128xf32>
    %7 = arith.subf %5, %6 : vector<1x128xf32>
    %cst_4 = arith.constant 0.000000e+00 : f32
    %8 = vector.broadcast %cst_4 : f32 to vector<1x128xf32>
    %9 = arith.maximumf %7, %8 : vector<1x128xf32>
    %c0_5 = arith.constant 0 : index
    %c0_6 = arith.constant 0 : index
    %10 = vector.load %arg4[%c0_5, %c0_6] : memref<1x128xf32, #tpu.memory_space<vmem>>, vector<1x128xf32>
    %cst_7 = arith.constant 9.99999974E-6 : f32
    %11 = vector.broadcast %cst_7 : f32 to vector<1x128xf32>
    %12 = arith.addf %9, %11 : vector<1x128xf32>
    %13 = math.rsqrt %12 : vector<1x128xf32>
    %14 = arith.mulf %10, %13 : vector<1x128xf32>
    %c0_8 = arith.constant 0 : index
    %c0_9 = arith.constant 0 : index
    %15 = vector.load %arg5[%c0_8, %c0_9] : memref<1x128xf32, #tpu.memory_space<vmem>>, vector<1x128xf32>
    %16 = arith.mulf %2, %14 : vector<1x128xf32>
    %17 = arith.subf %15, %16 : vector<1x128xf32>
    %c0_10 = arith.constant 0 : index
    %c0_11 = arith.constant 0 : index
    %18 = vector.load %arg1[%c0_10, %c0_11] : memref<512x128xbf16, #tpu.memory_space<vmem>>, vector<512x128xbf16>
    %19 = arith.extf %18 : vector<512x128xbf16> to vector<512x128xf32>
    %20 = vector.broadcast %14 : vector<1x128xf32> to vector<512x128xf32>
    %21 = arith.mulf %19, %20 : vector<512x128xf32>
    %22 = vector.broadcast %17 : vector<1x128xf32> to vector<512x128xf32>
    %23 = arith.addf %21, %22 : vector<512x128xf32>
    %c0_12 = arith.constant 0 : index
    %c0_13 = arith.constant 0 : index
    %24 = vector.load %arg6[%c0_12, %c0_13] : memref<512x128xf32, #tpu.memory_space<vmem>>, vector<512x128xf32>
    %25 = arith.addf %23, %24 : vector<512x128xf32>
    %cst_14 = arith.constant 0.000000e+00 : f32
    %26 = vector.broadcast %cst_14 : f32 to vector<512x128xf32>
    %27 = arith.maximumf %25, %26 : vector<512x128xf32>
    %c0_15 = arith.constant 0 : index
    %c0_16 = arith.constant 0 : index
    %28 = vector.load %arg7[%c0_15, %c0_16] : memref<512x128xf32, #tpu.memory_space<vmem>>, vector<512x128xf32>
    tpu.vector_store %arg7[%c0_15, %c0_16], %27 {strides = array<i32>} : memref<512x128xf32, #tpu.memory_space<vmem>>, vector<512x128xf32>,
    return
  }
  func.func @transform_0(%arg0: i32) -> (i32, i32) {
    %c0_i32 = arith.constant 0 : i32
    %c0_i32_0 = arith.constant 0 : i32
    return %arg0, %c0_i32 : i32, i32
  }
  func.func @transform_1(%arg0: i32) -> (i32, i32) {
    %c0_i32 = arith.constant 0 : i32
    %c0_i32_0 = arith.constant 0 : i32
    %c0_i32_1 = arith.constant 0 : i32
    return %c0_i32, %c0_i32_0 : i32, i32
  }
  func.func @transform_2(%arg0: i32) -> (i32, i32) {
    %c0_i32 = arith.constant 0 : i32
    %c0_i32_0 = arith.constant 0 : i32
    %c0_i32_1 = arith.constant 0 : i32
    return %c0_i32, %c0_i32_0 : i32, i32
  }
  func.func @transform_3(%arg0: i32) -> (i32, i32) {
    %c0_i32 = arith.constant 0 : i32
    %c0_i32_0 = arith.constant 0 : i32
    %c0_i32_1 = arith.constant 0 : i32
    return %c0_i32, %c0_i32_0 : i32, i32
  }
  func.func @transform_4(%arg0: i32) -> (i32, i32) {
    %c0_i32 = arith.constant 0 : i32
    %c0_i32_0 = arith.constant 0 : i32
    %c0_i32_1 = arith.constant 0 : i32
    return %c0_i32, %c0_i32_0 : i32, i32
  }
  func.func @transform_5(%arg0: i32) -> (i32, i32) {
    %c0_i32 = arith.constant 0 : i32
    %c0_i32_0 = arith.constant 0 : i32
    return %arg0, %c0_i32 : i32, i32
  }
  func.func @transform_6(%arg0: i32) -> (i32, i32) {
    %c0_i32 = arith.constant 0 : i32
    %c0_i32_0 = arith.constant 0 : i32
    return %arg0, %c0_i32 : i32, i32
  }
}

</mosaic_0001>

<llo_original>
// kernel: bottleneck_forward.7
$region0: #{bottleneck_forward.7}
  #allocation0 [shape = 'u32[]', space=smem, size = 0x4, offset = 0x4, fixed_abs, tag = 'smem constant byte address 0x4 - core index']
  #allocation1 [shape = 'u32[144,128]{1,0:T(1,128)}', space=vmem, size = 0x12000, scoped, tag = 'internal scratch']
  %s0 = inlined_call_operand.vmem [shape: bf16[512,128], index: 0, kind: input, shape index: {}]
  %s1 = inlined_call_operand.vmem [shape: f32[1,128], index: 1, kind: input, shape index: {}]
  %s2 = inlined_call_operand.vmem [shape: f32[1,128], index: 2, kind: input, shape index: {}]
  %s3 = inlined_call_operand.vmem [shape: f32[1,128], index: 3, kind: input, shape index: {}]
  %s4 = inlined_call_operand.vmem [shape: f32[1,128], index: 4, kind: input, shape index: {}]
  %s5 = inlined_call_operand.vmem [shape: f32[512,128], index: 5, kind: input, shape index: {}, may-alias: {5,6}]
  %s6 = inlined_call_operand.vmem [shape: f32[512,128], index: 6, kind: output, shape index: {}, may-alias: {5,6}]
  %s7 = sld [smem:[#allocation0]]
  $region34: #{bottleneck_forward.7} parent=0
    _
  %s9 = ssub.s32 1, %s7
  %s10 = scalar_select 0, %s9, %s7
  // Predicated region
  $region2: #{bottleneck_forward.7} parent=0 // pred_check
    _
  $region3: #{bottleneck_forward.7} parent=0 // pred_check_branch
    %12 = sbr.rel (0) target = $region5
  $region4: #{bottleneck_forward.7} parent=0 // pred_region
    _
  $region5: #{bottleneck_forward.7} parent=0 // pred_fallthru
    _
  // Predicated region
  $region6: #{bottleneck_forward.7} parent=0 // pred_check
    _
  $region7: #{bottleneck_forward.7} parent=0 // pred_check_branch
    %14 = sbr.rel (0) target = $region9
  $region8: #{bottleneck_forward.7} parent=0 // pred_region
    _
  $region9: #{bottleneck_forward.7} parent=0 // pred_fallthru
    _
  // Predicated region
  $region10: #{bottleneck_forward.7} parent=0 // pred_check
    _
  $region11: #{bottleneck_forward.7} parent=0 // pred_check_branch
    %16 = sbr.rel (0) target = $region13
  $region12: #{bottleneck_forward.7} parent=0 // pred_region
    _
  $region13: #{bottleneck_forward.7} parent=0 // pred_fallthru
    _
  // Predicated region
  $region14: #{bottleneck_forward.7} parent=0 // pred_check
    _
  $region15: #{bottleneck_forward.7} parent=0 // pred_check_branch
    %18 = sbr.rel (0) target = $region17
  $region16: #{bottleneck_forward.7} parent=0 // pred_region
    _
  $region17: #{bottleneck_forward.7} parent=0 // pred_fallthru
    _
  // Predicated region
  $region18: #{bottleneck_forward.7} parent=0 // pred_check
    _
  $region19: #{bottleneck_forward.7} parent=0 // pred_check_branch
    %20 = sbr.rel (0) target = $region21
  $region20: #{bottleneck_forward.7} parent=0 // pred_region
    _
  $region21: #{bottleneck_forward.7} parent=0 // pred_fallthru
    _
  // Predicated region
  $region22: #{bottleneck_forward.7} parent=0 // pred_check
    _
  $region23: #{bottleneck_forward.7} parent=0 // pred_check_branch
    %22 = sbr.rel (0) target = $region25
  $region24: #{bottleneck_forward.7} parent=0 // pred_region
    _
  $region25: #{bottleneck_forward.7} parent=0 // pred_fallthru
    _
  %v23 = vld [vmem:[%s1] sm:$0x1]
  %v24 = vmul.f32 %v23, 0.001953125
  %v25 = vld [vmem:[%s2] sm:$0x1]
  %v26 = vmul.f32 %v25, 0.001953125
  %v27 = vmul.f32 %v24, %v24
  %v28 = vsub.f32 %v26, %v27
  %v29 = vmax.f32 %v28, 0.0
  %v30 = vld [vmem:[%s3] sm:$0x1]
  %v31 = vadd.f32 %v29, 1e-05
  %v32 = vrsqrt.pop %v31
  %v33 = vmul.f32 %v30, %v32
  %v34 = vld [vmem:[%s4] sm:$0x1]
  %v35 = vmul.f32 %v24, %v33
  %v36 = vsub.f32 %v34, %v35
  %v37 = vld [vmem:[%s0] sm:$0xf]
  %v38 = vld [vmem:[%s0 + $0x4] sm:$0xf]
  %v39 = vld [vmem:[%s0 + $0x8] sm:$0xf]
  %v40 = vld [vmem:[%s0 + $0xc] sm:$0xf]
  %v41 = vld [vmem:[%s0 + $0x10] sm:$0xf]
  %v42 = vld [vmem:[%s0 + $0x14] sm:$0xf]
  %v43 = vld [vmem:[%s0 + $0x18] sm:$0xf]
  %v44 = vld [vmem:[%s0 + $0x1c] sm:$0xf]
  %v45 = vld [vmem:[%s0 + $0x20] sm:$0xf]
  %v46 = vld [vmem:[%s0 + $0x24] sm:$0xf]
  %v47 = vld [vmem:[%s0 + $0x28] sm:$0xf]
  %v48 = vld [vmem:[%s0 + $0x2c] sm:$0xf]
  %v49 = vld [vmem:[%s0 + $0x30] sm:$0xf]
  %v50 = vld [vmem:[%s0 + $0x34] sm:$0xf]
  %v51 = vld [vmem:[%s0 + $0x38] sm:$0xf]
  %v52 = vld [vmem:[%s0 + $0x3c] sm:$0xf]
  %v53 = vld [vmem:[%s0 + $0x40] sm:$0xf]
  %v54 = vld [vmem:[%s0 + $0x44] sm:$0xf]
  %v55 = vld [vmem:[%s0 + $0x48] sm:$0xf]
  %v56 = vld [vmem:[%s0 + $0x4c] sm:$0xf]
  %v57 = vld [vmem:[%s0 + $0x50] sm:$0xf]
  %v58 = vld [vmem:[%s0 + $0x54] sm:$0xf]
  %v59 = vld [vmem:[%s0 + $0x58] sm:$0xf]
  %v60 = vld [vmem:[%s0 + $0x5c] sm:$0xf]
  %v61 = vld [vmem:[%s0 + $0x60] sm:$0xf]
  %v62 = vld [vmem:[%s0 + $0x64] sm:$0xf]
  %v63 = vld [vmem:[%s0 + $0x68] sm:$0xf]
  %v64 = vld [vmem:[%s0 + $0x6c] sm:$0xf]
  %v65 = vld [vmem:[%s0 + $0x70] sm:$0xf]
  %v66 = vld [vmem:[%s0 + $0x74] sm:$0xf]
  %v67 = vld [vmem:[%s0 + $0x78] sm:$0xf]
  %v68 = vld [vmem:[%s0 + $0x7c] sm:$0xf]
  %v69 = vld [vmem:[%s0 + $0x80] sm:$0xf]
  %v70 = vld [vmem:[%s0 + $0x84] sm:$0xf]
  %v71 = vld [vmem:[%s0 + $0x88] sm:$0xf]
  %v72 = vld [vmem:[%s0 + $0x8c] sm:$0xf]
  %v73 = vld [vmem:[%s0 + $0x90] sm:$0xf]
  %v74 = vld [vmem:[%s0 + $0x94] sm:$0xf]
  %v75 = vld [vmem:[%s0 + $0x98] sm:$0xf]
  %v76 = vld [vmem:[%s0 + $0x9c] sm:$0xf]
  %v77 = vld [vmem:[%s0 + $0xa0] sm:$0xf]
  %v78 = vld [vmem:[%s0 + $0xa4] sm:$0xf]
  %v79 = vld [vmem:[%s0 + $0xa8] sm:$0xf]
  %v80 = vld [vmem:[%s0 + $0xac] sm:$0xf]
  %v81 = vld [vmem:[%s0 + $0xb0] sm:$0xf]
  %v82 = vld [vmem:[%s0 + $0xb4] sm:$0xf]
  %v83 = vld [vmem:[%s0 + $0xb8] sm:$0xf]
  %v84 = vld [vmem:[%s0 + $0xbc] sm:$0xf]
  %v85 = vld [vmem:[%s0 + $0xc0] sm:$0xf]
  %v86 = vld [vmem:[%s0 + $0xc4] sm:$0xf]
  %v87 = vld [vmem:[%s0 + $0xc8] sm:$0xf]
  %v88 = vld [vmem:[%s0 + $0xcc] sm:$0xf]
  %v89 = vld [vmem:[%s0 + $0xd0] sm:$0xf]
  %v90 = vld [vmem:[%s0 + $0xd4] sm:$0xf]
  %v91 = vld [vmem:[%s0 + $0xd8] sm:$0xf]
  %v92 = vld [vmem:[%s0 + $0xdc] sm:$0xf]
  %v93 = vld [vmem:[%s0 + $0xe0] sm:$0xf]
  %v94 = vld [vmem:[%s0 + $0xe4] sm:$0xf]
  %v95 = vld [vmem:[%s0 + $0xe8] sm:$0xf]
  %v96 = vld [vmem:[%s0 + $0xec] sm:$0xf]
  %v97 = vld [vmem:[%s0 + $0xf0] sm:$0xf]
  %v98 = vld [vmem:[%s0 + $0xf4] sm:$0xf]
  %v99 = vld [vmem:[%s0 + $0xf8] sm:$0xf]
  %v100 = vld [vmem:[%s0 + $0xfc] sm:$0xf]
  %v101 = vunpack.c.l.bf16 %v37
  %v102 = vunpack.c.l.bf16 %v38
  %v103 = vunpack.c.l.bf16 %v39
  %v104 = vunpack.c.l.bf16 %v40
  %v105 = vunpack.c.l.bf16 %v41
  %v106 = vunpack.c.l.bf16 %v42
  %v107 = vunpack.c.l.bf16 %v43
  %v108 = vunpack.c.l.bf16 %v44
  %v109 = vunpack.c.l.bf16 %v45
  %v110 = vunpack.c.l.bf16 %v46
  %v111 = vunpack.c.l.bf16 %v47
  %v112 = vunpack.c.l.bf16 %v48
  %v113 = vunpack.c.l.bf16 %v49
  %v114 = vunpack.c.l.bf16 %v50
  %v115 = vunpack.c.l.bf16 %v51
  %v116 = vunpack.c.l.bf16 %v52
  %v117 = vunpack.c.l.bf16 %v53
  %v118 = vunpack.c.l.bf16 %v54
  %v119 = vunpack.c.l.bf16 %v55
  %v120 = vunpack.c.l.bf16 %v56
  %v121 = vunpack.c.l.bf16 %v57
  %v122 = vunpack.c.l.bf16 %v58
  %v123 = vunpack.c.l.bf16 %v59
  %v124 = vunpack.c.l.bf16 %v60
  %v125 = vunpack.c.l.bf16 %v61
  %v126 = vunpack.c.l.bf16 %v62
  %v127 = vunpack.c.l.bf16 %v63
  %v128 = vunpack.c.l.bf16 %v64
  %v129 = vunpack.c.l.bf16 %v65
  %v130 = vunpack.c.l.bf16 %v66
  %v131 = vunpack.c.l.bf16 %v67
  %v132 = vunpack.c.l.bf16 %v68
  %v133 = vunpack.c.l.bf16 %v69
  %v134 = vunpack.c.l.bf16 %v70
  %v135 = vunpack.c.l.bf16 %v71
  %v136 = vunpack.c.l.bf16 %v72
  %v137 = vunpack.c.l.bf16 %v73
  %v138 = vunpack.c.l.bf16 %v74
  %v139 = vunpack.c.l.bf16 %v75
  %v140 = vunpack.c.l.bf16 %v76
  %v141 = vunpack.c.l.bf16 %v77
  %v142 = vunpack.c.l.bf16 %v78
  %v143 = vunpack.c.l.bf16 %v79
  %v144 = vunpack.c.l.bf16 %v80
  %v145 = vunpack.c.l.bf16 %v81
  %v146 = vunpack.c.l.bf16 %v82
  %v147 = vunpack.c.l.bf16 %v83
  %v148 = vunpack.c.l.bf16 %v84
  %v149 = vunpack.c.l.bf16 %v85
  %v150 = vunpack.c.l.bf16 %v86
  %v151 = vunpack.c.l.bf16 %v87
  %v152 = vunpack.c.l.bf16 %v88
  %v153 = vunpack.c.l.bf16 %v89
  %v154 = vunpack.c.l.bf16 %v90
  %v155 = vunpack.c.l.bf16 %v91
  %v156 = vunpack.c.l.bf16 %v92
  %v157 = vunpack.c.l.bf16 %v93
  %v158 = vunpack.c.l.bf16 %v94
  %v159 = vunpack.c.l.bf16 %v95
  %v160 = vunpack.c.l.bf16 %v96
  %v161 = vunpack.c.l.bf16 %v97
  %v162 = vunpack.c.l.bf16 %v98
  %v163 = vunpack.c.l.bf16 %v99
  %v164 = vunpack.c.l.bf16 %v100
  %v166 = vlaneseq
  %v167 = vshrl.u32 %v166, 7
  %v168 = vsub.s32 0, %v167
  %v169 = vrot.slane %v33, %v168
  %v171 = vmul.f32 %v101, %v169
  %v172 = vmul.f32 %v102, %v169
  %v173 = vmul.f32 %v103, %v169
  %v174 = vmul.f32 %v104, %v169
  %v175 = vmul.f32 %v105, %v169
  %v176 = vmul.f32 %v106, %v169
  %v177 = vmul.f32 %v107, %v169
  %v178 = vmul.f32 %v108, %v169
  %v179 = vmul.f32 %v109, %v169
  %v180 = vmul.f32 %v110, %v169
  %v181 = vmul.f32 %v111, %v169
  %v182 = vmul.f32 %v112, %v169
  %v183 = vmul.f32 %v113, %v169
  %v184 = vmul.f32 %v114, %v169
  %v185 = vmul.f32 %v115, %v169
  %v186 = vmul.f32 %v116, %v169
  %v187 = vmul.f32 %v117, %v169
  %v188 = vmul.f32 %v118, %v169
  %v189 = vmul.f32 %v119, %v169
  %v190 = vmul.f32 %v120, %v169
  %v191 = vmul.f32 %v121, %v169
  %v192 = vmul.f32 %v122, %v169
  %v193 = vmul.f32 %v123, %v169
  %v194 = vmul.f32 %v124, %v169
  %v195 = vmul.f32 %v125, %v169
  %v196 = vmul.f32 %v126, %v169
  %v197 = vmul.f32 %v127, %v169
  %v198 = vmul.f32 %v128, %v169
  %v199 = vmul.f32 %v129, %v169
  %v200 = vmul.f32 %v130, %v169
  %v201 = vmul.f32 %v131, %v169
  %v202 = vmul.f32 %v132, %v169
  %v203 = vmul.f32 %v133, %v169
  %v204 = vmul.f32 %v134, %v169
  %v205 = vmul.f32 %v135, %v169
  %v206 = vmul.f32 %v136, %v169
  %v207 = vmul.f32 %v137, %v169
  %v208 = vmul.f32 %v138, %v169
  %v209 = vmul.f32 %v139, %v169
  %v210 = vmul.f32 %v140, %v169
  %v211 = vmul.f32 %v141, %v169
  %v212 = vmul.f32 %v142, %v169
  %v213 = vmul.f32 %v143, %v169
  %v214 = vmul.f32 %v144, %v169
  %v215 = vmul.f32 %v145, %v169
  %v216 = vmul.f32 %v146, %v169
  %v217 = vmul.f32 %v147, %v169
  %v218 = vmul.f32 %v148, %v169
  %v219 = vmul.f32 %v149, %v169
  %v220 = vmul.f32 %v150, %v169
  %v221 = vmul.f32 %v151, %v169
  %v222 = vmul.f32 %v152, %v169
  %v223 = vmul.f32 %v153, %v169
  %v224 = vmul.f32 %v154, %v169
  %v225 = vmul.f32 %v155, %v169
  %v226 = vmul.f32 %v156, %v169
  %v227 = vmul.f32 %v157, %v169
  %v228 = vmul.f32 %v158, %v169
  %v229 = vmul.f32 %v159, %v169
  %v230 = vmul.f32 %v160, %v169
  %v231 = vmul.f32 %v161, %v169
  %v232 = vmul.f32 %v162, %v169
  %v233 = vmul.f32 %v163, %v169
  %v234 = vmul.f32 %v164, %v169
  %v236 = vlaneseq
  %v237 = vshrl.u32 %v236, 7
  %v238 = vsub.s32 0, %v237
  %v239 = vrot.slane %v36, %v238
  %v241 = vadd.f32 %v171, %v239
  %v242 = vadd.f32 %v172, %v239
  %v243 = vadd.f32 %v173, %v239
  %v244 = vadd.f32 %v174, %v239
  %v245 = vadd.f32 %v175, %v239
  %v246 = vadd.f32 %v176, %v239
  %v247 = vadd.f32 %v177, %v239
  %v248 = vadd.f32 %v178, %v239
  %v249 = vadd.f32 %v179, %v239
  %v250 = vadd.f32 %v180, %v239
  %v251 = vadd.f32 %v181, %v239
  %v252 = vadd.f32 %v182, %v239
  %v253 = vadd.f32 %v183, %v239
  %v254 = vadd.f32 %v184, %v239
  %v255 = vadd.f32 %v185, %v239
  %v256 = vadd.f32 %v186, %v239
  %v257 = vadd.f32 %v187, %v239
  %v258 = vadd.f32 %v188, %v239
  %v259 = vadd.f32 %v189, %v239
  %v260 = vadd.f32 %v190, %v239
  %v261 = vadd.f32 %v191, %v239
  %v262 = vadd.f32 %v192, %v239
  %v263 = vadd.f32 %v193, %v239
  %v264 = vadd.f32 %v194, %v239
  %v265 = vadd.f32 %v195, %v239
  %v266 = vadd.f32 %v196, %v239
  %v267 = vadd.f32 %v197, %v239
  %v268 = vadd.f32 %v198, %v239
  %v269 = vadd.f32 %v199, %v239
  %v270 = vadd.f32 %v200, %v239
  %v271 = vadd.f32 %v201, %v239
  %v272 = vadd.f32 %v202, %v239
  %v273 = vadd.f32 %v203, %v239
  %v274 = vadd.f32 %v204, %v239
  %v275 = vadd.f32 %v205, %v239
  %v276 = vadd.f32 %v206, %v239
  %v277 = vadd.f32 %v207, %v239
  %v278 = vadd.f32 %v208, %v239
  %v279 = vadd.f32 %v209, %v239
  %v280 = vadd.f32 %v210, %v239
  %v281 = vadd.f32 %v211, %v239
  %v282 = vadd.f32 %v212, %v239
  %v283 = vadd.f32 %v213, %v239
  %v284 = vadd.f32 %v214, %v239
  %v285 = vadd.f32 %v215, %v239
  %v286 = vadd.f32 %v216, %v239
  %v287 = vadd.f32 %v217, %v239
  %v288 = vadd.f32 %v218, %v239
  %v289 = vadd.f32 %v219, %v239
  %v290 = vadd.f32 %v220, %v239
  %v291 = vadd.f32 %v221, %v239
  %v292 = vadd.f32 %v222, %v239
  %v293 = vadd.f32 %v223, %v239
  %v294 = vadd.f32 %v224, %v239
  %v295 = vadd.f32 %v225, %v239
  %v296 = vadd.f32 %v226, %v239
  %v297 = vadd.f32 %v227, %v239
  %v298 = vadd.f32 %v228, %v239
  %v299 = vadd.f32 %v229, %v239
  %v300 = vadd.f32 %v230, %v239
  %v301 = vadd.f32 %v231, %v239
  %v302 = vadd.f32 %v232, %v239
  %v303 = vadd.f32 %v233, %v239
  %v304 = vadd.f32 %v234, %v239
  %v305 = vld [vmem:[%s5] sm:$0xff]
  %v306 = vld [vmem:[%s5 + $0x8] sm:$0xff]
  %v307 = vld [vmem:[%s5 + $0x10] sm:$0xff]
  %v308 = vld [vmem:[%s5 + $0x18] sm:$0xff]
  %v309 = vld [vmem:[%s5 + $0x20] sm:$0xff]
  %v310 = vld [vmem:[%s5 + $0x28] sm:$0xff]
  %v311 = vld [vmem:[%s5 + $0x30] sm:$0xff]
  %v312 = vld [vmem:[%s5 + $0x38] sm:$0xff]
  %v313 = vld [vmem:[%s5 + $0x40] sm:$0xff]
  %v314 = vld [vmem:[%s5 + $0x48] sm:$0xff]
  %v315 = vld [vmem:[%s5 + $0x50] sm:$0xff]
  %v316 = vld [vmem:[%s5 + $0x58] sm:$0xff]
  %v317 = vld [vmem:[%s5 + $0x60] sm:$0xff]
  %v318 = vld [vmem:[%s5 + $0x68] sm:$0xff]
  %v319 = vld [vmem:[%s5 + $0x70] sm:$0xff]
  %v320 = vld [vmem:[%s5 + $0x78] sm:$0xff]
  %v321 = vld [vmem:[%s5 + $0x80] sm:$0xff]
  %v322 = vld [vmem:[%s5 + $0x88] sm:$0xff]
  %v323 = vld [vmem:[%s5 + $0x90] sm:$0xff]
  %v324 = vld [vmem:[%s5 + $0x98] sm:$0xff]
  %v325 = vld [vmem:[%s5 + $0xa0] sm:$0xff]
  %v326 = vld [vmem:[%s5 + $0xa8] sm:$0xff]
  %v327 = vld [vmem:[%s5 + $0xb0] sm:$0xff]
  %v328 = vld [vmem:[%s5 + $0xb8] sm:$0xff]
  %v329 = vld [vmem:[%s5 + $0xc0] sm:$0xff]
  %v330 = vld [vmem:[%s5 + $0xc8] sm:$0xff]
  %v331 = vld [vmem:[%s5 + $0xd0] sm:$0xff]
  %v332 = vld [vmem:[%s5 + $0xd8] sm:$0xff]
  %v333 = vld [vmem:[%s5 + $0xe0] sm:$0xff]
  %v334 = vld [vmem:[%s5 + $0xe8] sm:$0xff]
  %v335 = vld [vmem:[%s5 + $0xf0] sm:$0xff]
  %v336 = vld [vmem:[%s5 + $0xf8] sm:$0xff]
  %v337 = vld [vmem:[%s5 + $0x100] sm:$0xff]
  %v338 = vld [vmem:[%s5 + $0x108] sm:$0xff]
  %v339 = vld [vmem:[%s5 + $0x110] sm:$0xff]
  %v340 = vld [vmem:[%s5 + $0x118] sm:$0xff]
  %v341 = vld [vmem:[%s5 + $0x120] sm:$0xff]
  %v342 = vld [vmem:[%s5 + $0x128] sm:$0xff]
  %v343 = vld [vmem:[%s5 + $0x130] sm:$0xff]
  %v344 = vld [vmem:[%s5 + $0x138] sm:$0xff]
  %v345 = vld [vmem:[%s5 + $0x140] sm:$0xff]
  %v346 = vld [vmem:[%s5 + $0x148] sm:$0xff]
  %v347 = vld [vmem:[%s5 + $0x150] sm:$0xff]
  %v348 = vld [vmem:[%s5 + $0x158] sm:$0xff]
  %v349 = vld [vmem:[%s5 + $0x160] sm:$0xff]
  %v350 = vld [vmem:[%s5 + $0x168] sm:$0xff]
  %v351 = vld [vmem:[%s5 + $0x170] sm:$0xff]
  %v352 = vld [vmem:[%s5 + $0x178] sm:$0xff]
  %v353 = vld [vmem:[%s5 + $0x180] sm:$0xff]
  %v354 = vld [vmem:[%s5 + $0x188] sm:$0xff]
  %v355 = vld [vmem:[%s5 + $0x190] sm:$0xff]
  %v356 = vld [vmem:[%s5 + $0x198] sm:$0xff]
  %v357 = vld [vmem:[%s5 + $0x1a0] sm:$0xff]
  %v358 = vld [vmem:[%s5 + $0x1a8] sm:$0xff]
  %v359 = vld [vmem:[%s5 + $0x1b0] sm:$0xff]
  %v360 = vld [vmem:[%s5 + $0x1b8] sm:$0xff]
  %v361 = vld [vmem:[%s5 + $0x1c0] sm:$0xff]
  %v362 = vld [vmem:[%s5 + $0x1c8] sm:$0xff]
  %v363 = vld [vmem:[%s5 + $0x1d0] sm:$0xff]
  %v364 = vld [vmem:[%s5 + $0x1d8] sm:$0xff]
  %v365 = vld [vmem:[%s5 + $0x1e0] sm:$0xff]
  %v366 = vld [vmem:[%s5 + $0x1e8] sm:$0xff]
  %v367 = vld [vmem:[%s5 + $0x1f0] sm:$0xff]
  %v368 = vld [vmem:[%s5 + $0x1f8] sm:$0xff]
  %v369 = vadd.f32 %v241, %v305
  %v370 = vadd.f32 %v242, %v306
  %v371 = vadd.f32 %v243, %v307
  %v372 = vadd.f32 %v244, %v308
  %v373 = vadd.f32 %v245, %v309
  %v374 = vadd.f32 %v246, %v310
  %v375 = vadd.f32 %v247, %v311
  %v376 = vadd.f32 %v248, %v312
  %v377 = vadd.f32 %v249, %v313
  %v378 = vadd.f32 %v250, %v314
  %v379 = vadd.f32 %v251, %v315
  %v380 = vadd.f32 %v252, %v316
  %v381 = vadd.f32 %v253, %v317
  %v382 = vadd.f32 %v254, %v318
  %v383 = vadd.f32 %v255, %v319
  %v384 = vadd.f32 %v256, %v320
  %v385 = vadd.f32 %v257, %v321
  %v386 = vadd.f32 %v258, %v322
  %v387 = vadd.f32 %v259, %v323
  %v388 = vadd.f32 %v260, %v324
  %v389 = vadd.f32 %v261, %v325
  %v390 = vadd.f32 %v262, %v326
  %v391 = vadd.f32 %v263, %v327
  %v392 = vadd.f32 %v264, %v328
  %v393 = vadd.f32 %v265, %v329
  %v394 = vadd.f32 %v266, %v330
  %v395 = vadd.f32 %v267, %v331
  %v396 = vadd.f32 %v268, %v332
  %v397 = vadd.f32 %v269, %v333
  %v398 = vadd.f32 %v270, %v334
  %v399 = vadd.f32 %v271, %v335
  %v400 = vadd.f32 %v272, %v336
  %v401 = vadd.f32 %v273, %v337
  %v402 = vadd.f32 %v274, %v338
  %v403 = vadd.f32 %v275, %v339
  %v404 = vadd.f32 %v276, %v340
  %v405 = vadd.f32 %v277, %v341
  %v406 = vadd.f32 %v278, %v342
  %v407 = vadd.f32 %v279, %v343
  %v408 = vadd.f32 %v280, %v344
  %v409 = vadd.f32 %v281, %v345
  %v410 = vadd.f32 %v282, %v346
  %v411 = vadd.f32 %v283, %v347
  %v412 = vadd.f32 %v284, %v348
  %v413 = vadd.f32 %v285, %v349
  %v414 = vadd.f32 %v286, %v350
  %v415 = vadd.f32 %v287, %v351
  %v416 = vadd.f32 %v288, %v352
  %v417 = vadd.f32 %v289, %v353
  %v418 = vadd.f32 %v290, %v354
  %v419 = vadd.f32 %v291, %v355
  %v420 = vadd.f32 %v292, %v356
  %v421 = vadd.f32 %v293, %v357
  %v422 = vadd.f32 %v294, %v358
  %v423 = vadd.f32 %v295, %v359
  %v424 = vadd.f32 %v296, %v360
  %v425 = vadd.f32 %v297, %v361
  %v426 = vadd.f32 %v298, %v362
  %v427 = vadd.f32 %v299, %v363
  %v428 = vadd.f32 %v300, %v364
  %v429 = vadd.f32 %v301, %v365
  %v430 = vadd.f32 %v302, %v366
  %v431 = vadd.f32 %v303, %v367
  %v432 = vadd.f32 %v304, %v368
  %v433 = vmax.f32 %v369, 0.0
  %v434 = vmax.f32 %v370, 0.0
  %v435 = vmax.f32 %v371, 0.0
  %v436 = vmax.f32 %v372, 0.0
  %v437 = vmax.f32 %v373, 0.0
  %v438 = vmax.f32 %v374, 0.0
  %v439 = vmax.f32 %v375, 0.0
  %v440 = vmax.f32 %v376, 0.0
  %v441 = vmax.f32 %v377, 0.0
  %v442 = vmax.f32 %v378, 0.0
  %v443 = vmax.f32 %v379, 0.0
  %v444 = vmax.f32 %v380, 0.0
  %v445 = vmax.f32 %v381, 0.0
  %v446 = vmax.f32 %v382, 0.0
  %v447 = vmax.f32 %v383, 0.0
  %v448 = vmax.f32 %v384, 0.0
  %v449 = vmax.f32 %v385, 0.0
  %v450 = vmax.f32 %v386, 0.0
  %v451 = vmax.f32 %v387, 0.0
  %v452 = vmax.f32 %v388, 0.0
  %v453 = vmax.f32 %v389, 0.0
  %v454 = vmax.f32 %v390, 0.0
  %v455 = vmax.f32 %v391, 0.0
  %v456 = vmax.f32 %v392, 0.0
  %v457 = vmax.f32 %v393, 0.0
  %v458 = vmax.f32 %v394, 0.0
  %v459 = vmax.f32 %v395, 0.0
  %v460 = vmax.f32 %v396, 0.0
  %v461 = vmax.f32 %v397, 0.0
  %v462 = vmax.f32 %v398, 0.0
  %v463 = vmax.f32 %v399, 0.0
  %v464 = vmax.f32 %v400, 0.0
  %v465 = vmax.f32 %v401, 0.0
  %v466 = vmax.f32 %v402, 0.0
  %v467 = vmax.f32 %v403, 0.0
  %v468 = vmax.f32 %v404, 0.0
  %v469 = vmax.f32 %v405, 0.0
  %v470 = vmax.f32 %v406, 0.0
  %v471 = vmax.f32 %v407, 0.0
  %v472 = vmax.f32 %v408, 0.0
  %v473 = vmax.f32 %v409, 0.0
  %v474 = vmax.f32 %v410, 0.0
  %v475 = vmax.f32 %v411, 0.0
  %v476 = vmax.f32 %v412, 0.0
  %v477 = vmax.f32 %v413, 0.0
  %v478 = vmax.f32 %v414, 0.0
  %v479 = vmax.f32 %v415, 0.0
  %v480 = vmax.f32 %v416, 0.0
  %v481 = vmax.f32 %v417, 0.0
  %v482 = vmax.f32 %v418, 0.0
  %v483 = vmax.f32 %v419, 0.0
  %v484 = vmax.f32 %v420, 0.0
  %v485 = vmax.f32 %v421, 0.0
  %v486 = vmax.f32 %v422, 0.0
  %v487 = vmax.f32 %v423, 0.0
  %v488 = vmax.f32 %v424, 0.0
  %v489 = vmax.f32 %v425, 0.0
  %v490 = vmax.f32 %v426, 0.0
  %v491 = vmax.f32 %v427, 0.0
  %v492 = vmax.f32 %v428, 0.0
  %v493 = vmax.f32 %v429, 0.0
  %v494 = vmax.f32 %v430, 0.0
  %v495 = vmax.f32 %v431, 0.0
  %v496 = vmax.f32 %v432, 0.0
  %497 = vst [vmem:[%s6] sm:$0xff] %v433
  %498 = vst [vmem:[%s6 + $0x8] sm:$0xff] %v434
  %499 = vst [vmem:[%s6 + $0x10] sm:$0xff] %v435
  %500 = vst [vmem:[%s6 + $0x18] sm:$0xff] %v436
  %501 = vst [vmem:[%s6 + $0x20] sm:$0xff] %v437
  %502 = vst [vmem:[%s6 + $0x28] sm:$0xff] %v438
  %503 = vst [vmem:[%s6 + $0x30] sm:$0xff] %v439
  %504 = vst [vmem:[%s6 + $0x38] sm:$0xff] %v440
  %505 = vst [vmem:[%s6 + $0x40] sm:$0xff] %v441
  %506 = vst [vmem:[%s6 + $0x48] sm:$0xff] %v442
  %507 = vst [vmem:[%s6 + $0x50] sm:$0xff] %v443
  %508 = vst [vmem:[%s6 + $0x58] sm:$0xff] %v444
  %509 = vst [vmem:[%s6 + $0x60] sm:$0xff] %v445
  %510 = vst [vmem:[%s6 + $0x68] sm:$0xff] %v446
  %511 = vst [vmem:[%s6 + $0x70] sm:$0xff] %v447
  %512 = vst [vmem:[%s6 + $0x78] sm:$0xff] %v448
  %513 = vst [vmem:[%s6 + $0x80] sm:$0xff] %v449
  %514 = vst [vmem:[%s6 + $0x88] sm:$0xff] %v450
  %515 = vst [vmem:[%s6 + $0x90] sm:$0xff] %v451
  %516 = vst [vmem:[%s6 + $0x98] sm:$0xff] %v452
  %517 = vst [vmem:[%s6 + $0xa0] sm:$0xff] %v453
  %518 = vst [vmem:[%s6 + $0xa8] sm:$0xff] %v454
  %519 = vst [vmem:[%s6 + $0xb0] sm:$0xff] %v455
  %520 = vst [vmem:[%s6 + $0xb8] sm:$0xff] %v456
  %521 = vst [vmem:[%s6 + $0xc0] sm:$0xff] %v457
  %522 = vst [vmem:[%s6 + $0xc8] sm:$0xff] %v458
  %523 = vst [vmem:[%s6 + $0xd0] sm:$0xff] %v459
  %524 = vst [vmem:[%s6 + $0xd8] sm:$0xff] %v460
  %525 = vst [vmem:[%s6 + $0xe0] sm:$0xff] %v461
  %526 = vst [vmem:[%s6 + $0xe8] sm:$0xff] %v462
  %527 = vst [vmem:[%s6 + $0xf0] sm:$0xff] %v463
  %528 = vst [vmem:[%s6 + $0xf8] sm:$0xff] %v464
  %529 = vst [vmem:[%s6 + $0x100] sm:$0xff] %v465
  %530 = vst [vmem:[%s6 + $0x108] sm:$0xff] %v466
  %531 = vst [vmem:[%s6 + $0x110] sm:$0xff] %v467
  %532 = vst [vmem:[%s6 + $0x118] sm:$0xff] %v468
  %533 = vst [vmem:[%s6 + $0x120] sm:$0xff] %v469
  %534 = vst [vmem:[%s6 + $0x128] sm:$0xff] %v470
  %535 = vst [vmem:[%s6 + $0x130] sm:$0xff] %v471
  %536 = vst [vmem:[%s6 + $0x138] sm:$0xff] %v472
  %537 = vst [vmem:[%s6 + $0x140] sm:$0xff] %v473
  %538 = vst [vmem:[%s6 + $0x148] sm:$0xff] %v474
  %539 = vst [vmem:[%s6 + $0x150] sm:$0xff] %v475
  %540 = vst [vmem:[%s6 + $0x158] sm:$0xff] %v476
  %541 = vst [vmem:[%s6 + $0x160] sm:$0xff] %v477
  %542 = vst [vmem:[%s6 + $0x168] sm:$0xff] %v478
  %543 = vst [vmem:[%s6 + $0x170] sm:$0xff] %v479
  %544 = vst [vmem:[%s6 + $0x178] sm:$0xff] %v480
  %545 = vst [vmem:[%s6 + $0x180] sm:$0xff] %v481
  %546 = vst [vmem:[%s6 + $0x188] sm:$0xff] %v482
  %547 = vst [vmem:[%s6 + $0x190] sm:$0xff] %v483
  %548 = vst [vmem:[%s6 + $0x198] sm:$0xff] %v484
  %549 = vst [vmem:[%s6 + $0x1a0] sm:$0xff] %v485
  %550 = vst [vmem:[%s6 + $0x1a8] sm:$0xff] %v486
  %551 = vst [vmem:[%s6 + $0x1b0] sm:$0xff] %v487
  %552 = vst [vmem:[%s6 + $0x1b8] sm:$0xff] %v488
  %553 = vst [vmem:[%s6 + $0x1c0] sm:$0xff] %v489
  %554 = vst [vmem:[%s6 + $0x1c8] sm:$0xff] %v490
  %555 = vst [vmem:[%s6 + $0x1d0] sm:$0xff] %v491
  %556 = vst [vmem:[%s6 + $0x1d8] sm:$0xff] %v492
  %557 = vst [vmem:[%s6 + $0x1e0] sm:$0xff] %v493
  %558 = vst [vmem:[%s6 + $0x1e8] sm:$0xff] %v494
  %559 = vst [vmem:[%s6 + $0x1f0] sm:$0xff] %v495
  %560 = vst [vmem:[%s6 + $0x1f8] sm:$0xff] %v496
  // Predicated region
  $region26: #{bottleneck_forward.7} parent=0 // pred_check
    _
  $region27: #{bottleneck_forward.7} parent=0 // pred_check_branch
    %562 = sbr.rel (0) target = $region29
  $region28: #{bottleneck_forward.7} parent=0 // pred_region
    _
  $region29: #{bottleneck_forward.7} parent=0 // pred_fallthru
    _
  // Predicated region
  $region30: #{bottleneck_forward.7} parent=0 // pred_check
    _
  $region31: #{bottleneck_forward.7} parent=0 // pred_check_branch
    %564 = sbr.rel (0) target = $region33
  $region32: #{bottleneck_forward.7} parent=0 // pred_region
    _
  $region33: #{bottleneck_forward.7} parent=0 // pred_fallthru
    _

// kernel: bottleneck_forward.4
$region0: #{bottleneck_forward.4}
  #allocation0 [shape = 'u32[]', space=smem, size = 0x4, offset = 0x4, fixed_abs, tag = 'smem constant byte address 0x4 - core index']
  #allocation1 [shape = 'u32[144,128]{1,0:T(1,128)}', space=vmem, size = 0x12000, scoped, tag = 'internal scratch']
  %s0 = inlined_call_operand.vmem [shape: f32[512,128], index: 0, kind: input, shape index: {}]
  %s1 = inlined_call_operand.vmem [shape: bf16[128,128], index: 1, kind: input, shape index: {}]
  %s2 = inlined_call_operand.vmem [shape: bf16[512,128], index: 2, kind: output, shape index: {0}]
  %s3 = inlined_call_operand.vmem [shape: f32[1,1,128], index: 3, kind: output, shape index: {1}]
  %s4 = inlined_call_operand.vmem [shape: f32[1,1,128], index: 4, kind: output, shape index: {2}]
  %5 = xla_tuple %s2, %s3, %s4
  %s6 = sld [smem:[#allocation0]]
  $region34: #{bottleneck_forward.4} parent=0
    _
  %s8 = ssub.s32 1, %s6
  %s9 = scalar_select 0, %s8, %s6
  // Predicated region
  $region2: #{bottleneck_forward.4} parent=0 // pred_check
    _
  $region3: #{bottleneck_forward.4} parent=0 // pred_check_branch
    %11 = sbr.rel (0) target = $region5
  $region4: #{bottleneck_forward.4} parent=0 // pred_region
    _
  $region5: #{bottleneck_forward.4} parent=0 // pred_fallthru
    _
  // Predicated region
  $region6: #{bottleneck_forward.4} parent=0 // pred_check
    _
  $region7: #{bottleneck_forward.4} parent=0 // pred_check_branch
    %13 = sbr.rel (0) target = $region9
  $region8: #{bottleneck_forward.4} parent=0 // pred_region
    _
  $region9: #{bottleneck_forward.4} parent=0 // pred_fallthru
    _
  %v15 = vld [vmem:[%s0] sm:$0xff]
  %v16 = vld [vmem:[%s0 + $0x8] sm:$0xff]
  %v17 = vld [vmem:[%s0 + $0x10] sm:$0xff]
  %v18 = vld [vmem:[%s0 + $0x18] sm:$0xff]
  %v19 = vld [vmem:[%s0 + $0x20] sm:$0xff]
  %v20 = vld [vmem:[%s0 + $0x28] sm:$0xff]
  %v21 = vld [vmem:[%s0 + $0x30] sm:$0xff]
  %v22 = vld [vmem:[%s0 + $0x38] sm:$0xff]
  %v23 = vld [vmem:[%s0 + $0x40] sm:$0xff]
  %v24 = vld [vmem:[%s0 + $0x48] sm:$0xff]
  %v25 = vld [vmem:[%s0 + $0x50] sm:$0xff]
  %v26 = vld [vmem:[%s0 + $0x58] sm:$0xff]
  %v27 = vld [vmem:[%s0 + $0x60] sm:$0xff]
  %v28 = vld [vmem:[%s0 + $0x68] sm:$0xff]
  %v29 = vld [vmem:[%s0 + $0x70] sm:$0xff]
  %v30 = vld [vmem:[%s0 + $0x78] sm:$0xff]
  %v31 = vld [vmem:[%s0 + $0x80] sm:$0xff]
  %v32 = vld [vmem:[%s0 + $0x88] sm:$0xff]
  %v33 = vld [vmem:[%s0 + $0x90] sm:$0xff]
  %v34 = vld [vmem:[%s0 + $0x98] sm:$0xff]
  %v35 = vld [vmem:[%s0 + $0xa0] sm:$0xff]
  %v36 = vld [vmem:[%s0 + $0xa8] sm:$0xff]
  %v37 = vld [vmem:[%s0 + $0xb0] sm:$0xff]
  %v38 = vld [vmem:[%s0 + $0xb8] sm:$0xff]
  %v39 = vld [vmem:[%s0 + $0xc0] sm:$0xff]
  %v40 = vld [vmem:[%s0 + $0xc8] sm:$0xff]
  %v41 = vld [vmem:[%s0 + $0xd0] sm:$0xff]
  %v42 = vld [vmem:[%s0 + $0xd8] sm:$0xff]
  %v43 = vld [vmem:[%s0 + $0xe0] sm:$0xff]
  %v44 = vld [vmem:[%s0 + $0xe8] sm:$0xff]
  %v45 = vld [vmem:[%s0 + $0xf0] sm:$0xff]
  %v46 = vld [vmem:[%s0 + $0xf8] sm:$0xff]
  %v47 = vld [vmem:[%s0 + $0x100] sm:$0xff]
  %v48 = vld [vmem:[%s0 + $0x108] sm:$0xff]
  %v49 = vld [vmem:[%s0 + $0x110] sm:$0xff]
  %v50 = vld [vmem:[%s0 + $0x118] sm:$0xff]
  %v51 = vld [vmem:[%s0 + $0x120] sm:$0xff]
  %v52 = vld [vmem:[%s0 + $0x128] sm:$0xff]
  %v53 = vld [vmem:[%s0 + $0x130] sm:$0xff]
  %v54 = vld [vmem:[%s0 + $0x138] sm:$0xff]
  %v55 = vld [vmem:[%s0 + $0x140] sm:$0xff]
  %v56 = vld [vmem:[%s0 + $0x148] sm:$0xff]
  %v57 = vld [vmem:[%s0 + $0x150] sm:$0xff]
  %v58 = vld [vmem:[%s0 + $0x158] sm:$0xff]
  %v59 = vld [vmem:[%s0 + $0x160] sm:$0xff]
  %v60 = vld [vmem:[%s0 + $0x168] sm:$0xff]
  %v61 = vld [vmem:[%s0 + $0x170] sm:$0xff]
  %v62 = vld [vmem:[%s0 + $0x178] sm:$0xff]
  %v63 = vld [vmem:[%s0 + $0x180] sm:$0xff]
  %v64 = vld [vmem:[%s0 + $0x188] sm:$0xff]
  %v65 = vld [vmem:[%s0 + $0x190] sm:$0xff]
  %v66 = vld [vmem:[%s0 + $0x198] sm:$0xff]
  %v67 = vld [vmem:[%s0 + $0x1a0] sm:$0xff]
  %v68 = vld [vmem:[%s0 + $0x1a8] sm:$0xff]
  %v69 = vld [vmem:[%s0 + $0x1b0] sm:$0xff]
  %v70 = vld [vmem:[%s0 + $0x1b8] sm:$0xff]
  %v71 = vld [vmem:[%s0 + $0x1c0] sm:$0xff]
  %v72 = vld [vmem:[%s0 + $0x1c8] sm:$0xff]
  %v73 = vld [vmem:[%s0 + $0x1d0] sm:$0xff]
  %v74 = vld [vmem:[%s0 + $0x1d8] sm:$0xff]
  %v75 = vld [vmem:[%s0 + $0x1e0] sm:$0xff]
  %v76 = vld [vmem:[%s0 + $0x1e8] sm:$0xff]
  %v77 = vld [vmem:[%s0 + $0x1f0] sm:$0xff]
  %v78 = vld [vmem:[%s0 + $0x1f8] sm:$0xff]
  %v79 = vpack.c.bf16 %v16, %v15
  %v80 = vpack.c.bf16 %v18, %v17
  %v81 = vpack.c.bf16 %v20, %v19
  %v82 = vpack.c.bf16 %v22, %v21
  %v83 = vpack.c.bf16 %v24, %v23
  %v84 = vpack.c.bf16 %v26, %v25
  %v85 = vpack.c.bf16 %v28, %v27
  %v86 = vpack.c.bf16 %v30, %v29
  %v87 = vpack.c.bf16 %v32, %v31
  %v88 = vpack.c.bf16 %v34, %v33
  %v89 = vpack.c.bf16 %v36, %v35
  %v90 = vpack.c.bf16 %v38, %v37
  %v91 = vpack.c.bf16 %v40, %v39
  %v92 = vpack.c.bf16 %v42, %v41
  %v93 = vpack.c.bf16 %v44, %v43
  %v94 = vpack.c.bf16 %v46, %v45
  %v95 = vpack.c.bf16 %v48, %v47
  %v96 = vpack.c.bf16 %v50, %v49
  %v97 = vpack.c.bf16 %v52, %v51
  %v98 = vpack.c.bf16 %v54, %v53
  %v99 = vpack.c.bf16 %v56, %v55
  %v100 = vpack.c.bf16 %v58, %v57
  %v101 = vpack.c.bf16 %v60, %v59
  %v102 = vpack.c.bf16 %v62, %v61
  %v103 = vpack.c.bf16 %v64, %v63
  %v104 = vpack.c.bf16 %v66, %v65
  %v105 = vpack.c.bf16 %v68, %v67
  %v106 = vpack.c.bf16 %v70, %v69
  %v107 = vpack.c.bf16 %v72, %v71
  %v108 = vpack.c.bf16 %v74, %v73
  %v109 = vpack.c.bf16 %v76, %v75
  %v110 = vpack.c.bf16 %v78, %v77
  %v111 = vld [vmem:[%s1] sm:$0xf]
  %v112 = vld [vmem:[%s1 + $0x4] sm:$0xf]
  %v113 = vld [vmem:[%s1 + $0x8] sm:$0xf]
  %v114 = vld [vmem:[%s1 + $0xc] sm:$0xf]
  %v115 = vld [vmem:[%s1 + $0x10] sm:$0xf]
  %v116 = vld [vmem:[%s1 + $0x14] sm:$0xf]
  %v117 = vld [vmem:[%s1 + $0x18] sm:$0xf]
  %v118 = vld [vmem:[%s1 + $0x1c] sm:$0xf]
  %v119 = vld [vmem:[%s1 + $0x20] sm:$0xf]
  %v120 = vld [vmem:[%s1 + $0x24] sm:$0xf]
  %v121 = vld [vmem:[%s1 + $0x28] sm:$0xf]
  %v122 = vld [vmem:[%s1 + $0x2c] sm:$0xf]
  %v123 = vld [vmem:[%s1 + $0x30] sm:$0xf]
  %v124 = vld [vmem:[%s1 + $0x34] sm:$0xf]
  %v125 = vld [vmem:[%s1 + $0x38] sm:$0xf]
  %v126 = vld [vmem:[%s1 + $0x3c] sm:$0xf]
  %v143 = vunpack.c.l.b16 %v111
  %v144 = vunpack.c.l.b16 %v112
  %v145 = vunpack.c.l.b16 %v113
  %v146 = vunpack.c.l.b16 %v114
  %v147 = vunpack.c.l.b16 %v115
  %v148 = vunpack.c.l.b16 %v116
  %v149 = vunpack.c.l.b16 %v117
  %v150 = vunpack.c.l.b16 %v118
  %v151 = vunpack.c.l.b16 %v119
  %v152 = vunpack.c.l.b16 %v120
  %v153 = vunpack.c.l.b16 %v121
  %v154 = vunpack.c.l.b16 %v122
  %v155 = vunpack.c.l.b16 %v123
  %v156 = vunpack.c.l.b16 %v124
  %v157 = vunpack.c.l.b16 %v125
  %v158 = vunpack.c.l.b16 %v126
  %v159 = vpack.c.b16 %v144, %v143
  %v160 = vpack.c.b16 %v146, %v145
  %v161 = vpack.c.b16 %v148, %v147
  %v162 = vpack.c.b16 %v150, %v149
  %v163 = vpack.c.b16 %v152, %v151
  %v164 = vpack.c.b16 %v154, %v153
  %v165 = vpack.c.b16 %v156, %v155
  %v166 = vpack.c.b16 %v158, %v157
  %175 = vmatprep.subr.bf16.mxu0 0
  %176 = vmatpush1.bf16.msra.mxu0 %v166
  %177 = vmatprep.subr.bf16.mxu0 0
  %178 = vmatpush1.bf16.msra.mxu0 %v165
  %179 = vmatprep.subr.bf16.mxu0 0
  %180 = vmatpush1.bf16.msra.mxu0 %v164
  %181 = vmatprep.subr.bf16.mxu0 0
  %182 = vmatpush1.bf16.msra.mxu0 %v163
  %183 = vmatprep.subr.bf16.mxu0 0
  %184 = vmatpush1.bf16.msra.mxu0 %v162
  %185 = vmatprep.subr.bf16.mxu0 0
  %186 = vmatpush1.bf16.msra.mxu0 %v161
  %187 = vmatprep.subr.bf16.mxu0 0
  %188 = vmatpush1.bf16.msra.mxu0 %v160
  %189 = vmatprep.subr.bf16.mxu0 0
  %190 = vmatpush1.bf16.msra.mxu0 %v159
  %191 = vmatprep.subr.bf16.mxu0 0
  %192 = vmatpush2.bf16.msra.mxu0 0
  %193 = vmatprep.subr.bf16.mxu0 0
  %194 = vmatpush2.bf16.msra.mxu0 0
  %195 = vmatprep.subr.bf16.mxu0 0
  %196 = vmatpush2.bf16.msra.mxu0 0
  %197 = vmatprep.subr.bf16.mxu0 0
  %198 = vmatpush2.bf16.msra.mxu0 0
  %199 = vmatprep.subr.bf16.mxu0 0
  %200 = vmatpush2.bf16.msra.mxu0 0
  %201 = vmatprep.subr.bf16.mxu0 0
  %202 = vmatpush2.bf16.msra.mxu0 0
  %203 = vmatprep.subr.bf16.mxu0 0
  %204 = vmatpush2.bf16.msra.mxu0 0
  %205 = vmatprep.subr.bf16.mxu0 0
  %206 = vmatpush2.bf16.msra.mxu0 0
  %207 = vmatprep.mubr.bf16.mxu0 0
  %208 = vmatmul.mubr.bf16.gmra.mxu0 %v79
  %v209 = vpop.f32.mrf.mxu0
  %v210 = vadd.f32 0.0, %v209
  %v211 = vpop.f32.mrf.mxu0
  %v212 = vpop.f32.mrf.mxu0
  %v213 = vadd.f32 0.0, %v212
  %v214 = vpop.f32.mrf.mxu0
  %215 = vmatprep.mubr.bf16.mxu0 0
  %216 = vmatmul.mubr.bf16.gmra.mxu0 %v80
  %v217 = vpop.f32.mrf.mxu0
  %v218 = vadd.f32 0.0, %v217
  %v219 = vpop.f32.mrf.mxu0
  %v220 = vpop.f32.mrf.mxu0
  %v221 = vadd.f32 0.0, %v220
  %v222 = vpop.f32.mrf.mxu0
  %223 = vmatprep.mubr.bf16.mxu0 0
  %224 = vmatmul.mubr.bf16.gmra.mxu0 %v81
  %v225 = vpop.f32.mrf.mxu0
  %v226 = vadd.f32 0.0, %v225
  %v227 = vpop.f32.mrf.mxu0
  %v228 = vpop.f32.mrf.mxu0
  %v229 = vadd.f32 0.0, %v228
  %v230 = vpop.f32.mrf.mxu0
  %231 = vmatprep.mubr.bf16.mxu0 0
  %232 = vmatmul.mubr.bf16.gmra.mxu0 %v82
  %v233 = vpop.f32.mrf.mxu0
  %v234 = vadd.f32 0.0, %v233
  %v235 = vpop.f32.mrf.mxu0
  %v236 = vpop.f32.mrf.mxu0
  %v237 = vadd.f32 0.0, %v236
  %v238 = vpop.f32.mrf.mxu0
  %239 = vmatprep.mubr.bf16.mxu0 0
  %240 = vmatmul.mubr.bf16.gmra.mxu0 %v83
  %v241 = vpop.f32.mrf.mxu0
  %v242 = vadd.f32 0.0, %v241
  %v243 = vpop.f32.mrf.mxu0
  %v244 = vpop.f32.mrf.mxu0
  %v245 = vadd.f32 0.0, %v244
  %v246 = vpop.f32.mrf.mxu0
  %247 = vmatprep.mubr.bf16.mxu0 0
  %248 = vmatmul.mubr.bf16.gmra.mxu0 %v84
  %v249 = vpop.f32.mrf.mxu0
  %v250 = vadd.f32 0.0, %v249
  %v251 = vpop.f32.mrf.mxu0
  %v252 = vpop.f32.mrf.mxu0
  %v253 = vadd.f32 0.0, %v252
  %v254 = vpop.f32.mrf.mxu0
  %255 = vmatprep.mubr.bf16.mxu0 0
  %256 = vmatmul.mubr.bf16.gmra.mxu0 %v85
  %v257 = vpop.f32.mrf.mxu0
  %v258 = vadd.f32 0.0, %v257
  %v259 = vpop.f32.mrf.mxu0
  %v260 = vpop.f32.mrf.mxu0
  %v261 = vadd.f32 0.0, %v260
  %v262 = vpop.f32.mrf.mxu0
  %263 = vmatprep.mubr.bf16.mxu0 0
  %264 = vmatmul.mubr.bf16.gmra.mxu0 %v86
  %v265 = vpop.f32.mrf.mxu0
  %v266 = vadd.f32 0.0, %v265
  %v267 = vpop.f32.mrf.mxu0
  %v268 = vpop.f32.mrf.mxu0
  %v269 = vadd.f32 0.0, %v268
  %v270 = vpop.f32.mrf.mxu0
  %271 = vmatprep.mubr.bf16.mxu0 0
  %272 = vmatmul.mubr.bf16.gmra.mxu0 %v87
  %v273 = vpop.f32.mrf.mxu0
  %v274 = vadd.f32 0.0, %v273
  %v275 = vpop.f32.mrf.mxu0
  %v276 = vpop.f32.mrf.mxu0
  %v277 = vadd.f32 0.0, %v276
  %v278 = vpop.f32.mrf.mxu0
  %279 = vmatprep.mubr.bf16.mxu0 0
  %280 = vmatmul.mubr.bf16.gmra.mxu0 %v88
  %v281 = vpop.f32.mrf.mxu0
  %v282 = vadd.f32 0.0, %v281
  %v283 = vpop.f32.mrf.mxu0
  %v284 = vpop.f32.mrf.mxu0
  %v285 = vadd.f32 0.0, %v284
  %v286 = vpop.f32.mrf.mxu0
  %287 = vmatprep.mubr.bf16.mxu0 0
  %288 = vmatmul.mubr.bf16.gmra.mxu0 %v89
  %v289 = vpop.f32.mrf.mxu0
  %v290 = vadd.f32 0.0, %v289
  %v291 = vpop.f32.mrf.mxu0
  %v292 = vpop.f32.mrf.mxu0
  %v293 = vadd.f32 0.0, %v292
  %v294 = vpop.f32.mrf.mxu0
  %295 = vmatprep.mubr.bf16.mxu0 0
  %296 = vmatmul.mubr.bf16.gmra.mxu0 %v90
  %v297 = vpop.f32.mrf.mxu0
  %v298 = vadd.f32 0.0, %v297
  %v299 = vpop.f32.mrf.mxu0
  %v300 = vpop.f32.mrf.mxu0
  %v301 = vadd.f32 0.0, %v300
  %v302 = vpop.f32.mrf.mxu0
  %303 = vmatprep.mubr.bf16.mxu0 0
  %304 = vmatmul.mubr.bf16.gmra.mxu0 %v91
  %v305 = vpop.f32.mrf.mxu0
  %v306 = vadd.f32 0.0, %v305
  %v307 = vpop.f32.mrf.mxu0
  %v308 = vpop.f32.mrf.mxu0
  %v309 = vadd.f32 0.0, %v308
  %v310 = vpop.f32.mrf.mxu0
  %311 = vmatprep.mubr.bf16.mxu0 0
  %312 = vmatmul.mubr.bf16.gmra.mxu0 %v92
  %v313 = vpop.f32.mrf.mxu0
  %v314 = vadd.f32 0.0, %v313
  %v315 = vpop.f32.mrf.mxu0
  %v316 = vpop.f32.mrf.mxu0
  %v317 = vadd.f32 0.0, %v316
  %v318 = vpop.f32.mrf.mxu0
  %319 = vmatprep.mubr.bf16.mxu0 0
  %320 = vmatmul.mubr.bf16.gmra.mxu0 %v93
  %v321 = vpop.f32.mrf.mxu0
  %v322 = vadd.f32 0.0, %v321
  %v323 = vpop.f32.mrf.mxu0
  %v324 = vpop.f32.mrf.mxu0
  %v325 = vadd.f32 0.0, %v324
  %v326 = vpop.f32.mrf.mxu0
  %327 = vmatprep.mubr.bf16.mxu0 0
  %328 = vmatmul.mubr.bf16.gmra.mxu0 %v94
  %v329 = vpop.f32.mrf.mxu0
  %v330 = vadd.f32 0.0, %v329
  %v331 = vpop.f32.mrf.mxu0
  %v332 = vpop.f32.mrf.mxu0
  %v333 = vadd.f32 0.0, %v332
  %v334 = vpop.f32.mrf.mxu0
  %335 = vmatprep.mubr.bf16.mxu0 0
  %336 = vmatmul.mubr.bf16.gmra.mxu0 %v95
  %v337 = vpop.f32.mrf.mxu0
  %v338 = vadd.f32 0.0, %v337
  %v339 = vpop.f32.mrf.mxu0
  %v340 = vpop.f32.mrf.mxu0
  %v341 = vadd.f32 0.0, %v340
  %v342 = vpop.f32.mrf.mxu0
  %343 = vmatprep.mubr.bf16.mxu0 0
  %344 = vmatmul.mubr.bf16.gmra.mxu0 %v96
  %v345 = vpop.f32.mrf.mxu0
  %v346 = vadd.f32 0.0, %v345
  %v347 = vpop.f32.mrf.mxu0
  %v348 = vpop.f32.mrf.mxu0
  %v349 = vadd.f32 0.0, %v348
  %v350 = vpop.f32.mrf.mxu0
  %351 = vmatprep.mubr.bf16.mxu0 0
  %352 = vmatmul.mubr.bf16.gmra.mxu0 %v97
  %v353 = vpop.f32.mrf.mxu0
  %v354 = vadd.f32 0.0, %v353
  %v355 = vpop.f32.mrf.mxu0
  %v356 = vpop.f32.mrf.mxu0
  %v357 = vadd.f32 0.0, %v356
  %v358 = vpop.f32.mrf.mxu0
  %359 = vmatprep.mubr.bf16.mxu0 0
  %360 = vmatmul.mubr.bf16.gmra.mxu0 %v98
  %v361 = vpop.f32.mrf.mxu0
  %v362 = vadd.f32 0.0, %v361
  %v363 = vpop.f32.mrf.mxu0
  %v364 = vpop.f32.mrf.mxu0
  %v365 = vadd.f32 0.0, %v364
  %v366 = vpop.f32.mrf.mxu0
  %367 = vmatprep.mubr.bf16.mxu0 0
  %368 = vmatmul.mubr.bf16.gmra.mxu0 %v99
  %v369 = vpop.f32.mrf.mxu0
  %v370 = vadd.f32 0.0, %v369
  %v371 = vpop.f32.mrf.mxu0
  %v372 = vpop.f32.mrf.mxu0
  %v373 = vadd.f32 0.0, %v372
  %v374 = vpop.f32.mrf.mxu0
  %375 = vmatprep.mubr.bf16.mxu0 0
  %376 = vmatmul.mubr.bf16.gmra.mxu0 %v100
  %v377 = vpop.f32.mrf.mxu0
  %v378 = vadd.f32 0.0, %v377
  %v379 = vpop.f32.mrf.mxu0
  %v380 = vpop.f32.mrf.mxu0
  %v381 = vadd.f32 0.0, %v380
  %v382 = vpop.f32.mrf.mxu0
  %383 = vmatprep.mubr.bf16.mxu0 0
  %384 = vmatmul.mubr.bf16.gmra.mxu0 %v101
  %v385 = vpop.f32.mrf.mxu0
  %v386 = vadd.f32 0.0, %v385
  %v387 = vpop.f32.mrf.mxu0
  %v388 = vpop.f32.mrf.mxu0
  %v389 = vadd.f32 0.0, %v388
  %v390 = vpop.f32.mrf.mxu0
  %391 = vmatprep.mubr.bf16.mxu0 0
  %392 = vmatmul.mubr.bf16.gmra.mxu0 %v102
  %v393 = vpop.f32.mrf.mxu0
  %v394 = vadd.f32 0.0, %v393
  %v395 = vpop.f32.mrf.mxu0
  %v396 = vpop.f32.mrf.mxu0
  %v397 = vadd.f32 0.0, %v396
  %v398 = vpop.f32.mrf.mxu0
  %399 = vmatprep.mubr.bf16.mxu0 0
  %400 = vmatmul.mubr.bf16.gmra.mxu0 %v103
  %v401 = vpop.f32.mrf.mxu0
  %v402 = vadd.f32 0.0, %v401
  %v403 = vpop.f32.mrf.mxu0
  %v404 = vpop.f32.mrf.mxu0
  %v405 = vadd.f32 0.0, %v404
  %v406 = vpop.f32.mrf.mxu0
  %407 = vmatprep.mubr.bf16.mxu0 0
  %408 = vmatmul.mubr.bf16.gmra.mxu0 %v104
  %v409 = vpop.f32.mrf.mxu0
  %v410 = vadd.f32 0.0, %v409
  %v411 = vpop.f32.mrf.mxu0
  %v412 = vpop.f32.mrf.mxu0
  %v413 = vadd.f32 0.0, %v412
  %v414 = vpop.f32.mrf.mxu0
  %415 = vmatprep.mubr.bf16.mxu0 0
  %416 = vmatmul.mubr.bf16.gmra.mxu0 %v105
  %v417 = vpop.f32.mrf.mxu0
  %v418 = vadd.f32 0.0, %v417
  %v419 = vpop.f32.mrf.mxu0
  %v420 = vpop.f32.mrf.mxu0
  %v421 = vadd.f32 0.0, %v420
  %v422 = vpop.f32.mrf.mxu0
  %423 = vmatprep.mubr.bf16.mxu0 0
  %424 = vmatmul.mubr.bf16.gmra.mxu0 %v106
  %v425 = vpop.f32.mrf.mxu0
  %v426 = vadd.f32 0.0, %v425
  %v427 = vpop.f32.mrf.mxu0
  %v428 = vpop.f32.mrf.mxu0
  %v429 = vadd.f32 0.0, %v428
  %v430 = vpop.f32.mrf.mxu0
  %431 = vmatprep.mubr.bf16.mxu0 0
  %432 = vmatmul.mubr.bf16.gmra.mxu0 %v107
  %v433 = vpop.f32.mrf.mxu0
  %v434 = vadd.f32 0.0, %v433
  %v435 = vpop.f32.mrf.mxu0
  %v436 = vpop.f32.mrf.mxu0
  %v437 = vadd.f32 0.0, %v436
  %v438 = vpop.f32.mrf.mxu0
  %439 = vmatprep.mubr.bf16.mxu0 0
  %440 = vmatmul.mubr.bf16.gmra.mxu0 %v108
  %v441 = vpop.f32.mrf.mxu0
  %v442 = vadd.f32 0.0, %v441
  %v443 = vpop.f32.mrf.mxu0
  %v444 = vpop.f32.mrf.mxu0
  %v445 = vadd.f32 0.0, %v444
  %v446 = vpop.f32.mrf.mxu0
  %447 = vmatprep.mubr.bf16.mxu0 0
  %448 = vmatmul.mubr.bf16.gmra.mxu0 %v109
  %v449 = vpop.f32.mrf.mxu0
  %v450 = vadd.f32 0.0, %v449
  %v451 = vpop.f32.mrf.mxu0
  %v452 = vpop.f32.mrf.mxu0
  %v453 = vadd.f32 0.0, %v452
  %v454 = vpop.f32.mrf.mxu0
  %455 = vmatprep.mubr.bf16.mxu0 0
  %456 = vmatmul.mubr.bf16.gmra.mxu0 %v110
  %v457 = vpop.f32.mrf.mxu0
  %v458 = vadd.f32 0.0, %v457
  %v459 = vpop.f32.mrf.mxu0
  %v460 = vpop.f32.mrf.mxu0
  %v461 = vadd.f32 0.0, %v460
  %v462 = vpop.f32.mrf.mxu0
  %463 = vdwg.mxu0
  %v464 = vpack.c.bf16 %v213, %v210
  %v465 = vpack.c.bf16 %v221, %v218
  %v466 = vpack.c.bf16 %v229, %v226
  %v467 = vpack.c.bf16 %v237, %v234
  %v468 = vpack.c.bf16 %v245, %v242
  %v469 = vpack.c.bf16 %v253, %v250
  %v470 = vpack.c.bf16 %v261, %v258
  %v471 = vpack.c.bf16 %v269, %v266
  %v472 = vpack.c.bf16 %v277, %v274
  %v473 = vpack.c.bf16 %v285, %v282
  %v474 = vpack.c.bf16 %v293, %v290
  %v475 = vpack.c.bf16 %v301, %v298
  %v476 = vpack.c.bf16 %v309, %v306
  %v477 = vpack.c.bf16 %v317, %v314
  %v478 = vpack.c.bf16 %v325, %v322
  %v479 = vpack.c.bf16 %v333, %v330
  %v480 = vpack.c.bf16 %v341, %v338
  %v481 = vpack.c.bf16 %v349, %v346
  %v482 = vpack.c.bf16 %v357, %v354
  %v483 = vpack.c.bf16 %v365, %v362
  %v484 = vpack.c.bf16 %v373, %v370
  %v485 = vpack.c.bf16 %v381, %v378
  %v486 = vpack.c.bf16 %v389, %v386
  %v487 = vpack.c.bf16 %v397, %v394
  %v488 = vpack.c.bf16 %v405, %v402
  %v489 = vpack.c.bf16 %v413, %v410
  %v490 = vpack.c.bf16 %v421, %v418
  %v491 = vpack.c.bf16 %v429, %v426
  %v492 = vpack.c.bf16 %v437, %v434
  %v493 = vpack.c.bf16 %v445, %v442
  %v494 = vpack.c.bf16 %v453, %v450
  %v495 = vpack.c.bf16 %v461, %v458
  %v528 = vunpack.c.l.b16 %v464
  %v529 = vunpack.c.h.b16 %v464
  %v530 = vunpack.c.l.b16 %v465
  %v531 = vunpack.c.h.b16 %v465
  %v532 = vunpack.c.l.b16 %v466
  %v533 = vunpack.c.h.b16 %v466
  %v534 = vunpack.c.l.b16 %v467
  %v535 = vunpack.c.h.b16 %v467
  %v536 = vunpack.c.l.b16 %v468
  %v537 = vunpack.c.h.b16 %v468
  %v538 = vunpack.c.l.b16 %v469
  %v539 = vunpack.c.h.b16 %v469
  %v540 = vunpack.c.l.b16 %v470
  %v541 = vunpack.c.h.b16 %v470
  %v542 = vunpack.c.l.b16 %v471
  %v543 = vunpack.c.h.b16 %v471
  %v544 = vunpack.c.l.b16 %v472
  %v545 = vunpack.c.h.b16 %v472
  %v546 = vunpack.c.l.b16 %v473
  %v547 = vunpack.c.h.b16 %v473
  %v548 = vunpack.c.l.b16 %v474
  %v549 = vunpack.c.h.b16 %v474
  %v550 = vunpack.c.l.b16 %v475
  %v551 = vunpack.c.h.b16 %v475
  %v552 = vunpack.c.l.b16 %v476
  %v553 = vunpack.c.h.b16 %v476
  %v554 = vunpack.c.l.b16 %v477
  %v555 = vunpack.c.h.b16 %v477
  %v556 = vunpack.c.l.b16 %v478
  %v557 = vunpack.c.h.b16 %v478
  %v558 = vunpack.c.l.b16 %v479
  %v559 = vunpack.c.h.b16 %v479
  %v560 = vunpack.c.l.b16 %v480
  %v561 = vunpack.c.h.b16 %v480
  %v562 = vunpack.c.l.b16 %v481
  %v563 = vunpack.c.h.b16 %v481
  %v564 = vunpack.c.l.b16 %v482
  %v565 = vunpack.c.h.b16 %v482
  %v566 = vunpack.c.l.b16 %v483
  %v567 = vunpack.c.h.b16 %v483
  %v568 = vunpack.c.l.b16 %v484
  %v569 = vunpack.c.h.b16 %v484
  %v570 = vunpack.c.l.b16 %v485
  %v571 = vunpack.c.h.b16 %v485
  %v572 = vunpack.c.l.b16 %v486
  %v573 = vunpack.c.h.b16 %v486
  %v574 = vunpack.c.l.b16 %v487
  %v575 = vunpack.c.h.b16 %v487
  %v576 = vunpack.c.l.b16 %v488
  %v577 = vunpack.c.h.b16 %v488
  %v578 = vunpack.c.l.b16 %v489
  %v579 = vunpack.c.h.b16 %v489
  %v580 = vunpack.c.l.b16 %v490
  %v581 = vunpack.c.h.b16 %v490
  %v582 = vunpack.c.l.b16 %v491
  %v583 = vunpack.c.h.b16 %v491
  %v584 = vunpack.c.l.b16 %v492
  %v585 = vunpack.c.h.b16 %v492
  %v586 = vunpack.c.l.b16 %v493
  %v587 = vunpack.c.h.b16 %v493
  %v588 = vunpack.c.l.b16 %v494
  %v589 = vunpack.c.h.b16 %v494
  %v590 = vunpack.c.l.b16 %v495
  %v591 = vunpack.c.h.b16 %v495
  %v592 = vpack.c.b16 %v528, %v528
  %v593 = vpack.c.b16 %v529, %v529
  %v594 = vpack.c.b16 %v530, %v530
  %v595 = vpack.c.b16 %v531, %v531
  %v596 = vpack.c.b16 %v532, %v532
  %v597 = vpack.c.b16 %v533, %v533
  %v598 = vpack.c.b16 %v534, %v534
  %v599 = vpack.c.b16 %v535, %v535
  %v600 = vpack.c.b16 %v536, %v536
  %v601 = vpack.c.b16 %v537, %v537
  %v602 = vpack.c.b16 %v538, %v538
  %v603 = vpack.c.b16 %v539, %v539
  %v604 = vpack.c.b16 %v540, %v540
  %v605 = vpack.c.b16 %v541, %v541
  %v606 = vpack.c.b16 %v542, %v542
  %v607 = vpack.c.b16 %v543, %v543
  %v608 = vpack.c.b16 %v544, %v544
  %v609 = vpack.c.b16 %v545, %v545
  %v610 = vpack.c.b16 %v546, %v546
  %v611 = vpack.c.b16 %v547, %v547
  %v612 = vpack.c.b16 %v548, %v548
  %v613 = vpack.c.b16 %v549, %v549
  %v614 = vpack.c.b16 %v550, %v550
  %v615 = vpack.c.b16 %v551, %v551
  %v616 = vpack.c.b16 %v552, %v552
  %v617 = vpack.c.b16 %v553, %v553
  %v618 = vpack.c.b16 %v554, %v554
  %v619 = vpack.c.b16 %v555, %v555
  %v620 = vpack.c.b16 %v556, %v556
  %v621 = vpack.c.b16 %v557, %v557
  %v622 = vpack.c.b16 %v558, %v558
  %v623 = vpack.c.b16 %v559, %v559
  %v624 = vpack.c.b16 %v560, %v560
  %v625 = vpack.c.b16 %v561, %v561
  %v626 = vpack.c.b16 %v562, %v562
  %v627 = vpack.c.b16 %v563, %v563
  %v628 = vpack.c.b16 %v564, %v564
  %v629 = vpack.c.b16 %v565, %v565
  %v630 = vpack.c.b16 %v566, %v566
  %v631 = vpack.c.b16 %v567, %v567
  %v632 = vpack.c.b16 %v568, %v568
  %v633 = vpack.c.b16 %v569, %v569
  %v634 = vpack.c.b16 %v570, %v570
  %v635 = vpack.c.b16 %v571, %v571
  %v636 = vpack.c.b16 %v572, %v572
  %v637 = vpack.c.b16 %v573, %v573
  %v638 = vpack.c.b16 %v574, %v574
  %v639 = vpack.c.b16 %v575, %v575
  %v640 = vpack.c.b16 %v576, %v576
  %v641 = vpack.c.b16 %v577, %v577
  %v642 = vpack.c.b16 %v578, %v578
  %v643 = vpack.c.b16 %v579, %v579
  %v644 = vpack.c.b16 %v580, %v580
  %v645 = vpack.c.b16 %v581, %v581
  %v646 = vpack.c.b16 %v582, %v582
  %v647 = vpack.c.b16 %v583, %v583
  %v648 = vpack.c.b16 %v584, %v584
  %v649 = vpack.c.b16 %v585, %v585
  %v650 = vpack.c.b16 %v586, %v586
  %v651 = vpack.c.b16 %v587, %v587
  %v652 = vpack.c.b16 %v588, %v588
  %v653 = vpack.c.b16 %v589, %v589
  %v654 = vpack.c.b16 %v590, %v590
  %v655 = vpack.c.b16 %v591, %v591
  %720 = vst [vmem:[%s2] sm:$0xf] %v592
  %721 = vst [vmem:[%s2 + $0x4] sm:$0xf] %v593
  %722 = vst [vmem:[%s2 + $0x8] sm:$0xf] %v594
  %723 = vst [vmem:[%s2 + $0xc] sm:$0xf] %v595
  %724 = vst [vmem:[%s2 + $0x10] sm:$0xf] %v596
  %725 = vst [vmem:[%s2 + $0x14] sm:$0xf] %v597
  %726 = vst [vmem:[%s2 + $0x18] sm:$0xf] %v598
  %727 = vst [vmem:[%s2 + $0x1c] sm:$0xf] %v599
  %728 = vst [vmem:[%s2 + $0x20] sm:$0xf] %v600
  %729 = vst [vmem:[%s2 + $0x24] sm:$0xf] %v601
  %730 = vst [vmem:[%s2 + $0x28] sm:$0xf] %v602
  %731 = vst [vmem:[%s2 + $0x2c] sm:$0xf] %v603
  %732 = vst [vmem:[%s2 + $0x30] sm:$0xf] %v604
  %733 = vst [vmem:[%s2 + $0x34] sm:$0xf] %v605
  %734 = vst [vmem:[%s2 + $0x38] sm:$0xf] %v606
  %735 = vst [vmem:[%s2 + $0x3c] sm:$0xf] %v607
  %736 = vst [vmem:[%s2 + $0x40] sm:$0xf] %v608
  %737 = vst [vmem:[%s2 + $0x44] sm:$0xf] %v609
  %738 = vst [vmem:[%s2 + $0x48] sm:$0xf] %v610
  %739 = vst [vmem:[%s2 + $0x4c] sm:$0xf] %v611
  %740 = vst [vmem:[%s2 + $0x50] sm:$0xf] %v612
  %741 = vst [vmem:[%s2 + $0x54] sm:$0xf] %v613
  %742 = vst [vmem:[%s2 + $0x58] sm:$0xf] %v614
  %743 = vst [vmem:[%s2 + $0x5c] sm:$0xf] %v615
  %744 = vst [vmem:[%s2 + $0x60] sm:$0xf] %v616
  %745 = vst [vmem:[%s2 + $0x64] sm:$0xf] %v617
  %746 = vst [vmem:[%s2 + $0x68] sm:$0xf] %v618
  %747 = vst [vmem:[%s2 + $0x6c] sm:$0xf] %v619
  %748 = vst [vmem:[%s2 + $0x70] sm:$0xf] %v620
  %749 = vst [vmem:[%s2 + $0x74] sm:$0xf] %v621
  %750 = vst [vmem:[%s2 + $0x78] sm:$0xf] %v622
  %751 = vst [vmem:[%s2 + $0x7c] sm:$0xf] %v623
  %752 = vst [vmem:[%s2 + $0x80] sm:$0xf] %v624
  %753 = vst [vmem:[%s2 + $0x84] sm:$0xf] %v625
  %754 = vst [vmem:[%s2 + $0x88] sm:$0xf] %v626
  %755 = vst [vmem:[%s2 + $0x8c] sm:$0xf] %v627
  %756 = vst [vmem:[%s2 + $0x90] sm:$0xf] %v628
  %757 = vst [vmem:[%s2 + $0x94] sm:$0xf] %v629
  %758 = vst [vmem:[%s2 + $0x98] sm:$0xf] %v630
  %759 = vst [vmem:[%s2 + $0x9c] sm:$0xf] %v631
  %760 = vst [vmem:[%s2 + $0xa0] sm:$0xf] %v632
  %761 = vst [vmem:[%s2 + $0xa4] sm:$0xf] %v633
  %762 = vst [vmem:[%s2 + $0xa8] sm:$0xf] %v634
  %763 = vst [vmem:[%s2 + $0xac] sm:$0xf] %v635
  %764 = vst [vmem:[%s2 + $0xb0] sm:$0xf] %v636
  %765 = vst [vmem:[%s2 + $0xb4] sm:$0xf] %v637
  %766 = vst [vmem:[%s2 + $0xb8] sm:$0xf] %v638
  %767 = vst [vmem:[%s2 + $0xbc] sm:$0xf] %v639
  %768 = vst [vmem:[%s2 + $0xc0] sm:$0xf] %v640
  %769 = vst [vmem:[%s2 + $0xc4] sm:$0xf] %v641
  %770 = vst [vmem:[%s2 + $0xc8] sm:$0xf] %v642
  %771 = vst [vmem:[%s2 + $0xcc] sm:$0xf] %v643
  %772 = vst [vmem:[%s2 + $0xd0] sm:$0xf] %v644
  %773 = vst [vmem:[%s2 + $0xd4] sm:$0xf] %v645
  %774 = vst [vmem:[%s2 + $0xd8] sm:$0xf] %v646
  %775 = vst [vmem:[%s2 + $0xdc] sm:$0xf] %v647
  %776 = vst [vmem:[%s2 + $0xe0] sm:$0xf] %v648
  %777 = vst [vmem:[%s2 + $0xe4] sm:$0xf] %v649
  %778 = vst [vmem:[%s2 + $0xe8] sm:$0xf] %v650
  %779 = vst [vmem:[%s2 + $0xec] sm:$0xf] %v651
  %780 = vst [vmem:[%s2 + $0xf0] sm:$0xf] %v652
  %781 = vst [vmem:[%s2 + $0xf4] sm:$0xf] %v653
  %782 = vst [vmem:[%s2 + $0xf8] sm:$0xf] %v654
  %783 = vst [vmem:[%s2 + $0xfc] sm:$0xf] %v655
  %v784 = vadd.f32 %v210, %v213
  %v785 = vadd.f32 %v784, %v218
  %v786 = vadd.f32 %v785, %v221
  %v787 = vadd.f32 %v786, %v226
  %v788 = vadd.f32 %v787, %v229
  %v789 = vadd.f32 %v788, %v234
  %v790 = vadd.f32 %v789, %v237
  %v791 = vadd.f32 %v790, %v242
  %v792 = vadd.f32 %v791, %v245
  %v793 = vadd.f32 %v792, %v250
  %v794 = vadd.f32 %v793, %v253
  %v795 = vadd.f32 %v794, %v258
  %v796 = vadd.f32 %v795, %v261
  %v797 = vadd.f32 %v796, %v266
  %v798 = vadd.f32 %v797, %v269
  %v799 = vadd.f32 %v798, %v274
  %v800 = vadd.f32 %v799, %v277
  %v801 = vadd.f32 %v800, %v282
  %v802 = vadd.f32 %v801, %v285
  %v803 = vadd.f32 %v802, %v290
  %v804 = vadd.f32 %v803, %v293
  %v805 = vadd.f32 %v804, %v298
  %v806 = vadd.f32 %v805, %v301
  %v807 = vadd.f32 %v806, %v306
  %v808 = vadd.f32 %v807, %v309
  %v809 = vadd.f32 %v808, %v314
  %v810 = vadd.f32 %v809, %v317
  %v811 = vadd.f32 %v810, %v322
  %v812 = vadd.f32 %v811, %v325
  %v813 = vadd.f32 %v812, %v330
  %v814 = vadd.f32 %v813, %v333
  %v815 = vadd.f32 %v814, %v338
  %v816 = vadd.f32 %v815, %v341
  %v817 = vadd.f32 %v816, %v346
  %v818 = vadd.f32 %v817, %v349
  %v819 = vadd.f32 %v818, %v354
  %v820 = vadd.f32 %v819, %v357
  %v821 = vadd.f32 %v820, %v362
  %v822 = vadd.f32 %v821, %v365
  %v823 = vadd.f32 %v822, %v370
  %v824 = vadd.f32 %v823, %v373
  %v825 = vadd.f32 %v824, %v378
  %v826 = vadd.f32 %v825, %v381
  %v827 = vadd.f32 %v826, %v386
  %v828 = vadd.f32 %v827, %v389
  %v829 = vadd.f32 %v828, %v394
  %v830 = vadd.f32 %v829, %v397
  %v831 = vadd.f32 %v830, %v402
  %v832 = vadd.f32 %v831, %v405
  %v833 = vadd.f32 %v832, %v410
  %v834 = vadd.f32 %v833, %v413
  %v835 = vadd.f32 %v834, %v418
  %v836 = vadd.f32 %v835, %v421
  %v837 = vadd.f32 %v836, %v426
  %v838 = vadd.f32 %v837, %v429
  %v839 = vadd.f32 %v838, %v434
  %v840 = vadd.f32 %v839, %v437
  %v841 = vadd.f32 %v840, %v442
  %v842 = vadd.f32 %v841, %v445
  %v843 = vadd.f32 %v842, %v450
  %v844 = vadd.f32 %v843, %v453
  %v845 = vadd.f32 %v844, %v458
  %v846 = vadd.f32 %v845, %v461
  %v847 = vrot.slane %v846, 4
  %v848 = vadd.f32 %v846, %v847
  %v849 = vrot.slane %v848, 2
  %v850 = vadd.f32 %v848, %v849
  %v851 = vrot.slane %v850, 1
  %v852 = vadd.f32 %v850, %v851
  %853 = vst [vmem:[%s3] sm:$0x1] %v852
  %v854 = vmul.f32 %v210, %v210
  %v855 = vmul.f32 %v213, %v213
  %v856 = vmul.f32 %v218, %v218
  %v857 = vmul.f32 %v221, %v221
  %v858 = vmul.f32 %v226, %v226
  %v859 = vmul.f32 %v229, %v229
  %v860 = vmul.f32 %v234, %v234
  %v861 = vmul.f32 %v237, %v237
  %v862 = vmul.f32 %v242, %v242
  %v863 = vmul.f32 %v245, %v245
  %v864 = vmul.f32 %v250, %v250
  %v865 = vmul.f32 %v253, %v253
  %v866 = vmul.f32 %v258, %v258
  %v867 = vmul.f32 %v261, %v261
  %v868 = vmul.f32 %v266, %v266
  %v869 = vmul.f32 %v269, %v269
  %v870 = vmul.f32 %v274, %v274
  %v871 = vmul.f32 %v277, %v277
  %v872 = vmul.f32 %v282, %v282
  %v873 = vmul.f32 %v285, %v285
  %v874 = vmul.f32 %v290, %v290
  %v875 = vmul.f32 %v293, %v293
  %v876 = vmul.f32 %v298, %v298
  %v877 = vmul.f32 %v301, %v301
  %v878 = vmul.f32 %v306, %v306
  %v879 = vmul.f32 %v309, %v309
  %v880 = vmul.f32 %v314, %v314
  %v881 = vmul.f32 %v317, %v317
  %v882 = vmul.f32 %v322, %v322
  %v883 = vmul.f32 %v325, %v325
  %v884 = vmul.f32 %v330, %v330
  %v885 = vmul.f32 %v333, %v333
  %v886 = vmul.f32 %v338, %v338
  %v887 = vmul.f32 %v341, %v341
  %v888 = vmul.f32 %v346, %v346
  %v889 = vmul.f32 %v349, %v349
  %v890 = vmul.f32 %v354, %v354
  %v891 = vmul.f32 %v357, %v357
  %v892 = vmul.f32 %v362, %v362
  %v893 = vmul.f32 %v365, %v365
  %v894 = vmul.f32 %v370, %v370
  %v895 = vmul.f32 %v373, %v373
  %v896 = vmul.f32 %v378, %v378
  %v897 = vmul.f32 %v381, %v381
  %v898 = vmul.f32 %v386, %v386
  %v899 = vmul.f32 %v389, %v389
  %v900 = vmul.f32 %v394, %v394
  %v901 = vmul.f32 %v397, %v397
  %v902 = vmul.f32 %v402, %v402
  %v903 = vmul.f32 %v405, %v405
  %v904 = vmul.f32 %v410, %v410
  %v905 = vmul.f32 %v413, %v413
  %v906 = vmul.f32 %v418, %v418
  %v907 = vmul.f32 %v421, %v421
  %v908 = vmul.f32 %v426, %v426
  %v909 = vmul.f32 %v429, %v429
  %v910 = vmul.f32 %v434, %v434
  %v911 = vmul.f32 %v437, %v437
  %v912 = vmul.f32 %v442, %v442
  %v913 = vmul.f32 %v445, %v445
  %v914 = vmul.f32 %v450, %v450
  %v915 = vmul.f32 %v453, %v453
  %v916 = vmul.f32 %v458, %v458
  %v917 = vmul.f32 %v461, %v461
  %v918 = vadd.f32 %v854, %v855
  %v919 = vadd.f32 %v918, %v856
  %v920 = vadd.f32 %v919, %v857
  %v921 = vadd.f32 %v920, %v858
  %v922 = vadd.f32 %v921, %v859
  %v923 = vadd.f32 %v922, %v860
  %v924 = vadd.f32 %v923, %v861
  %v925 = vadd.f32 %v924, %v862
  %v926 = vadd.f32 %v925, %v863
  %v927 = vadd.f32 %v926, %v864
  %v928 = vadd.f32 %v927, %v865
  %v929 = vadd.f32 %v928, %v866
  %v930 = vadd.f32 %v929, %v867
  %v931 = vadd.f32 %v930, %v868
  %v932 = vadd.f32 %v931, %v869
  %v933 = vadd.f32 %v932, %v870
  %v934 = vadd.f32 %v933, %v871
  %v935 = vadd.f32 %v934, %v872
  %v936 = vadd.f32 %v935, %v873
  %v937 = vadd.f32 %v936, %v874
  %v938 = vadd.f32 %v937, %v875
  %v939 = vadd.f32 %v938, %v876
  %v940 = vadd.f32 %v939, %v877
  %v941 = vadd.f32 %v940, %v878
  %v942 = vadd.f32 %v941, %v879
  %v943 = vadd.f32 %v942, %v880
  %v944 = vadd.f32 %v943, %v881
  %v945 = vadd.f32 %v944, %v882
  %v946 = vadd.f32 %v945, %v883
  %v947 = vadd.f32 %v946, %v884
  %v948 = vadd.f32 %v947, %v885
  %v949 = vadd.f32 %v948, %v886
  %v950 = vadd.f32 %v949, %v887
  %v951 = vadd.f32 %v950, %v888
  %v952 = vadd.f32 %v951, %v889
  %v953 = vadd.f32 %v952, %v890
  %v954 = vadd.f32 %v953, %v891
  %v955 = vadd.f32 %v954, %v892
  %v956 = vadd.f32 %v955, %v893
  %v957 = vadd.f32 %v956, %v894
  %v958 = vadd.f32 %v957, %v895
  %v959 = vadd.f32 %v958, %v896
  %v960 = vadd.f32 %v959, %v897
  %v961 = vadd.f32 %v960, %v898
  %v962 = vadd.f32 %v961, %v899
  %v963 = vadd.f32 %v962, %v900
  %v964 = vadd.f32 %v963, %v901
  %v965 = vadd.f32 %v964, %v902
  %v966 = vadd.f32 %v965, %v903
  %v967 = vadd.f32 %v966, %v904
  %v968 = vadd.f32 %v967, %v905
  %v969 = vadd.f32 %v968, %v906
  %v970 = vadd.f32 %v969, %v907
  %v971 = vadd.f32 %v970, %v908
  %v972 = vadd.f32 %v971, %v909
  %v973 = vadd.f32 %v972, %v910
  %v974 = vadd.f32 %v973, %v911
  %v975 = vadd.f32 %v974, %v912
  %v976 = vadd.f32 %v975, %v913
  %v977 = vadd.f32 %v976, %v914
  %v978 = vadd.f32 %v977, %v915
  %v979 = vadd.f32 %v978, %v916
  %v980 = vadd.f32 %v979, %v917
  %v981 = vrot.slane %v980, 4
  %v982 = vadd.f32 %v980, %v981
  %v983 = vrot.slane %v982, 2
  %v984 = vadd.f32 %v982, %v983
  %v985 = vrot.slane %v984, 1
  %v986 = vadd.f32 %v984, %v985
  %987 = vst [vmem:[%s4] sm:$0x1] %v986
  // Predicated region
  $region10: #{bottleneck_forward.4} parent=0 // pred_check
    _
  $region11: #{bottleneck_forward.4} parent=0 // pred_check_branch
    %989 = sbr.rel (0) target = $region13
  $region12: #{bottleneck_forward.4} parent=0 // pred_region
    _
  $region13: #{bottleneck_forward.4} parent=0 // pred_fallthru
    _
  // Predicated region
  $region14: #{bottleneck_forward.4} parent=0 // pred_check
    _
  $region15: #{bottleneck_forward.4} parent=0 // pred_check_branch
    %991 = sbr.rel (0) target = $region17
  $region16: #{bottleneck_forward.4} parent=0 // pred_region
    _
  $region17: #{bottleneck_forward.4} parent=0 // pred_fallthru
    _
  // Predicated region
  $region18: #{bottleneck_forward.4} parent=0 // pred_check
    _
  $region19: #{bottleneck_forward.4} parent=0 // pred_check_branch
    %993 = sbr.rel (0) target = $region21
  $region20: #{bottleneck_forward.4} parent=0 // pred_region
    _
  $region21: #{bottleneck_forward.4} parent=0 // pred_fallthru
    _
  // Predicated region
  $region22: #{bottleneck_forward.4} parent=0 // pred_check
    _
  $region23: #{bottleneck_forward.4} parent=0 // pred_check_branch
    %995 = sbr.rel (0) target = $region25
  $region24: #{bottleneck_forward.4} parent=0 // pred_region
    _
  $region25: #{bottleneck_forward.4} parent=0 // pred_fallthru
    _
  // Predicated region
  $region26: #{bottleneck_forward.4} parent=0 // pred_check
    _
  $region27: #{bottleneck_forward.4} parent=0 // pred_check_branch
    %997 = sbr.rel (0) target = $region29
  $region28: #{bottleneck_forward.4} parent=0 // pred_region
    _
  $region29: #{bottleneck_forward.4} parent=0 // pred_fallthru
    _
  // Predicated region
  $region30: #{bottleneck_forward.4} parent=0 // pred_check
    _
  $region31: #{bottleneck_forward.4} parent=0 // pred_check_branch
    %999 = sbr.rel (0) target = $region33
  $region32: #{bottleneck_forward.4} parent=0 // pred_region
    _
  $region33: #{bottleneck_forward.4} parent=0 // pred_fallthru
    _

// kernel: bottleneck_forward.6
$region0: #{bottleneck_forward.6}
  #allocation0 [shape = 'u32[]', space=smem, size = 0x4, offset = 0x4, fixed_abs, tag = 'smem constant byte address 0x4 - core index']
  #allocation1 [shape = 'u32[144,128]{1,0:T(1,128)}', space=vmem, size = 0x12000, scoped, tag = 'internal scratch']
  %s0 = inlined_call_operand.vmem [shape: bf16[512,128], index: 0, kind: input, shape index: {}]
  %s1 = inlined_call_operand.vmem [shape: f32[1,128], index: 1, kind: input, shape index: {}]
  %s2 = inlined_call_operand.vmem [shape: f32[1,128], index: 2, kind: input, shape index: {}]
  %s3 = inlined_call_operand.vmem [shape: f32[1,128], index: 3, kind: input, shape index: {}]
  %s4 = inlined_call_operand.vmem [shape: f32[1,128], index: 4, kind: input, shape index: {}]
  %s5 = inlined_call_operand.vmem [shape: bf16[128,128], index: 5, kind: input, shape index: {}]
  %s6 = inlined_call_operand.vmem [shape: bf16[512,128], index: 6, kind: output, shape index: {0}]
  %s7 = inlined_call_operand.vmem [shape: f32[1,1,128], index: 7, kind: output, shape index: {1}]
  %s8 = inlined_call_operand.vmem [shape: f32[1,1,128], index: 8, kind: output, shape index: {2}]
  %9 = xla_tuple %s6, %s7, %s8
  %s10 = sld [smem:[#allocation0]]
  $region50: #{bottleneck_forward.6} parent=0
    _
  %s12 = ssub.s32 1, %s10
  %s13 = scalar_select 0, %s12, %s10
  // Predicated region
  $region2: #{bottleneck_forward.6} parent=0 // pred_check
    _
  $region3: #{bottleneck_forward.6} parent=0 // pred_check_branch
    %15 = sbr.rel (0) target = $region5
  $region4: #{bottleneck_forward.6} parent=0 // pred_region
    _
  $region5: #{bottleneck_forward.6} parent=0 // pred_fallthru
    _
  // Predicated region
  $region6: #{bottleneck_forward.6} parent=0 // pred_check
    _
  $region7: #{bottleneck_forward.6} parent=0 // pred_check_branch
    %17 = sbr.rel (0) target = $region9
  $region8: #{bottleneck_forward.6} parent=0 // pred_region
    _
  $region9: #{bottleneck_forward.6} parent=0 // pred_fallthru
    _
  // Predicated region
  $region10: #{bottleneck_forward.6} parent=0 // pred_check
    _
  $region11: #{bottleneck_forward.6} parent=0 // pred_check_branch
    %19 = sbr.rel (0) target = $region13
  $region12: #{bottleneck_forward.6} parent=0 // pred_region
    _
  $region13: #{bottleneck_forward.6} parent=0 // pred_fallthru
    _
  // Predicated region
  $region14: #{bottleneck_forward.6} parent=0 // pred_check
    _
  $region15: #{bottleneck_forward.6} parent=0 // pred_check_branch
    %21 = sbr.rel (0) target = $region17
  $region16: #{bottleneck_forward.6} parent=0 // pred_region
    _
  $region17: #{bottleneck_forward.6} parent=0 // pred_fallthru
    _
  // Predicated region
  $region18: #{bottleneck_forward.6} parent=0 // pred_check
    _
  $region19: #{bottleneck_forward.6} parent=0 // pred_check_branch
    %23 = sbr.rel (0) target = $region21
  $region20: #{bottleneck_forward.6} parent=0 // pred_region
    _
  $region21: #{bottleneck_forward.6} parent=0 // pred_fallthru
    _
  // Predicated region
  $region22: #{bottleneck_forward.6} parent=0 // pred_check
    _
  $region23: #{bottleneck_forward.6} parent=0 // pred_check_branch
    %25 = sbr.rel (0) target = $region25
  $region24: #{bottleneck_forward.6} parent=0 // pred_region
    _
  $region25: #{bottleneck_forward.6} parent=0 // pred_fallthru
    _
  %v27 = vld [vmem:[%s1] sm:$0x1]
  %v28 = vmul.f32 %v27, 0.001953125
  %v29 = vld [vmem:[%s2] sm:$0x1]
  %v30 = vmul.f32 %v29, 0.001953125
  %v31 = vmul.f32 %v28, %v28
  %v32 = vsub.f32 %v30, %v31
  %v33 = vmax.f32 %v32, 0.0
  %v34 = vld [vmem:[%s3] sm:$0x1]
  %v35 = vadd.f32 %v33, 1e-05
  %v36 = vrsqrt.pop %v35
  %v37 = vmul.f32 %v34, %v36
  %v38 = vld [vmem:[%s4] sm:$0x1]
  %v39 = vmul.f32 %v28, %v37
  %v40 = vsub.f32 %v38, %v39
  %v41 = vld [vmem:[%s0] sm:$0xf]
  %v42 = vld [vmem:[%s0 + $0x4] sm:$0xf]
  %v43 = vld [vmem:[%s0 + $0x8] sm:$0xf]
  %v44 = vld [vmem:[%s0 + $0xc] sm:$0xf]
  %v45 = vld [vmem:[%s0 + $0x10] sm:$0xf]
  %v46 = vld [vmem:[%s0 + $0x14] sm:$0xf]
  %v47 = vld [vmem:[%s0 + $0x18] sm:$0xf]
  %v48 = vld [vmem:[%s0 + $0x1c] sm:$0xf]
  %v49 = vld [vmem:[%s0 + $0x20] sm:$0xf]
  %v50 = vld [vmem:[%s0 + $0x24] sm:$0xf]
  %v51 = vld [vmem:[%s0 + $0x28] sm:$0xf]
  %v52 = vld [vmem:[%s0 + $0x2c] sm:$0xf]
  %v53 = vld [vmem:[%s0 + $0x30] sm:$0xf]
  %v54 = vld [vmem:[%s0 + $0x34] sm:$0xf]
  %v55 = vld [vmem:[%s0 + $0x38] sm:$0xf]
  %v56 = vld [vmem:[%s0 + $0x3c] sm:$0xf]
  %v57 = vld [vmem:[%s0 + $0x40] sm:$0xf]
  %v58 = vld [vmem:[%s0 + $0x44] sm:$0xf]
  %v59 = vld [vmem:[%s0 + $0x48] sm:$0xf]
  %v60 = vld [vmem:[%s0 + $0x4c] sm:$0xf]
  %v61 = vld [vmem:[%s0 + $0x50] sm:$0xf]
  %v62 = vld [vmem:[%s0 + $0x54] sm:$0xf]
  %v63 = vld [vmem:[%s0 + $0x58] sm:$0xf]
  %v64 = vld [vmem:[%s0 + $0x5c] sm:$0xf]
  %v65 = vld [vmem:[%s0 + $0x60] sm:$0xf]
  %v66 = vld [vmem:[%s0 + $0x64] sm:$0xf]
  %v67 = vld [vmem:[%s0 + $0x68] sm:$0xf]
  %v68 = vld [vmem:[%s0 + $0x6c] sm:$0xf]
  %v69 = vld [vmem:[%s0 + $0x70] sm:$0xf]
  %v70 = vld [vmem:[%s0 + $0x74] sm:$0xf]
  %v71 = vld [vmem:[%s0 + $0x78] sm:$0xf]
  %v72 = vld [vmem:[%s0 + $0x7c] sm:$0xf]
  %v73 = vld [vmem:[%s0 + $0x80] sm:$0xf]
  %v74 = vld [vmem:[%s0 + $0x84] sm:$0xf]
  %v75 = vld [vmem:[%s0 + $0x88] sm:$0xf]
  %v76 = vld [vmem:[%s0 + $0x8c] sm:$0xf]
  %v77 = vld [vmem:[%s0 + $0x90] sm:$0xf]
  %v78 = vld [vmem:[%s0 + $0x94] sm:$0xf]
  %v79 = vld [vmem:[%s0 + $0x98] sm:$0xf]
  %v80 = vld [vmem:[%s0 + $0x9c] sm:$0xf]
  %v81 = vld [vmem:[%s0 + $0xa0] sm:$0xf]
  %v82 = vld [vmem:[%s0 + $0xa4] sm:$0xf]
  %v83 = vld [vmem:[%s0 + $0xa8] sm:$0xf]
  %v84 = vld [vmem:[%s0 + $0xac] sm:$0xf]
  %v85 = vld [vmem:[%s0 + $0xb0] sm:$0xf]
  %v86 = vld [vmem:[%s0 + $0xb4] sm:$0xf]
  %v87 = vld [vmem:[%s0 + $0xb8] sm:$0xf]
  %v88 = vld [vmem:[%s0 + $0xbc] sm:$0xf]
  %v89 = vld [vmem:[%s0 + $0xc0] sm:$0xf]
  %v90 = vld [vmem:[%s0 + $0xc4] sm:$0xf]
  %v91 = vld [vmem:[%s0 + $0xc8] sm:$0xf]
  %v92 = vld [vmem:[%s0 + $0xcc] sm:$0xf]
  %v93 = vld [vmem:[%s0 + $0xd0] sm:$0xf]
  %v94 = vld [vmem:[%s0 + $0xd4] sm:$0xf]
  %v95 = vld [vmem:[%s0 + $0xd8] sm:$0xf]
  %v96 = vld [vmem:[%s0 + $0xdc] sm:$0xf]
  %v97 = vld [vmem:[%s0 + $0xe0] sm:$0xf]
  %v98 = vld [vmem:[%s0 + $0xe4] sm:$0xf]
  %v99 = vld [vmem:[%s0 + $0xe8] sm:$0xf]
  %v100 = vld [vmem:[%s0 + $0xec] sm:$0xf]
  %v101 = vld [vmem:[%s0 + $0xf0] sm:$0xf]
  %v102 = vld [vmem:[%s0 + $0xf4] sm:$0xf]
  %v103 = vld [vmem:[%s0 + $0xf8] sm:$0xf]
  %v104 = vld [vmem:[%s0 + $0xfc] sm:$0xf]
  %v105 = vunpack.c.l.bf16 %v41
  %v106 = vunpack.c.l.bf16 %v42
  %v107 = vunpack.c.l.bf16 %v43
  %v108 = vunpack.c.l.bf16 %v44
  %v109 = vunpack.c.l.bf16 %v45
  %v110 = vunpack.c.l.bf16 %v46
  %v111 = vunpack.c.l.bf16 %v47
  %v112 = vunpack.c.l.bf16 %v48
  %v113 = vunpack.c.l.bf16 %v49
  %v114 = vunpack.c.l.bf16 %v50
  %v115 = vunpack.c.l.bf16 %v51
  %v116 = vunpack.c.l.bf16 %v52
  %v117 = vunpack.c.l.bf16 %v53
  %v118 = vunpack.c.l.bf16 %v54
  %v119 = vunpack.c.l.bf16 %v55
  %v120 = vunpack.c.l.bf16 %v56
  %v121 = vunpack.c.l.bf16 %v57
  %v122 = vunpack.c.l.bf16 %v58
  %v123 = vunpack.c.l.bf16 %v59
  %v124 = vunpack.c.l.bf16 %v60
  %v125 = vunpack.c.l.bf16 %v61
  %v126 = vunpack.c.l.bf16 %v62
  %v127 = vunpack.c.l.bf16 %v63
  %v128 = vunpack.c.l.bf16 %v64
  %v129 = vunpack.c.l.bf16 %v65
  %v130 = vunpack.c.l.bf16 %v66
  %v131 = vunpack.c.l.bf16 %v67
  %v132 = vunpack.c.l.bf16 %v68
  %v133 = vunpack.c.l.bf16 %v69
  %v134 = vunpack.c.l.bf16 %v70
  %v135 = vunpack.c.l.bf16 %v71
  %v136 = vunpack.c.l.bf16 %v72
  %v137 = vunpack.c.l.bf16 %v73
  %v138 = vunpack.c.l.bf16 %v74
  %v139 = vunpack.c.l.bf16 %v75
  %v140 = vunpack.c.l.bf16 %v76
  %v141 = vunpack.c.l.bf16 %v77
  %v142 = vunpack.c.l.bf16 %v78
  %v143 = vunpack.c.l.bf16 %v79
  %v144 = vunpack.c.l.bf16 %v80
  %v145 = vunpack.c.l.bf16 %v81
  %v146 = vunpack.c.l.bf16 %v82
  %v147 = vunpack.c.l.bf16 %v83
  %v148 = vunpack.c.l.bf16 %v84
  %v149 = vunpack.c.l.bf16 %v85
  %v150 = vunpack.c.l.bf16 %v86
  %v151 = vunpack.c.l.bf16 %v87
  %v152 = vunpack.c.l.bf16 %v88
  %v153 = vunpack.c.l.bf16 %v89
  %v154 = vunpack.c.l.bf16 %v90
  %v155 = vunpack.c.l.bf16 %v91
  %v156 = vunpack.c.l.bf16 %v92
  %v157 = vunpack.c.l.bf16 %v93
  %v158 = vunpack.c.l.bf16 %v94
  %v159 = vunpack.c.l.bf16 %v95
  %v160 = vunpack.c.l.bf16 %v96
  %v161 = vunpack.c.l.bf16 %v97
  %v162 = vunpack.c.l.bf16 %v98
  %v163 = vunpack.c.l.bf16 %v99
  %v164 = vunpack.c.l.bf16 %v100
  %v165 = vunpack.c.l.bf16 %v101
  %v166 = vunpack.c.l.bf16 %v102
  %v167 = vunpack.c.l.bf16 %v103
  %v168 = vunpack.c.l.bf16 %v104
  %v170 = vlaneseq
  %v171 = vshrl.u32 %v170, 7
  %v172 = vsub.s32 0, %v171
  %v173 = vrot.slane %v37, %v172
  %v175 = vmul.f32 %v105, %v173
  %v176 = vmul.f32 %v106, %v173
  %v177 = vmul.f32 %v107, %v173
  %v178 = vmul.f32 %v108, %v173
  %v179 = vmul.f32 %v109, %v173
  %v180 = vmul.f32 %v110, %v173
  %v181 = vmul.f32 %v111, %v173
  %v182 = vmul.f32 %v112, %v173
  %v183 = vmul.f32 %v113, %v173
  %v184 = vmul.f32 %v114, %v173
  %v185 = vmul.f32 %v115, %v173
  %v186 = vmul.f32 %v116, %v173
  %v187 = vmul.f32 %v117, %v173
  %v188 = vmul.f32 %v118, %v173
  %v189 = vmul.f32 %v119, %v173
  %v190 = vmul.f32 %v120, %v173
  %v191 = vmul.f32 %v121, %v173
  %v192 = vmul.f32 %v122, %v173
  %v193 = vmul.f32 %v123, %v173
  %v194 = vmul.f32 %v124, %v173
  %v195 = vmul.f32 %v125, %v173
  %v196 = vmul.f32 %v126, %v173
  %v197 = vmul.f32 %v127, %v173
  %v198 = vmul.f32 %v128, %v173
  %v199 = vmul.f32 %v129, %v173
  %v200 = vmul.f32 %v130, %v173
  %v201 = vmul.f32 %v131, %v173
  %v202 = vmul.f32 %v132, %v173
  %v203 = vmul.f32 %v133, %v173
  %v204 = vmul.f32 %v134, %v173
  %v205 = vmul.f32 %v135, %v173
  %v206 = vmul.f32 %v136, %v173
  %v207 = vmul.f32 %v137, %v173
  %v208 = vmul.f32 %v138, %v173
  %v209 = vmul.f32 %v139, %v173
  %v210 = vmul.f32 %v140, %v173
  %v211 = vmul.f32 %v141, %v173
  %v212 = vmul.f32 %v142, %v173
  %v213 = vmul.f32 %v143, %v173
  %v214 = vmul.f32 %v144, %v173
  %v215 = vmul.f32 %v145, %v173
  %v216 = vmul.f32 %v146, %v173
  %v217 = vmul.f32 %v147, %v173
  %v218 = vmul.f32 %v148, %v173
  %v219 = vmul.f32 %v149, %v173
  %v220 = vmul.f32 %v150, %v173
  %v221 = vmul.f32 %v151, %v173
  %v222 = vmul.f32 %v152, %v173
  %v223 = vmul.f32 %v153, %v173
  %v224 = vmul.f32 %v154, %v173
  %v225 = vmul.f32 %v155, %v173
  %v226 = vmul.f32 %v156, %v173
  %v227 = vmul.f32 %v157, %v173
  %v228 = vmul.f32 %v158, %v173
  %v229 = vmul.f32 %v159, %v173
  %v230 = vmul.f32 %v160, %v173
  %v231 = vmul.f32 %v161, %v173
  %v232 = vmul.f32 %v162, %v173
  %v233 = vmul.f32 %v163, %v173
  %v234 = vmul.f32 %v164, %v173
  %v235 = vmul.f32 %v165, %v173
  %v236 = vmul.f32 %v166, %v173
  %v237 = vmul.f32 %v167, %v173
  %v238 = vmul.f32 %v168, %v173
  %v240 = vlaneseq
  %v241 = vshrl.u32 %v240, 7
  %v242 = vsub.s32 0, %v241
  %v243 = vrot.slane %v40, %v242
  %v245 = vadd.f32 %v175, %v243
  %v246 = vadd.f32 %v176, %v243
  %v247 = vadd.f32 %v177, %v243
  %v248 = vadd.f32 %v178, %v243
  %v249 = vadd.f32 %v179, %v243
  %v250 = vadd.f32 %v180, %v243
  %v251 = vadd.f32 %v181, %v243
  %v252 = vadd.f32 %v182, %v243
  %v253 = vadd.f32 %v183, %v243
  %v254 = vadd.f32 %v184, %v243
  %v255 = vadd.f32 %v185, %v243
  %v256 = vadd.f32 %v186, %v243
  %v257 = vadd.f32 %v187, %v243
  %v258 = vadd.f32 %v188, %v243
  %v259 = vadd.f32 %v189, %v243
  %v260 = vadd.f32 %v190, %v243
  %v261 = vadd.f32 %v191, %v243
  %v262 = vadd.f32 %v192, %v243
  %v263 = vadd.f32 %v193, %v243
  %v264 = vadd.f32 %v194, %v243
  %v265 = vadd.f32 %v195, %v243
  %v266 = vadd.f32 %v196, %v243
  %v267 = vadd.f32 %v197, %v243
  %v268 = vadd.f32 %v198, %v243
  %v269 = vadd.f32 %v199, %v243
  %v270 = vadd.f32 %v200, %v243
  %v271 = vadd.f32 %v201, %v243
  %v272 = vadd.f32 %v202, %v243
  %v273 = vadd.f32 %v203, %v243
  %v274 = vadd.f32 %v204, %v243
  %v275 = vadd.f32 %v205, %v243
  %v276 = vadd.f32 %v206, %v243
  %v277 = vadd.f32 %v207, %v243
  %v278 = vadd.f32 %v208, %v243
  %v279 = vadd.f32 %v209, %v243
  %v280 = vadd.f32 %v210, %v243
  %v281 = vadd.f32 %v211, %v243
  %v282 = vadd.f32 %v212, %v243
  %v283 = vadd.f32 %v213, %v243
  %v284 = vadd.f32 %v214, %v243
  %v285 = vadd.f32 %v215, %v243
  %v286 = vadd.f32 %v216, %v243
  %v287 = vadd.f32 %v217, %v243
  %v288 = vadd.f32 %v218, %v243
  %v289 = vadd.f32 %v219, %v243
  %v290 = vadd.f32 %v220, %v243
  %v291 = vadd.f32 %v221, %v243
  %v292 = vadd.f32 %v222, %v243
  %v293 = vadd.f32 %v223, %v243
  %v294 = vadd.f32 %v224, %v243
  %v295 = vadd.f32 %v225, %v243
  %v296 = vadd.f32 %v226, %v243
  %v297 = vadd.f32 %v227, %v243
  %v298 = vadd.f32 %v228, %v243
  %v299 = vadd.f32 %v229, %v243
  %v300 = vadd.f32 %v230, %v243
  %v301 = vadd.f32 %v231, %v243
  %v302 = vadd.f32 %v232, %v243
  %v303 = vadd.f32 %v233, %v243
  %v304 = vadd.f32 %v234, %v243
  %v305 = vadd.f32 %v235, %v243
  %v306 = vadd.f32 %v236, %v243
  %v307 = vadd.f32 %v237, %v243
  %v308 = vadd.f32 %v238, %v243
  %v309 = vmax.f32 %v245, 0.0
  %v310 = vmax.f32 %v246, 0.0
  %v311 = vmax.f32 %v247, 0.0
  %v312 = vmax.f32 %v248, 0.0
  %v313 = vmax.f32 %v249, 0.0
  %v314 = vmax.f32 %v250, 0.0
  %v315 = vmax.f32 %v251, 0.0
  %v316 = vmax.f32 %v252, 0.0
  %v317 = vmax.f32 %v253, 0.0
  %v318 = vmax.f32 %v254, 0.0
  %v319 = vmax.f32 %v255, 0.0
  %v320 = vmax.f32 %v256, 0.0
  %v321 = vmax.f32 %v257, 0.0
  %v322 = vmax.f32 %v258, 0.0
  %v323 = vmax.f32 %v259, 0.0
  %v324 = vmax.f32 %v260, 0.0
  %v325 = vmax.f32 %v261, 0.0
  %v326 = vmax.f32 %v262, 0.0
  %v327 = vmax.f32 %v263, 0.0
  %v328 = vmax.f32 %v264, 0.0
  %v329 = vmax.f32 %v265, 0.0
  %v330 = vmax.f32 %v266, 0.0
  %v331 = vmax.f32 %v267, 0.0
  %v332 = vmax.f32 %v268, 0.0
  %v333 = vmax.f32 %v269, 0.0
  %v334 = vmax.f32 %v270, 0.0
  %v335 = vmax.f32 %v271, 0.0
  %v336 = vmax.f32 %v272, 0.0
  %v337 = vmax.f32 %v273, 0.0
  %v338 = vmax.f32 %v274, 0.0
  %v339 = vmax.f32 %v275, 0.0
  %v340 = vmax.f32 %v276, 0.0
  %v341 = vmax.f32 %v277, 0.0
  %v342 = vmax.f32 %v278, 0.0
  %v343 = vmax.f32 %v279, 0.0
  %v344 = vmax.f32 %v280, 0.0
  %v345 = vmax.f32 %v281, 0.0
  %v346 = vmax.f32 %v282, 0.0
  %v347 = vmax.f32 %v283, 0.0
  %v348 = vmax.f32 %v284, 0.0
  %v349 = vmax.f32 %v285, 0.0
  %v350 = vmax.f32 %v286, 0.0
  %v351 = vmax.f32 %v287, 0.0
  %v352 = vmax.f32 %v288, 0.0
  %v353 = vmax.f32 %v289, 0.0
  %v354 = vmax.f32 %v290, 0.0
  %v355 = vmax.f32 %v291, 0.0
  %v356 = vmax.f32 %v292, 0.0
  %v357 = vmax.f32 %v293, 0.0
  %v358 = vmax.f32 %v294, 0.0
  %v359 = vmax.f32 %v295, 0.0
  %v360 = vmax.f32 %v296, 0.0
  %v361 = vmax.f32 %v297, 0.0
  %v362 = vmax.f32 %v298, 0.0
  %v363 = vmax.f32 %v299, 0.0
  %v364 = vmax.f32 %v300, 0.0
  %v365 = vmax.f32 %v301, 0.0
  %v366 = vmax.f32 %v302, 0.0
  %v367 = vmax.f32 %v303, 0.0
  %v368 = vmax.f32 %v304, 0.0
  %v369 = vmax.f32 %v305, 0.0
  %v370 = vmax.f32 %v306, 0.0
  %v371 = vmax.f32 %v307, 0.0
  %v372 = vmax.f32 %v308, 0.0
  %v373 = vpack.c.bf16 %v310, %v309
  %v374 = vpack.c.bf16 %v312, %v311
  %v375 = vpack.c.bf16 %v314, %v313
  %v376 = vpack.c.bf16 %v316, %v315
  %v377 = vpack.c.bf16 %v318, %v317
  %v378 = vpack.c.bf16 %v320, %v319
  %v379 = vpack.c.bf16 %v322, %v321
  %v380 = vpack.c.bf16 %v324, %v323
  %v381 = vpack.c.bf16 %v326, %v325
  %v382 = vpack.c.bf16 %v328, %v327
  %v383 = vpack.c.bf16 %v330, %v329
  %v384 = vpack.c.bf16 %v332, %v331
  %v385 = vpack.c.bf16 %v334, %v333
  %v386 = vpack.c.bf16 %v336, %v335
  %v387 = vpack.c.bf16 %v338, %v337
  %v388 = vpack.c.bf16 %v340, %v339
  %v389 = vpack.c.bf16 %v342, %v341
  %v390 = vpack.c.bf16 %v344, %v343
  %v391 = vpack.c.bf16 %v346, %v345
  %v392 = vpack.c.bf16 %v348, %v347
  %v393 = vpack.c.bf16 %v350, %v349
  %v394 = vpack.c.bf16 %v352, %v351
  %v395 = vpack.c.bf16 %v354, %v353
  %v396 = vpack.c.bf16 %v356, %v355
  %v397 = vpack.c.bf16 %v358, %v357
  %v398 = vpack.c.bf16 %v360, %v359
  %v399 = vpack.c.bf16 %v362, %v361
  %v400 = vpack.c.bf16 %v364, %v363
  %v401 = vpack.c.bf16 %v366, %v365
  %v402 = vpack.c.bf16 %v368, %v367
  %v403 = vpack.c.bf16 %v370, %v369
  %v404 = vpack.c.bf16 %v372, %v371
  %v405 = vld [vmem:[%s5] sm:$0xf]
  %v406 = vld [vmem:[%s5 + $0x4] sm:$0xf]
  %v407 = vld [vmem:[%s5 + $0x8] sm:$0xf]
  %v408 = vld [vmem:[%s5 + $0xc] sm:$0xf]
  %v409 = vld [vmem:[%s5 + $0x10] sm:$0xf]
  %v410 = vld [vmem:[%s5 + $0x14] sm:$0xf]
  %v411 = vld [vmem:[%s5 + $0x18] sm:$0xf]
  %v412 = vld [vmem:[%s5 + $0x1c] sm:$0xf]
  %v413 = vld [vmem:[%s5 + $0x20] sm:$0xf]
  %v414 = vld [vmem:[%s5 + $0x24] sm:$0xf]
  %v415 = vld [vmem:[%s5 + $0x28] sm:$0xf]
  %v416 = vld [vmem:[%s5 + $0x2c] sm:$0xf]
  %v417 = vld [vmem:[%s5 + $0x30] sm:$0xf]
  %v418 = vld [vmem:[%s5 + $0x34] sm:$0xf]
  %v419 = vld [vmem:[%s5 + $0x38] sm:$0xf]
  %v420 = vld [vmem:[%s5 + $0x3c] sm:$0xf]
  %v437 = vunpack.c.l.b16 %v405
  %v438 = vunpack.c.l.b16 %v406
  %v439 = vunpack.c.l.b16 %v407
  %v440 = vunpack.c.l.b16 %v408
  %v441 = vunpack.c.l.b16 %v409
  %v442 = vunpack.c.l.b16 %v410
  %v443 = vunpack.c.l.b16 %v411
  %v444 = vunpack.c.l.b16 %v412
  %v445 = vunpack.c.l.b16 %v413
  %v446 = vunpack.c.l.b16 %v414
  %v447 = vunpack.c.l.b16 %v415
  %v448 = vunpack.c.l.b16 %v416
  %v449 = vunpack.c.l.b16 %v417
  %v450 = vunpack.c.l.b16 %v418
  %v451 = vunpack.c.l.b16 %v419
  %v452 = vunpack.c.l.b16 %v420
  %v453 = vpack.c.b16 %v438, %v437
  %v454 = vpack.c.b16 %v440, %v439
  %v455 = vpack.c.b16 %v442, %v441
  %v456 = vpack.c.b16 %v444, %v443
  %v457 = vpack.c.b16 %v446, %v445
  %v458 = vpack.c.b16 %v448, %v447
  %v459 = vpack.c.b16 %v450, %v449
  %v460 = vpack.c.b16 %v452, %v451
  %469 = vmatprep.subr.bf16.mxu0 0
  %470 = vmatpush1.bf16.msra.mxu0 %v460
  %471 = vmatprep.subr.bf16.mxu0 0
  %472 = vmatpush1.bf16.msra.mxu0 %v459
  %473 = vmatprep.subr.bf16.mxu0 0
  %474 = vmatpush1.bf16.msra.mxu0 %v458
  %475 = vmatprep.subr.bf16.mxu0 0
  %476 = vmatpush1.bf16.msra.mxu0 %v457
  %477 = vmatprep.subr.bf16.mxu0 0
  %478 = vmatpush1.bf16.msra.mxu0 %v456
  %479 = vmatprep.subr.bf16.mxu0 0
  %480 = vmatpush1.bf16.msra.mxu0 %v455
  %481 = vmatprep.subr.bf16.mxu0 0
  %482 = vmatpush1.bf16.msra.mxu0 %v454
  %483 = vmatprep.subr.bf16.mxu0 0
  %484 = vmatpush1.bf16.msra.mxu0 %v453
  %485 = vmatprep.subr.bf16.mxu0 0
  %486 = vmatpush2.bf16.msra.mxu0 0
  %487 = vmatprep.subr.bf16.mxu0 0
  %488 = vmatpush2.bf16.msra.mxu0 0
  %489 = vmatprep.subr.bf16.mxu0 0
  %490 = vmatpush2.bf16.msra.mxu0 0
  %491 = vmatprep.subr.bf16.mxu0 0
  %492 = vmatpush2.bf16.msra.mxu0 0
  %493 = vmatprep.subr.bf16.mxu0 0
  %494 = vmatpush2.bf16.msra.mxu0 0
  %495 = vmatprep.subr.bf16.mxu0 0
  %496 = vmatpush2.bf16.msra.mxu0 0
  %497 = vmatprep.subr.bf16.mxu0 0
  %498 = vmatpush2.bf16.msra.mxu0 0
  %499 = vmatprep.subr.bf16.mxu0 0
  %500 = vmatpush2.bf16.msra.mxu0 0
  %501 = vmatprep.mubr.bf16.mxu0 0
  %502 = vmatmul.mubr.bf16.gmra.mxu0 %v373
  %v503 = vpop.f32.mrf.mxu0
  %v504 = vadd.f32 0.0, %v503
  %v505 = vpop.f32.mrf.mxu0
  %v506 = vpop.f32.mrf.mxu0
  %v507 = vadd.f32 0.0, %v506
  %v508 = vpop.f32.mrf.mxu0
  %509 = vmatprep.mubr.bf16.mxu0 0
  %510 = vmatmul.mubr.bf16.gmra.mxu0 %v374
  %v511 = vpop.f32.mrf.mxu0
  %v512 = vadd.f32 0.0, %v511
  %v513 = vpop.f32.mrf.mxu0
  %v514 = vpop.f32.mrf.mxu0
  %v515 = vadd.f32 0.0, %v514
  %v516 = vpop.f32.mrf.mxu0
  %517 = vmatprep.mubr.bf16.mxu0 0
  %518 = vmatmul.mubr.bf16.gmra.mxu0 %v375
  %v519 = vpop.f32.mrf.mxu0
  %v520 = vadd.f32 0.0, %v519
  %v521 = vpop.f32.mrf.mxu0
  %v522 = vpop.f32.mrf.mxu0
  %v523 = vadd.f32 0.0, %v522
  %v524 = vpop.f32.mrf.mxu0
  %525 = vmatprep.mubr.bf16.mxu0 0
  %526 = vmatmul.mubr.bf16.gmra.mxu0 %v376
  %v527 = vpop.f32.mrf.mxu0
  %v528 = vadd.f32 0.0, %v527
  %v529 = vpop.f32.mrf.mxu0
  %v530 = vpop.f32.mrf.mxu0
  %v531 = vadd.f32 0.0, %v530
  %v532 = vpop.f32.mrf.mxu0
  %533 = vmatprep.mubr.bf16.mxu0 0
  %534 = vmatmul.mubr.bf16.gmra.mxu0 %v377
  %v535 = vpop.f32.mrf.mxu0
  %v536 = vadd.f32 0.0, %v535
  %v537 = vpop.f32.mrf.mxu0
  %v538 = vpop.f32.mrf.mxu0
  %v539 = vadd.f32 0.0, %v538
  %v540 = vpop.f32.mrf.mxu0
  %541 = vmatprep.mubr.bf16.mxu0 0
  %542 = vmatmul.mubr.bf16.gmra.mxu0 %v378
  %v543 = vpop.f32.mrf.mxu0
  %v544 = vadd.f32 0.0, %v543
  %v545 = vpop.f32.mrf.mxu0
  %v546 = vpop.f32.mrf.mxu0
  %v547 = vadd.f32 0.0, %v546
  %v548 = vpop.f32.mrf.mxu0
  %549 = vmatprep.mubr.bf16.mxu0 0
  %550 = vmatmul.mubr.bf16.gmra.mxu0 %v379
  %v551 = vpop.f32.mrf.mxu0
  %v552 = vadd.f32 0.0, %v551
  %v553 = vpop.f32.mrf.mxu0
  %v554 = vpop.f32.mrf.mxu0
  %v555 = vadd.f32 0.0, %v554
  %v556 = vpop.f32.mrf.mxu0
  %557 = vmatprep.mubr.bf16.mxu0 0
  %558 = vmatmul.mubr.bf16.gmra.mxu0 %v380
  %v559 = vpop.f32.mrf.mxu0
  %v560 = vadd.f32 0.0, %v559
  %v561 = vpop.f32.mrf.mxu0
  %v562 = vpop.f32.mrf.mxu0
  %v563 = vadd.f32 0.0, %v562
  %v564 = vpop.f32.mrf.mxu0
  %565 = vmatprep.mubr.bf16.mxu0 0
  %566 = vmatmul.mubr.bf16.gmra.mxu0 %v381
  %v567 = vpop.f32.mrf.mxu0
  %v568 = vadd.f32 0.0, %v567
  %v569 = vpop.f32.mrf.mxu0
  %v570 = vpop.f32.mrf.mxu0
  %v571 = vadd.f32 0.0, %v570
  %v572 = vpop.f32.mrf.mxu0
  %573 = vmatprep.mubr.bf16.mxu0 0
  %574 = vmatmul.mubr.bf16.gmra.mxu0 %v382
  %v575 = vpop.f32.mrf.mxu0
  %v576 = vadd.f32 0.0, %v575
  %v577 = vpop.f32.mrf.mxu0
  %v578 = vpop.f32.mrf.mxu0
  %v579 = vadd.f32 0.0, %v578
  %v580 = vpop.f32.mrf.mxu0
  %581 = vmatprep.mubr.bf16.mxu0 0
  %582 = vmatmul.mubr.bf16.gmra.mxu0 %v383
  %v583 = vpop.f32.mrf.mxu0
  %v584 = vadd.f32 0.0, %v583
  %v585 = vpop.f32.mrf.mxu0
  %v586 = vpop.f32.mrf.mxu0
  %v587 = vadd.f32 0.0, %v586
  %v588 = vpop.f32.mrf.mxu0
  %589 = vmatprep.mubr.bf16.mxu0 0
  %590 = vmatmul.mubr.bf16.gmra.mxu0 %v384
  %v591 = vpop.f32.mrf.mxu0
  %v592 = vadd.f32 0.0, %v591
  %v593 = vpop.f32.mrf.mxu0
  %v594 = vpop.f32.mrf.mxu0
  %v595 = vadd.f32 0.0, %v594
  %v596 = vpop.f32.mrf.mxu0
  %597 = vmatprep.mubr.bf16.mxu0 0
  %598 = vmatmul.mubr.bf16.gmra.mxu0 %v385
  %v599 = vpop.f32.mrf.mxu0
  %v600 = vadd.f32 0.0, %v599
  %v601 = vpop.f32.mrf.mxu0
  %v602 = vpop.f32.mrf.mxu0
  %v603 = vadd.f32 0.0, %v602
  %v604 = vpop.f32.mrf.mxu0
  %605 = vmatprep.mubr.bf16.mxu0 0
  %606 = vmatmul.mubr.bf16.gmra.mxu0 %v386
  %v607 = vpop.f32.mrf.mxu0
  %v608 = vadd.f32 0.0, %v607
  %v609 = vpop.f32.mrf.mxu0
  %v610 = vpop.f32.mrf.mxu0
  %v611 = vadd.f32 0.0, %v610
  %v612 = vpop.f32.mrf.mxu0
  %613 = vmatprep.mubr.bf16.mxu0 0
  %614 = vmatmul.mubr.bf16.gmra.mxu0 %v387
  %v615 = vpop.f32.mrf.mxu0
  %v616 = vadd.f32 0.0, %v615
  %v617 = vpop.f32.mrf.mxu0
  %v618 = vpop.f32.mrf.mxu0
  %v619 = vadd.f32 0.0, %v618
  %v620 = vpop.f32.mrf.mxu0
  %621 = vmatprep.mubr.bf16.mxu0 0
  %622 = vmatmul.mubr.bf16.gmra.mxu0 %v388
  %v623 = vpop.f32.mrf.mxu0
  %v624 = vadd.f32 0.0, %v623
  %v625 = vpop.f32.mrf.mxu0
  %v626 = vpop.f32.mrf.mxu0
  %v627 = vadd.f32 0.0, %v626
  %v628 = vpop.f32.mrf.mxu0
  %629 = vmatprep.mubr.bf16.mxu0 0
  %630 = vmatmul.mubr.bf16.gmra.mxu0 %v389
  %v631 = vpop.f32.mrf.mxu0
  %v632 = vadd.f32 0.0, %v631
  %v633 = vpop.f32.mrf.mxu0
  %v634 = vpop.f32.mrf.mxu0
  %v635 = vadd.f32 0.0, %v634
  %v636 = vpop.f32.mrf.mxu0
  %637 = vmatprep.mubr.bf16.mxu0 0
  %638 = vmatmul.mubr.bf16.gmra.mxu0 %v390
  %v639 = vpop.f32.mrf.mxu0
  %v640 = vadd.f32 0.0, %v639
  %v641 = vpop.f32.mrf.mxu0
  %v642 = vpop.f32.mrf.mxu0
  %v643 = vadd.f32 0.0, %v642
  %v644 = vpop.f32.mrf.mxu0
  %645 = vmatprep.mubr.bf16.mxu0 0
  %646 = vmatmul.mubr.bf16.gmra.mxu0 %v391
  %v647 = vpop.f32.mrf.mxu0
  %v648 = vadd.f32 0.0, %v647
  %v649 = vpop.f32.mrf.mxu0
  %v650 = vpop.f32.mrf.mxu0
  %v651 = vadd.f32 0.0, %v650
  %v652 = vpop.f32.mrf.mxu0
  %653 = vmatprep.mubr.bf16.mxu0 0
  %654 = vmatmul.mubr.bf16.gmra.mxu0 %v392
  %v655 = vpop.f32.mrf.mxu0
  %v656 = vadd.f32 0.0, %v655
  %v657 = vpop.f32.mrf.mxu0
  %v658 = vpop.f32.mrf.mxu0
  %v659 = vadd.f32 0.0, %v658
  %v660 = vpop.f32.mrf.mxu0
  %661 = vmatprep.mubr.bf16.mxu0 0
  %662 = vmatmul.mubr.bf16.gmra.mxu0 %v393
  %v663 = vpop.f32.mrf.mxu0
  %v664 = vadd.f32 0.0, %v663
  %v665 = vpop.f32.mrf.mxu0
  %v666 = vpop.f32.mrf.mxu0
  %v667 = vadd.f32 0.0, %v666
  %v668 = vpop.f32.mrf.mxu0
  %669 = vmatprep.mubr.bf16.mxu0 0
  %670 = vmatmul.mubr.bf16.gmra.mxu0 %v394
  %v671 = vpop.f32.mrf.mxu0
  %v672 = vadd.f32 0.0, %v671
  %v673 = vpop.f32.mrf.mxu0
  %v674 = vpop.f32.mrf.mxu0
  %v675 = vadd.f32 0.0, %v674
  %v676 = vpop.f32.mrf.mxu0
  %677 = vmatprep.mubr.bf16.mxu0 0
  %678 = vmatmul.mubr.bf16.gmra.mxu0 %v395
  %v679 = vpop.f32.mrf.mxu0
  %v680 = vadd.f32 0.0, %v679
  %v681 = vpop.f32.mrf.mxu0
  %v682 = vpop.f32.mrf.mxu0
  %v683 = vadd.f32 0.0, %v682
  %v684 = vpop.f32.mrf.mxu0
  %685 = vmatprep.mubr.bf16.mxu0 0
  %686 = vmatmul.mubr.bf16.gmra.mxu0 %v396
  %v687 = vpop.f32.mrf.mxu0
  %v688 = vadd.f32 0.0, %v687
  %v689 = vpop.f32.mrf.mxu0
  %v690 = vpop.f32.mrf.mxu0
  %v691 = vadd.f32 0.0, %v690
  %v692 = vpop.f32.mrf.mxu0
  %693 = vmatprep.mubr.bf16.mxu0 0
  %694 = vmatmul.mubr.bf16.gmra.mxu0 %v397
  %v695 = vpop.f32.mrf.mxu0
  %v696 = vadd.f32 0.0, %v695
  %v697 = vpop.f32.mrf.mxu0
  %v698 = vpop.f32.mrf.mxu0
  %v699 = vadd.f32 0.0, %v698
  %v700 = vpop.f32.mrf.mxu0
  %701 = vmatprep.mubr.bf16.mxu0 0
  %702 = vmatmul.mubr.bf16.gmra.mxu0 %v398
  %v703 = vpop.f32.mrf.mxu0
  %v704 = vadd.f32 0.0, %v703
  %v705 = vpop.f32.mrf.mxu0
  %v706 = vpop.f32.mrf.mxu0
  %v707 = vadd.f32 0.0, %v706
  %v708 = vpop.f32.mrf.mxu0
  %709 = vmatprep.mubr.bf16.mxu0 0
  %710 = vmatmul.mubr.bf16.gmra.mxu0 %v399
  %v711 = vpop.f32.mrf.mxu0
  %v712 = vadd.f32 0.0, %v711
  %v713 = vpop.f32.mrf.mxu0
  %v714 = vpop.f32.mrf.mxu0
  %v715 = vadd.f32 0.0, %v714
  %v716 = vpop.f32.mrf.mxu0
  %717 = vmatprep.mubr.bf16.mxu0 0
  %718 = vmatmul.mubr.bf16.gmra.mxu0 %v400
  %v719 = vpop.f32.mrf.mxu0
  %v720 = vadd.f32 0.0, %v719
  %v721 = vpop.f32.mrf.mxu0
  %v722 = vpop.f32.mrf.mxu0
  %v723 = vadd.f32 0.0, %v722
  %v724 = vpop.f32.mrf.mxu0
  %725 = vmatprep.mubr.bf16.mxu0 0
  %726 = vmatmul.mubr.bf16.gmra.mxu0 %v401
  %v727 = vpop.f32.mrf.mxu0
  %v728 = vadd.f32 0.0, %v727
  %v729 = vpop.f32.mrf.mxu0
  %v730 = vpop.f32.mrf.mxu0
  %v731 = vadd.f32 0.0, %v730
  %v732 = vpop.f32.mrf.mxu0
  %733 = vmatprep.mubr.bf16.mxu0 0
  %734 = vmatmul.mubr.bf16.gmra.mxu0 %v402
  %v735 = vpop.f32.mrf.mxu0
  %v736 = vadd.f32 0.0, %v735
  %v737 = vpop.f32.mrf.mxu0
  %v738 = vpop.f32.mrf.mxu0
  %v739 = vadd.f32 0.0, %v738
  %v740 = vpop.f32.mrf.mxu0
  %741 = vmatprep.mubr.bf16.mxu0 0
  %742 = vmatmul.mubr.bf16.gmra.mxu0 %v403
  %v743 = vpop.f32.mrf.mxu0
  %v744 = vadd.f32 0.0, %v743
  %v745 = vpop.f32.mrf.mxu0
  %v746 = vpop.f32.mrf.mxu0
  %v747 = vadd.f32 0.0, %v746
  %v748 = vpop.f32.mrf.mxu0
  %749 = vmatprep.mubr.bf16.mxu0 0
  %750 = vmatmul.mubr.bf16.gmra.mxu0 %v404
  %v751 = vpop.f32.mrf.mxu0
  %v752 = vadd.f32 0.0, %v751
  %v753 = vpop.f32.mrf.mxu0
  %v754 = vpop.f32.mrf.mxu0
  %v755 = vadd.f32 0.0, %v754
  %v756 = vpop.f32.mrf.mxu0
  %757 = vdwg.mxu0
  %v758 = vpack.c.bf16 %v507, %v504
  %v759 = vpack.c.bf16 %v515, %v512
  %v760 = vpack.c.bf16 %v523, %v520
  %v761 = vpack.c.bf16 %v531, %v528
  %v762 = vpack.c.bf16 %v539, %v536
  %v763 = vpack.c.bf16 %v547, %v544
  %v764 = vpack.c.bf16 %v555, %v552
  %v765 = vpack.c.bf16 %v563, %v560
  %v766 = vpack.c.bf16 %v571, %v568
  %v767 = vpack.c.bf16 %v579, %v576
  %v768 = vpack.c.bf16 %v587, %v584
  %v769 = vpack.c.bf16 %v595, %v592
  %v770 = vpack.c.bf16 %v603, %v600
  %v771 = vpack.c.bf16 %v611, %v608
  %v772 = vpack.c.bf16 %v619, %v616
  %v773 = vpack.c.bf16 %v627, %v624
  %v774 = vpack.c.bf16 %v635, %v632
  %v775 = vpack.c.bf16 %v643, %v640
  %v776 = vpack.c.bf16 %v651, %v648
  %v777 = vpack.c.bf16 %v659, %v656
  %v778 = vpack.c.bf16 %v667, %v664
  %v779 = vpack.c.bf16 %v675, %v672
  %v780 = vpack.c.bf16 %v683, %v680
  %v781 = vpack.c.bf16 %v691, %v688
  %v782 = vpack.c.bf16 %v699, %v696
  %v783 = vpack.c.bf16 %v707, %v704
  %v784 = vpack.c.bf16 %v715, %v712
  %v785 = vpack.c.bf16 %v723, %v720
  %v786 = vpack.c.bf16 %v731, %v728
  %v787 = vpack.c.bf16 %v739, %v736
  %v788 = vpack.c.bf16 %v747, %v744
  %v789 = vpack.c.bf16 %v755, %v752
  %v822 = vunpack.c.l.b16 %v758
  %v823 = vunpack.c.h.b16 %v758
  %v824 = vunpack.c.l.b16 %v759
  %v825 = vunpack.c.h.b16 %v759
  %v826 = vunpack.c.l.b16 %v760
  %v827 = vunpack.c.h.b16 %v760
  %v828 = vunpack.c.l.b16 %v761
  %v829 = vunpack.c.h.b16 %v761
  %v830 = vunpack.c.l.b16 %v762
  %v831 = vunpack.c.h.b16 %v762
  %v832 = vunpack.c.l.b16 %v763
  %v833 = vunpack.c.h.b16 %v763
  %v834 = vunpack.c.l.b16 %v764
  %v835 = vunpack.c.h.b16 %v764
  %v836 = vunpack.c.l.b16 %v765
  %v837 = vunpack.c.h.b16 %v765
  %v838 = vunpack.c.l.b16 %v766
  %v839 = vunpack.c.h.b16 %v766
  %v840 = vunpack.c.l.b16 %v767
  %v841 = vunpack.c.h.b16 %v767
  %v842 = vunpack.c.l.b16 %v768
  %v843 = vunpack.c.h.b16 %v768
  %v844 = vunpack.c.l.b16 %v769
  %v845 = vunpack.c.h.b16 %v769
  %v846 = vunpack.c.l.b16 %v770
  %v847 = vunpack.c.h.b16 %v770
  %v848 = vunpack.c.l.b16 %v771
  %v849 = vunpack.c.h.b16 %v771
  %v850 = vunpack.c.l.b16 %v772
  %v851 = vunpack.c.h.b16 %v772
  %v852 = vunpack.c.l.b16 %v773
  %v853 = vunpack.c.h.b16 %v773
  %v854 = vunpack.c.l.b16 %v774
  %v855 = vunpack.c.h.b16 %v774
  %v856 = vunpack.c.l.b16 %v775
  %v857 = vunpack.c.h.b16 %v775
  %v858 = vunpack.c.l.b16 %v776
  %v859 = vunpack.c.h.b16 %v776
  %v860 = vunpack.c.l.b16 %v777
  %v861 = vunpack.c.h.b16 %v777
  %v862 = vunpack.c.l.b16 %v778
  %v863 = vunpack.c.h.b16 %v778
  %v864 = vunpack.c.l.b16 %v779
  %v865 = vunpack.c.h.b16 %v779
  %v866 = vunpack.c.l.b16 %v780
  %v867 = vunpack.c.h.b16 %v780
  %v868 = vunpack.c.l.b16 %v781
  %v869 = vunpack.c.h.b16 %v781
  %v870 = vunpack.c.l.b16 %v782
  %v871 = vunpack.c.h.b16 %v782
  %v872 = vunpack.c.l.b16 %v783
  %v873 = vunpack.c.h.b16 %v783
  %v874 = vunpack.c.l.b16 %v784
  %v875 = vunpack.c.h.b16 %v784
  %v876 = vunpack.c.l.b16 %v785
  %v877 = vunpack.c.h.b16 %v785
  %v878 = vunpack.c.l.b16 %v786
  %v879 = vunpack.c.h.b16 %v786
  %v880 = vunpack.c.l.b16 %v787
  %v881 = vunpack.c.h.b16 %v787
  %v882 = vunpack.c.l.b16 %v788
  %v883 = vunpack.c.h.b16 %v788
  %v884 = vunpack.c.l.b16 %v789
  %v885 = vunpack.c.h.b16 %v789
  %v886 = vpack.c.b16 %v822, %v822
  %v887 = vpack.c.b16 %v823, %v823
  %v888 = vpack.c.b16 %v824, %v824
  %v889 = vpack.c.b16 %v825, %v825
  %v890 = vpack.c.b16 %v826, %v826
  %v891 = vpack.c.b16 %v827, %v827
  %v892 = vpack.c.b16 %v828, %v828
  %v893 = vpack.c.b16 %v829, %v829
  %v894 = vpack.c.b16 %v830, %v830
  %v895 = vpack.c.b16 %v831, %v831
  %v896 = vpack.c.b16 %v832, %v832
  %v897 = vpack.c.b16 %v833, %v833
  %v898 = vpack.c.b16 %v834, %v834
  %v899 = vpack.c.b16 %v835, %v835
  %v900 = vpack.c.b16 %v836, %v836
  %v901 = vpack.c.b16 %v837, %v837
  %v902 = vpack.c.b16 %v838, %v838
  %v903 = vpack.c.b16 %v839, %v839
  %v904 = vpack.c.b16 %v840, %v840
  %v905 = vpack.c.b16 %v841, %v841
  %v906 = vpack.c.b16 %v842, %v842
  %v907 = vpack.c.b16 %v843, %v843
  %v908 = vpack.c.b16 %v844, %v844
  %v909 = vpack.c.b16 %v845, %v845
  %v910 = vpack.c.b16 %v846, %v846
  %v911 = vpack.c.b16 %v847, %v847
  %v912 = vpack.c.b16 %v848, %v848
  %v913 = vpack.c.b16 %v849, %v849
  %v914 = vpack.c.b16 %v850, %v850
  %v915 = vpack.c.b16 %v851, %v851
  %v916 = vpack.c.b16 %v852, %v852
  %v917 = vpack.c.b16 %v853, %v853
  %v918 = vpack.c.b16 %v854, %v854
  %v919 = vpack.c.b16 %v855, %v855
  %v920 = vpack.c.b16 %v856, %v856
  %v921 = vpack.c.b16 %v857, %v857
  %v922 = vpack.c.b16 %v858, %v858
  %v923 = vpack.c.b16 %v859, %v859
  %v924 = vpack.c.b16 %v860, %v860
  %v925 = vpack.c.b16 %v861, %v861
  %v926 = vpack.c.b16 %v862, %v862
  %v927 = vpack.c.b16 %v863, %v863
  %v928 = vpack.c.b16 %v864, %v864
  %v929 = vpack.c.b16 %v865, %v865
  %v930 = vpack.c.b16 %v866, %v866
  %v931 = vpack.c.b16 %v867, %v867
  %v932 = vpack.c.b16 %v868, %v868
  %v933 = vpack.c.b16 %v869, %v869
  %v934 = vpack.c.b16 %v870, %v870
  %v935 = vpack.c.b16 %v871, %v871
  %v936 = vpack.c.b16 %v872, %v872
  %v937 = vpack.c.b16 %v873, %v873
  %v938 = vpack.c.b16 %v874, %v874
  %v939 = vpack.c.b16 %v875, %v875
  %v940 = vpack.c.b16 %v876, %v876
  %v941 = vpack.c.b16 %v877, %v877
  %v942 = vpack.c.b16 %v878, %v878
  %v943 = vpack.c.b16 %v879, %v879
  %v944 = vpack.c.b16 %v880, %v880
  %v945 = vpack.c.b16 %v881, %v881
  %v946 = vpack.c.b16 %v882, %v882
  %v947 = vpack.c.b16 %v883, %v883
  %v948 = vpack.c.b16 %v884, %v884
  %v949 = vpack.c.b16 %v885, %v885
  %1014 = vst [vmem:[%s6] sm:$0xf] %v886
  %1015 = vst [vmem:[%s6 + $0x4] sm:$0xf] %v887
  %1016 = vst [vmem:[%s6 + $0x8] sm:$0xf] %v888
  %1017 = vst [vmem:[%s6 + $0xc] sm:$0xf] %v889
  %1018 = vst [vmem:[%s6 + $0x10] sm:$0xf] %v890
  %1019 = vst [vmem:[%s6 + $0x14] sm:$0xf] %v891
  %1020 = vst [vmem:[%s6 + $0x18] sm:$0xf] %v892
  %1021 = vst [vmem:[%s6 + $0x1c] sm:$0xf] %v893
  %1022 = vst [vmem:[%s6 + $0x20] sm:$0xf] %v894
  %1023 = vst [vmem:[%s6 + $0x24] sm:$0xf] %v895
  %1024 = vst [vmem:[%s6 + $0x28] sm:$0xf] %v896
  %1025 = vst [vmem:[%s6 + $0x2c] sm:$0xf] %v897
  %1026 = vst [vmem:[%s6 + $0x30] sm:$0xf] %v898
  %1027 = vst [vmem:[%s6 + $0x34] sm:$0xf] %v899
  %1028 = vst [vmem:[%s6 + $0x38] sm:$0xf] %v900
  %1029 = vst [vmem:[%s6 + $0x3c] sm:$0xf] %v901
  %1030 = vst [vmem:[%s6 + $0x40] sm:$0xf] %v902
  %1031 = vst [vmem:[%s6 + $0x44] sm:$0xf] %v903
  %1032 = vst [vmem:[%s6 + $0x48] sm:$0xf] %v904
  %1033 = vst [vmem:[%s6 + $0x4c] sm:$0xf] %v905
  %1034 = vst [vmem:[%s6 + $0x50] sm:$0xf] %v906
  %1035 = vst [vmem:[%s6 + $0x54] sm:$0xf] %v907
  %1036 = vst [vmem:[%s6 + $0x58] sm:$0xf] %v908
  %1037 = vst [vmem:[%s6 + $0x5c] sm:$0xf] %v909
  %1038 = vst [vmem:[%s6 + $0x60] sm:$0xf] %v910
  %1039 = vst [vmem:[%s6 + $0x64] sm:$0xf] %v911
  %1040 = vst [vmem:[%s6 + $0x68] sm:$0xf] %v912
  %1041 = vst [vmem:[%s6 + $0x6c] sm:$0xf] %v913
  %1042 = vst [vmem:[%s6 + $0x70] sm:$0xf] %v914
  %1043 = vst [vmem:[%s6 + $0x74] sm:$0xf] %v915
  %1044 = vst [vmem:[%s6 + $0x78] sm:$0xf] %v916
  %1045 = vst [vmem:[%s6 + $0x7c] sm:$0xf] %v917
  %1046 = vst [vmem:[%s6 + $0x80] sm:$0xf] %v918
  %1047 = vst [vmem:[%s6 + $0x84] sm:$0xf] %v919
  %1048 = vst [vmem:[%s6 + $0x88] sm:$0xf] %v920
  %1049 = vst [vmem:[%s6 + $0x8c] sm:$0xf] %v921
  %1050 = vst [vmem:[%s6 + $0x90] sm:$0xf] %v922
  %1051 = vst [vmem:[%s6 + $0x94] sm:$0xf] %v923
  %1052 = vst [vmem:[%s6 + $0x98] sm:$0xf] %v924
  %1053 = vst [vmem:[%s6 + $0x9c] sm:$0xf] %v925
  %1054 = vst [vmem:[%s6 + $0xa0] sm:$0xf] %v926
  %1055 = vst [vmem:[%s6 + $0xa4] sm:$0xf] %v927
  %1056 = vst [vmem:[%s6 + $0xa8] sm:$0xf] %v928
  %1057 = vst [vmem:[%s6 + $0xac] sm:$0xf] %v929
  %1058 = vst [vmem:[%s6 + $0xb0] sm:$0xf] %v930
  %1059 = vst [vmem:[%s6 + $0xb4] sm:$0xf] %v931
  %1060 = vst [vmem:[%s6 + $0xb8] sm:$0xf] %v932
  %1061 = vst [vmem:[%s6 + $0xbc] sm:$0xf] %v933
  %1062 = vst [vmem:[%s6 + $0xc0] sm:$0xf] %v934
  %1063 = vst [vmem:[%s6 + $0xc4] sm:$0xf] %v935
  %1064 = vst [vmem:[%s6 + $0xc8] sm:$0xf] %v936
  %1065 = vst [vmem:[%s6 + $0xcc] sm:$0xf] %v937
  %1066 = vst [vmem:[%s6 + $0xd0] sm:$0xf] %v938
  %1067 = vst [vmem:[%s6 + $0xd4] sm:$0xf] %v939
  %1068 = vst [vmem:[%s6 + $0xd8] sm:$0xf] %v940
  %1069 = vst [vmem:[%s6 + $0xdc] sm:$0xf] %v941
  %1070 = vst [vmem:[%s6 + $0xe0] sm:$0xf] %v942
  %1071 = vst [vmem:[%s6 + $0xe4] sm:$0xf] %v943
  %1072 = vst [vmem:[%s6 + $0xe8] sm:$0xf] %v944
  %1073 = vst [vmem:[%s6 + $0xec] sm:$0xf] %v945
  %1074 = vst [vmem:[%s6 + $0xf0] sm:$0xf] %v946
  %1075 = vst [vmem:[%s6 + $0xf4] sm:$0xf] %v947
  %1076 = vst [vmem:[%s6 + $0xf8] sm:$0xf] %v948
  %1077 = vst [vmem:[%s6 + $0xfc] sm:$0xf] %v949
  %v1078 = vadd.f32 %v504, %v507
  %v1079 = vadd.f32 %v1078, %v512
  %v1080 = vadd.f32 %v1079, %v515
  %v1081 = vadd.f32 %v1080, %v520
  %v1082 = vadd.f32 %v1081, %v523
  %v1083 = vadd.f32 %v1082, %v528
  %v1084 = vadd.f32 %v1083, %v531
  %v1085 = vadd.f32 %v1084, %v536
  %v1086 = vadd.f32 %v1085, %v539
  %v1087 = vadd.f32 %v1086, %v544
  %v1088 = vadd.f32 %v1087, %v547
  %v1089 = vadd.f32 %v1088, %v552
  %v1090 = vadd.f32 %v1089, %v555
  %v1091 = vadd.f32 %v1090, %v560
  %v1092 = vadd.f32 %v1091, %v563
  %v1093 = vadd.f32 %v1092, %v568
  %v1094 = vadd.f32 %v1093, %v571
  %v1095 = vadd.f32 %v1094, %v576
  %v1096 = vadd.f32 %v1095, %v579
  %v1097 = vadd.f32 %v1096, %v584
  %v1098 = vadd.f32 %v1097, %v587
  %v1099 = vadd.f32 %v1098, %v592
  %v1100 = vadd.f32 %v1099, %v595
  %v1101 = vadd.f32 %v1100, %v600
  %v1102 = vadd.f32 %v1101, %v603
  %v1103 = vadd.f32 %v1102, %v608
  %v1104 = vadd.f32 %v1103, %v611
  %v1105 = vadd.f32 %v1104, %v616
  %v1106 = vadd.f32 %v1105, %v619
  %v1107 = vadd.f32 %v1106, %v624
  %v1108 = vadd.f32 %v1107, %v627
  %v1109 = vadd.f32 %v1108, %v632
  %v1110 = vadd.f32 %v1109, %v635
  %v1111 = vadd.f32 %v1110, %v640
  %v1112 = vadd.f32 %v1111, %v643
  %v1113 = vadd.f32 %v1112, %v648
  %v1114 = vadd.f32 %v1113, %v651
  %v1115 = vadd.f32 %v1114, %v656
  %v1116 = vadd.f32 %v1115, %v659
  %v1117 = vadd.f32 %v1116, %v664
  %v1118 = vadd.f32 %v1117, %v667
  %v1119 = vadd.f32 %v1118, %v672
  %v1120 = vadd.f32 %v1119, %v675
  %v1121 = vadd.f32 %v1120, %v680
  %v1122 = vadd.f32 %v1121, %v683
  %v1123 = vadd.f32 %v1122, %v688
  %v1124 = vadd.f32 %v1123, %v691
  %v1125 = vadd.f32 %v1124, %v696
  %v1126 = vadd.f32 %v1125, %v699
  %v1127 = vadd.f32 %v1126, %v704
  %v1128 = vadd.f32 %v1127, %v707
  %v1129 = vadd.f32 %v1128, %v712
  %v1130 = vadd.f32 %v1129, %v715
  %v1131 = vadd.f32 %v1130, %v720
  %v1132 = vadd.f32 %v1131, %v723
  %v1133 = vadd.f32 %v1132, %v728
  %v1134 = vadd.f32 %v1133, %v731
  %v1135 = vadd.f32 %v1134, %v736
  %v1136 = vadd.f32 %v1135, %v739
  %v1137 = vadd.f32 %v1136, %v744
  %v1138 = vadd.f32 %v1137, %v747
  %v1139 = vadd.f32 %v1138, %v752
  %v1140 = vadd.f32 %v1139, %v755
  %v1141 = vrot.slane %v1140, 4
  %v1142 = vadd.f32 %v1140, %v1141
  %v1143 = vrot.slane %v1142, 2
  %v1144 = vadd.f32 %v1142, %v1143
  %v1145 = vrot.slane %v1144, 1
  %v1146 = vadd.f32 %v1144, %v1145
  %1147 = vst [vmem:[%s7] sm:$0x1] %v1146
  %v1148 = vmul.f32 %v504, %v504
  %v1149 = vmul.f32 %v507, %v507
  %v1150 = vmul.f32 %v512, %v512
  %v1151 = vmul.f32 %v515, %v515
  %v1152 = vmul.f32 %v520, %v520
  %v1153 = vmul.f32 %v523, %v523
  %v1154 = vmul.f32 %v528, %v528
  %v1155 = vmul.f32 %v531, %v531
  %v1156 = vmul.f32 %v536, %v536
  %v1157 = vmul.f32 %v539, %v539
  %v1158 = vmul.f32 %v544, %v544
  %v1159 = vmul.f32 %v547, %v547
  %v1160 = vmul.f32 %v552, %v552
  %v1161 = vmul.f32 %v555, %v555
  %v1162 = vmul.f32 %v560, %v560
  %v1163 = vmul.f32 %v563, %v563
  %v1164 = vmul.f32 %v568, %v568
  %v1165 = vmul.f32 %v571, %v571
  %v1166 = vmul.f32 %v576, %v576
  %v1167 = vmul.f32 %v579, %v579
  %v1168 = vmul.f32 %v584, %v584
  %v1169 = vmul.f32 %v587, %v587
  %v1170 = vmul.f32 %v592, %v592
  %v1171 = vmul.f32 %v595, %v595
  %v1172 = vmul.f32 %v600, %v600
  %v1173 = vmul.f32 %v603, %v603
  %v1174 = vmul.f32 %v608, %v608
  %v1175 = vmul.f32 %v611, %v611
  %v1176 = vmul.f32 %v616, %v616
  %v1177 = vmul.f32 %v619, %v619
  %v1178 = vmul.f32 %v624, %v624
  %v1179 = vmul.f32 %v627, %v627
  %v1180 = vmul.f32 %v632, %v632
  %v1181 = vmul.f32 %v635, %v635
  %v1182 = vmul.f32 %v640, %v640
  %v1183 = vmul.f32 %v643, %v643
  %v1184 = vmul.f32 %v648, %v648
  %v1185 = vmul.f32 %v651, %v651
  %v1186 = vmul.f32 %v656, %v656
  %v1187 = vmul.f32 %v659, %v659
  %v1188 = vmul.f32 %v664, %v664
  %v1189 = vmul.f32 %v667, %v667
  %v1190 = vmul.f32 %v672, %v672
  %v1191 = vmul.f32 %v675, %v675
  %v1192 = vmul.f32 %v680, %v680
  %v1193 = vmul.f32 %v683, %v683
  %v1194 = vmul.f32 %v688, %v688
  %v1195 = vmul.f32 %v691, %v691
  %v1196 = vmul.f32 %v696, %v696
  %v1197 = vmul.f32 %v699, %v699
  %v1198 = vmul.f32 %v704, %v704
  %v1199 = vmul.f32 %v707, %v707
  %v1200 = vmul.f32 %v712, %v712
  %v1201 = vmul.f32 %v715, %v715
  %v1202 = vmul.f32 %v720, %v720
  %v1203 = vmul.f32 %v723, %v723
  %v1204 = vmul.f32 %v728, %v728
  %v1205 = vmul.f32 %v731, %v731
  %v1206 = vmul.f32 %v736, %v736
  %v1207 = vmul.f32 %v739, %v739
  %v1208 = vmul.f32 %v744, %v744
  %v1209 = vmul.f32 %v747, %v747
  %v1210 = vmul.f32 %v752, %v752
  %v1211 = vmul.f32 %v755, %v755
  %v1212 = vadd.f32 %v1148, %v1149
  %v1213 = vadd.f32 %v1212, %v1150
  %v1214 = vadd.f32 %v1213, %v1151
  %v1215 = vadd.f32 %v1214, %v1152
  %v1216 = vadd.f32 %v1215, %v1153
  %v1217 = vadd.f32 %v1216, %v1154
  %v1218 = vadd.f32 %v1217, %v1155
  %v1219 = vadd.f32 %v1218, %v1156
  %v1220 = vadd.f32 %v1219, %v1157
  %v1221 = vadd.f32 %v1220, %v1158
  %v1222 = vadd.f32 %v1221, %v1159
  %v1223 = vadd.f32 %v1222, %v1160
  %v1224 = vadd.f32 %v1223, %v1161
  %v1225 = vadd.f32 %v1224, %v1162
  %v1226 = vadd.f32 %v1225, %v1163
  %v1227 = vadd.f32 %v1226, %v1164
  %v1228 = vadd.f32 %v1227, %v1165
  %v1229 = vadd.f32 %v1228, %v1166
  %v1230 = vadd.f32 %v1229, %v1167
  %v1231 = vadd.f32 %v1230, %v1168
  %v1232 = vadd.f32 %v1231, %v1169
  %v1233 = vadd.f32 %v1232, %v1170
  %v1234 = vadd.f32 %v1233, %v1171
  %v1235 = vadd.f32 %v1234, %v1172
  %v1236 = vadd.f32 %v1235, %v1173
  %v1237 = vadd.f32 %v1236, %v1174
  %v1238 = vadd.f32 %v1237, %v1175
  %v1239 = vadd.f32 %v1238, %v1176
  %v1240 = vadd.f32 %v1239, %v1177
  %v1241 = vadd.f32 %v1240, %v1178
  %v1242 = vadd.f32 %v1241, %v1179
  %v1243 = vadd.f32 %v1242, %v1180
  %v1244 = vadd.f32 %v1243, %v1181
  %v1245 = vadd.f32 %v1244, %v1182
  %v1246 = vadd.f32 %v1245, %v1183
  %v1247 = vadd.f32 %v1246, %v1184
  %v1248 = vadd.f32 %v1247, %v1185
  %v1249 = vadd.f32 %v1248, %v1186
  %v1250 = vadd.f32 %v1249, %v1187
  %v1251 = vadd.f32 %v1250, %v1188
  %v1252 = vadd.f32 %v1251, %v1189
  %v1253 = vadd.f32 %v1252, %v1190
  %v1254 = vadd.f32 %v1253, %v1191
  %v1255 = vadd.f32 %v1254, %v1192
  %v1256 = vadd.f32 %v1255, %v1193
  %v1257 = vadd.f32 %v1256, %v1194
  %v1258 = vadd.f32 %v1257, %v1195
  %v1259 = vadd.f32 %v1258, %v1196
  %v1260 = vadd.f32 %v1259, %v1197
  %v1261 = vadd.f32 %v1260, %v1198
  %v1262 = vadd.f32 %v1261, %v1199
  %v1263 = vadd.f32 %v1262, %v1200
  %v1264 = vadd.f32 %v1263, %v1201
  %v1265 = vadd.f32 %v1264, %v1202
  %v1266 = vadd.f32 %v1265, %v1203
  %v1267 = vadd.f32 %v1266, %v1204
  %v1268 = vadd.f32 %v1267, %v1205
  %v1269 = vadd.f32 %v1268, %v1206
  %v1270 = vadd.f32 %v1269, %v1207
  %v1271 = vadd.f32 %v1270, %v1208
  %v1272 = vadd.f32 %v1271, %v1209
  %v1273 = vadd.f32 %v1272, %v1210
  %v1274 = vadd.f32 %v1273, %v1211
  %v1275 = vrot.slane %v1274, 4
  %v1276 = vadd.f32 %v1274, %v1275
  %v1277 = vrot.slane %v1276, 2
  %v1278 = vadd.f32 %v1276, %v1277
  %v1279 = vrot.slane %v1278, 1
  %v1280 = vadd.f32 %v1278, %v1279
  %1281 = vst [vmem:[%s8] sm:$0x1] %v1280
  // Predicated region
  $region26: #{bottleneck_forward.6} parent=0 // pred_check
    _
  $region27: #{bottleneck_forward.6} parent=0 // pred_check_branch
    %1283 = sbr.rel (0) target = $region29
  $region28: #{bottleneck_forward.6} parent=0 // pred_region
    _
  $region29: #{bottleneck_forward.6} parent=0 // pred_fallthru
    _
  // Predicated region
  $region30: #{bottleneck_forward.6} parent=0 // pred_check
    _
  $region31: #{bottleneck_forward.6} parent=0 // pred_check_branch
    %1285 = sbr.rel (0) target = $region33
  $region32: #{bottleneck_forward.6} parent=0 // pred_region
    _
  $region33: #{bottleneck_forward.6} parent=0 // pred_fallthru
    _
  // Predicated region
  $region34: #{bottleneck_forward.6} parent=0 // pred_check
    _
  $region35: #{bottleneck_forward.6} parent=0 // pred_check_branch
    %1287 = sbr.rel (0) target = $region37
  $region36: #{bottleneck_forward.6} parent=0 // pred_region
    _
  $region37: #{bottleneck_forward.6} parent=0 // pred_fallthru
    _
  // Predicated region
  $region38: #{bottleneck_forward.6} parent=0 // pred_check
    _
  $region39: #{bottleneck_forward.6} parent=0 // pred_check_branch
    %1289 = sbr.rel (0) target = $region41
  $region40: #{bottleneck_forward.6} parent=0 // pred_region
    _
  $region41: #{bottleneck_forward.6} parent=0 // pred_fallthru
    _
  // Predicated region
  $region42: #{bottleneck_forward.6} parent=0 // pred_check
    _
  $region43: #{bottleneck_forward.6} parent=0 // pred_check_branch
    %1291 = sbr.rel (0) target = $region45
  $region44: #{bottleneck_forward.6} parent=0 // pred_region
    _
  $region45: #{bottleneck_forward.6} parent=0 // pred_fallthru
    _
  // Predicated region
  $region46: #{bottleneck_forward.6} parent=0 // pred_check
    _
  $region47: #{bottleneck_forward.6} parent=0 // pred_check_branch
    %1293 = sbr.rel (0) target = $region49
  $region48: #{bottleneck_forward.6} parent=0 // pred_region
    _
  $region49: #{bottleneck_forward.6} parent=0 // pred_fallthru
    _

// kernel: bottleneck_forward.5
$region0: #{bottleneck_forward.5}
  #allocation0 [shape = 'u32[]', space=smem, size = 0x4, offset = 0x4, fixed_abs, tag = 'smem constant byte address 0x4 - core index']
  #allocation1 [shape = 'u32[144,128]{1,0:T(1,128)}', space=vmem, size = 0x12000, scoped, tag = 'internal scratch']
  #allocation2 [shape = 'f32[1,18,18,128]{3,2,1,0:T(8,128)}', space=vmem, size = 0x36000, scoped, tag = 'scratch operand']
  #allocation3 [shape = 'f32[256,128]{1,0:T(8,128)}', space=vmem, size = 0x20000, scoped, tag = 'scratch operand']
  %s0 = inlined_call_operand.vmem [shape: bf16[2,16,16,128], index: 0, kind: input, shape index: {}]
  %s1 = inlined_call_operand.vmem [shape: f32[1,128], index: 1, kind: input, shape index: {}]
  %s2 = inlined_call_operand.vmem [shape: f32[1,128], index: 2, kind: input, shape index: {}]
  %s3 = inlined_call_operand.vmem [shape: f32[1,128], index: 3, kind: input, shape index: {}]
  %s4 = inlined_call_operand.vmem [shape: f32[1,128], index: 4, kind: input, shape index: {}]
  %s5 = inlined_call_operand.vmem [shape: bf16[1152,128], index: 5, kind: input, shape index: {}]
  %s6 = inlined_call_operand.vmem [shape: bf16[2,16,16,128], index: 6, kind: output, shape index: {0}]
  %s7 = inlined_call_operand.vmem [shape: f32[2,1,128], index: 7, kind: output, shape index: {1}]
  %s8 = inlined_call_operand.vmem [shape: f32[2,1,128], index: 8, kind: output, shape index: {2}]
  %9 = xla_tuple %s6, %s7, %s8
  %s10 = sld [smem:[#allocation0]]
  $region73: #{bottleneck_forward.5} parent=0
    _
  %s12 = ssub.s32 1, %s10
  %s13 = scalar_select 0, %s12, %s10
  loop: start=0, step=1, limit=4
  $region2: #{bottleneck_forward.5} parent=0 // loop_pre_header
    _
  $region3: #{bottleneck_forward.5} parent=0 // loop_header
    %s15 = sphi 0, %s19
    %p16 = scmp.ge.s32.totalorder %s15, 4
    %s25 = sphi 0, %s27
    %s28 = sphi 0, %s25
    %s29 = sphi 0, %s28
    %s45 = sphi 0, %s29
    %s49 = sphi 0, %s49
    %s51 = sphi 0, %s49
    %s52 = sphi 0, %s51
    %s66 = sphi 0, %s52
    %s70 = sphi 0, %s70
    %s72 = sphi 0, %s70
    %s73 = sphi 0, %s72
    %s87 = sphi 0, %s73
    %s91 = sphi 0, %s91
    %s93 = sphi 0, %s91
    %s94 = sphi 0, %s93
    %s108 = sphi 0, %s94
    %s112 = sphi 0, %s112
    %s114 = sphi 0, %s112
    %s115 = sphi 0, %s114
    %s129 = sphi 0, %s115
    %s133 = sphi 0, %s133
    %s135 = sphi 0, %s133
    %s136 = sphi 0, %s135
    %s150 = sphi 0, %s136
    %s156 = sphi 0, %s158
    %s159 = sphi 0, %s156
    %s160 = sphi 0, %s159
    %s176 = sphi 0, %s160
    %s182 = sphi 0, %s184
    %s185 = sphi 0, %s182
    %s186 = sphi 0, %s185
    %s202 = sphi 0, %s186
    %s208 = sphi 0, %s210
    %s211 = sphi 0, %s208
    %s212 = sphi 0, %s211
    %s228 = sphi 0, %s212
  $region4: #{bottleneck_forward.5} parent=0 // loop_header_branch
    %18 = sbr.rel (%p16) target = $region8
  $region5: #{bottleneck_forward.5} parent=0 // loop_body
    %s20 = ssub.s32 %s15, 1
    %s21 = ssub.s32 %s15, 2
    %s22 = sadd.s32 %s15, 1
    %s23 = ssub.s32 %s15, %s22
    %p24 = scmp.eq.s32.totalorder %s23, 0
    %s26 = sadd.s32 %s25, 1
    %s27 = scalar_select %p24, %s25, %s26
    %p30 = pneg %p24
    %p31 = scmp.eq.s32.totalorder %s15, 1
    %p32 = por %p30, %p31
    %p33 = scmp.ne.s32.totalorder %s25, %s28
    %p34 = scmp.eq.s32.totalorder %s15, 0
    %p35 = por %p33, %p34
    %p36 = scmp.ne.s32.totalorder %s25, %s28
    %p37 = scmp.eq.s32.totalorder %s20, 1
    %p38 = por %p36, %p37
    %p39 = scmp.ne.s32.totalorder %s28, %s29
    %p40 = scmp.eq.s32.totalorder %s20, 0
    %p41 = por %p39, %p40
    %p42 = scmp.ne.s32.totalorder %s28, %s29
    %p43 = scmp.eq.s32.totalorder %s21, 1
    %p44 = por %p42, %p43
    %p46 = scmp.ne.s32.totalorder %s29, %s45
    %p47 = scmp.eq.s32.totalorder %s21, 0
    %p48 = por %p46, %p47
    %s50 = sadd.s32 %s49, 1
    %p53 = scmp.eq.s32.totalorder %s15, 1
    %p54 = scmp.ne.s32.totalorder %s49, %s51
    %p55 = scmp.eq.s32.totalorder %s15, 0
    %p56 = por %p54, %p55
    %p57 = scmp.ne.s32.totalorder %s49, %s51
    %p58 = scmp.eq.s32.totalorder %s20, 1
    %p59 = por %p57, %p58
    %p60 = scmp.ne.s32.totalorder %s51, %s52
    %p61 = scmp.eq.s32.totalorder %s20, 0
    %p62 = por %p60, %p61
    %p63 = scmp.ne.s32.totalorder %s51, %s52
    %p64 = scmp.eq.s32.totalorder %s21, 1
    %p65 = por %p63, %p64
    %p67 = scmp.ne.s32.totalorder %s52, %s66
    %p68 = scmp.eq.s32.totalorder %s21, 0
    %p69 = por %p67, %p68
    %s71 = sadd.s32 %s70, 1
    %p74 = scmp.eq.s32.totalorder %s15, 1
    %p75 = scmp.ne.s32.totalorder %s70, %s72
    %p76 = scmp.eq.s32.totalorder %s15, 0
    %p77 = por %p75, %p76
    %p78 = scmp.ne.s32.totalorder %s70, %s72
    %p79 = scmp.eq.s32.totalorder %s20, 1
    %p80 = por %p78, %p79
    %p81 = scmp.ne.s32.totalorder %s72, %s73
    %p82 = scmp.eq.s32.totalorder %s20, 0
    %p83 = por %p81, %p82
    %p84 = scmp.ne.s32.totalorder %s72, %s73
    %p85 = scmp.eq.s32.totalorder %s21, 1
    %p86 = por %p84, %p85
    %p88 = scmp.ne.s32.totalorder %s73, %s87
    %p89 = scmp.eq.s32.totalorder %s21, 0
    %p90 = por %p88, %p89
    %s92 = sadd.s32 %s91, 1
    %p95 = scmp.eq.s32.totalorder %s15, 1
    %p96 = scmp.ne.s32.totalorder %s91, %s93
    %p97 = scmp.eq.s32.totalorder %s15, 0
    %p98 = por %p96, %p97
    %p99 = scmp.ne.s32.totalorder %s91, %s93
    %p100 = scmp.eq.s32.totalorder %s20, 1
    %p101 = por %p99, %p100
    %p102 = scmp.ne.s32.totalorder %s93, %s94
    %p103 = scmp.eq.s32.totalorder %s20, 0
    %p104 = por %p102, %p103
    %p105 = scmp.ne.s32.totalorder %s93, %s94
    %p106 = scmp.eq.s32.totalorder %s21, 1
    %p107 = por %p105, %p106
    %p109 = scmp.ne.s32.totalorder %s94, %s108
    %p110 = scmp.eq.s32.totalorder %s21, 0
    %p111 = por %p109, %p110
    %s113 = sadd.s32 %s112, 1
    %p116 = scmp.eq.s32.totalorder %s15, 1
    %p117 = scmp.ne.s32.totalorder %s112, %s114
    %p118 = scmp.eq.s32.totalorder %s15, 0
    %p119 = por %p117, %p118
    %p120 = scmp.ne.s32.totalorder %s112, %s114
    %p121 = scmp.eq.s32.totalorder %s20, 1
    %p122 = por %p120, %p121
    %p123 = scmp.ne.s32.totalorder %s114, %s115
    %p124 = scmp.eq.s32.totalorder %s20, 0
    %p125 = por %p123, %p124
    %p126 = scmp.ne.s32.totalorder %s114, %s115
    %p127 = scmp.eq.s32.totalorder %s21, 1
    %p128 = por %p126, %p127
    %p130 = scmp.ne.s32.totalorder %s115, %s129
    %p131 = scmp.eq.s32.totalorder %s21, 0
    %p132 = por %p130, %p131
    %s134 = sadd.s32 %s133, 1
    %p137 = scmp.eq.s32.totalorder %s15, 1
    %p138 = scmp.ne.s32.totalorder %s133, %s135
    %p139 = scmp.eq.s32.totalorder %s15, 0
    %p140 = por %p138, %p139
    %p141 = scmp.ne.s32.totalorder %s133, %s135
    %p142 = scmp.eq.s32.totalorder %s20, 1
    %p143 = por %p141, %p142
    %p144 = scmp.ne.s32.totalorder %s135, %s136
    %p145 = scmp.eq.s32.totalorder %s20, 0
    %p146 = por %p144, %p145
    %p147 = scmp.ne.s32.totalorder %s135, %s136
    %p148 = scmp.eq.s32.totalorder %s21, 1
    %p149 = por %p147, %p148
    %p151 = scmp.ne.s32.totalorder %s136, %s150
    %p152 = scmp.eq.s32.totalorder %s21, 0
    %p153 = por %p151, %p152
    %s154 = ssub.s32 %s15, %s22
    %p155 = scmp.eq.s32.totalorder %s154, 0
    %s157 = sadd.s32 %s156, 1
    %s158 = scalar_select %p155, %s156, %s157
    %p161 = pneg %p155
    %p162 = scmp.eq.s32.totalorder %s15, 1
    %p163 = por %p161, %p162
    %p164 = scmp.ne.s32.totalorder %s156, %s159
    %p165 = scmp.eq.s32.totalorder %s15, 0
    %p166 = por %p164, %p165
    %p167 = scmp.ne.s32.totalorder %s156, %s159
    %p168 = scmp.eq.s32.totalorder %s20, 1
    %p169 = por %p167, %p168
    %p170 = scmp.ne.s32.totalorder %s159, %s160
    %p171 = scmp.eq.s32.totalorder %s20, 0
    %p172 = por %p170, %p171
    %p173 = scmp.ne.s32.totalorder %s159, %s160
    %p174 = scmp.eq.s32.totalorder %s21, 1
    %p175 = por %p173, %p174
    %p177 = scmp.ne.s32.totalorder %s160, %s176
    %p178 = scmp.eq.s32.totalorder %s21, 0
    %p179 = por %p177, %p178
    %s180 = ssub.s32 %s15, %s22
    %p181 = scmp.eq.s32.totalorder %s180, 0
    %s183 = sadd.s32 %s182, 1
    %s184 = scalar_select %p181, %s182, %s183
    %p187 = pneg %p181
    %p188 = scmp.eq.s32.totalorder %s15, 1
    %p189 = por %p187, %p188
    %p190 = scmp.ne.s32.totalorder %s182, %s185
    %p191 = scmp.eq.s32.totalorder %s15, 0
    %p192 = por %p190, %p191
    %p193 = scmp.ne.s32.totalorder %s182, %s185
    %p194 = scmp.eq.s32.totalorder %s20, 1
    %p195 = por %p193, %p194
    %p196 = scmp.ne.s32.totalorder %s185, %s186
    %p197 = scmp.eq.s32.totalorder %s20, 0
    %p198 = por %p196, %p197
    %p199 = scmp.ne.s32.totalorder %s185, %s186
    %p200 = scmp.eq.s32.totalorder %s21, 1
    %p201 = por %p199, %p200
    %p203 = scmp.ne.s32.totalorder %s186, %s202
    %p204 = scmp.eq.s32.totalorder %s21, 0
    %p205 = por %p203, %p204
    %s206 = ssub.s32 %s15, %s22
    %p207 = scmp.eq.s32.totalorder %s206, 0
    %s209 = sadd.s32 %s208, 1
    %s210 = scalar_select %p207, %s208, %s209
    %p213 = pneg %p207
    %p214 = scmp.eq.s32.totalorder %s15, 1
    %p215 = por %p213, %p214
    %p216 = scmp.ne.s32.totalorder %s208, %s211
    %p217 = scmp.eq.s32.totalorder %s15, 0
    %p218 = por %p216, %p217
    %p219 = scmp.ne.s32.totalorder %s208, %s211
    %p220 = scmp.eq.s32.totalorder %s20, 1
    %p221 = por %p219, %p220
    %p222 = scmp.ne.s32.totalorder %s211, %s212
    %p223 = scmp.eq.s32.totalorder %s20, 0
    %p224 = por %p222, %p223
    %p225 = scmp.ne.s32.totalorder %s211, %s212
    %p226 = scmp.eq.s32.totalorder %s21, 1
    %p227 = por %p225, %p226
    %p229 = scmp.ne.s32.totalorder %s212, %s228
    %p230 = scmp.eq.s32.totalorder %s21, 0
    %p231 = por %p229, %p230
    %p232 = scmp.le.s32.totalorder 1, %s15
    %p233 = scmp.lt.s32.totalorder %s15, 3
    %p234 = pnand %p232, %p233
    %p235 = pneg %p234
    // Predicated region
    $region9: #{bottleneck_forward.5} parent=5 // pred_check
      _
    $region10: #{bottleneck_forward.5} parent=5 // pred_check_branch
      %237 = sbr.rel (%p234) target = $region12
    $region11: #{bottleneck_forward.5} parent=5 // pred_region
      %s238 = ssub.s32 %s15, 1
      // Predicated region
      $region13: #{bottleneck_forward.5} parent=11 // pred_check
        %p239 = pneg %p62
      $region14: #{bottleneck_forward.5} parent=11 // pred_check_branch
        %241 = sbr.rel (%p239) target = $region16
      $region15: #{bottleneck_forward.5} parent=11 // pred_region
        _
      $region16: #{bottleneck_forward.5} parent=11 // pred_fallthru
        _
      // Predicated region
      $region17: #{bottleneck_forward.5} parent=11 // pred_check
        %p242 = pneg %p83
      $region18: #{bottleneck_forward.5} parent=11 // pred_check_branch
        %244 = sbr.rel (%p242) target = $region20
      $region19: #{bottleneck_forward.5} parent=11 // pred_region
        _
      $region20: #{bottleneck_forward.5} parent=11 // pred_fallthru
        _
      // Predicated region
      $region21: #{bottleneck_forward.5} parent=11 // pred_check
        %p245 = pneg %p104
      $region22: #{bottleneck_forward.5} parent=11 // pred_check_branch
        %247 = sbr.rel (%p245) target = $region24
      $region23: #{bottleneck_forward.5} parent=11 // pred_region
        _
      $region24: #{bottleneck_forward.5} parent=11 // pred_fallthru
        _
      // Predicated region
      $region25: #{bottleneck_forward.5} parent=11 // pred_check
        %p248 = pneg %p125
      $region26: #{bottleneck_forward.5} parent=11 // pred_check_branch
        %250 = sbr.rel (%p248) target = $region28
      $region27: #{bottleneck_forward.5} parent=11 // pred_region
        _
      $region28: #{bottleneck_forward.5} parent=11 // pred_fallthru
        _
      // Predicated region
      $region29: #{bottleneck_forward.5} parent=11 // pred_check
        %p251 = pneg %p146
      $region30: #{bottleneck_forward.5} parent=11 // pred_check_branch
        %253 = sbr.rel (%p251) target = $region32
      $region31: #{bottleneck_forward.5} parent=11 // pred_region
        _
      $region32: #{bottleneck_forward.5} parent=11 // pred_fallthru
        _
    $region12: #{bottleneck_forward.5} parent=5 // pred_fallthru
      _
    %p254 = scmp.lt.s32.totalorder %s15, 2
    // Predicated region
    $region33: #{bottleneck_forward.5} parent=5 // pred_check
      %p255 = pneg %p254
    $region34: #{bottleneck_forward.5} parent=5 // pred_check_branch
      %257 = sbr.rel (%p255) target = $region36
    $region35: #{bottleneck_forward.5} parent=5 // pred_region
      // Predicated region
      $region37: #{bottleneck_forward.5} parent=35 // pred_check
        %p258 = pneg %p35
      $region38: #{bottleneck_forward.5} parent=35 // pred_check_branch
        %260 = sbr.rel (%p258) target = $region40
      $region39: #{bottleneck_forward.5} parent=35 // pred_region
        %p261 = scmp.lt.s32.totalorder %s15, 1
        %s262 = scalar_select %p261, %s15, 1
        %s263 = smul.addr %s262, 32
        %s264 = smul.addr %s263, 4
        %s265 = scalar_lea.vmem %s0, %s264
      $region40: #{bottleneck_forward.5} parent=35 // pred_fallthru
        _
    $region36: #{bottleneck_forward.5} parent=5 // pred_fallthru
      _
    %p266 = scmp.le.s32.totalorder 1, %s15
    %p267 = scmp.lt.s32.totalorder %s15, 3
    %p268 = pnand %p266, %p267
    %p269 = pneg %p268
    // Predicated region
    $region41: #{bottleneck_forward.5} parent=5 // pred_check
      _
    $region42: #{bottleneck_forward.5} parent=5 // pred_check_branch
      %271 = sbr.rel (%p268) target = $region44
    $region43: #{bottleneck_forward.5} parent=5 // pred_region
      %s272 = ssub.s32 %s15, 1
      %p273 = scmp.lt.s32.totalorder %s20, 1
      %s274 = scalar_select %p273, %s20, 1
      %s275 = smul.addr %s274, 32
      %s276 = smul.addr %s275, 4
      %s277 = scalar_lea.vmem %s0, %s276
      %p278 = pneg %p41
      %p279 = pneg %p38
      %p280 = pneg %p62
      %p281 = pneg %p59
      %p282 = pneg %p83
      %p283 = pneg %p80
      %p284 = pneg %p104
      %p285 = pneg %p101
      %p286 = pneg %p125
      %p287 = pneg %p122
      %p288 = pneg %p146
      %p289 = pneg %p143
      %p290 = pneg %p172
      %p291 = pneg %p169
      %p292 = scmp.lt.s32.totalorder %s20, 1
      %s293 = scalar_select %p292, %s20, 1
      %s294 = smul.addr %s293, 32
      %s295 = smul.addr %s294, 4
      %s296 = scalar_lea.vmem %s6, %s295
      %p297 = pneg %p198
      %p298 = pneg %p195
      %p299 = scmp.lt.s32.totalorder %s20, 1
      %s300 = scalar_select %p299, %s20, 1
      %s301 = scalar_lea.vmem %s7, %s300
      %p302 = pneg %p224
      %p303 = pneg %p221
      %p304 = scmp.lt.s32.totalorder %s20, 1
      %s305 = scalar_select %p304, %s20, 1
      %s306 = scalar_lea.vmem %s8, %s305
      %p307 = scmp.lt.s32.totalorder %s20, 1
      %s308 = scalar_select %p307, %s20, 1
      %s309 = smul.addr %s308, 32
      %s310 = smul.addr %s309, 4
      %s311 = scalar_lea.vmem %s0, %s310
      %p312 = scmp.lt.s32.totalorder %s20, 1
      %s313 = scalar_select %p312, %s20, 1
      %s314 = smul.addr %s313, 32
      %s315 = smul.addr %s314, 4
      %s316 = scalar_lea.vmem %s6, %s315
      %p317 = scmp.lt.s32.totalorder %s20, 1
      %s318 = scalar_select %p317, %s20, 1
      %s319 = scalar_lea.vmem %s7, %s318
      %p320 = scmp.lt.s32.totalorder %s20, 1
      %s321 = scalar_select %p320, %s20, 1
      %s322 = scalar_lea.vmem %s8, %s321
      %v324 = vld [vmem:[%s1] sm:$0x1]
      %v325 = vmul.f32 %v324, 0.001953125
      %v326 = vld [vmem:[%s2] sm:$0x1]
      %v327 = vmul.f32 %v326, 0.001953125
      %v328 = vmul.f32 %v325, %v325
      %v329 = vsub.f32 %v327, %v328
      %v330 = vmax.f32 %v329, 0.0
      %v331 = vld [vmem:[%s3] sm:$0x1]
      %v332 = vadd.f32 %v330, 1e-05
      %v333 = vrsqrt.pop %v332
      %v334 = vmul.f32 %v331, %v333
      %v335 = vld [vmem:[%s4] sm:$0x1]
      %v336 = vmul.f32 %v325, %v334
      %v337 = vsub.f32 %v335, %v336
      %v338 = vld [vmem:[%s311] sm:$0xf]
      %v339 = vld [vmem:[%s311 + $0x4] sm:$0xf]
      %v340 = vld [vmem:[%s311 + $0x8] sm:$0xf]
      %v341 = vld [vmem:[%s311 + $0xc] sm:$0xf]
      %v342 = vld [vmem:[%s311 + $0x10] sm:$0xf]
      %v343 = vld [vmem:[%s311 + $0x14] sm:$0xf]
      %v344 = vld [vmem:[%s311 + $0x18] sm:$0xf]
      %v345 = vld [vmem:[%s311 + $0x1c] sm:$0xf]
      %v346 = vld [vmem:[%s311 + $0x20] sm:$0xf]
      %v347 = vld [vmem:[%s311 + $0x24] sm:$0xf]
      %v348 = vld [vmem:[%s311 + $0x28] sm:$0xf]
      %v349 = vld [vmem:[%s311 + $0x2c] sm:$0xf]
      %v350 = vld [vmem:[%s311 + $0x30] sm:$0xf]
      %v351 = vld [vmem:[%s311 + $0x34] sm:$0xf]
      %v352 = vld [vmem:[%s311 + $0x38] sm:$0xf]
      %v353 = vld [vmem:[%s311 + $0x3c] sm:$0xf]
      %v354 = vld [vmem:[%s311 + $0x40] sm:$0xf]
      %v355 = vld [vmem:[%s311 + $0x44] sm:$0xf]
      %v356 = vld [vmem:[%s311 + $0x48] sm:$0xf]
      %v357 = vld [vmem:[%s311 + $0x4c] sm:$0xf]
      %v358 = vld [vmem:[%s311 + $0x50] sm:$0xf]
      %v359 = vld [vmem:[%s311 + $0x54] sm:$0xf]
      %v360 = vld [vmem:[%s311 + $0x58] sm:$0xf]
      %v361 = vld [vmem:[%s311 + $0x5c] sm:$0xf]
      %v362 = vld [vmem:[%s311 + $0x60] sm:$0xf]
      %v363 = vld [vmem:[%s311 + $0x64] sm:$0xf]
      %v364 = vld [vmem:[%s311 + $0x68] sm:$0xf]
      %v365 = vld [vmem:[%s311 + $0x6c] sm:$0xf]
      %v366 = vld [vmem:[%s311 + $0x70] sm:$0xf]
      %v367 = vld [vmem:[%s311 + $0x74] sm:$0xf]
      %v368 = vld [vmem:[%s311 + $0x78] sm:$0xf]
      %v369 = vld [vmem:[%s311 + $0x7c] sm:$0xf]
      %v370 = vunpack.c.l.bf16 %v338
      %v371 = vunpack.c.l.bf16 %v339
      %v372 = vunpack.c.l.bf16 %v340
      %v373 = vunpack.c.l.bf16 %v341
      %v374 = vunpack.c.l.bf16 %v342
      %v375 = vunpack.c.l.bf16 %v343
      %v376 = vunpack.c.l.bf16 %v344
      %v377 = vunpack.c.l.bf16 %v345
      %v378 = vunpack.c.l.bf16 %v346
      %v379 = vunpack.c.l.bf16 %v347
      %v380 = vunpack.c.l.bf16 %v348
      %v381 = vunpack.c.l.bf16 %v349
      %v382 = vunpack.c.l.bf16 %v350
      %v383 = vunpack.c.l.bf16 %v351
      %v384 = vunpack.c.l.bf16 %v352
      %v385 = vunpack.c.l.bf16 %v353
      %v386 = vunpack.c.l.bf16 %v354
      %v387 = vunpack.c.l.bf16 %v355
      %v388 = vunpack.c.l.bf16 %v356
      %v389 = vunpack.c.l.bf16 %v357
      %v390 = vunpack.c.l.bf16 %v358
      %v391 = vunpack.c.l.bf16 %v359
      %v392 = vunpack.c.l.bf16 %v360
      %v393 = vunpack.c.l.bf16 %v361
      %v394 = vunpack.c.l.bf16 %v362
      %v395 = vunpack.c.l.bf16 %v363
      %v396 = vunpack.c.l.bf16 %v364
      %v397 = vunpack.c.l.bf16 %v365
      %v398 = vunpack.c.l.bf16 %v366
      %v399 = vunpack.c.l.bf16 %v367
      %v400 = vunpack.c.l.bf16 %v368
      %v401 = vunpack.c.l.bf16 %v369
      %v403 = vlaneseq
      %v404 = vshrl.u32 %v403, 7
      %v405 = vsub.s32 0, %v404
      %v406 = vrot.slane %v334, %v405
      %v408 = vmul.f32 %v370, %v406
      %v409 = vmul.f32 %v371, %v406
      %v410 = vmul.f32 %v372, %v406
      %v411 = vmul.f32 %v373, %v406
      %v412 = vmul.f32 %v374, %v406
      %v413 = vmul.f32 %v375, %v406
      %v414 = vmul.f32 %v376, %v406
      %v415 = vmul.f32 %v377, %v406
      %v416 = vmul.f32 %v378, %v406
      %v417 = vmul.f32 %v379, %v406
      %v418 = vmul.f32 %v380, %v406
      %v419 = vmul.f32 %v381, %v406
      %v420 = vmul.f32 %v382, %v406
      %v421 = vmul.f32 %v383, %v406
      %v422 = vmul.f32 %v384, %v406
      %v423 = vmul.f32 %v385, %v406
      %v424 = vmul.f32 %v386, %v406
      %v425 = vmul.f32 %v387, %v406
      %v426 = vmul.f32 %v388, %v406
      %v427 = vmul.f32 %v389, %v406
      %v428 = vmul.f32 %v390, %v406
      %v429 = vmul.f32 %v391, %v406
      %v430 = vmul.f32 %v392, %v406
      %v431 = vmul.f32 %v393, %v406
      %v432 = vmul.f32 %v394, %v406
      %v433 = vmul.f32 %v395, %v406
      %v434 = vmul.f32 %v396, %v406
      %v435 = vmul.f32 %v397, %v406
      %v436 = vmul.f32 %v398, %v406
      %v437 = vmul.f32 %v399, %v406
      %v438 = vmul.f32 %v400, %v406
      %v439 = vmul.f32 %v401, %v406
      %v441 = vlaneseq
      %v442 = vshrl.u32 %v441, 7
      %v443 = vsub.s32 0, %v442
      %v444 = vrot.slane %v337, %v443
      %v446 = vadd.f32 %v408, %v444
      %v447 = vadd.f32 %v409, %v444
      %v448 = vadd.f32 %v410, %v444
      %v449 = vadd.f32 %v411, %v444
      %v450 = vadd.f32 %v412, %v444
      %v451 = vadd.f32 %v413, %v444
      %v452 = vadd.f32 %v414, %v444
      %v453 = vadd.f32 %v415, %v444
      %v454 = vadd.f32 %v416, %v444
      %v455 = vadd.f32 %v417, %v444
      %v456 = vadd.f32 %v418, %v444
      %v457 = vadd.f32 %v419, %v444
      %v458 = vadd.f32 %v420, %v444
      %v459 = vadd.f32 %v421, %v444
      %v460 = vadd.f32 %v422, %v444
      %v461 = vadd.f32 %v423, %v444
      %v462 = vadd.f32 %v424, %v444
      %v463 = vadd.f32 %v425, %v444
      %v464 = vadd.f32 %v426, %v444
      %v465 = vadd.f32 %v427, %v444
      %v466 = vadd.f32 %v428, %v444
      %v467 = vadd.f32 %v429, %v444
      %v468 = vadd.f32 %v430, %v444
      %v469 = vadd.f32 %v431, %v444
      %v470 = vadd.f32 %v432, %v444
      %v471 = vadd.f32 %v433, %v444
      %v472 = vadd.f32 %v434, %v444
      %v473 = vadd.f32 %v435, %v444
      %v474 = vadd.f32 %v436, %v444
      %v475 = vadd.f32 %v437, %v444
      %v476 = vadd.f32 %v438, %v444
      %v477 = vadd.f32 %v439, %v444
      %v478 = vmax.f32 %v446, 0.0
      %v479 = vmax.f32 %v447, 0.0
      %v480 = vmax.f32 %v448, 0.0
      %v481 = vmax.f32 %v449, 0.0
      %v482 = vmax.f32 %v450, 0.0
      %v483 = vmax.f32 %v451, 0.0
      %v484 = vmax.f32 %v452, 0.0
      %v485 = vmax.f32 %v453, 0.0
      %v486 = vmax.f32 %v454, 0.0
      %v487 = vmax.f32 %v455, 0.0
      %v488 = vmax.f32 %v456, 0.0
      %v489 = vmax.f32 %v457, 0.0
      %v490 = vmax.f32 %v458, 0.0
      %v491 = vmax.f32 %v459, 0.0
      %v492 = vmax.f32 %v460, 0.0
      %v493 = vmax.f32 %v461, 0.0
      %v494 = vmax.f32 %v462, 0.0
      %v495 = vmax.f32 %v463, 0.0
      %v496 = vmax.f32 %v464, 0.0
      %v497 = vmax.f32 %v465, 0.0
      %v498 = vmax.f32 %v466, 0.0
      %v499 = vmax.f32 %v467, 0.0
      %v500 = vmax.f32 %v468, 0.0
      %v501 = vmax.f32 %v469, 0.0
      %v502 = vmax.f32 %v470, 0.0
      %v503 = vmax.f32 %v471, 0.0
      %v504 = vmax.f32 %v472, 0.0
      %v505 = vmax.f32 %v473, 0.0
      %v506 = vmax.f32 %v474, 0.0
      %v507 = vmax.f32 %v475, 0.0
      %v508 = vmax.f32 %v476, 0.0
      %v509 = vmax.f32 %v477, 0.0
      %510 = vst [vmem:[#allocation2] sm:$0xff] 0.0
      %511 = vst [vmem:[#allocation2 + $0x8] sm:$0xff] 0.0
      %512 = vst [vmem:[#allocation2 + $0x10] sm:$0x3] 0.0
      %s513 = scalar_lea.vmem [#allocation2], 408
      %514 = vst [vmem:[%s513] sm:$0xff] 0.0
      %515 = vst [vmem:[%s513 + $0x8] sm:$0xff] 0.0
      %516 = vst [vmem:[%s513 + $0x10] sm:$0x3] 0.0
      %s517 = scalar_lea.vmem [#allocation2], 24
      %518 = vst [vmem:[%s517] sm:$0x1] 0.0
      %519 = vst [vmem:[%s517 + $0x18] sm:$0x1] 0.0
      %520 = vst [vmem:[%s517 + $0x30] sm:$0x1] 0.0
      %521 = vst [vmem:[%s517 + $0x48] sm:$0x1] 0.0
      %522 = vst [vmem:[%s517 + $0x60] sm:$0x1] 0.0
      %523 = vst [vmem:[%s517 + $0x78] sm:$0x1] 0.0
      %524 = vst [vmem:[%s517 + $0x90] sm:$0x1] 0.0
      %525 = vst [vmem:[%s517 + $0xa8] sm:$0x1] 0.0
      %526 = vst [vmem:[%s517 + $0xc0] sm:$0x1] 0.0
      %527 = vst [vmem:[%s517 + $0xd8] sm:$0x1] 0.0
      %528 = vst [vmem:[%s517 + $0xf0] sm:$0x1] 0.0
      %529 = vst [vmem:[%s517 + $0x108] sm:$0x1] 0.0
      %530 = vst [vmem:[%s517 + $0x120] sm:$0x1] 0.0
      %531 = vst [vmem:[%s517 + $0x138] sm:$0x1] 0.0
      %532 = vst [vmem:[%s517 + $0x150] sm:$0x1] 0.0
      %533 = vst [vmem:[%s517 + $0x168] sm:$0x1] 0.0
      %534 = vst [vmem:[%s517 + $0x11] sm:$0x1] 0.0
      %535 = vst [vmem:[%s517 + $0x29] sm:$0x1] 0.0
      %536 = vst [vmem:[%s517 + $0x41] sm:$0x1] 0.0
      %537 = vst [vmem:[%s517 + $0x59] sm:$0x1] 0.0
      %538 = vst [vmem:[%s517 + $0x71] sm:$0x1] 0.0
      %539 = vst [vmem:[%s517 + $0x89] sm:$0x1] 0.0
      %540 = vst [vmem:[%s517 + $0xa1] sm:$0x1] 0.0
      %541 = vst [vmem:[%s517 + $0xb9] sm:$0x1] 0.0
      %542 = vst [vmem:[%s517 + $0xd1] sm:$0x1] 0.0
      %543 = vst [vmem:[%s517 + $0xe9] sm:$0x1] 0.0
      %544 = vst [vmem:[%s517 + $0x101] sm:$0x1] 0.0
      %545 = vst [vmem:[%s517 + $0x119] sm:$0x1] 0.0
      %546 = vst [vmem:[%s517 + $0x131] sm:$0x1] 0.0
      %547 = vst [vmem:[%s517 + $0x149] sm:$0x1] 0.0
      %548 = vst [vmem:[%s517 + $0x161] sm:$0x1] 0.0
      %549 = vst [vmem:[%s517 + $0x179] sm:$0x1] 0.0
      %550 = vst [vmem:[%s517 + $0x1] sm:$0xff] %v478
      %551 = vst [vmem:[%s517 + $0x9] sm:$0xff] %v479
      %552 = vst [vmem:[%s517 + $0x19] sm:$0xff] %v480
      %553 = vst [vmem:[%s517 + $0x21] sm:$0xff] %v481
      %554 = vst [vmem:[%s517 + $0x31] sm:$0xff] %v482
      %555 = vst [vmem:[%s517 + $0x39] sm:$0xff] %v483
      %556 = vst [vmem:[%s517 + $0x49] sm:$0xff] %v484
      %557 = vst [vmem:[%s517 + $0x51] sm:$0xff] %v485
      %558 = vst [vmem:[%s517 + $0x61] sm:$0xff] %v486
      %559 = vst [vmem:[%s517 + $0x69] sm:$0xff] %v487
      %560 = vst [vmem:[%s517 + $0x79] sm:$0xff] %v488
      %561 = vst [vmem:[%s517 + $0x81] sm:$0xff] %v489
      %562 = vst [vmem:[%s517 + $0x91] sm:$0xff] %v490
      %563 = vst [vmem:[%s517 + $0x99] sm:$0xff] %v491
      %564 = vst [vmem:[%s517 + $0xa9] sm:$0xff] %v492
      %565 = vst [vmem:[%s517 + $0xb1] sm:$0xff] %v493
      %566 = vst [vmem:[%s517 + $0xc1] sm:$0xff] %v494
      %567 = vst [vmem:[%s517 + $0xc9] sm:$0xff] %v495
      %568 = vst [vmem:[%s517 + $0xd9] sm:$0xff] %v496
      %569 = vst [vmem:[%s517 + $0xe1] sm:$0xff] %v497
      %570 = vst [vmem:[%s517 + $0xf1] sm:$0xff] %v498
      %571 = vst [vmem:[%s517 + $0xf9] sm:$0xff] %v499
      %572 = vst [vmem:[%s517 + $0x109] sm:$0xff] %v500
      %573 = vst [vmem:[%s517 + $0x111] sm:$0xff] %v501
      %574 = vst [vmem:[%s517 + $0x121] sm:$0xff] %v502
      %575 = vst [vmem:[%s517 + $0x129] sm:$0xff] %v503
      %576 = vst [vmem:[%s517 + $0x139] sm:$0xff] %v504
      %577 = vst [vmem:[%s517 + $0x141] sm:$0xff] %v505
      %578 = vst [vmem:[%s517 + $0x151] sm:$0xff] %v506
      %579 = vst [vmem:[%s517 + $0x159] sm:$0xff] %v507
      %580 = vst [vmem:[%s517 + $0x169] sm:$0xff] %v508
      %581 = vst [vmem:[%s517 + $0x171] sm:$0xff] %v509
      %v582 = vld [vmem:[#allocation2] sm:$0xff]
      %v583 = vld [vmem:[#allocation2 + $0x8] sm:$0xff]
      %v584 = vld [vmem:[#allocation2 + $0x18] sm:$0xff]
      %v585 = vld [vmem:[#allocation2 + $0x20] sm:$0xff]
      %v586 = vld [vmem:[#allocation2 + $0x30] sm:$0xff]
      %v587 = vld [vmem:[#allocation2 + $0x38] sm:$0xff]
      %v588 = vld [vmem:[#allocation2 + $0x48] sm:$0xff]
      %v589 = vld [vmem:[#allocation2 + $0x50] sm:$0xff]
      %v590 = vld [vmem:[#allocation2 + $0x60] sm:$0xff]
      %v591 = vld [vmem:[#allocation2 + $0x68] sm:$0xff]
      %v592 = vld [vmem:[#allocation2 + $0x78] sm:$0xff]
      %v593 = vld [vmem:[#allocation2 + $0x80] sm:$0xff]
      %v594 = vld [vmem:[#allocation2 + $0x90] sm:$0xff]
      %v595 = vld [vmem:[#allocation2 + $0x98] sm:$0xff]
      %v596 = vld [vmem:[#allocation2 + $0xa8] sm:$0xff]
      %v597 = vld [vmem:[#allocation2 + $0xb0] sm:$0xff]
      %v598 = vld [vmem:[#allocation2 + $0xc0] sm:$0xff]
      %v599 = vld [vmem:[#allocation2 + $0xc8] sm:$0xff]
      %v600 = vld [vmem:[#allocation2 + $0xd8] sm:$0xff]
      %v601 = vld [vmem:[#allocation2 + $0xe0] sm:$0xff]
      %v602 = vld [vmem:[#allocation2 + $0xf0] sm:$0xff]
      %v603 = vld [vmem:[#allocation2 + $0xf8] sm:$0xff]
      %v604 = vld [vmem:[#allocation2 + $0x108] sm:$0xff]
      %v605 = vld [vmem:[#allocation2 + $0x110] sm:$0xff]
      %v606 = vld [vmem:[#allocation2 + $0x120] sm:$0xff]
      %v607 = vld [vmem:[#allocation2 + $0x128] sm:$0xff]
      %v608 = vld [vmem:[#allocation2 + $0x138] sm:$0xff]
      %v609 = vld [vmem:[#allocation2 + $0x140] sm:$0xff]
      %v610 = vld [vmem:[#allocation2 + $0x150] sm:$0xff]
      %v611 = vld [vmem:[#allocation2 + $0x158] sm:$0xff]
      %v612 = vld [vmem:[#allocation2 + $0x168] sm:$0xff]
      %v613 = vld [vmem:[#allocation2 + $0x170] sm:$0xff]
      %v614 = vpack.c.bf16 %v583, %v582
      %v615 = vpack.c.bf16 %v585, %v584
      %v616 = vpack.c.bf16 %v587, %v586
      %v617 = vpack.c.bf16 %v589, %v588
      %v618 = vpack.c.bf16 %v591, %v590
      %v619 = vpack.c.bf16 %v593, %v592
      %v620 = vpack.c.bf16 %v595, %v594
      %v621 = vpack.c.bf16 %v597, %v596
      %v622 = vpack.c.bf16 %v599, %v598
      %v623 = vpack.c.bf16 %v601, %v600
      %v624 = vpack.c.bf16 %v603, %v602
      %v625 = vpack.c.bf16 %v605, %v604
      %v626 = vpack.c.bf16 %v607, %v606
      %v627 = vpack.c.bf16 %v609, %v608
      %v628 = vpack.c.bf16 %v611, %v610
      %v629 = vpack.c.bf16 %v613, %v612
      %v630 = vld [vmem:[%s5] sm:$0xf]
      %v631 = vld [vmem:[%s5 + $0x4] sm:$0xf]
      %v632 = vld [vmem:[%s5 + $0x8] sm:$0xf]
      %v633 = vld [vmem:[%s5 + $0xc] sm:$0xf]
      %v634 = vld [vmem:[%s5 + $0x10] sm:$0xf]
      %v635 = vld [vmem:[%s5 + $0x14] sm:$0xf]
      %v636 = vld [vmem:[%s5 + $0x18] sm:$0xf]
      %v637 = vld [vmem:[%s5 + $0x1c] sm:$0xf]
      %v638 = vld [vmem:[%s5 + $0x20] sm:$0xf]
      %v639 = vld [vmem:[%s5 + $0x24] sm:$0xf]
      %v640 = vld [vmem:[%s5 + $0x28] sm:$0xf]
      %v641 = vld [vmem:[%s5 + $0x2c] sm:$0xf]
      %v642 = vld [vmem:[%s5 + $0x30] sm:$0xf]
      %v643 = vld [vmem:[%s5 + $0x34] sm:$0xf]
      %v644 = vld [vmem:[%s5 + $0x38] sm:$0xf]
      %v645 = vld [vmem:[%s5 + $0x3c] sm:$0xf]
      %v662 = vunpack.c.l.b16 %v630
      %v663 = vunpack.c.l.b16 %v631
      %v664 = vunpack.c.l.b16 %v632
      %v665 = vunpack.c.l.b16 %v633
      %v666 = vunpack.c.l.b16 %v634
      %v667 = vunpack.c.l.b16 %v635
      %v668 = vunpack.c.l.b16 %v636
      %v669 = vunpack.c.l.b16 %v637
      %v670 = vunpack.c.l.b16 %v638
      %v671 = vunpack.c.l.b16 %v639
      %v672 = vunpack.c.l.b16 %v640
      %v673 = vunpack.c.l.b16 %v641
      %v674 = vunpack.c.l.b16 %v642
      %v675 = vunpack.c.l.b16 %v643
      %v676 = vunpack.c.l.b16 %v644
      %v677 = vunpack.c.l.b16 %v645
      %v678 = vpack.c.b16 %v663, %v662
      %v679 = vpack.c.b16 %v665, %v664
      %v680 = vpack.c.b16 %v667, %v666
      %v681 = vpack.c.b16 %v669, %v668
      %v682 = vpack.c.b16 %v671, %v670
      %v683 = vpack.c.b16 %v673, %v672
      %v684 = vpack.c.b16 %v675, %v674
      %v685 = vpack.c.b16 %v677, %v676
      %694 = vmatprep.subr.bf16.mxu0 0
      %695 = vmatpush1.bf16.msra.mxu0 %v685
      %696 = vmatprep.subr.bf16.mxu0 0
      %697 = vmatpush1.bf16.msra.mxu0 %v684
      %698 = vmatprep.subr.bf16.mxu0 0
      %699 = vmatpush1.bf16.msra.mxu0 %v683
      %700 = vmatprep.subr.bf16.mxu0 0
      %701 = vmatpush1.bf16.msra.mxu0 %v682
      %702 = vmatprep.subr.bf16.mxu0 0
      %703 = vmatpush1.bf16.msra.mxu0 %v681
      %704 = vmatprep.subr.bf16.mxu0 0
      %705 = vmatpush1.bf16.msra.mxu0 %v680
      %706 = vmatprep.subr.bf16.mxu0 0
      %707 = vmatpush1.bf16.msra.mxu0 %v679
      %708 = vmatprep.subr.bf16.mxu0 0
      %709 = vmatpush1.bf16.msra.mxu0 %v678
      %710 = vmatprep.subr.bf16.mxu0 0
      %711 = vmatpush2.bf16.msra.mxu0 0
      %712 = vmatprep.subr.bf16.mxu0 0
      %713 = vmatpush2.bf16.msra.mxu0 0
      %714 = vmatprep.subr.bf16.mxu0 0
      %715 = vmatpush2.bf16.msra.mxu0 0
      %716 = vmatprep.subr.bf16.mxu0 0
      %717 = vmatpush2.bf16.msra.mxu0 0
      %718 = vmatprep.subr.bf16.mxu0 0
      %719 = vmatpush2.bf16.msra.mxu0 0
      %720 = vmatprep.subr.bf16.mxu0 0
      %721 = vmatpush2.bf16.msra.mxu0 0
      %722 = vmatprep.subr.bf16.mxu0 0
      %723 = vmatpush2.bf16.msra.mxu0 0
      %724 = vmatprep.subr.bf16.mxu0 0
      %725 = vmatpush2.bf16.msra.mxu0 0
      %726 = vmatprep.mubr.bf16.mxu0 0
      %727 = vmatmul.mubr.bf16.gmra.mxu0 %v614
      %v728 = vpop.f32.mrf.mxu0
      %v729 = vadd.f32 0.0, %v728
      %v730 = vpop.f32.mrf.mxu0
      %v731 = vpop.f32.mrf.mxu0
      %v732 = vadd.f32 0.0, %v731
      %v733 = vpop.f32.mrf.mxu0
      %734 = vmatprep.mubr.bf16.mxu0 0
      %735 = vmatmul.mubr.bf16.gmra.mxu0 %v615
      %v736 = vpop.f32.mrf.mxu0
      %v737 = vadd.f32 0.0, %v736
      %v738 = vpop.f32.mrf.mxu0
      %v739 = vpop.f32.mrf.mxu0
      %v740 = vadd.f32 0.0, %v739
      %v741 = vpop.f32.mrf.mxu0
      %742 = vmatprep.mubr.bf16.mxu0 0
      %743 = vmatmul.mubr.bf16.gmra.mxu0 %v616
      %v744 = vpop.f32.mrf.mxu0
      %v745 = vadd.f32 0.0, %v744
      %v746 = vpop.f32.mrf.mxu0
      %v747 = vpop.f32.mrf.mxu0
      %v748 = vadd.f32 0.0, %v747
      %v749 = vpop.f32.mrf.mxu0
      %750 = vmatprep.mubr.bf16.mxu0 0
      %751 = vmatmul.mubr.bf16.gmra.mxu0 %v617
      %v752 = vpop.f32.mrf.mxu0
      %v753 = vadd.f32 0.0, %v752
      %v754 = vpop.f32.mrf.mxu0
      %v755 = vpop.f32.mrf.mxu0
      %v756 = vadd.f32 0.0, %v755
      %v757 = vpop.f32.mrf.mxu0
      %758 = vmatprep.mubr.bf16.mxu0 0
      %759 = vmatmul.mubr.bf16.gmra.mxu0 %v618
      %v760 = vpop.f32.mrf.mxu0
      %v761 = vadd.f32 0.0, %v760
      %v762 = vpop.f32.mrf.mxu0
      %v763 = vpop.f32.mrf.mxu0
      %v764 = vadd.f32 0.0, %v763
      %v765 = vpop.f32.mrf.mxu0
      %766 = vmatprep.mubr.bf16.mxu0 0
      %767 = vmatmul.mubr.bf16.gmra.mxu0 %v619
      %v768 = vpop.f32.mrf.mxu0
      %v769 = vadd.f32 0.0, %v768
      %v770 = vpop.f32.mrf.mxu0
      %v771 = vpop.f32.mrf.mxu0
      %v772 = vadd.f32 0.0, %v771
      %v773 = vpop.f32.mrf.mxu0
      %774 = vmatprep.mubr.bf16.mxu0 0
      %775 = vmatmul.mubr.bf16.gmra.mxu0 %v620
      %v776 = vpop.f32.mrf.mxu0
      %v777 = vadd.f32 0.0, %v776
      %v778 = vpop.f32.mrf.mxu0
      %v779 = vpop.f32.mrf.mxu0
      %v780 = vadd.f32 0.0, %v779
      %v781 = vpop.f32.mrf.mxu0
      %782 = vmatprep.mubr.bf16.mxu0 0
      %783 = vmatmul.mubr.bf16.gmra.mxu0 %v621
      %v784 = vpop.f32.mrf.mxu0
      %v785 = vadd.f32 0.0, %v784
      %v786 = vpop.f32.mrf.mxu0
      %v787 = vpop.f32.mrf.mxu0
      %v788 = vadd.f32 0.0, %v787
      %v789 = vpop.f32.mrf.mxu0
      %790 = vmatprep.mubr.bf16.mxu0 0
      %791 = vmatmul.mubr.bf16.gmra.mxu0 %v622
      %v792 = vpop.f32.mrf.mxu0
      %v793 = vadd.f32 0.0, %v792
      %v794 = vpop.f32.mrf.mxu0
      %v795 = vpop.f32.mrf.mxu0
      %v796 = vadd.f32 0.0, %v795
      %v797 = vpop.f32.mrf.mxu0
      %798 = vmatprep.mubr.bf16.mxu0 0
      %799 = vmatmul.mubr.bf16.gmra.mxu0 %v623
      %v800 = vpop.f32.mrf.mxu0
      %v801 = vadd.f32 0.0, %v800
      %v802 = vpop.f32.mrf.mxu0
      %v803 = vpop.f32.mrf.mxu0
      %v804 = vadd.f32 0.0, %v803
      %v805 = vpop.f32.mrf.mxu0
      %806 = vmatprep.mubr.bf16.mxu0 0
      %807 = vmatmul.mubr.bf16.gmra.mxu0 %v624
      %v808 = vpop.f32.mrf.mxu0
      %v809 = vadd.f32 0.0, %v808
      %v810 = vpop.f32.mrf.mxu0
      %v811 = vpop.f32.mrf.mxu0
      %v812 = vadd.f32 0.0, %v811
      %v813 = vpop.f32.mrf.mxu0
      %814 = vmatprep.mubr.bf16.mxu0 0
      %815 = vmatmul.mubr.bf16.gmra.mxu0 %v625
      %v816 = vpop.f32.mrf.mxu0
      %v817 = vadd.f32 0.0, %v816
      %v818 = vpop.f32.mrf.mxu0
      %v819 = vpop.f32.mrf.mxu0
      %v820 = vadd.f32 0.0, %v819
      %v821 = vpop.f32.mrf.mxu0
      %822 = vmatprep.mubr.bf16.mxu0 0
      %823 = vmatmul.mubr.bf16.gmra.mxu0 %v626
      %v824 = vpop.f32.mrf.mxu0
      %v825 = vadd.f32 0.0, %v824
      %v826 = vpop.f32.mrf.mxu0
      %v827 = vpop.f32.mrf.mxu0
      %v828 = vadd.f32 0.0, %v827
      %v829 = vpop.f32.mrf.mxu0
      %830 = vmatprep.mubr.bf16.mxu0 0
      %831 = vmatmul.mubr.bf16.gmra.mxu0 %v627
      %v832 = vpop.f32.mrf.mxu0
      %v833 = vadd.f32 0.0, %v832
      %v834 = vpop.f32.mrf.mxu0
      %v835 = vpop.f32.mrf.mxu0
      %v836 = vadd.f32 0.0, %v835
      %v837 = vpop.f32.mrf.mxu0
      %838 = vmatprep.mubr.bf16.mxu0 0
      %839 = vmatmul.mubr.bf16.gmra.mxu0 %v628
      %v840 = vpop.f32.mrf.mxu0
      %v841 = vadd.f32 0.0, %v840
      %v842 = vpop.f32.mrf.mxu0
      %v843 = vpop.f32.mrf.mxu0
      %v844 = vadd.f32 0.0, %v843
      %v845 = vpop.f32.mrf.mxu0
      %846 = vmatprep.mubr.bf16.mxu0 0
      %847 = vmatmul.mubr.bf16.gmra.mxu0 %v629
      %v848 = vpop.f32.mrf.mxu0
      %v849 = vadd.f32 0.0, %v848
      %v850 = vpop.f32.mrf.mxu0
      %v851 = vpop.f32.mrf.mxu0
      %v852 = vadd.f32 0.0, %v851
      %v853 = vpop.f32.mrf.mxu0
      %854 = vdwg.mxu0
      %855 = vst [vmem:[#allocation3] sm:$0xff] %v729
      %856 = vst [vmem:[#allocation3 + $0x8] sm:$0xff] %v732
      %857 = vst [vmem:[#allocation3 + $0x10] sm:$0xff] %v737
      %858 = vst [vmem:[#allocation3 + $0x18] sm:$0xff] %v740
      %859 = vst [vmem:[#allocation3 + $0x20] sm:$0xff] %v745
      %860 = vst [vmem:[#allocation3 + $0x28] sm:$0xff] %v748
      %861 = vst [vmem:[#allocation3 + $0x30] sm:$0xff] %v753
      %862 = vst [vmem:[#allocation3 + $0x38] sm:$0xff] %v756
      %863 = vst [vmem:[#allocation3 + $0x40] sm:$0xff] %v761
      %864 = vst [vmem:[#allocation3 + $0x48] sm:$0xff] %v764
      %865 = vst [vmem:[#allocation3 + $0x50] sm:$0xff] %v769
      %866 = vst [vmem:[#allocation3 + $0x58] sm:$0xff] %v772
      %867 = vst [vmem:[#allocation3 + $0x60] sm:$0xff] %v777
      %868 = vst [vmem:[#allocation3 + $0x68] sm:$0xff] %v780
      %869 = vst [vmem:[#allocation3 + $0x70] sm:$0xff] %v785
      %870 = vst [vmem:[#allocation3 + $0x78] sm:$0xff] %v788
      %871 = vst [vmem:[#allocation3 + $0x80] sm:$0xff] %v793
      %872 = vst [vmem:[#allocation3 + $0x88] sm:$0xff] %v796
      %873 = vst [vmem:[#allocation3 + $0x90] sm:$0xff] %v801
      %874 = vst [vmem:[#allocation3 + $0x98] sm:$0xff] %v804
      %875 = vst [vmem:[#allocation3 + $0xa0] sm:$0xff] %v809
      %876 = vst [vmem:[#allocation3 + $0xa8] sm:$0xff] %v812
      %877 = vst [vmem:[#allocation3 + $0xb0] sm:$0xff] %v817
      %878 = vst [vmem:[#allocation3 + $0xb8] sm:$0xff] %v820
      %879 = vst [vmem:[#allocation3 + $0xc0] sm:$0xff] %v825
      %880 = vst [vmem:[#allocation3 + $0xc8] sm:$0xff] %v828
      %881 = vst [vmem:[#allocation3 + $0xd0] sm:$0xff] %v833
      %882 = vst [vmem:[#allocation3 + $0xd8] sm:$0xff] %v836
      %883 = vst [vmem:[#allocation3 + $0xe0] sm:$0xff] %v841
      %884 = vst [vmem:[#allocation3 + $0xe8] sm:$0xff] %v844
      %885 = vst [vmem:[#allocation3 + $0xf0] sm:$0xff] %v849
      %886 = vst [vmem:[#allocation3 + $0xf8] sm:$0xff] %v852
      %v887 = vld [vmem:[#allocation2 + $0x1] sm:$0xff]
      %v888 = vld [vmem:[#allocation2 + $0x9] sm:$0xff]
      %v889 = vld [vmem:[#allocation2 + $0x19] sm:$0xff]
      %v890 = vld [vmem:[#allocation2 + $0x21] sm:$0xff]
      %v891 = vld [vmem:[#allocation2 + $0x31] sm:$0xff]
      %v892 = vld [vmem:[#allocation2 + $0x39] sm:$0xff]
      %v893 = vld [vmem:[#allocation2 + $0x49] sm:$0xff]
      %v894 = vld [vmem:[#allocation2 + $0x51] sm:$0xff]
      %v895 = vld [vmem:[#allocation2 + $0x61] sm:$0xff]
      %v896 = vld [vmem:[#allocation2 + $0x69] sm:$0xff]
      %v897 = vld [vmem:[#allocation2 + $0x79] sm:$0xff]
      %v898 = vld [vmem:[#allocation2 + $0x81] sm:$0xff]
      %v899 = vld [vmem:[#allocation2 + $0x91] sm:$0xff]
      %v900 = vld [vmem:[#allocation2 + $0x99] sm:$0xff]
      %v901 = vld [vmem:[#allocation2 + $0xa9] sm:$0xff]
      %v902 = vld [vmem:[#allocation2 + $0xb1] sm:$0xff]
      %v903 = vld [vmem:[#allocation2 + $0xc1] sm:$0xff]
      %v904 = vld [vmem:[#allocation2 + $0xc9] sm:$0xff]
      %v905 = vld [vmem:[#allocation2 + $0xd9] sm:$0xff]
      %v906 = vld [vmem:[#allocation2 + $0xe1] sm:$0xff]
      %v907 = vld [vmem:[#allocation2 + $0xf1] sm:$0xff]
      %v908 = vld [vmem:[#allocation2 + $0xf9] sm:$0xff]
      %v909 = vld [vmem:[#allocation2 + $0x109] sm:$0xff]
      %v910 = vld [vmem:[#allocation2 + $0x111] sm:$0xff]
      %v911 = vld [vmem:[#allocation2 + $0x121] sm:$0xff]
      %v912 = vld [vmem:[#allocation2 + $0x129] sm:$0xff]
      %v913 = vld [vmem:[#allocation2 + $0x139] sm:$0xff]
      %v914 = vld [vmem:[#allocation2 + $0x141] sm:$0xff]
      %v915 = vld [vmem:[#allocation2 + $0x151] sm:$0xff]
      %v916 = vld [vmem:[#allocation2 + $0x159] sm:$0xff]
      %v917 = vld [vmem:[#allocation2 + $0x169] sm:$0xff]
      %v918 = vld [vmem:[#allocation2 + $0x171] sm:$0xff]
      %v919 = vpack.c.bf16 %v888, %v887
      %v920 = vpack.c.bf16 %v890, %v889
      %v921 = vpack.c.bf16 %v892, %v891
      %v922 = vpack.c.bf16 %v894, %v893
      %v923 = vpack.c.bf16 %v896, %v895
      %v924 = vpack.c.bf16 %v898, %v897
      %v925 = vpack.c.bf16 %v900, %v899
      %v926 = vpack.c.bf16 %v902, %v901
      %v927 = vpack.c.bf16 %v904, %v903
      %v928 = vpack.c.bf16 %v906, %v905
      %v929 = vpack.c.bf16 %v908, %v907
      %v930 = vpack.c.bf16 %v910, %v909
      %v931 = vpack.c.bf16 %v912, %v911
      %v932 = vpack.c.bf16 %v914, %v913
      %v933 = vpack.c.bf16 %v916, %v915
      %v934 = vpack.c.bf16 %v918, %v917
      %v935 = vld [vmem:[%s5 + $0x40] sm:$0xf]
      %v936 = vld [vmem:[%s5 + $0x44] sm:$0xf]
      %v937 = vld [vmem:[%s5 + $0x48] sm:$0xf]
      %v938 = vld [vmem:[%s5 + $0x4c] sm:$0xf]
      %v939 = vld [vmem:[%s5 + $0x50] sm:$0xf]
      %v940 = vld [vmem:[%s5 + $0x54] sm:$0xf]
      %v941 = vld [vmem:[%s5 + $0x58] sm:$0xf]
      %v942 = vld [vmem:[%s5 + $0x5c] sm:$0xf]
      %v943 = vld [vmem:[%s5 + $0x60] sm:$0xf]
      %v944 = vld [vmem:[%s5 + $0x64] sm:$0xf]
      %v945 = vld [vmem:[%s5 + $0x68] sm:$0xf]
      %v946 = vld [vmem:[%s5 + $0x6c] sm:$0xf]
      %v947 = vld [vmem:[%s5 + $0x70] sm:$0xf]
      %v948 = vld [vmem:[%s5 + $0x74] sm:$0xf]
      %v949 = vld [vmem:[%s5 + $0x78] sm:$0xf]
      %v950 = vld [vmem:[%s5 + $0x7c] sm:$0xf]
      %v967 = vunpack.c.l.b16 %v935
      %v968 = vunpack.c.l.b16 %v936
      %v969 = vunpack.c.l.b16 %v937
      %v970 = vunpack.c.l.b16 %v938
      %v971 = vunpack.c.l.b16 %v939
      %v972 = vunpack.c.l.b16 %v940
      %v973 = vunpack.c.l.b16 %v941
      %v974 = vunpack.c.l.b16 %v942
      %v975 = vunpack.c.l.b16 %v943
      %v976 = vunpack.c.l.b16 %v944
      %v977 = vunpack.c.l.b16 %v945
      %v978 = vunpack.c.l.b16 %v946
      %v979 = vunpack.c.l.b16 %v947
      %v980 = vunpack.c.l.b16 %v948
      %v981 = vunpack.c.l.b16 %v949
      %v982 = vunpack.c.l.b16 %v950
      %v983 = vpack.c.b16 %v968, %v967
      %v984 = vpack.c.b16 %v970, %v969
      %v985 = vpack.c.b16 %v972, %v971
      %v986 = vpack.c.b16 %v974, %v973
      %v987 = vpack.c.b16 %v976, %v975
      %v988 = vpack.c.b16 %v978, %v977
      %v989 = vpack.c.b16 %v980, %v979
      %v990 = vpack.c.b16 %v982, %v981
      %999 = vmatprep.subr.bf16.mxu0 0
      %1000 = vmatpush1.bf16.msra.mxu0 %v990
      %1001 = vmatprep.subr.bf16.mxu0 0
      %1002 = vmatpush1.bf16.msra.mxu0 %v989
      %1003 = vmatprep.subr.bf16.mxu0 0
      %1004 = vmatpush1.bf16.msra.mxu0 %v988
      %1005 = vmatprep.subr.bf16.mxu0 0
      %1006 = vmatpush1.bf16.msra.mxu0 %v987
      %1007 = vmatprep.subr.bf16.mxu0 0
      %1008 = vmatpush1.bf16.msra.mxu0 %v986
      %1009 = vmatprep.subr.bf16.mxu0 0
      %1010 = vmatpush1.bf16.msra.mxu0 %v985
      %1011 = vmatprep.subr.bf16.mxu0 0
      %1012 = vmatpush1.bf16.msra.mxu0 %v984
      %1013 = vmatprep.subr.bf16.mxu0 0
      %1014 = vmatpush1.bf16.msra.mxu0 %v983
      %1015 = vmatprep.subr.bf16.mxu0 0
      %1016 = vmatpush2.bf16.msra.mxu0 0
      %1017 = vmatprep.subr.bf16.mxu0 0
      %1018 = vmatpush2.bf16.msra.mxu0 0
      %1019 = vmatprep.subr.bf16.mxu0 0
      %1020 = vmatpush2.bf16.msra.mxu0 0
      %1021 = vmatprep.subr.bf16.mxu0 0
      %1022 = vmatpush2.bf16.msra.mxu0 0
      %1023 = vmatprep.subr.bf16.mxu0 0
      %1024 = vmatpush2.bf16.msra.mxu0 0
      %1025 = vmatprep.subr.bf16.mxu0 0
      %1026 = vmatpush2.bf16.msra.mxu0 0
      %1027 = vmatprep.subr.bf16.mxu0 0
      %1028 = vmatpush2.bf16.msra.mxu0 0
      %1029 = vmatprep.subr.bf16.mxu0 0
      %1030 = vmatpush2.bf16.msra.mxu0 0
      %1031 = vmatprep.mubr.bf16.mxu0 0
      %1032 = vmatmul.mubr.bf16.gmra.mxu0 %v919
      %v1033 = vpop.f32.mrf.mxu0
      %v1034 = vadd.f32 0.0, %v1033
      %v1035 = vpop.f32.mrf.mxu0
      %v1036 = vpop.f32.mrf.mxu0
      %v1037 = vadd.f32 0.0, %v1036
      %v1038 = vpop.f32.mrf.mxu0
      %1039 = vmatprep.mubr.bf16.mxu0 0
      %1040 = vmatmul.mubr.bf16.gmra.mxu0 %v920
      %v1041 = vpop.f32.mrf.mxu0
      %v1042 = vadd.f32 0.0, %v1041
      %v1043 = vpop.f32.mrf.mxu0
      %v1044 = vpop.f32.mrf.mxu0
      %v1045 = vadd.f32 0.0, %v1044
      %v1046 = vpop.f32.mrf.mxu0
      %1047 = vmatprep.mubr.bf16.mxu0 0
      %1048 = vmatmul.mubr.bf16.gmra.mxu0 %v921
      %v1049 = vpop.f32.mrf.mxu0
      %v1050 = vadd.f32 0.0, %v1049
      %v1051 = vpop.f32.mrf.mxu0
      %v1052 = vpop.f32.mrf.mxu0
      %v1053 = vadd.f32 0.0, %v1052
      %v1054 = vpop.f32.mrf.mxu0
      %1055 = vmatprep.mubr.bf16.mxu0 0
      %1056 = vmatmul.mubr.bf16.gmra.mxu0 %v922
      %v1057 = vpop.f32.mrf.mxu0
      %v1058 = vadd.f32 0.0, %v1057
      %v1059 = vpop.f32.mrf.mxu0
      %v1060 = vpop.f32.mrf.mxu0
      %v1061 = vadd.f32 0.0, %v1060
      %v1062 = vpop.f32.mrf.mxu0
      %1063 = vmatprep.mubr.bf16.mxu0 0
      %1064 = vmatmul.mubr.bf16.gmra.mxu0 %v923
      %v1065 = vpop.f32.mrf.mxu0
      %v1066 = vadd.f32 0.0, %v1065
      %v1067 = vpop.f32.mrf.mxu0
      %v1068 = vpop.f32.mrf.mxu0
      %v1069 = vadd.f32 0.0, %v1068
      %v1070 = vpop.f32.mrf.mxu0
      %1071 = vmatprep.mubr.bf16.mxu0 0
      %1072 = vmatmul.mubr.bf16.gmra.mxu0 %v924
      %v1073 = vpop.f32.mrf.mxu0
      %v1074 = vadd.f32 0.0, %v1073
      %v1075 = vpop.f32.mrf.mxu0
      %v1076 = vpop.f32.mrf.mxu0
      %v1077 = vadd.f32 0.0, %v1076
      %v1078 = vpop.f32.mrf.mxu0
      %1079 = vmatprep.mubr.bf16.mxu0 0
      %1080 = vmatmul.mubr.bf16.gmra.mxu0 %v925
      %v1081 = vpop.f32.mrf.mxu0
      %v1082 = vadd.f32 0.0, %v1081
      %v1083 = vpop.f32.mrf.mxu0
      %v1084 = vpop.f32.mrf.mxu0
      %v1085 = vadd.f32 0.0, %v1084
      %v1086 = vpop.f32.mrf.mxu0
      %1087 = vmatprep.mubr.bf16.mxu0 0
      %1088 = vmatmul.mubr.bf16.gmra.mxu0 %v926
      %v1089 = vpop.f32.mrf.mxu0
      %v1090 = vadd.f32 0.0, %v1089
      %v1091 = vpop.f32.mrf.mxu0
      %v1092 = vpop.f32.mrf.mxu0
      %v1093 = vadd.f32 0.0, %v1092
      %v1094 = vpop.f32.mrf.mxu0
      %1095 = vmatprep.mubr.bf16.mxu0 0
      %1096 = vmatmul.mubr.bf16.gmra.mxu0 %v927
      %v1097 = vpop.f32.mrf.mxu0
      %v1098 = vadd.f32 0.0, %v1097
      %v1099 = vpop.f32.mrf.mxu0
      %v1100 = vpop.f32.mrf.mxu0
      %v1101 = vadd.f32 0.0, %v1100
      %v1102 = vpop.f32.mrf.mxu0
      %1103 = vmatprep.mubr.bf16.mxu0 0
      %1104 = vmatmul.mubr.bf16.gmra.mxu0 %v928
      %v1105 = vpop.f32.mrf.mxu0
      %v1106 = vadd.f32 0.0, %v1105
      %v1107 = vpop.f32.mrf.mxu0
      %v1108 = vpop.f32.mrf.mxu0
      %v1109 = vadd.f32 0.0, %v1108
      %v1110 = vpop.f32.mrf.mxu0
      %1111 = vmatprep.mubr.bf16.mxu0 0
      %1112 = vmatmul.mubr.bf16.gmra.mxu0 %v929
      %v1113 = vpop.f32.mrf.mxu0
      %v1114 = vadd.f32 0.0, %v1113
      %v1115 = vpop.f32.mrf.mxu0
      %v1116 = vpop.f32.mrf.mxu0
      %v1117 = vadd.f32 0.0, %v1116
      %v1118 = vpop.f32.mrf.mxu0
      %1119 = vmatprep.mubr.bf16.mxu0 0
      %1120 = vmatmul.mubr.bf16.gmra.mxu0 %v930
      %v1121 = vpop.f32.mrf.mxu0
      %v1122 = vadd.f32 0.0, %v1121
      %v1123 = vpop.f32.mrf.mxu0
      %v1124 = vpop.f32.mrf.mxu0
      %v1125 = vadd.f32 0.0, %v1124
      %v1126 = vpop.f32.mrf.mxu0
      %1127 = vmatprep.mubr.bf16.mxu0 0
      %1128 = vmatmul.mubr.bf16.gmra.mxu0 %v931
      %v1129 = vpop.f32.mrf.mxu0
      %v1130 = vadd.f32 0.0, %v1129
      %v1131 = vpop.f32.mrf.mxu0
      %v1132 = vpop.f32.mrf.mxu0
      %v1133 = vadd.f32 0.0, %v1132
      %v1134 = vpop.f32.mrf.mxu0
      %1135 = vmatprep.mubr.bf16.mxu0 0
      %1136 = vmatmul.mubr.bf16.gmra.mxu0 %v932
      %v1137 = vpop.f32.mrf.mxu0
      %v1138 = vadd.f32 0.0, %v1137
      %v1139 = vpop.f32.mrf.mxu0
      %v1140 = vpop.f32.mrf.mxu0
      %v1141 = vadd.f32 0.0, %v1140
      %v1142 = vpop.f32.mrf.mxu0
      %1143 = vmatprep.mubr.bf16.mxu0 0
      %1144 = vmatmul.mubr.bf16.gmra.mxu0 %v933
      %v1145 = vpop.f32.mrf.mxu0
      %v1146 = vadd.f32 0.0, %v1145
      %v1147 = vpop.f32.mrf.mxu0
      %v1148 = vpop.f32.mrf.mxu0
      %v1149 = vadd.f32 0.0, %v1148
      %v1150 = vpop.f32.mrf.mxu0
      %1151 = vmatprep.mubr.bf16.mxu0 0
      %1152 = vmatmul.mubr.bf16.gmra.mxu0 %v934
      %v1153 = vpop.f32.mrf.mxu0
      %v1154 = vadd.f32 0.0, %v1153
      %v1155 = vpop.f32.mrf.mxu0
      %v1156 = vpop.f32.mrf.mxu0
      %v1157 = vadd.f32 0.0, %v1156
      %v1158 = vpop.f32.mrf.mxu0
      %1159 = vdwg.mxu0
      %v1160 = vld [vmem:[#allocation3] sm:$0xff]
      %v1161 = vld [vmem:[#allocation3 + $0x8] sm:$0xff]
      %v1162 = vld [vmem:[#allocation3 + $0x10] sm:$0xff]
      %v1163 = vld [vmem:[#allocation3 + $0x18] sm:$0xff]
      %v1164 = vld [vmem:[#allocation3 + $0x20] sm:$0xff]
      %v1165 = vld [vmem:[#allocation3 + $0x28] sm:$0xff]
      %v1166 = vld [vmem:[#allocation3 + $0x30] sm:$0xff]
      %v1167 = vld [vmem:[#allocation3 + $0x38] sm:$0xff]
      %v1168 = vld [vmem:[#allocation3 + $0x40] sm:$0xff]
      %v1169 = vld [vmem:[#allocation3 + $0x48] sm:$0xff]
      %v1170 = vld [vmem:[#allocation3 + $0x50] sm:$0xff]
      %v1171 = vld [vmem:[#allocation3 + $0x58] sm:$0xff]
      %v1172 = vld [vmem:[#allocation3 + $0x60] sm:$0xff]
      %v1173 = vld [vmem:[#allocation3 + $0x68] sm:$0xff]
      %v1174 = vld [vmem:[#allocation3 + $0x70] sm:$0xff]
      %v1175 = vld [vmem:[#allocation3 + $0x78] sm:$0xff]
      %v1176 = vld [vmem:[#allocation3 + $0x80] sm:$0xff]
      %v1177 = vld [vmem:[#allocation3 + $0x88] sm:$0xff]
      %v1178 = vld [vmem:[#allocation3 + $0x90] sm:$0xff]
      %v1179 = vld [vmem:[#allocation3 + $0x98] sm:$0xff]
      %v1180 = vld [vmem:[#allocation3 + $0xa0] sm:$0xff]
      %v1181 = vld [vmem:[#allocation3 + $0xa8] sm:$0xff]
      %v1182 = vld [vmem:[#allocation3 + $0xb0] sm:$0xff]
      %v1183 = vld [vmem:[#allocation3 + $0xb8] sm:$0xff]
      %v1184 = vld [vmem:[#allocation3 + $0xc0] sm:$0xff]
      %v1185 = vld [vmem:[#allocation3 + $0xc8] sm:$0xff]
      %v1186 = vld [vmem:[#allocation3 + $0xd0] sm:$0xff]
      %v1187 = vld [vmem:[#allocation3 + $0xd8] sm:$0xff]
      %v1188 = vld [vmem:[#allocation3 + $0xe0] sm:$0xff]
      %v1189 = vld [vmem:[#allocation3 + $0xe8] sm:$0xff]
      %v1190 = vld [vmem:[#allocation3 + $0xf0] sm:$0xff]
      %v1191 = vld [vmem:[#allocation3 + $0xf8] sm:$0xff]
      %v1192 = vadd.f32 %v1160, %v1034
      %v1193 = vadd.f32 %v1161, %v1037
      %v1194 = vadd.f32 %v1162, %v1042
      %v1195 = vadd.f32 %v1163, %v1045
      %v1196 = vadd.f32 %v1164, %v1050
      %v1197 = vadd.f32 %v1165, %v1053
      %v1198 = vadd.f32 %v1166, %v1058
      %v1199 = vadd.f32 %v1167, %v1061
      %v1200 = vadd.f32 %v1168, %v1066
      %v1201 = vadd.f32 %v1169, %v1069
      %v1202 = vadd.f32 %v1170, %v1074
      %v1203 = vadd.f32 %v1171, %v1077
      %v1204 = vadd.f32 %v1172, %v1082
      %v1205 = vadd.f32 %v1173, %v1085
      %v1206 = vadd.f32 %v1174, %v1090
      %v1207 = vadd.f32 %v1175, %v1093
      %v1208 = vadd.f32 %v1176, %v1098
      %v1209 = vadd.f32 %v1177, %v1101
      %v1210 = vadd.f32 %v1178, %v1106
      %v1211 = vadd.f32 %v1179, %v1109
      %v1212 = vadd.f32 %v1180, %v1114
      %v1213 = vadd.f32 %v1181, %v1117
      %v1214 = vadd.f32 %v1182, %v1122
      %v1215 = vadd.f32 %v1183, %v1125
      %v1216 = vadd.f32 %v1184, %v1130
      %v1217 = vadd.f32 %v1185, %v1133
      %v1218 = vadd.f32 %v1186, %v1138
      %v1219 = vadd.f32 %v1187, %v1141
      %v1220 = vadd.f32 %v1188, %v1146
      %v1221 = vadd.f32 %v1189, %v1149
      %v1222 = vadd.f32 %v1190, %v1154
      %v1223 = vadd.f32 %v1191, %v1157
      %1224 = vst [vmem:[#allocation3] sm:$0xff] %v1192
      %1225 = vst [vmem:[#allocation3 + $0x8] sm:$0xff] %v1193
      %1226 = vst [vmem:[#allocation3 + $0x10] sm:$0xff] %v1194
      %1227 = vst [vmem:[#allocation3 + $0x18] sm:$0xff] %v1195
      %1228 = vst [vmem:[#allocation3 + $0x20] sm:$0xff] %v1196
      %1229 = vst [vmem:[#allocation3 + $0x28] sm:$0xff] %v1197
      %1230 = vst [vmem:[#allocation3 + $0x30] sm:$0xff] %v1198
      %1231 = vst [vmem:[#allocation3 + $0x38] sm:$0xff] %v1199
      %1232 = vst [vmem:[#allocation3 + $0x40] sm:$0xff] %v1200
      %1233 = vst [vmem:[#allocation3 + $0x48] sm:$0xff] %v1201
      %1234 = vst [vmem:[#allocation3 + $0x50] sm:$0xff] %v1202
      %1235 = vst [vmem:[#allocation3 + $0x58] sm:$0xff] %v1203
      %1236 = vst [vmem:[#allocation3 + $0x60] sm:$0xff] %v1204
      %1237 = vst [vmem:[#allocation3 + $0x68] sm:$0xff] %v1205
      %1238 = vst [vmem:[#allocation3 + $0x70] sm:$0xff] %v1206
      %1239 = vst [vmem:[#allocation3 + $0x78] sm:$0xff] %v1207
      %1240 = vst [vmem:[#allocation3 + $0x80] sm:$0xff] %v1208
      %1241 = vst [vmem:[#allocation3 + $0x88] sm:$0xff] %v1209
      %1242 = vst [vmem:[#allocation3 + $0x90] sm:$0xff] %v1210
      %1243 = vst [vmem:[#allocation3 + $0x98] sm:$0xff] %v1211
      %1244 = vst [vmem:[#allocation3 + $0xa0] sm:$0xff] %v1212
      %1245 = vst [vmem:[#allocation3 + $0xa8] sm:$0xff] %v1213
      %1246 = vst [vmem:[#allocation3 + $0xb0] sm:$0xff] %v1214
      %1247 = vst [vmem:[#allocation3 + $0xb8] sm:$0xff] %v1215
      %1248 = vst [vmem:[#allocation3 + $0xc0] sm:$0xff] %v1216
      %1249 = vst [vmem:[#allocation3 + $0xc8] sm:$0xff] %v1217
      %1250 = vst [vmem:[#allocation3 + $0xd0] sm:$0xff] %v1218
      %1251 = vst [vmem:[#allocation3 + $0xd8] sm:$0xff] %v1219
      %1252 = vst [vmem:[#allocation3 + $0xe0] sm:$0xff] %v1220
      %1253 = vst [vmem:[#allocation3 + $0xe8] sm:$0xff] %v1221
      %1254 = vst [vmem:[#allocation3 + $0xf0] sm:$0xff] %v1222
      %1255 = vst [vmem:[#allocation3 + $0xf8] sm:$0xff] %v1223
      %v1256 = vld [vmem:[#allocation2 + $0x2] sm:$0xff]
      %v1257 = vld [vmem:[#allocation2 + $0xa] sm:$0xff]
      %v1258 = vld [vmem:[#allocation2 + $0x1a] sm:$0xff]
      %v1259 = vld [vmem:[#allocation2 + $0x22] sm:$0xff]
      %v1260 = vld [vmem:[#allocation2 + $0x32] sm:$0xff]
      %v1261 = vld [vmem:[#allocation2 + $0x3a] sm:$0xff]
      %v1262 = vld [vmem:[#allocation2 + $0x4a] sm:$0xff]
      %v1263 = vld [vmem:[#allocation2 + $0x52] sm:$0xff]
      %v1264 = vld [vmem:[#allocation2 + $0x62] sm:$0xff]
      %v1265 = vld [vmem:[#allocation2 + $0x6a] sm:$0xff]
      %v1266 = vld [vmem:[#allocation2 + $0x7a] sm:$0xff]
      %v1267 = vld [vmem:[#allocation2 + $0x82] sm:$0xff]
      %v1268 = vld [vmem:[#allocation2 + $0x92] sm:$0xff]
      %v1269 = vld [vmem:[#allocation2 + $0x9a] sm:$0xff]
      %v1270 = vld [vmem:[#allocation2 + $0xaa] sm:$0xff]
      %v1271 = vld [vmem:[#allocation2 + $0xb2] sm:$0xff]
      %v1272 = vld [vmem:[#allocation2 + $0xc2] sm:$0xff]
      %v1273 = vld [vmem:[#allocation2 + $0xca] sm:$0xff]
      %v1274 = vld [vmem:[#allocation2 + $0xda] sm:$0xff]
      %v1275 = vld [vmem:[#allocation2 + $0xe2] sm:$0xff]
      %v1276 = vld [vmem:[#allocation2 + $0xf2] sm:$0xff]
      %v1277 = vld [vmem:[#allocation2 + $0xfa] sm:$0xff]
      %v1278 = vld [vmem:[#allocation2 + $0x10a] sm:$0xff]
      %v1279 = vld [vmem:[#allocation2 + $0x112] sm:$0xff]
      %v1280 = vld [vmem:[#allocation2 + $0x122] sm:$0xff]
      %v1281 = vld [vmem:[#allocation2 + $0x12a] sm:$0xff]
      %v1282 = vld [vmem:[#allocation2 + $0x13a] sm:$0xff]
      %v1283 = vld [vmem:[#allocation2 + $0x142] sm:$0xff]
      %v1284 = vld [vmem:[#allocation2 + $0x152] sm:$0xff]
      %v1285 = vld [vmem:[#allocation2 + $0x15a] sm:$0xff]
      %v1286 = vld [vmem:[#allocation2 + $0x16a] sm:$0xff]
      %v1287 = vld [vmem:[#allocation2 + $0x172] sm:$0xff]
      %v1288 = vpack.c.bf16 %v1257, %v1256
      %v1289 = vpack.c.bf16 %v1259, %v1258
      %v1290 = vpack.c.bf16 %v1261, %v1260
      %v1291 = vpack.c.bf16 %v1263, %v1262
      %v1292 = vpack.c.bf16 %v1265, %v1264
      %v1293 = vpack.c.bf16 %v1267, %v1266
      %v1294 = vpack.c.bf16 %v1269, %v1268
      %v1295 = vpack.c.bf16 %v1271, %v1270
      %v1296 = vpack.c.bf16 %v1273, %v1272
      %v1297 = vpack.c.bf16 %v1275, %v1274
      %v1298 = vpack.c.bf16 %v1277, %v1276
      %v1299 = vpack.c.bf16 %v1279, %v1278
      %v1300 = vpack.c.bf16 %v1281, %v1280
      %v1301 = vpack.c.bf16 %v1283, %v1282
      %v1302 = vpack.c.bf16 %v1285, %v1284
      %v1303 = vpack.c.bf16 %v1287, %v1286
      %v1304 = vld [vmem:[%s5 + $0x80] sm:$0xf]
      %v1305 = vld [vmem:[%s5 + $0x84] sm:$0xf]
      %v1306 = vld [vmem:[%s5 + $0x88] sm:$0xf]
      %v1307 = vld [vmem:[%s5 + $0x8c] sm:$0xf]
      %v1308 = vld [vmem:[%s5 + $0x90] sm:$0xf]
      %v1309 = vld [vmem:[%s5 + $0x94] sm:$0xf]
      %v1310 = vld [vmem:[%s5 + $0x98] sm:$0xf]
      %v1311 = vld [vmem:[%s5 + $0x9c] sm:$0xf]
      %v1312 = vld [vmem:[%s5 + $0xa0] sm:$0xf]
      %v1313 = vld [vmem:[%s5 + $0xa4] sm:$0xf]
      %v1314 = vld [vmem:[%s5 + $0xa8] sm:$0xf]
      %v1315 = vld [vmem:[%s5 + $0xac] sm:$0xf]
      %v1316 = vld [vmem:[%s5 + $0xb0] sm:$0xf]
      %v1317 = vld [vmem:[%s5 + $0xb4] sm:$0xf]
      %v1318 = vld [vmem:[%s5 + $0xb8] sm:$0xf]
      %v1319 = vld [vmem:[%s5 + $0xbc] sm:$0xf]
      %v1336 = vunpack.c.l.b16 %v1304
      %v1337 = vunpack.c.l.b16 %v1305
      %v1338 = vunpack.c.l.b16 %v1306
      %v1339 = vunpack.c.l.b16 %v1307
      %v1340 = vunpack.c.l.b16 %v1308
      %v1341 = vunpack.c.l.b16 %v1309
      %v1342 = vunpack.c.l.b16 %v1310
      %v1343 = vunpack.c.l.b16 %v1311
      %v1344 = vunpack.c.l.b16 %v1312
      %v1345 = vunpack.c.l.b16 %v1313
      %v1346 = vunpack.c.l.b16 %v1314
      %v1347 = vunpack.c.l.b16 %v1315
      %v1348 = vunpack.c.l.b16 %v1316
      %v1349 = vunpack.c.l.b16 %v1317
      %v1350 = vunpack.c.l.b16 %v1318
      %v1351 = vunpack.c.l.b16 %v1319
      %v1352 = vpack.c.b16 %v1337, %v1336
      %v1353 = vpack.c.b16 %v1339, %v1338
      %v1354 = vpack.c.b16 %v1341, %v1340
      %v1355 = vpack.c.b16 %v1343, %v1342
      %v1356 = vpack.c.b16 %v1345, %v1344
      %v1357 = vpack.c.b16 %v1347, %v1346
      %v1358 = vpack.c.b16 %v1349, %v1348
      %v1359 = vpack.c.b16 %v1351, %v1350
      %1368 = vmatprep.subr.bf16.mxu0 0
      %1369 = vmatpush1.bf16.msra.mxu0 %v1359
      %1370 = vmatprep.subr.bf16.mxu0 0
      %1371 = vmatpush1.bf16.msra.mxu0 %v1358
      %1372 = vmatprep.subr.bf16.mxu0 0
      %1373 = vmatpush1.bf16.msra.mxu0 %v1357
      %1374 = vmatprep.subr.bf16.mxu0 0
      %1375 = vmatpush1.bf16.msra.mxu0 %v1356
      %1376 = vmatprep.subr.bf16.mxu0 0
      %1377 = vmatpush1.bf16.msra.mxu0 %v1355
      %1378 = vmatprep.subr.bf16.mxu0 0
      %1379 = vmatpush1.bf16.msra.mxu0 %v1354
      %1380 = vmatprep.subr.bf16.mxu0 0
      %1381 = vmatpush1.bf16.msra.mxu0 %v1353
      %1382 = vmatprep.subr.bf16.mxu0 0
      %1383 = vmatpush1.bf16.msra.mxu0 %v1352
      %1384 = vmatprep.subr.bf16.mxu0 0
      %1385 = vmatpush2.bf16.msra.mxu0 0
      %1386 = vmatprep.subr.bf16.mxu0 0
      %1387 = vmatpush2.bf16.msra.mxu0 0
      %1388 = vmatprep.subr.bf16.mxu0 0
      %1389 = vmatpush2.bf16.msra.mxu0 0
      %1390 = vmatprep.subr.bf16.mxu0 0
      %1391 = vmatpush2.bf16.msra.mxu0 0
      %1392 = vmatprep.subr.bf16.mxu0 0
      %1393 = vmatpush2.bf16.msra.mxu0 0
      %1394 = vmatprep.subr.bf16.mxu0 0
      %1395 = vmatpush2.bf16.msra.mxu0 0
      %1396 = vmatprep.subr.bf16.mxu0 0
      %1397 = vmatpush2.bf16.msra.mxu0 0
      %1398 = vmatprep.subr.bf16.mxu0 0
      %1399 = vmatpush2.bf16.msra.mxu0 0
      %1400 = vmatprep.mubr.bf16.mxu0 0
      %1401 = vmatmul.mubr.bf16.gmra.mxu0 %v1288
      %v1402 = vpop.f32.mrf.mxu0
      %v1403 = vadd.f32 0.0, %v1402
      %v1404 = vpop.f32.mrf.mxu0
      %v1405 = vpop.f32.mrf.mxu0
      %v1406 = vadd.f32 0.0, %v1405
      %v1407 = vpop.f32.mrf.mxu0
      %1408 = vmatprep.mubr.bf16.mxu0 0
      %1409 = vmatmul.mubr.bf16.gmra.mxu0 %v1289
      %v1410 = vpop.f32.mrf.mxu0
      %v1411 = vadd.f32 0.0, %v1410
      %v1412 = vpop.f32.mrf.mxu0
      %v1413 = vpop.f32.mrf.mxu0
      %v1414 = vadd.f32 0.0, %v1413
      %v1415 = vpop.f32.mrf.mxu0
      %1416 = vmatprep.mubr.bf16.mxu0 0
      %1417 = vmatmul.mubr.bf16.gmra.mxu0 %v1290
      %v1418 = vpop.f32.mrf.mxu0
      %v1419 = vadd.f32 0.0, %v1418
      %v1420 = vpop.f32.mrf.mxu0
      %v1421 = vpop.f32.mrf.mxu0
      %v1422 = vadd.f32 0.0, %v1421
      %v1423 = vpop.f32.mrf.mxu0
      %1424 = vmatprep.mubr.bf16.mxu0 0
      %1425 = vmatmul.mubr.bf16.gmra.mxu0 %v1291
      %v1426 = vpop.f32.mrf.mxu0
      %v1427 = vadd.f32 0.0, %v1426
      %v1428 = vpop.f32.mrf.mxu0
      %v1429 = vpop.f32.mrf.mxu0
      %v1430 = vadd.f32 0.0, %v1429
      %v1431 = vpop.f32.mrf.mxu0
      %1432 = vmatprep.mubr.bf16.mxu0 0
      %1433 = vmatmul.mubr.bf16.gmra.mxu0 %v1292
      %v1434 = vpop.f32.mrf.mxu0
      %v1435 = vadd.f32 0.0, %v1434
      %v1436 = vpop.f32.mrf.mxu0
      %v1437 = vpop.f32.mrf.mxu0
      %v1438 = vadd.f32 0.0, %v1437
      %v1439 = vpop.f32.mrf.mxu0
      %1440 = vmatprep.mubr.bf16.mxu0 0
      %1441 = vmatmul.mubr.bf16.gmra.mxu0 %v1293
      %v1442 = vpop.f32.mrf.mxu0
      %v1443 = vadd.f32 0.0, %v1442
      %v1444 = vpop.f32.mrf.mxu0
      %v1445 = vpop.f32.mrf.mxu0
      %v1446 = vadd.f32 0.0, %v1445
      %v1447 = vpop.f32.mrf.mxu0
      %1448 = vmatprep.mubr.bf16.mxu0 0
      %1449 = vmatmul.mubr.bf16.gmra.mxu0 %v1294
      %v1450 = vpop.f32.mrf.mxu0
      %v1451 = vadd.f32 0.0, %v1450
      %v1452 = vpop.f32.mrf.mxu0
      %v1453 = vpop.f32.mrf.mxu0
      %v1454 = vadd.f32 0.0, %v1453
      %v1455 = vpop.f32.mrf.mxu0
      %1456 = vmatprep.mubr.bf16.mxu0 0
      %1457 = vmatmul.mubr.bf16.gmra.mxu0 %v1295
      %v1458 = vpop.f32.mrf.mxu0
      %v1459 = vadd.f32 0.0, %v1458
      %v1460 = vpop.f32.mrf.mxu0
      %v1461 = vpop.f32.mrf.mxu0
      %v1462 = vadd.f32 0.0, %v1461
      %v1463 = vpop.f32.mrf.mxu0
      %1464 = vmatprep.mubr.bf16.mxu0 0
      %1465 = vmatmul.mubr.bf16.gmra.mxu0 %v1296
      %v1466 = vpop.f32.mrf.mxu0
      %v1467 = vadd.f32 0.0, %v1466
      %v1468 = vpop.f32.mrf.mxu0
      %v1469 = vpop.f32.mrf.mxu0
      %v1470 = vadd.f32 0.0, %v1469
      %v1471 = vpop.f32.mrf.mxu0
      %1472 = vmatprep.mubr.bf16.mxu0 0
      %1473 = vmatmul.mubr.bf16.gmra.mxu0 %v1297
      %v1474 = vpop.f32.mrf.mxu0
      %v1475 = vadd.f32 0.0, %v1474
      %v1476 = vpop.f32.mrf.mxu0
      %v1477 = vpop.f32.mrf.mxu0
      %v1478 = vadd.f32 0.0, %v1477
      %v1479 = vpop.f32.mrf.mxu0
      %1480 = vmatprep.mubr.bf16.mxu0 0
      %1481 = vmatmul.mubr.bf16.gmra.mxu0 %v1298
      %v1482 = vpop.f32.mrf.mxu0
      %v1483 = vadd.f32 0.0, %v1482
      %v1484 = vpop.f32.mrf.mxu0
      %v1485 = vpop.f32.mrf.mxu0
      %v1486 = vadd.f32 0.0, %v1485
      %v1487 = vpop.f32.mrf.mxu0
      %1488 = vmatprep.mubr.bf16.mxu0 0
      %1489 = vmatmul.mubr.bf16.gmra.mxu0 %v1299
      %v1490 = vpop.f32.mrf.mxu0
      %v1491 = vadd.f32 0.0, %v1490
      %v1492 = vpop.f32.mrf.mxu0
      %v1493 = vpop.f32.mrf.mxu0
      %v1494 = vadd.f32 0.0, %v1493
      %v1495 = vpop.f32.mrf.mxu0
      %1496 = vmatprep.mubr.bf16.mxu0 0
      %1497 = vmatmul.mubr.bf16.gmra.mxu0 %v1300
      %v1498 = vpop.f32.mrf.mxu0
      %v1499 = vadd.f32 0.0, %v1498
      %v1500 = vpop.f32.mrf.mxu0
      %v1501 = vpop.f32.mrf.mxu0
      %v1502 = vadd.f32 0.0, %v1501
      %v1503 = vpop.f32.mrf.mxu0
      %1504 = vmatprep.mubr.bf16.mxu0 0
      %1505 = vmatmul.mubr.bf16.gmra.mxu0 %v1301
      %v1506 = vpop.f32.mrf.mxu0
      %v1507 = vadd.f32 0.0, %v1506
      %v1508 = vpop.f32.mrf.mxu0
      %v1509 = vpop.f32.mrf.mxu0
      %v1510 = vadd.f32 0.0, %v1509
      %v1511 = vpop.f32.mrf.mxu0
      %1512 = vmatprep.mubr.bf16.mxu0 0
      %1513 = vmatmul.mubr.bf16.gmra.mxu0 %v1302
      %v1514 = vpop.f32.mrf.mxu0
      %v1515 = vadd.f32 0.0, %v1514
      %v1516 = vpop.f32.mrf.mxu0
      %v1517 = vpop.f32.mrf.mxu0
      %v1518 = vadd.f32 0.0, %v1517
      %v1519 = vpop.f32.mrf.mxu0
      %1520 = vmatprep.mubr.bf16.mxu0 0
      %1521 = vmatmul.mubr.bf16.gmra.mxu0 %v1303
      %v1522 = vpop.f32.mrf.mxu0
      %v1523 = vadd.f32 0.0, %v1522
      %v1524 = vpop.f32.mrf.mxu0
      %v1525 = vpop.f32.mrf.mxu0
      %v1526 = vadd.f32 0.0, %v1525
      %v1527 = vpop.f32.mrf.mxu0
      %1528 = vdwg.mxu0
      %v1529 = vld [vmem:[#allocation3] sm:$0xff]
      %v1530 = vld [vmem:[#allocation3 + $0x8] sm:$0xff]
      %v1531 = vld [vmem:[#allocation3 + $0x10] sm:$0xff]
      %v1532 = vld [vmem:[#allocation3 + $0x18] sm:$0xff]
      %v1533 = vld [vmem:[#allocation3 + $0x20] sm:$0xff]
      %v1534 = vld [vmem:[#allocation3 + $0x28] sm:$0xff]
      %v1535 = vld [vmem:[#allocation3 + $0x30] sm:$0xff]
      %v1536 = vld [vmem:[#allocation3 + $0x38] sm:$0xff]
      %v1537 = vld [vmem:[#allocation3 + $0x40] sm:$0xff]
      %v1538 = vld [vmem:[#allocation3 + $0x48] sm:$0xff]
      %v1539 = vld [vmem:[#allocation3 + $0x50] sm:$0xff]
      %v1540 = vld [vmem:[#allocation3 + $0x58] sm:$0xff]
      %v1541 = vld [vmem:[#allocation3 + $0x60] sm:$0xff]
      %v1542 = vld [vmem:[#allocation3 + $0x68] sm:$0xff]
      %v1543 = vld [vmem:[#allocation3 + $0x70] sm:$0xff]
      %v1544 = vld [vmem:[#allocation3 + $0x78] sm:$0xff]
      %v1545 = vld [vmem:[#allocation3 + $0x80] sm:$0xff]
      %v1546 = vld [vmem:[#allocation3 + $0x88] sm:$0xff]
      %v1547 = vld [vmem:[#allocation3 + $0x90] sm:$0xff]
      %v1548 = vld [vmem:[#allocation3 + $0x98] sm:$0xff]
      %v1549 = vld [vmem:[#allocation3 + $0xa0] sm:$0xff]
      %v1550 = vld [vmem:[#allocation3 + $0xa8] sm:$0xff]
      %v1551 = vld [vmem:[#allocation3 + $0xb0] sm:$0xff]
      %v1552 = vld [vmem:[#allocation3 + $0xb8] sm:$0xff]
      %v1553 = vld [vmem:[#allocation3 + $0xc0] sm:$0xff]
      %v1554 = vld [vmem:[#allocation3 + $0xc8] sm:$0xff]
      %v1555 = vld [vmem:[#allocation3 + $0xd0] sm:$0xff]
      %v1556 = vld [vmem:[#allocation3 + $0xd8] sm:$0xff]
      %v1557 = vld [vmem:[#allocation3 + $0xe0] sm:$0xff]
      %v1558 = vld [vmem:[#allocation3 + $0xe8] sm:$0xff]
      %v1559 = vld [vmem:[#allocation3 + $0xf0] sm:$0xff]
      %v1560 = vld [vmem:[#allocation3 + $0xf8] sm:$0xff]
      %v1561 = vadd.f32 %v1529, %v1403
      %v1562 = vadd.f32 %v1530, %v1406
      %v1563 = vadd.f32 %v1531, %v1411
      %v1564 = vadd.f32 %v1532, %v1414
      %v1565 = vadd.f32 %v1533, %v1419
      %v1566 = vadd.f32 %v1534, %v1422
      %v1567 = vadd.f32 %v1535, %v1427
      %v1568 = vadd.f32 %v1536, %v1430
      %v1569 = vadd.f32 %v1537, %v1435
      %v1570 = vadd.f32 %v1538, %v1438
      %v1571 = vadd.f32 %v1539, %v1443
      %v1572 = vadd.f32 %v1540, %v1446
      %v1573 = vadd.f32 %v1541, %v1451
      %v1574 = vadd.f32 %v1542, %v1454
      %v1575 = vadd.f32 %v1543, %v1459
      %v1576 = vadd.f32 %v1544, %v1462
      %v1577 = vadd.f32 %v1545, %v1467
      %v1578 = vadd.f32 %v1546, %v1470
      %v1579 = vadd.f32 %v1547, %v1475
      %v1580 = vadd.f32 %v1548, %v1478
      %v1581 = vadd.f32 %v1549, %v1483
      %v1582 = vadd.f32 %v1550, %v1486
      %v1583 = vadd.f32 %v1551, %v1491
      %v1584 = vadd.f32 %v1552, %v1494
      %v1585 = vadd.f32 %v1553, %v1499
      %v1586 = vadd.f32 %v1554, %v1502
      %v1587 = vadd.f32 %v1555, %v1507
      %v1588 = vadd.f32 %v1556, %v1510
      %v1589 = vadd.f32 %v1557, %v1515
      %v1590 = vadd.f32 %v1558, %v1518
      %v1591 = vadd.f32 %v1559, %v1523
      %v1592 = vadd.f32 %v1560, %v1526
      %1593 = vst [vmem:[#allocation3] sm:$0xff] %v1561
      %1594 = vst [vmem:[#allocation3 + $0x8] sm:$0xff] %v1562
      %1595 = vst [vmem:[#allocation3 + $0x10] sm:$0xff] %v1563
      %1596 = vst [vmem:[#allocation3 + $0x18] sm:$0xff] %v1564
      %1597 = vst [vmem:[#allocation3 + $0x20] sm:$0xff] %v1565
      %1598 = vst [vmem:[#allocation3 + $0x28] sm:$0xff] %v1566
      %1599 = vst [vmem:[#allocation3 + $0x30] sm:$0xff] %v1567
      %1600 = vst [vmem:[#allocation3 + $0x38] sm:$0xff] %v1568
      %1601 = vst [vmem:[#allocation3 + $0x40] sm:$0xff] %v1569
      %1602 = vst [vmem:[#allocation3 + $0x48] sm:$0xff] %v1570
      %1603 = vst [vmem:[#allocation3 + $0x50] sm:$0xff] %v1571
      %1604 = vst [vmem:[#allocation3 + $0x58] sm:$0xff] %v1572
      %1605 = vst [vmem:[#allocation3 + $0x60] sm:$0xff] %v1573
      %1606 = vst [vmem:[#allocation3 + $0x68] sm:$0xff] %v1574
      %1607 = vst [vmem:[#allocation3 + $0x70] sm:$0xff] %v1575
      %1608 = vst [vmem:[#allocation3 + $0x78] sm:$0xff] %v1576
      %1609 = vst [vmem:[#allocation3 + $0x80] sm:$0xff] %v1577
      %1610 = vst [vmem:[#allocation3 + $0x88] sm:$0xff] %v1578
      %1611 = vst [vmem:[#allocation3 + $0x90] sm:$0xff] %v1579
      %1612 = vst [vmem:[#allocation3 + $0x98] sm:$0xff] %v1580
      %1613 = vst [vmem:[#allocation3 + $0xa0] sm:$0xff] %v1581
      %1614 = vst [vmem:[#allocation3 + $0xa8] sm:$0xff] %v1582
      %1615 = vst [vmem:[#allocation3 + $0xb0] sm:$0xff] %v1583
      %1616 = vst [vmem:[#allocation3 + $0xb8] sm:$0xff] %v1584
      %1617 = vst [vmem:[#allocation3 + $0xc0] sm:$0xff] %v1585
      %1618 = vst [vmem:[#allocation3 + $0xc8] sm:$0xff] %v1586
      %1619 = vst [vmem:[#allocation3 + $0xd0] sm:$0xff] %v1587
      %1620 = vst [vmem:[#allocation3 + $0xd8] sm:$0xff] %v1588
      %1621 = vst [vmem:[#allocation3 + $0xe0] sm:$0xff] %v1589
      %1622 = vst [vmem:[#allocation3 + $0xe8] sm:$0xff] %v1590
      %1623 = vst [vmem:[#allocation3 + $0xf0] sm:$0xff] %v1591
      %1624 = vst [vmem:[#allocation3 + $0xf8] sm:$0xff] %v1592
      %v1625 = vld [vmem:[%s517] sm:$0xff]
      %v1626 = vld [vmem:[%s517 + $0x8] sm:$0xff]
      %v1627 = vld [vmem:[%s517 + $0x18] sm:$0xff]
      %v1628 = vld [vmem:[%s517 + $0x20] sm:$0xff]
      %v1629 = vld [vmem:[%s517 + $0x30] sm:$0xff]
      %v1630 = vld [vmem:[%s517 + $0x38] sm:$0xff]
      %v1631 = vld [vmem:[%s517 + $0x48] sm:$0xff]
      %v1632 = vld [vmem:[%s517 + $0x50] sm:$0xff]
      %v1633 = vld [vmem:[%s517 + $0x60] sm:$0xff]
      %v1634 = vld [vmem:[%s517 + $0x68] sm:$0xff]
      %v1635 = vld [vmem:[%s517 + $0x78] sm:$0xff]
      %v1636 = vld [vmem:[%s517 + $0x80] sm:$0xff]
      %v1637 = vld [vmem:[%s517 + $0x90] sm:$0xff]
      %v1638 = vld [vmem:[%s517 + $0x98] sm:$0xff]
      %v1639 = vld [vmem:[%s517 + $0xa8] sm:$0xff]
      %v1640 = vld [vmem:[%s517 + $0xb0] sm:$0xff]
      %v1641 = vld [vmem:[%s517 + $0xc0] sm:$0xff]
      %v1642 = vld [vmem:[%s517 + $0xc8] sm:$0xff]
      %v1643 = vld [vmem:[%s517 + $0xd8] sm:$0xff]
      %v1644 = vld [vmem:[%s517 + $0xe0] sm:$0xff]
      %v1645 = vld [vmem:[%s517 + $0xf0] sm:$0xff]
      %v1646 = vld [vmem:[%s517 + $0xf8] sm:$0xff]
      %v1647 = vld [vmem:[%s517 + $0x108] sm:$0xff]
      %v1648 = vld [vmem:[%s517 + $0x110] sm:$0xff]
      %v1649 = vld [vmem:[%s517 + $0x120] sm:$0xff]
      %v1650 = vld [vmem:[%s517 + $0x128] sm:$0xff]
      %v1651 = vld [vmem:[%s517 + $0x138] sm:$0xff]
      %v1652 = vld [vmem:[%s517 + $0x140] sm:$0xff]
      %v1653 = vld [vmem:[%s517 + $0x150] sm:$0xff]
      %v1654 = vld [vmem:[%s517 + $0x158] sm:$0xff]
      %v1655 = vld [vmem:[%s517 + $0x168] sm:$0xff]
      %v1656 = vld [vmem:[%s517 + $0x170] sm:$0xff]
      %v1657 = vpack.c.bf16 %v1626, %v1625
      %v1658 = vpack.c.bf16 %v1628, %v1627
      %v1659 = vpack.c.bf16 %v1630, %v1629
      %v1660 = vpack.c.bf16 %v1632, %v1631
      %v1661 = vpack.c.bf16 %v1634, %v1633
      %v1662 = vpack.c.bf16 %v1636, %v1635
      %v1663 = vpack.c.bf16 %v1638, %v1637
      %v1664 = vpack.c.bf16 %v1640, %v1639
      %v1665 = vpack.c.bf16 %v1642, %v1641
      %v1666 = vpack.c.bf16 %v1644, %v1643
      %v1667 = vpack.c.bf16 %v1646, %v1645
      %v1668 = vpack.c.bf16 %v1648, %v1647
      %v1669 = vpack.c.bf16 %v1650, %v1649
      %v1670 = vpack.c.bf16 %v1652, %v1651
      %v1671 = vpack.c.bf16 %v1654, %v1653
      %v1672 = vpack.c.bf16 %v1656, %v1655
      %v1673 = vld [vmem:[%s5 + $0xc0] sm:$0xf]
      %v1674 = vld [vmem:[%s5 + $0xc4] sm:$0xf]
      %v1675 = vld [vmem:[%s5 + $0xc8] sm:$0xf]
      %v1676 = vld [vmem:[%s5 + $0xcc] sm:$0xf]
      %v1677 = vld [vmem:[%s5 + $0xd0] sm:$0xf]
      %v1678 = vld [vmem:[%s5 + $0xd4] sm:$0xf]
      %v1679 = vld [vmem:[%s5 + $0xd8] sm:$0xf]
      %v1680 = vld [vmem:[%s5 + $0xdc] sm:$0xf]
      %v1681 = vld [vmem:[%s5 + $0xe0] sm:$0xf]
      %v1682 = vld [vmem:[%s5 + $0xe4] sm:$0xf]
      %v1683 = vld [vmem:[%s5 + $0xe8] sm:$0xf]
      %v1684 = vld [vmem:[%s5 + $0xec] sm:$0xf]
      %v1685 = vld [vmem:[%s5 + $0xf0] sm:$0xf]
      %v1686 = vld [vmem:[%s5 + $0xf4] sm:$0xf]
      %v1687 = vld [vmem:[%s5 + $0xf8] sm:$0xf]
      %v1688 = vld [vmem:[%s5 + $0xfc] sm:$0xf]
      %v1705 = vunpack.c.l.b16 %v1673
      %v1706 = vunpack.c.l.b16 %v1674
      %v1707 = vunpack.c.l.b16 %v1675
      %v1708 = vunpack.c.l.b16 %v1676
      %v1709 = vunpack.c.l.b16 %v1677
      %v1710 = vunpack.c.l.b16 %v1678
      %v1711 = vunpack.c.l.b16 %v1679
      %v1712 = vunpack.c.l.b16 %v1680
      %v1713 = vunpack.c.l.b16 %v1681
      %v1714 = vunpack.c.l.b16 %v1682
      %v1715 = vunpack.c.l.b16 %v1683
      %v1716 = vunpack.c.l.b16 %v1684
      %v1717 = vunpack.c.l.b16 %v1685
      %v1718 = vunpack.c.l.b16 %v1686
      %v1719 = vunpack.c.l.b16 %v1687
      %v1720 = vunpack.c.l.b16 %v1688
      %v1721 = vpack.c.b16 %v1706, %v1705
      %v1722 = vpack.c.b16 %v1708, %v1707
      %v1723 = vpack.c.b16 %v1710, %v1709
      %v1724 = vpack.c.b16 %v1712, %v1711
      %v1725 = vpack.c.b16 %v1714, %v1713
      %v1726 = vpack.c.b16 %v1716, %v1715
      %v1727 = vpack.c.b16 %v1718, %v1717
      %v1728 = vpack.c.b16 %v1720, %v1719
      %1737 = vmatprep.subr.bf16.mxu0 0
      %1738 = vmatpush1.bf16.msra.mxu0 %v1728
      %1739 = vmatprep.subr.bf16.mxu0 0
      %1740 = vmatpush1.bf16.msra.mxu0 %v1727
      %1741 = vmatprep.subr.bf16.mxu0 0
      %1742 = vmatpush1.bf16.msra.mxu0 %v1726
      %1743 = vmatprep.subr.bf16.mxu0 0
      %1744 = vmatpush1.bf16.msra.mxu0 %v1725
      %1745 = vmatprep.subr.bf16.mxu0 0
      %1746 = vmatpush1.bf16.msra.mxu0 %v1724
      %1747 = vmatprep.subr.bf16.mxu0 0
      %1748 = vmatpush1.bf16.msra.mxu0 %v1723
      %1749 = vmatprep.subr.bf16.mxu0 0
      %1750 = vmatpush1.bf16.msra.mxu0 %v1722
      %1751 = vmatprep.subr.bf16.mxu0 0
      %1752 = vmatpush1.bf16.msra.mxu0 %v1721
      %1753 = vmatprep.subr.bf16.mxu0 0
      %1754 = vmatpush2.bf16.msra.mxu0 0
      %1755 = vmatprep.subr.bf16.mxu0 0
      %1756 = vmatpush2.bf16.msra.mxu0 0
      %1757 = vmatprep.subr.bf16.mxu0 0
      %1758 = vmatpush2.bf16.msra.mxu0 0
      %1759 = vmatprep.subr.bf16.mxu0 0
      %1760 = vmatpush2.bf16.msra.mxu0 0
      %1761 = vmatprep.subr.bf16.mxu0 0
      %1762 = vmatpush2.bf16.msra.mxu0 0
      %1763 = vmatprep.subr.bf16.mxu0 0
      %1764 = vmatpush2.bf16.msra.mxu0 0
      %1765 = vmatprep.subr.bf16.mxu0 0
      %1766 = vmatpush2.bf16.msra.mxu0 0
      %1767 = vmatprep.subr.bf16.mxu0 0
      %1768 = vmatpush2.bf16.msra.mxu0 0
      %1769 = vmatprep.mubr.bf16.mxu0 0
      %1770 = vmatmul.mubr.bf16.gmra.mxu0 %v1657
      %v1771 = vpop.f32.mrf.mxu0
      %v1772 = vadd.f32 0.0, %v1771
      %v1773 = vpop.f32.mrf.mxu0
      %v1774 = vpop.f32.mrf.mxu0
      %v1775 = vadd.f32 0.0, %v1774
      %v1776 = vpop.f32.mrf.mxu0
      %1777 = vmatprep.mubr.bf16.mxu0 0
      %1778 = vmatmul.mubr.bf16.gmra.mxu0 %v1658
      %v1779 = vpop.f32.mrf.mxu0
      %v1780 = vadd.f32 0.0, %v1779
      %v1781 = vpop.f32.mrf.mxu0
      %v1782 = vpop.f32.mrf.mxu0
      %v1783 = vadd.f32 0.0, %v1782
      %v1784 = vpop.f32.mrf.mxu0
      %1785 = vmatprep.mubr.bf16.mxu0 0
      %1786 = vmatmul.mubr.bf16.gmra.mxu0 %v1659
      %v1787 = vpop.f32.mrf.mxu0
      %v1788 = vadd.f32 0.0, %v1787
      %v1789 = vpop.f32.mrf.mxu0
      %v1790 = vpop.f32.mrf.mxu0
      %v1791 = vadd.f32 0.0, %v1790
      %v1792 = vpop.f32.mrf.mxu0
      %1793 = vmatprep.mubr.bf16.mxu0 0
      %1794 = vmatmul.mubr.bf16.gmra.mxu0 %v1660
      %v1795 = vpop.f32.mrf.mxu0
      %v1796 = vadd.f32 0.0, %v1795
      %v1797 = vpop.f32.mrf.mxu0
      %v1798 = vpop.f32.mrf.mxu0
      %v1799 = vadd.f32 0.0, %v1798
      %v1800 = vpop.f32.mrf.mxu0
      %1801 = vmatprep.mubr.bf16.mxu0 0
      %1802 = vmatmul.mubr.bf16.gmra.mxu0 %v1661
      %v1803 = vpop.f32.mrf.mxu0
      %v1804 = vadd.f32 0.0, %v1803
      %v1805 = vpop.f32.mrf.mxu0
      %v1806 = vpop.f32.mrf.mxu0
      %v1807 = vadd.f32 0.0, %v1806
      %v1808 = vpop.f32.mrf.mxu0
      %1809 = vmatprep.mubr.bf16.mxu0 0
      %1810 = vmatmul.mubr.bf16.gmra.mxu0 %v1662
      %v1811 = vpop.f32.mrf.mxu0
      %v1812 = vadd.f32 0.0, %v1811
      %v1813 = vpop.f32.mrf.mxu0
      %v1814 = vpop.f32.mrf.mxu0
      %v1815 = vadd.f32 0.0, %v1814
      %v1816 = vpop.f32.mrf.mxu0
      %1817 = vmatprep.mubr.bf16.mxu0 0
      %1818 = vmatmul.mubr.bf16.gmra.mxu0 %v1663
      %v1819 = vpop.f32.mrf.mxu0
      %v1820 = vadd.f32 0.0, %v1819
      %v1821 = vpop.f32.mrf.mxu0
      %v1822 = vpop.f32.mrf.mxu0
      %v1823 = vadd.f32 0.0, %v1822
      %v1824 = vpop.f32.mrf.mxu0
      %1825 = vmatprep.mubr.bf16.mxu0 0
      %1826 = vmatmul.mubr.bf16.gmra.mxu0 %v1664
      %v1827 = vpop.f32.mrf.mxu0
      %v1828 = vadd.f32 0.0, %v1827
      %v1829 = vpop.f32.mrf.mxu0
      %v1830 = vpop.f32.mrf.mxu0
      %v1831 = vadd.f32 0.0, %v1830
      %v1832 = vpop.f32.mrf.mxu0
      %1833 = vmatprep.mubr.bf16.mxu0 0
      %1834 = vmatmul.mubr.bf16.gmra.mxu0 %v1665
      %v1835 = vpop.f32.mrf.mxu0
      %v1836 = vadd.f32 0.0, %v1835
      %v1837 = vpop.f32.mrf.mxu0
      %v1838 = vpop.f32.mrf.mxu0
      %v1839 = vadd.f32 0.0, %v1838
      %v1840 = vpop.f32.mrf.mxu0
      %1841 = vmatprep.mubr.bf16.mxu0 0
      %1842 = vmatmul.mubr.bf16.gmra.mxu0 %v1666
      %v1843 = vpop.f32.mrf.mxu0
      %v1844 = vadd.f32 0.0, %v1843
      %v1845 = vpop.f32.mrf.mxu0
      %v1846 = vpop.f32.mrf.mxu0
      %v1847 = vadd.f32 0.0, %v1846
      %v1848 = vpop.f32.mrf.mxu0
      %1849 = vmatprep.mubr.bf16.mxu0 0
      %1850 = vmatmul.mubr.bf16.gmra.mxu0 %v1667
      %v1851 = vpop.f32.mrf.mxu0
      %v1852 = vadd.f32 0.0, %v1851
      %v1853 = vpop.f32.mrf.mxu0
      %v1854 = vpop.f32.mrf.mxu0
      %v1855 = vadd.f32 0.0, %v1854
      %v1856 = vpop.f32.mrf.mxu0
      %1857 = vmatprep.mubr.bf16.mxu0 0
      %1858 = vmatmul.mubr.bf16.gmra.mxu0 %v1668
      %v1859 = vpop.f32.mrf.mxu0
      %v1860 = vadd.f32 0.0, %v1859
      %v1861 = vpop.f32.mrf.mxu0
      %v1862 = vpop.f32.mrf.mxu0
      %v1863 = vadd.f32 0.0, %v1862
      %v1864 = vpop.f32.mrf.mxu0
      %1865 = vmatprep.mubr.bf16.mxu0 0
      %1866 = vmatmul.mubr.bf16.gmra.mxu0 %v1669
      %v1867 = vpop.f32.mrf.mxu0
      %v1868 = vadd.f32 0.0, %v1867
      %v1869 = vpop.f32.mrf.mxu0
      %v1870 = vpop.f32.mrf.mxu0
      %v1871 = vadd.f32 0.0, %v1870
      %v1872 = vpop.f32.mrf.mxu0
      %1873 = vmatprep.mubr.bf16.mxu0 0
      %1874 = vmatmul.mubr.bf16.gmra.mxu0 %v1670
      %v1875 = vpop.f32.mrf.mxu0
      %v1876 = vadd.f32 0.0, %v1875
      %v1877 = vpop.f32.mrf.mxu0
      %v1878 = vpop.f32.mrf.mxu0
      %v1879 = vadd.f32 0.0, %v1878
      %v1880 = vpop.f32.mrf.mxu0
      %1881 = vmatprep.mubr.bf16.mxu0 0
      %1882 = vmatmul.mubr.bf16.gmra.mxu0 %v1671
      %v1883 = vpop.f32.mrf.mxu0
      %v1884 = vadd.f32 0.0, %v1883
      %v1885 = vpop.f32.mrf.mxu0
      %v1886 = vpop.f32.mrf.mxu0
      %v1887 = vadd.f32 0.0, %v1886
      %v1888 = vpop.f32.mrf.mxu0
      %1889 = vmatprep.mubr.bf16.mxu0 0
      %1890 = vmatmul.mubr.bf16.gmra.mxu0 %v1672
      %v1891 = vpop.f32.mrf.mxu0
      %v1892 = vadd.f32 0.0, %v1891
      %v1893 = vpop.f32.mrf.mxu0
      %v1894 = vpop.f32.mrf.mxu0
      %v1895 = vadd.f32 0.0, %v1894
      %v1896 = vpop.f32.mrf.mxu0
      %1897 = vdwg.mxu0
      %v1898 = vld [vmem:[#allocation3] sm:$0xff]
      %v1899 = vld [vmem:[#allocation3 + $0x8] sm:$0xff]
      %v1900 = vld [vmem:[#allocation3 + $0x10] sm:$0xff]
      %v1901 = vld [vmem:[#allocation3 + $0x18] sm:$0xff]
      %v1902 = vld [vmem:[#allocation3 + $0x20] sm:$0xff]
      %v1903 = vld [vmem:[#allocation3 + $0x28] sm:$0xff]
      %v1904 = vld [vmem:[#allocation3 + $0x30] sm:$0xff]
      %v1905 = vld [vmem:[#allocation3 + $0x38] sm:$0xff]
      %v1906 = vld [vmem:[#allocation3 + $0x40] sm:$0xff]
      %v1907 = vld [vmem:[#allocation3 + $0x48] sm:$0xff]
      %v1908 = vld [vmem:[#allocation3 + $0x50] sm:$0xff]
      %v1909 = vld [vmem:[#allocation3 + $0x58] sm:$0xff]
      %v1910 = vld [vmem:[#allocation3 + $0x60] sm:$0xff]
      %v1911 = vld [vmem:[#allocation3 + $0x68] sm:$0xff]
      %v1912 = vld [vmem:[#allocation3 + $0x70] sm:$0xff]
      %v1913 = vld [vmem:[#allocation3 + $0x78] sm:$0xff]
      %v1914 = vld [vmem:[#allocation3 + $0x80] sm:$0xff]
      %v1915 = vld [vmem:[#allocation3 + $0x88] sm:$0xff]
      %v1916 = vld [vmem:[#allocation3 + $0x90] sm:$0xff]
      %v1917 = vld [vmem:[#allocation3 + $0x98] sm:$0xff]
      %v1918 = vld [vmem:[#allocation3 + $0xa0] sm:$0xff]
      %v1919 = vld [vmem:[#allocation3 + $0xa8] sm:$0xff]
      %v1920 = vld [vmem:[#allocation3 + $0xb0] sm:$0xff]
      %v1921 = vld [vmem:[#allocation3 + $0xb8] sm:$0xff]
      %v1922 = vld [vmem:[#allocation3 + $0xc0] sm:$0xff]
      %v1923 = vld [vmem:[#allocation3 + $0xc8] sm:$0xff]
      %v1924 = vld [vmem:[#allocation3 + $0xd0] sm:$0xff]
      %v1925 = vld [vmem:[#allocation3 + $0xd8] sm:$0xff]
      %v1926 = vld [vmem:[#allocation3 + $0xe0] sm:$0xff]
      %v1927 = vld [vmem:[#allocation3 + $0xe8] sm:$0xff]
      %v1928 = vld [vmem:[#allocation3 + $0xf0] sm:$0xff]
      %v1929 = vld [vmem:[#allocation3 + $0xf8] sm:$0xff]
      %v1930 = vadd.f32 %v1898, %v1772
      %v1931 = vadd.f32 %v1899, %v1775
      %v1932 = vadd.f32 %v1900, %v1780
      %v1933 = vadd.f32 %v1901, %v1783
      %v1934 = vadd.f32 %v1902, %v1788
      %v1935 = vadd.f32 %v1903, %v1791
      %v1936 = vadd.f32 %v1904, %v1796
      %v1937 = vadd.f32 %v1905, %v1799
      %v1938 = vadd.f32 %v1906, %v1804
      %v1939 = vadd.f32 %v1907, %v1807
      %v1940 = vadd.f32 %v1908, %v1812
      %v1941 = vadd.f32 %v1909, %v1815
      %v1942 = vadd.f32 %v1910, %v1820
      %v1943 = vadd.f32 %v1911, %v1823
      %v1944 = vadd.f32 %v1912, %v1828
      %v1945 = vadd.f32 %v1913, %v1831
      %v1946 = vadd.f32 %v1914, %v1836
      %v1947 = vadd.f32 %v1915, %v1839
      %v1948 = vadd.f32 %v1916, %v1844
      %v1949 = vadd.f32 %v1917, %v1847
      %v1950 = vadd.f32 %v1918, %v1852
      %v1951 = vadd.f32 %v1919, %v1855
      %v1952 = vadd.f32 %v1920, %v1860
      %v1953 = vadd.f32 %v1921, %v1863
      %v1954 = vadd.f32 %v1922, %v1868
      %v1955 = vadd.f32 %v1923, %v1871
      %v1956 = vadd.f32 %v1924, %v1876
      %v1957 = vadd.f32 %v1925, %v1879
      %v1958 = vadd.f32 %v1926, %v1884
      %v1959 = vadd.f32 %v1927, %v1887
      %v1960 = vadd.f32 %v1928, %v1892
      %v1961 = vadd.f32 %v1929, %v1895
      %1962 = vst [vmem:[#allocation3] sm:$0xff] %v1930
      %1963 = vst [vmem:[#allocation3 + $0x8] sm:$0xff] %v1931
      %1964 = vst [vmem:[#allocation3 + $0x10] sm:$0xff] %v1932
      %1965 = vst [vmem:[#allocation3 + $0x18] sm:$0xff] %v1933
      %1966 = vst [vmem:[#allocation3 + $0x20] sm:$0xff] %v1934
      %1967 = vst [vmem:[#allocation3 + $0x28] sm:$0xff] %v1935
      %1968 = vst [vmem:[#allocation3 + $0x30] sm:$0xff] %v1936
      %1969 = vst [vmem:[#allocation3 + $0x38] sm:$0xff] %v1937
      %1970 = vst [vmem:[#allocation3 + $0x40] sm:$0xff] %v1938
      %1971 = vst [vmem:[#allocation3 + $0x48] sm:$0xff] %v1939
      %1972 = vst [vmem:[#allocation3 + $0x50] sm:$0xff] %v1940
      %1973 = vst [vmem:[#allocation3 + $0x58] sm:$0xff] %v1941
      %1974 = vst [vmem:[#allocation3 + $0x60] sm:$0xff] %v1942
      %1975 = vst [vmem:[#allocation3 + $0x68] sm:$0xff] %v1943
      %1976 = vst [vmem:[#allocation3 + $0x70] sm:$0xff] %v1944
      %1977 = vst [vmem:[#allocation3 + $0x78] sm:$0xff] %v1945
      %1978 = vst [vmem:[#allocation3 + $0x80] sm:$0xff] %v1946
      %1979 = vst [vmem:[#allocation3 + $0x88] sm:$0xff] %v1947
      %1980 = vst [vmem:[#allocation3 + $0x90] sm:$0xff] %v1948
      %1981 = vst [vmem:[#allocation3 + $0x98] sm:$0xff] %v1949
      %1982 = vst [vmem:[#allocation3 + $0xa0] sm:$0xff] %v1950
      %1983 = vst [vmem:[#allocation3 + $0xa8] sm:$0xff] %v1951
      %1984 = vst [vmem:[#allocation3 + $0xb0] sm:$0xff] %v1952
      %1985 = vst [vmem:[#allocation3 + $0xb8] sm:$0xff] %v1953
      %1986 = vst [vmem:[#allocation3 + $0xc0] sm:$0xff] %v1954
      %1987 = vst [vmem:[#allocation3 + $0xc8] sm:$0xff] %v1955
      %1988 = vst [vmem:[#allocation3 + $0xd0] sm:$0xff] %v1956
      %1989 = vst [vmem:[#allocation3 + $0xd8] sm:$0xff] %v1957
      %1990 = vst [vmem:[#allocation3 + $0xe0] sm:$0xff] %v1958
      %1991 = vst [vmem:[#allocation3 + $0xe8] sm:$0xff] %v1959
      %1992 = vst [vmem:[#allocation3 + $0xf0] sm:$0xff] %v1960
      %1993 = vst [vmem:[#allocation3 + $0xf8] sm:$0xff] %v1961
      %v1994 = vld [vmem:[%s517 + $0x1] sm:$0xff]
      %v1995 = vld [vmem:[%s517 + $0x9] sm:$0xff]
      %v1996 = vld [vmem:[%s517 + $0x19] sm:$0xff]
      %v1997 = vld [vmem:[%s517 + $0x21] sm:$0xff]
      %v1998 = vld [vmem:[%s517 + $0x31] sm:$0xff]
      %v1999 = vld [vmem:[%s517 + $0x39] sm:$0xff]
      %v2000 = vld [vmem:[%s517 + $0x49] sm:$0xff]
      %v2001 = vld [vmem:[%s517 + $0x51] sm:$0xff]
      %v2002 = vld [vmem:[%s517 + $0x61] sm:$0xff]
      %v2003 = vld [vmem:[%s517 + $0x69] sm:$0xff]
      %v2004 = vld [vmem:[%s517 + $0x79] sm:$0xff]
      %v2005 = vld [vmem:[%s517 + $0x81] sm:$0xff]
      %v2006 = vld [vmem:[%s517 + $0x91] sm:$0xff]
      %v2007 = vld [vmem:[%s517 + $0x99] sm:$0xff]
      %v2008 = vld [vmem:[%s517 + $0xa9] sm:$0xff]
      %v2009 = vld [vmem:[%s517 + $0xb1] sm:$0xff]
      %v2010 = vld [vmem:[%s517 + $0xc1] sm:$0xff]
      %v2011 = vld [vmem:[%s517 + $0xc9] sm:$0xff]
      %v2012 = vld [vmem:[%s517 + $0xd9] sm:$0xff]
      %v2013 = vld [vmem:[%s517 + $0xe1] sm:$0xff]
      %v2014 = vld [vmem:[%s517 + $0xf1] sm:$0xff]
      %v2015 = vld [vmem:[%s517 + $0xf9] sm:$0xff]
      %v2016 = vld [vmem:[%s517 + $0x109] sm:$0xff]
      %v2017 = vld [vmem:[%s517 + $0x111] sm:$0xff]
      %v2018 = vld [vmem:[%s517 + $0x121] sm:$0xff]
      %v2019 = vld [vmem:[%s517 + $0x129] sm:$0xff]
      %v2020 = vld [vmem:[%s517 + $0x139] sm:$0xff]
      %v2021 = vld [vmem:[%s517 + $0x141] sm:$0xff]
      %v2022 = vld [vmem:[%s517 + $0x151] sm:$0xff]
      %v2023 = vld [vmem:[%s517 + $0x159] sm:$0xff]
      %v2024 = vld [vmem:[%s517 + $0x169] sm:$0xff]
      %v2025 = vld [vmem:[%s517 + $0x171] sm:$0xff]
      %v2026 = vpack.c.bf16 %v1995, %v1994
      %v2027 = vpack.c.bf16 %v1997, %v1996
      %v2028 = vpack.c.bf16 %v1999, %v1998
      %v2029 = vpack.c.bf16 %v2001, %v2000
      %v2030 = vpack.c.bf16 %v2003, %v2002
      %v2031 = vpack.c.bf16 %v2005, %v2004
      %v2032 = vpack.c.bf16 %v2007, %v2006
      %v2033 = vpack.c.bf16 %v2009, %v2008
      %v2034 = vpack.c.bf16 %v2011, %v2010
      %v2035 = vpack.c.bf16 %v2013, %v2012
      %v2036 = vpack.c.bf16 %v2015, %v2014
      %v2037 = vpack.c.bf16 %v2017, %v2016
      %v2038 = vpack.c.bf16 %v2019, %v2018
      %v2039 = vpack.c.bf16 %v2021, %v2020
      %v2040 = vpack.c.bf16 %v2023, %v2022
      %v2041 = vpack.c.bf16 %v2025, %v2024
      %v2042 = vld [vmem:[%s5 + $0x100] sm:$0xf]
      %v2043 = vld [vmem:[%s5 + $0x104] sm:$0xf]
      %v2044 = vld [vmem:[%s5 + $0x108] sm:$0xf]
      %v2045 = vld [vmem:[%s5 + $0x10c] sm:$0xf]
      %v2046 = vld [vmem:[%s5 + $0x110] sm:$0xf]
      %v2047 = vld [vmem:[%s5 + $0x114] sm:$0xf]
      %v2048 = vld [vmem:[%s5 + $0x118] sm:$0xf]
      %v2049 = vld [vmem:[%s5 + $0x11c] sm:$0xf]
      %v2050 = vld [vmem:[%s5 + $0x120] sm:$0xf]
      %v2051 = vld [vmem:[%s5 + $0x124] sm:$0xf]
      %v2052 = vld [vmem:[%s5 + $0x128] sm:$0xf]
      %v2053 = vld [vmem:[%s5 + $0x12c] sm:$0xf]
      %v2054 = vld [vmem:[%s5 + $0x130] sm:$0xf]
      %v2055 = vld [vmem:[%s5 + $0x134] sm:$0xf]
      %v2056 = vld [vmem:[%s5 + $0x138] sm:$0xf]
      %v2057 = vld [vmem:[%s5 + $0x13c] sm:$0xf]
      %v2074 = vunpack.c.l.b16 %v2042
      %v2075 = vunpack.c.l.b16 %v2043
      %v2076 = vunpack.c.l.b16 %v2044
      %v2077 = vunpack.c.l.b16 %v2045
      %v2078 = vunpack.c.l.b16 %v2046
      %v2079 = vunpack.c.l.b16 %v2047
      %v2080 = vunpack.c.l.b16 %v2048
      %v2081 = vunpack.c.l.b16 %v2049
      %v2082 = vunpack.c.l.b16 %v2050
      %v2083 = vunpack.c.l.b16 %v2051
      %v2084 = vunpack.c.l.b16 %v2052
      %v2085 = vunpack.c.l.b16 %v2053
      %v2086 = vunpack.c.l.b16 %v2054
      %v2087 = vunpack.c.l.b16 %v2055
      %v2088 = vunpack.c.l.b16 %v2056
      %v2089 = vunpack.c.l.b16 %v2057
      %v2090 = vpack.c.b16 %v2075, %v2074
      %v2091 = vpack.c.b16 %v2077, %v2076
      %v2092 = vpack.c.b16 %v2079, %v2078
      %v2093 = vpack.c.b16 %v2081, %v2080
      %v2094 = vpack.c.b16 %v2083, %v2082
      %v2095 = vpack.c.b16 %v2085, %v2084
      %v2096 = vpack.c.b16 %v2087, %v2086
      %v2097 = vpack.c.b16 %v2089, %v2088
      %2106 = vmatprep.subr.bf16.mxu0 0
      %2107 = vmatpush1.bf16.msra.mxu0 %v2097
      %2108 = vmatprep.subr.bf16.mxu0 0
      %2109 = vmatpush1.bf16.msra.mxu0 %v2096
      %2110 = vmatprep.subr.bf16.mxu0 0
      %2111 = vmatpush1.bf16.msra.mxu0 %v2095
      %2112 = vmatprep.subr.bf16.mxu0 0
      %2113 = vmatpush1.bf16.msra.mxu0 %v2094
      %2114 = vmatprep.subr.bf16.mxu0 0
      %2115 = vmatpush1.bf16.msra.mxu0 %v2093
      %2116 = vmatprep.subr.bf16.mxu0 0
      %2117 = vmatpush1.bf16.msra.mxu0 %v2092
      %2118 = vmatprep.subr.bf16.mxu0 0
      %2119 = vmatpush1.bf16.msra.mxu0 %v2091
      %2120 = vmatprep.subr.bf16.mxu0 0
      %2121 = vmatpush1.bf16.msra.mxu0 %v2090
      %2122 = vmatprep.subr.bf16.mxu0 0
      %2123 = vmatpush2.bf16.msra.mxu0 0
      %2124 = vmatprep.subr.bf16.mxu0 0
      %2125 = vmatpush2.bf16.msra.mxu0 0
      %2126 = vmatprep.subr.bf16.mxu0 0
      %2127 = vmatpush2.bf16.msra.mxu0 0
      %2128 = vmatprep.subr.bf16.mxu0 0
      %2129 = vmatpush2.bf16.msra.mxu0 0
      %2130 = vmatprep.subr.bf16.mxu0 0
      %2131 = vmatpush2.bf16.msra.mxu0 0
      %2132 = vmatprep.subr.bf16.mxu0 0
      %2133 = vmatpush2.bf16.msra.mxu0 0
      %2134 = vmatprep.subr.bf16.mxu0 0
      %2135 = vmatpush2.bf16.msra.mxu0 0
      %2136 = vmatprep.subr.bf16.mxu0 0
      %2137 = vmatpush2.bf16.msra.mxu0 0
      %2138 = vmatprep.mubr.bf16.mxu0 0
      %2139 = vmatmul.mubr.bf16.gmra.mxu0 %v2026
      %v2140 = vpop.f32.mrf.mxu0
      %v2141 = vadd.f32 0.0, %v2140
      %v2142 = vpop.f32.mrf.mxu0
      %v2143 = vpop.f32.mrf.mxu0
      %v2144 = vadd.f32 0.0, %v2143
      %v2145 = vpop.f32.mrf.mxu0
      %2146 = vmatprep.mubr.bf16.mxu0 0
      %2147 = vmatmul.mubr.bf16.gmra.mxu0 %v2027
      %v2148 = vpop.f32.mrf.mxu0
      %v2149 = vadd.f32 0.0, %v2148
      %v2150 = vpop.f32.mrf.mxu0
      %v2151 = vpop.f32.mrf.mxu0
      %v2152 = vadd.f32 0.0, %v2151
      %v2153 = vpop.f32.mrf.mxu0
      %2154 = vmatprep.mubr.bf16.mxu0 0
      %2155 = vmatmul.mubr.bf16.gmra.mxu0 %v2028
      %v2156 = vpop.f32.mrf.mxu0
      %v2157 = vadd.f32 0.0, %v2156
      %v2158 = vpop.f32.mrf.mxu0
      %v2159 = vpop.f32.mrf.mxu0
      %v2160 = vadd.f32 0.0, %v2159
      %v2161 = vpop.f32.mrf.mxu0
      %2162 = vmatprep.mubr.bf16.mxu0 0
      %2163 = vmatmul.mubr.bf16.gmra.mxu0 %v2029
      %v2164 = vpop.f32.mrf.mxu0
      %v2165 = vadd.f32 0.0, %v2164
      %v2166 = vpop.f32.mrf.mxu0
      %v2167 = vpop.f32.mrf.mxu0
      %v2168 = vadd.f32 0.0, %v2167
      %v2169 = vpop.f32.mrf.mxu0
      %2170 = vmatprep.mubr.bf16.mxu0 0
      %2171 = vmatmul.mubr.bf16.gmra.mxu0 %v2030
      %v2172 = vpop.f32.mrf.mxu0
      %v2173 = vadd.f32 0.0, %v2172
      %v2174 = vpop.f32.mrf.mxu0
      %v2175 = vpop.f32.mrf.mxu0
      %v2176 = vadd.f32 0.0, %v2175
      %v2177 = vpop.f32.mrf.mxu0
      %2178 = vmatprep.mubr.bf16.mxu0 0
      %2179 = vmatmul.mubr.bf16.gmra.mxu0 %v2031
      %v2180 = vpop.f32.mrf.mxu0
      %v2181 = vadd.f32 0.0, %v2180
      %v2182 = vpop.f32.mrf.mxu0
      %v2183 = vpop.f32.mrf.mxu0
      %v2184 = vadd.f32 0.0, %v2183
      %v2185 = vpop.f32.mrf.mxu0
      %2186 = vmatprep.mubr.bf16.mxu0 0
      %2187 = vmatmul.mubr.bf16.gmra.mxu0 %v2032
      %v2188 = vpop.f32.mrf.mxu0
      %v2189 = vadd.f32 0.0, %v2188
      %v2190 = vpop.f32.mrf.mxu0
      %v2191 = vpop.f32.mrf.mxu0
      %v2192 = vadd.f32 0.0, %v2191
      %v2193 = vpop.f32.mrf.mxu0
      %2194 = vmatprep.mubr.bf16.mxu0 0
      %2195 = vmatmul.mubr.bf16.gmra.mxu0 %v2033
      %v2196 = vpop.f32.mrf.mxu0
      %v2197 = vadd.f32 0.0, %v2196
      %v2198 = vpop.f32.mrf.mxu0
      %v2199 = vpop.f32.mrf.mxu0
      %v2200 = vadd.f32 0.0, %v2199
      %v2201 = vpop.f32.mrf.mxu0
      %2202 = vmatprep.mubr.bf16.mxu0 0
      %2203 = vmatmul.mubr.bf16.gmra.mxu0 %v2034
      %v2204 = vpop.f32.mrf.mxu0
      %v2205 = vadd.f32 0.0, %v2204
      %v2206 = vpop.f32.mrf.mxu0
      %v2207 = vpop.f32.mrf.mxu0
      %v2208 = vadd.f32 0.0, %v2207
      %v2209 = vpop.f32.mrf.mxu0
      %2210 = vmatprep.mubr.bf16.mxu0 0
      %2211 = vmatmul.mubr.bf16.gmra.mxu0 %v2035
      %v2212 = vpop.f32.mrf.mxu0
      %v2213 = vadd.f32 0.0, %v2212
      %v2214 = vpop.f32.mrf.mxu0
      %v2215 = vpop.f32.mrf.mxu0
      %v2216 = vadd.f32 0.0, %v2215
      %v2217 = vpop.f32.mrf.mxu0
      %2218 = vmatprep.mubr.bf16.mxu0 0
      %2219 = vmatmul.mubr.bf16.gmra.mxu0 %v2036
      %v2220 = vpop.f32.mrf.mxu0
      %v2221 = vadd.f32 0.0, %v2220
      %v2222 = vpop.f32.mrf.mxu0
      %v2223 = vpop.f32.mrf.mxu0
      %v2224 = vadd.f32 0.0, %v2223
      %v2225 = vpop.f32.mrf.mxu0
      %2226 = vmatprep.mubr.bf16.mxu0 0
      %2227 = vmatmul.mubr.bf16.gmra.mxu0 %v2037
      %v2228 = vpop.f32.mrf.mxu0
      %v2229 = vadd.f32 0.0, %v2228
      %v2230 = vpop.f32.mrf.mxu0
      %v2231 = vpop.f32.mrf.mxu0
      %v2232 = vadd.f32 0.0, %v2231
      %v2233 = vpop.f32.mrf.mxu0
      %2234 = vmatprep.mubr.bf16.mxu0 0
      %2235 = vmatmul.mubr.bf16.gmra.mxu0 %v2038
      %v2236 = vpop.f32.mrf.mxu0
      %v2237 = vadd.f32 0.0, %v2236
      %v2238 = vpop.f32.mrf.mxu0
      %v2239 = vpop.f32.mrf.mxu0
      %v2240 = vadd.f32 0.0, %v2239
      %v2241 = vpop.f32.mrf.mxu0
      %2242 = vmatprep.mubr.bf16.mxu0 0
      %2243 = vmatmul.mubr.bf16.gmra.mxu0 %v2039
      %v2244 = vpop.f32.mrf.mxu0
      %v2245 = vadd.f32 0.0, %v2244
      %v2246 = vpop.f32.mrf.mxu0
      %v2247 = vpop.f32.mrf.mxu0
      %v2248 = vadd.f32 0.0, %v2247
      %v2249 = vpop.f32.mrf.mxu0
      %2250 = vmatprep.mubr.bf16.mxu0 0
      %2251 = vmatmul.mubr.bf16.gmra.mxu0 %v2040
      %v2252 = vpop.f32.mrf.mxu0
      %v2253 = vadd.f32 0.0, %v2252
      %v2254 = vpop.f32.mrf.mxu0
      %v2255 = vpop.f32.mrf.mxu0
      %v2256 = vadd.f32 0.0, %v2255
      %v2257 = vpop.f32.mrf.mxu0
      %2258 = vmatprep.mubr.bf16.mxu0 0
      %2259 = vmatmul.mubr.bf16.gmra.mxu0 %v2041
      %v2260 = vpop.f32.mrf.mxu0
      %v2261 = vadd.f32 0.0, %v2260
      %v2262 = vpop.f32.mrf.mxu0
      %v2263 = vpop.f32.mrf.mxu0
      %v2264 = vadd.f32 0.0, %v2263
      %v2265 = vpop.f32.mrf.mxu0
      %2266 = vdwg.mxu0
      %v2267 = vld [vmem:[#allocation3] sm:$0xff]
      %v2268 = vld [vmem:[#allocation3 + $0x8] sm:$0xff]
      %v2269 = vld [vmem:[#allocation3 + $0x10] sm:$0xff]
      %v2270 = vld [vmem:[#allocation3 + $0x18] sm:$0xff]
      %v2271 = vld [vmem:[#allocation3 + $0x20] sm:$0xff]
      %v2272 = vld [vmem:[#allocation3 + $0x28] sm:$0xff]
      %v2273 = vld [vmem:[#allocation3 + $0x30] sm:$0xff]
      %v2274 = vld [vmem:[#allocation3 + $0x38] sm:$0xff]
      %v2275 = vld [vmem:[#allocation3 + $0x40] sm:$0xff]
      %v2276 = vld [vmem:[#allocation3 + $0x48] sm:$0xff]
      %v2277 = vld [vmem:[#allocation3 + $0x50] sm:$0xff]
      %v2278 = vld [vmem:[#allocation3 + $0x58] sm:$0xff]
      %v2279 = vld [vmem:[#allocation3 + $0x60] sm:$0xff]
      %v2280 = vld [vmem:[#allocation3 + $0x68] sm:$0xff]
      %v2281 = vld [vmem:[#allocation3 + $0x70] sm:$0xff]
      %v2282 = vld [vmem:[#allocation3 + $0x78] sm:$0xff]
      %v2283 = vld [vmem:[#allocation3 + $0x80] sm:$0xff]
      %v2284 = vld [vmem:[#allocation3 + $0x88] sm:$0xff]
      %v2285 = vld [vmem:[#allocation3 + $0x90] sm:$0xff]
      %v2286 = vld [vmem:[#allocation3 + $0x98] sm:$0xff]
      %v2287 = vld [vmem:[#allocation3 + $0xa0] sm:$0xff]
      %v2288 = vld [vmem:[#allocation3 + $0xa8] sm:$0xff]
      %v2289 = vld [vmem:[#allocation3 + $0xb0] sm:$0xff]
      %v2290 = vld [vmem:[#allocation3 + $0xb8] sm:$0xff]
      %v2291 = vld [vmem:[#allocation3 + $0xc0] sm:$0xff]
      %v2292 = vld [vmem:[#allocation3 + $0xc8] sm:$0xff]
      %v2293 = vld [vmem:[#allocation3 + $0xd0] sm:$0xff]
      %v2294 = vld [vmem:[#allocation3 + $0xd8] sm:$0xff]
      %v2295 = vld [vmem:[#allocation3 + $0xe0] sm:$0xff]
      %v2296 = vld [vmem:[#allocation3 + $0xe8] sm:$0xff]
      %v2297 = vld [vmem:[#allocation3 + $0xf0] sm:$0xff]
      %v2298 = vld [vmem:[#allocation3 + $0xf8] sm:$0xff]
      %v2299 = vadd.f32 %v2267, %v2141
      %v2300 = vadd.f32 %v2268, %v2144
      %v2301 = vadd.f32 %v2269, %v2149
      %v2302 = vadd.f32 %v2270, %v2152
      %v2303 = vadd.f32 %v2271, %v2157
      %v2304 = vadd.f32 %v2272, %v2160
      %v2305 = vadd.f32 %v2273, %v2165
      %v2306 = vadd.f32 %v2274, %v2168
      %v2307 = vadd.f32 %v2275, %v2173
      %v2308 = vadd.f32 %v2276, %v2176
      %v2309 = vadd.f32 %v2277, %v2181
      %v2310 = vadd.f32 %v2278, %v2184
      %v2311 = vadd.f32 %v2279, %v2189
      %v2312 = vadd.f32 %v2280, %v2192
      %v2313 = vadd.f32 %v2281, %v2197
      %v2314 = vadd.f32 %v2282, %v2200
      %v2315 = vadd.f32 %v2283, %v2205
      %v2316 = vadd.f32 %v2284, %v2208
      %v2317 = vadd.f32 %v2285, %v2213
      %v2318 = vadd.f32 %v2286, %v2216
      %v2319 = vadd.f32 %v2287, %v2221
      %v2320 = vadd.f32 %v2288, %v2224
      %v2321 = vadd.f32 %v2289, %v2229
      %v2322 = vadd.f32 %v2290, %v2232
      %v2323 = vadd.f32 %v2291, %v2237
      %v2324 = vadd.f32 %v2292, %v2240
      %v2325 = vadd.f32 %v2293, %v2245
      %v2326 = vadd.f32 %v2294, %v2248
      %v2327 = vadd.f32 %v2295, %v2253
      %v2328 = vadd.f32 %v2296, %v2256
      %v2329 = vadd.f32 %v2297, %v2261
      %v2330 = vadd.f32 %v2298, %v2264
      %2331 = vst [vmem:[#allocation3] sm:$0xff] %v2299
      %2332 = vst [vmem:[#allocation3 + $0x8] sm:$0xff] %v2300
      %2333 = vst [vmem:[#allocation3 + $0x10] sm:$0xff] %v2301
      %2334 = vst [vmem:[#allocation3 + $0x18] sm:$0xff] %v2302
      %2335 = vst [vmem:[#allocation3 + $0x20] sm:$0xff] %v2303
      %2336 = vst [vmem:[#allocation3 + $0x28] sm:$0xff] %v2304
      %2337 = vst [vmem:[#allocation3 + $0x30] sm:$0xff] %v2305
      %2338 = vst [vmem:[#allocation3 + $0x38] sm:$0xff] %v2306
      %2339 = vst [vmem:[#allocation3 + $0x40] sm:$0xff] %v2307
      %2340 = vst [vmem:[#allocation3 + $0x48] sm:$0xff] %v2308
      %2341 = vst [vmem:[#allocation3 + $0x50] sm:$0xff] %v2309
      %2342 = vst [vmem:[#allocation3 + $0x58] sm:$0xff] %v2310
      %2343 = vst [vmem:[#allocation3 + $0x60] sm:$0xff] %v2311
      %2344 = vst [vmem:[#allocation3 + $0x68] sm:$0xff] %v2312
      %2345 = vst [vmem:[#allocation3 + $0x70] sm:$0xff] %v2313
      %2346 = vst [vmem:[#allocation3 + $0x78] sm:$0xff] %v2314
      %2347 = vst [vmem:[#allocation3 + $0x80] sm:$0xff] %v2315
      %2348 = vst [vmem:[#allocation3 + $0x88] sm:$0xff] %v2316
      %2349 = vst [vmem:[#allocation3 + $0x90] sm:$0xff] %v2317
      %2350 = vst [vmem:[#allocation3 + $0x98] sm:$0xff] %v2318
      %2351 = vst [vmem:[#allocation3 + $0xa0] sm:$0xff] %v2319
      %2352 = vst [vmem:[#allocation3 + $0xa8] sm:$0xff] %v2320
      %2353 = vst [vmem:[#allocation3 + $0xb0] sm:$0xff] %v2321
      %2354 = vst [vmem:[#allocation3 + $0xb8] sm:$0xff] %v2322
      %2355 = vst [vmem:[#allocation3 + $0xc0] sm:$0xff] %v2323
      %2356 = vst [vmem:[#allocation3 + $0xc8] sm:$0xff] %v2324
      %2357 = vst [vmem:[#allocation3 + $0xd0] sm:$0xff] %v2325
      %2358 = vst [vmem:[#allocation3 + $0xd8] sm:$0xff] %v2326
      %2359 = vst [vmem:[#allocation3 + $0xe0] sm:$0xff] %v2327
      %2360 = vst [vmem:[#allocation3 + $0xe8] sm:$0xff] %v2328
      %2361 = vst [vmem:[#allocation3 + $0xf0] sm:$0xff] %v2329
      %2362 = vst [vmem:[#allocation3 + $0xf8] sm:$0xff] %v2330
      %v2363 = vld [vmem:[%s517 + $0x2] sm:$0xff]
      %v2364 = vld [vmem:[%s517 + $0xa] sm:$0xff]
      %v2365 = vld [vmem:[%s517 + $0x1a] sm:$0xff]
      %v2366 = vld [vmem:[%s517 + $0x22] sm:$0xff]
      %v2367 = vld [vmem:[%s517 + $0x32] sm:$0xff]
      %v2368 = vld [vmem:[%s517 + $0x3a] sm:$0xff]
      %v2369 = vld [vmem:[%s517 + $0x4a] sm:$0xff]
      %v2370 = vld [vmem:[%s517 + $0x52] sm:$0xff]
      %v2371 = vld [vmem:[%s517 + $0x62] sm:$0xff]
      %v2372 = vld [vmem:[%s517 + $0x6a] sm:$0xff]
      %v2373 = vld [vmem:[%s517 + $0x7a] sm:$0xff]
      %v2374 = vld [vmem:[%s517 + $0x82] sm:$0xff]
      %v2375 = vld [vmem:[%s517 + $0x92] sm:$0xff]
      %v2376 = vld [vmem:[%s517 + $0x9a] sm:$0xff]
      %v2377 = vld [vmem:[%s517 + $0xaa] sm:$0xff]
      %v2378 = vld [vmem:[%s517 + $0xb2] sm:$0xff]
      %v2379 = vld [vmem:[%s517 + $0xc2] sm:$0xff]
      %v2380 = vld [vmem:[%s517 + $0xca] sm:$0xff]
      %v2381 = vld [vmem:[%s517 + $0xda] sm:$0xff]
      %v2382 = vld [vmem:[%s517 + $0xe2] sm:$0xff]
      %v2383 = vld [vmem:[%s517 + $0xf2] sm:$0xff]
      %v2384 = vld [vmem:[%s517 + $0xfa] sm:$0xff]
      %v2385 = vld [vmem:[%s517 + $0x10a] sm:$0xff]
      %v2386 = vld [vmem:[%s517 + $0x112] sm:$0xff]
      %v2387 = vld [vmem:[%s517 + $0x122] sm:$0xff]
      %v2388 = vld [vmem:[%s517 + $0x12a] sm:$0xff]
      %v2389 = vld [vmem:[%s517 + $0x13a] sm:$0xff]
      %v2390 = vld [vmem:[%s517 + $0x142] sm:$0xff]
      %v2391 = vld [vmem:[%s517 + $0x152] sm:$0xff]
      %v2392 = vld [vmem:[%s517 + $0x15a] sm:$0xff]
      %v2393 = vld [vmem:[%s517 + $0x16a] sm:$0xff]
      %v2394 = vld [vmem:[%s517 + $0x172] sm:$0xff]
      %v2395 = vpack.c.bf16 %v2364, %v2363
      %v2396 = vpack.c.bf16 %v2366, %v2365
      %v2397 = vpack.c.bf16 %v2368, %v2367
      %v2398 = vpack.c.bf16 %v2370, %v2369
      %v2399 = vpack.c.bf16 %v2372, %v2371
      %v2400 = vpack.c.bf16 %v2374, %v2373
      %v2401 = vpack.c.bf16 %v2376, %v2375
      %v2402 = vpack.c.bf16 %v2378, %v2377
      %v2403 = vpack.c.bf16 %v2380, %v2379
      %v2404 = vpack.c.bf16 %v2382, %v2381
      %v2405 = vpack.c.bf16 %v2384, %v2383
      %v2406 = vpack.c.bf16 %v2386, %v2385
      %v2407 = vpack.c.bf16 %v2388, %v2387
      %v2408 = vpack.c.bf16 %v2390, %v2389
      %v2409 = vpack.c.bf16 %v2392, %v2391
      %v2410 = vpack.c.bf16 %v2394, %v2393
      %v2411 = vld [vmem:[%s5 + $0x140] sm:$0xf]
      %v2412 = vld [vmem:[%s5 + $0x144] sm:$0xf]
      %v2413 = vld [vmem:[%s5 + $0x148] sm:$0xf]
      %v2414 = vld [vmem:[%s5 + $0x14c] sm:$0xf]
      %v2415 = vld [vmem:[%s5 + $0x150] sm:$0xf]
      %v2416 = vld [vmem:[%s5 + $0x154] sm:$0xf]
      %v2417 = vld [vmem:[%s5 + $0x158] sm:$0xf]
      %v2418 = vld [vmem:[%s5 + $0x15c] sm:$0xf]
      %v2419 = vld [vmem:[%s5 + $0x160] sm:$0xf]
      %v2420 = vld [vmem:[%s5 + $0x164] sm:$0xf]
      %v2421 = vld [vmem:[%s5 + $0x168] sm:$0xf]
      %v2422 = vld [vmem:[%s5 + $0x16c] sm:$0xf]
      %v2423 = vld [vmem:[%s5 + $0x170] sm:$0xf]
      %v2424 = vld [vmem:[%s5 + $0x174] sm:$0xf]
      %v2425 = vld [vmem:[%s5 + $0x178] sm:$0xf]
      %v2426 = vld [vmem:[%s5 + $0x17c] sm:$0xf]
      %v2443 = vunpack.c.l.b16 %v2411
      %v2444 = vunpack.c.l.b16 %v2412
      %v2445 = vunpack.c.l.b16 %v2413
      %v2446 = vunpack.c.l.b16 %v2414
      %v2447 = vunpack.c.l.b16 %v2415
      %v2448 = vunpack.c.l.b16 %v2416
      %v2449 = vunpack.c.l.b16 %v2417
      %v2450 = vunpack.c.l.b16 %v2418
      %v2451 = vunpack.c.l.b16 %v2419
      %v2452 = vunpack.c.l.b16 %v2420
      %v2453 = vunpack.c.l.b16 %v2421
      %v2454 = vunpack.c.l.b16 %v2422
      %v2455 = vunpack.c.l.b16 %v2423
      %v2456 = vunpack.c.l.b16 %v2424
      %v2457 = vunpack.c.l.b16 %v2425
      %v2458 = vunpack.c.l.b16 %v2426
      %v2459 = vpack.c.b16 %v2444, %v2443
      %v2460 = vpack.c.b16 %v2446, %v2445
      %v2461 = vpack.c.b16 %v2448, %v2447
      %v2462 = vpack.c.b16 %v2450, %v2449
      %v2463 = vpack.c.b16 %v2452, %v2451
      %v2464 = vpack.c.b16 %v2454, %v2453
      %v2465 = vpack.c.b16 %v2456, %v2455
      %v2466 = vpack.c.b16 %v2458, %v2457
      %2475 = vmatprep.subr.bf16.mxu0 0
      %2476 = vmatpush1.bf16.msra.mxu0 %v2466
      %2477 = vmatprep.subr.bf16.mxu0 0
      %2478 = vmatpush1.bf16.msra.mxu0 %v2465
      %2479 = vmatprep.subr.bf16.mxu0 0
      %2480 = vmatpush1.bf16.msra.mxu0 %v2464
      %2481 = vmatprep.subr.bf16.mxu0 0
      %2482 = vmatpush1.bf16.msra.mxu0 %v2463
      %2483 = vmatprep.subr.bf16.mxu0 0
      %2484 = vmatpush1.bf16.msra.mxu0 %v2462
      %2485 = vmatprep.subr.bf16.mxu0 0
      %2486 = vmatpush1.bf16.msra.mxu0 %v2461
      %2487 = vmatprep.subr.bf16.mxu0 0
      %2488 = vmatpush1.bf16.msra.mxu0 %v2460
      %2489 = vmatprep.subr.bf16.mxu0 0
      %2490 = vmatpush1.bf16.msra.mxu0 %v2459
      %2491 = vmatprep.subr.bf16.mxu0 0
      %2492 = vmatpush2.bf16.msra.mxu0 0
      %2493 = vmatprep.subr.bf16.mxu0 0
      %2494 = vmatpush2.bf16.msra.mxu0 0
      %2495 = vmatprep.subr.bf16.mxu0 0
      %2496 = vmatpush2.bf16.msra.mxu0 0
      %2497 = vmatprep.subr.bf16.mxu0 0
      %2498 = vmatpush2.bf16.msra.mxu0 0
      %2499 = vmatprep.subr.bf16.mxu0 0
      %2500 = vmatpush2.bf16.msra.mxu0 0
      %2501 = vmatprep.subr.bf16.mxu0 0
      %2502 = vmatpush2.bf16.msra.mxu0 0
      %2503 = vmatprep.subr.bf16.mxu0 0
      %2504 = vmatpush2.bf16.msra.mxu0 0
      %2505 = vmatprep.subr.bf16.mxu0 0
      %2506 = vmatpush2.bf16.msra.mxu0 0
      %2507 = vmatprep.mubr.bf16.mxu0 0
      %2508 = vmatmul.mubr.bf16.gmra.mxu0 %v2395
      %v2509 = vpop.f32.mrf.mxu0
      %v2510 = vadd.f32 0.0, %v2509
      %v2511 = vpop.f32.mrf.mxu0
      %v2512 = vpop.f32.mrf.mxu0
      %v2513 = vadd.f32 0.0, %v2512
      %v2514 = vpop.f32.mrf.mxu0
      %2515 = vmatprep.mubr.bf16.mxu0 0
      %2516 = vmatmul.mubr.bf16.gmra.mxu0 %v2396
      %v2517 = vpop.f32.mrf.mxu0
      %v2518 = vadd.f32 0.0, %v2517
      %v2519 = vpop.f32.mrf.mxu0
      %v2520 = vpop.f32.mrf.mxu0
      %v2521 = vadd.f32 0.0, %v2520
      %v2522 = vpop.f32.mrf.mxu0
      %2523 = vmatprep.mubr.bf16.mxu0 0
      %2524 = vmatmul.mubr.bf16.gmra.mxu0 %v2397
      %v2525 = vpop.f32.mrf.mxu0
      %v2526 = vadd.f32 0.0, %v2525
      %v2527 = vpop.f32.mrf.mxu0
      %v2528 = vpop.f32.mrf.mxu0
      %v2529 = vadd.f32 0.0, %v2528
      %v2530 = vpop.f32.mrf.mxu0
      %2531 = vmatprep.mubr.bf16.mxu0 0
      %2532 = vmatmul.mubr.bf16.gmra.mxu0 %v2398
      %v2533 = vpop.f32.mrf.mxu0
      %v2534 = vadd.f32 0.0, %v2533
      %v2535 = vpop.f32.mrf.mxu0
      %v2536 = vpop.f32.mrf.mxu0
      %v2537 = vadd.f32 0.0, %v2536
      %v2538 = vpop.f32.mrf.mxu0
      %2539 = vmatprep.mubr.bf16.mxu0 0
      %2540 = vmatmul.mubr.bf16.gmra.mxu0 %v2399
      %v2541 = vpop.f32.mrf.mxu0
      %v2542 = vadd.f32 0.0, %v2541
      %v2543 = vpop.f32.mrf.mxu0
      %v2544 = vpop.f32.mrf.mxu0
      %v2545 = vadd.f32 0.0, %v2544
      %v2546 = vpop.f32.mrf.mxu0
      %2547 = vmatprep.mubr.bf16.mxu0 0
      %2548 = vmatmul.mubr.bf16.gmra.mxu0 %v2400
      %v2549 = vpop.f32.mrf.mxu0
      %v2550 = vadd.f32 0.0, %v2549
      %v2551 = vpop.f32.mrf.mxu0
      %v2552 = vpop.f32.mrf.mxu0
      %v2553 = vadd.f32 0.0, %v2552
      %v2554 = vpop.f32.mrf.mxu0
      %2555 = vmatprep.mubr.bf16.mxu0 0
      %2556 = vmatmul.mubr.bf16.gmra.mxu0 %v2401
      %v2557 = vpop.f32.mrf.mxu0
      %v2558 = vadd.f32 0.0, %v2557
      %v2559 = vpop.f32.mrf.mxu0
      %v2560 = vpop.f32.mrf.mxu0
      %v2561 = vadd.f32 0.0, %v2560
      %v2562 = vpop.f32.mrf.mxu0
      %2563 = vmatprep.mubr.bf16.mxu0 0
      %2564 = vmatmul.mubr.bf16.gmra.mxu0 %v2402
      %v2565 = vpop.f32.mrf.mxu0
      %v2566 = vadd.f32 0.0, %v2565
      %v2567 = vpop.f32.mrf.mxu0
      %v2568 = vpop.f32.mrf.mxu0
      %v2569 = vadd.f32 0.0, %v2568
      %v2570 = vpop.f32.mrf.mxu0
      %2571 = vmatprep.mubr.bf16.mxu0 0
      %2572 = vmatmul.mubr.bf16.gmra.mxu0 %v2403
      %v2573 = vpop.f32.mrf.mxu0
      %v2574 = vadd.f32 0.0, %v2573
      %v2575 = vpop.f32.mrf.mxu0
      %v2576 = vpop.f32.mrf.mxu0
      %v2577 = vadd.f32 0.0, %v2576
      %v2578 = vpop.f32.mrf.mxu0
      %2579 = vmatprep.mubr.bf16.mxu0 0
      %2580 = vmatmul.mubr.bf16.gmra.mxu0 %v2404
      %v2581 = vpop.f32.mrf.mxu0
      %v2582 = vadd.f32 0.0, %v2581
      %v2583 = vpop.f32.mrf.mxu0
      %v2584 = vpop.f32.mrf.mxu0
      %v2585 = vadd.f32 0.0, %v2584
      %v2586 = vpop.f32.mrf.mxu0
      %2587 = vmatprep.mubr.bf16.mxu0 0
      %2588 = vmatmul.mubr.bf16.gmra.mxu0 %v2405
      %v2589 = vpop.f32.mrf.mxu0
      %v2590 = vadd.f32 0.0, %v2589
      %v2591 = vpop.f32.mrf.mxu0
      %v2592 = vpop.f32.mrf.mxu0
      %v2593 = vadd.f32 0.0, %v2592
      %v2594 = vpop.f32.mrf.mxu0
      %2595 = vmatprep.mubr.bf16.mxu0 0
      %2596 = vmatmul.mubr.bf16.gmra.mxu0 %v2406
      %v2597 = vpop.f32.mrf.mxu0
      %v2598 = vadd.f32 0.0, %v2597
      %v2599 = vpop.f32.mrf.mxu0
      %v2600 = vpop.f32.mrf.mxu0
      %v2601 = vadd.f32 0.0, %v2600
      %v2602 = vpop.f32.mrf.mxu0
      %2603 = vmatprep.mubr.bf16.mxu0 0
      %2604 = vmatmul.mubr.bf16.gmra.mxu0 %v2407
      %v2605 = vpop.f32.mrf.mxu0
      %v2606 = vadd.f32 0.0, %v2605
      %v2607 = vpop.f32.mrf.mxu0
      %v2608 = vpop.f32.mrf.mxu0
      %v2609 = vadd.f32 0.0, %v2608
      %v2610 = vpop.f32.mrf.mxu0
      %2611 = vmatprep.mubr.bf16.mxu0 0
      %2612 = vmatmul.mubr.bf16.gmra.mxu0 %v2408
      %v2613 = vpop.f32.mrf.mxu0
      %v2614 = vadd.f32 0.0, %v2613
      %v2615 = vpop.f32.mrf.mxu0
      %v2616 = vpop.f32.mrf.mxu0
      %v2617 = vadd.f32 0.0, %v2616
      %v2618 = vpop.f32.mrf.mxu0
      %2619 = vmatprep.mubr.bf16.mxu0 0
      %2620 = vmatmul.mubr.bf16.gmra.mxu0 %v2409
      %v2621 = vpop.f32.mrf.mxu0
      %v2622 = vadd.f32 0.0, %v2621
      %v2623 = vpop.f32.mrf.mxu0
      %v2624 = vpop.f32.mrf.mxu0
      %v2625 = vadd.f32 0.0, %v2624
      %v2626 = vpop.f32.mrf.mxu0
      %2627 = vmatprep.mubr.bf16.mxu0 0
      %2628 = vmatmul.mubr.bf16.gmra.mxu0 %v2410
      %v2629 = vpop.f32.mrf.mxu0
      %v2630 = vadd.f32 0.0, %v2629
      %v2631 = vpop.f32.mrf.mxu0
      %v2632 = vpop.f32.mrf.mxu0
      %v2633 = vadd.f32 0.0, %v2632
      %v2634 = vpop.f32.mrf.mxu0
      %2635 = vdwg.mxu0
      %v2636 = vld [vmem:[#allocation3] sm:$0xff]
      %v2637 = vld [vmem:[#allocation3 + $0x8] sm:$0xff]
      %v2638 = vld [vmem:[#allocation3 + $0x10] sm:$0xff]
      %v2639 = vld [vmem:[#allocation3 + $0x18] sm:$0xff]
      %v2640 = vld [vmem:[#allocation3 + $0x20] sm:$0xff]
      %v2641 = vld [vmem:[#allocation3 + $0x28] sm:$0xff]
      %v2642 = vld [vmem:[#allocation3 + $0x30] sm:$0xff]
      %v2643 = vld [vmem:[#allocation3 + $0x38] sm:$0xff]
      %v2644 = vld [vmem:[#allocation3 + $0x40] sm:$0xff]
      %v2645 = vld [vmem:[#allocation3 + $0x48] sm:$0xff]
      %v2646 = vld [vmem:[#allocation3 + $0x50] sm:$0xff]
      %v2647 = vld [vmem:[#allocation3 + $0x58] sm:$0xff]
      %v2648 = vld [vmem:[#allocation3 + $0x60] sm:$0xff]
      %v2649 = vld [vmem:[#allocation3 + $0x68] sm:$0xff]
      %v2650 = vld [vmem:[#allocation3 + $0x70] sm:$0xff]
      %v2651 = vld [vmem:[#allocation3 + $0x78] sm:$0xff]
      %v2652 = vld [vmem:[#allocation3 + $0x80] sm:$0xff]
      %v2653 = vld [vmem:[#allocation3 + $0x88] sm:$0xff]
      %v2654 = vld [vmem:[#allocation3 + $0x90] sm:$0xff]
      %v2655 = vld [vmem:[#allocation3 + $0x98] sm:$0xff]
      %v2656 = vld [vmem:[#allocation3 + $0xa0] sm:$0xff]
      %v2657 = vld [vmem:[#allocation3 + $0xa8] sm:$0xff]
      %v2658 = vld [vmem:[#allocation3 + $0xb0] sm:$0xff]
      %v2659 = vld [vmem:[#allocation3 + $0xb8] sm:$0xff]
      %v2660 = vld [vmem:[#allocation3 + $0xc0] sm:$0xff]
      %v2661 = vld [vmem:[#allocation3 + $0xc8] sm:$0xff]
      %v2662 = vld [vmem:[#allocation3 + $0xd0] sm:$0xff]
      %v2663 = vld [vmem:[#allocation3 + $0xd8] sm:$0xff]
      %v2664 = vld [vmem:[#allocation3 + $0xe0] sm:$0xff]
      %v2665 = vld [vmem:[#allocation3 + $0xe8] sm:$0xff]
      %v2666 = vld [vmem:[#allocation3 + $0xf0] sm:$0xff]
      %v2667 = vld [vmem:[#allocation3 + $0xf8] sm:$0xff]
      %v2668 = vadd.f32 %v2636, %v2510
      %v2669 = vadd.f32 %v2637, %v2513
      %v2670 = vadd.f32 %v2638, %v2518
      %v2671 = vadd.f32 %v2639, %v2521
      %v2672 = vadd.f32 %v2640, %v2526
      %v2673 = vadd.f32 %v2641, %v2529
      %v2674 = vadd.f32 %v2642, %v2534
      %v2675 = vadd.f32 %v2643, %v2537
      %v2676 = vadd.f32 %v2644, %v2542
      %v2677 = vadd.f32 %v2645, %v2545
      %v2678 = vadd.f32 %v2646, %v2550
      %v2679 = vadd.f32 %v2647, %v2553
      %v2680 = vadd.f32 %v2648, %v2558
      %v2681 = vadd.f32 %v2649, %v2561
      %v2682 = vadd.f32 %v2650, %v2566
      %v2683 = vadd.f32 %v2651, %v2569
      %v2684 = vadd.f32 %v2652, %v2574
      %v2685 = vadd.f32 %v2653, %v2577
      %v2686 = vadd.f32 %v2654, %v2582
      %v2687 = vadd.f32 %v2655, %v2585
      %v2688 = vadd.f32 %v2656, %v2590
      %v2689 = vadd.f32 %v2657, %v2593
      %v2690 = vadd.f32 %v2658, %v2598
      %v2691 = vadd.f32 %v2659, %v2601
      %v2692 = vadd.f32 %v2660, %v2606
      %v2693 = vadd.f32 %v2661, %v2609
      %v2694 = vadd.f32 %v2662, %v2614
      %v2695 = vadd.f32 %v2663, %v2617
      %v2696 = vadd.f32 %v2664, %v2622
      %v2697 = vadd.f32 %v2665, %v2625
      %v2698 = vadd.f32 %v2666, %v2630
      %v2699 = vadd.f32 %v2667, %v2633
      %2700 = vst [vmem:[#allocation3] sm:$0xff] %v2668
      %2701 = vst [vmem:[#allocation3 + $0x8] sm:$0xff] %v2669
      %2702 = vst [vmem:[#allocation3 + $0x10] sm:$0xff] %v2670
      %2703 = vst [vmem:[#allocation3 + $0x18] sm:$0xff] %v2671
      %2704 = vst [vmem:[#allocation3 + $0x20] sm:$0xff] %v2672
      %2705 = vst [vmem:[#allocation3 + $0x28] sm:$0xff] %v2673
      %2706 = vst [vmem:[#allocation3 + $0x30] sm:$0xff] %v2674
      %2707 = vst [vmem:[#allocation3 + $0x38] sm:$0xff] %v2675
      %2708 = vst [vmem:[#allocation3 + $0x40] sm:$0xff] %v2676
      %2709 = vst [vmem:[#allocation3 + $0x48] sm:$0xff] %v2677
      %2710 = vst [vmem:[#allocation3 + $0x50] sm:$0xff] %v2678
      %2711 = vst [vmem:[#allocation3 + $0x58] sm:$0xff] %v2679
      %2712 = vst [vmem:[#allocation3 + $0x60] sm:$0xff] %v2680
      %2713 = vst [vmem:[#allocation3 + $0x68] sm:$0xff] %v2681
      %2714 = vst [vmem:[#allocation3 + $0x70] sm:$0xff] %v2682
      %2715 = vst [vmem:[#allocation3 + $0x78] sm:$0xff] %v2683
      %2716 = vst [vmem:[#allocation3 + $0x80] sm:$0xff] %v2684
      %2717 = vst [vmem:[#allocation3 + $0x88] sm:$0xff] %v2685
      %2718 = vst [vmem:[#allocation3 + $0x90] sm:$0xff] %v2686
      %2719 = vst [vmem:[#allocation3 + $0x98] sm:$0xff] %v2687
      %2720 = vst [vmem:[#allocation3 + $0xa0] sm:$0xff] %v2688
      %2721 = vst [vmem:[#allocation3 + $0xa8] sm:$0xff] %v2689
      %2722 = vst [vmem:[#allocation3 + $0xb0] sm:$0xff] %v2690
      %2723 = vst [vmem:[#allocation3 + $0xb8] sm:$0xff] %v2691
      %2724 = vst [vmem:[#allocation3 + $0xc0] sm:$0xff] %v2692
      %2725 = vst [vmem:[#allocation3 + $0xc8] sm:$0xff] %v2693
      %2726 = vst [vmem:[#allocation3 + $0xd0] sm:$0xff] %v2694
      %2727 = vst [vmem:[#allocation3 + $0xd8] sm:$0xff] %v2695
      %2728 = vst [vmem:[#allocation3 + $0xe0] sm:$0xff] %v2696
      %2729 = vst [vmem:[#allocation3 + $0xe8] sm:$0xff] %v2697
      %2730 = vst [vmem:[#allocation3 + $0xf0] sm:$0xff] %v2698
      %2731 = vst [vmem:[#allocation3 + $0xf8] sm:$0xff] %v2699
      %s2732 = scalar_lea.vmem [#allocation2], 48
      %v2733 = vld [vmem:[%s2732] sm:$0xff]
      %v2734 = vld [vmem:[%s2732 + $0x8] sm:$0xff]
      %v2735 = vld [vmem:[%s2732 + $0x18] sm:$0xff]
      %v2736 = vld [vmem:[%s2732 + $0x20] sm:$0xff]
      %v2737 = vld [vmem:[%s2732 + $0x30] sm:$0xff]
      %v2738 = vld [vmem:[%s2732 + $0x38] sm:$0xff]
      %v2739 = vld [vmem:[%s2732 + $0x48] sm:$0xff]
      %v2740 = vld [vmem:[%s2732 + $0x50] sm:$0xff]
      %v2741 = vld [vmem:[%s2732 + $0x60] sm:$0xff]
      %v2742 = vld [vmem:[%s2732 + $0x68] sm:$0xff]
      %v2743 = vld [vmem:[%s2732 + $0x78] sm:$0xff]
      %v2744 = vld [vmem:[%s2732 + $0x80] sm:$0xff]
      %v2745 = vld [vmem:[%s2732 + $0x90] sm:$0xff]
      %v2746 = vld [vmem:[%s2732 + $0x98] sm:$0xff]
      %v2747 = vld [vmem:[%s2732 + $0xa8] sm:$0xff]
      %v2748 = vld [vmem:[%s2732 + $0xb0] sm:$0xff]
      %v2749 = vld [vmem:[%s2732 + $0xc0] sm:$0xff]
      %v2750 = vld [vmem:[%s2732 + $0xc8] sm:$0xff]
      %v2751 = vld [vmem:[%s2732 + $0xd8] sm:$0xff]
      %v2752 = vld [vmem:[%s2732 + $0xe0] sm:$0xff]
      %v2753 = vld [vmem:[%s2732 + $0xf0] sm:$0xff]
      %v2754 = vld [vmem:[%s2732 + $0xf8] sm:$0xff]
      %v2755 = vld [vmem:[%s2732 + $0x108] sm:$0xff]
      %v2756 = vld [vmem:[%s2732 + $0x110] sm:$0xff]
      %v2757 = vld [vmem:[%s2732 + $0x120] sm:$0xff]
      %v2758 = vld [vmem:[%s2732 + $0x128] sm:$0xff]
      %v2759 = vld [vmem:[%s2732 + $0x138] sm:$0xff]
      %v2760 = vld [vmem:[%s2732 + $0x140] sm:$0xff]
      %v2761 = vld [vmem:[%s2732 + $0x150] sm:$0xff]
      %v2762 = vld [vmem:[%s2732 + $0x158] sm:$0xff]
      %v2763 = vld [vmem:[%s2732 + $0x168] sm:$0xff]
      %v2764 = vld [vmem:[%s2732 + $0x170] sm:$0xff]
      %v2765 = vpack.c.bf16 %v2734, %v2733
      %v2766 = vpack.c.bf16 %v2736, %v2735
      %v2767 = vpack.c.bf16 %v2738, %v2737
      %v2768 = vpack.c.bf16 %v2740, %v2739
      %v2769 = vpack.c.bf16 %v2742, %v2741
      %v2770 = vpack.c.bf16 %v2744, %v2743
      %v2771 = vpack.c.bf16 %v2746, %v2745
      %v2772 = vpack.c.bf16 %v2748, %v2747
      %v2773 = vpack.c.bf16 %v2750, %v2749
      %v2774 = vpack.c.bf16 %v2752, %v2751
      %v2775 = vpack.c.bf16 %v2754, %v2753
      %v2776 = vpack.c.bf16 %v2756, %v2755
      %v2777 = vpack.c.bf16 %v2758, %v2757
      %v2778 = vpack.c.bf16 %v2760, %v2759
      %v2779 = vpack.c.bf16 %v2762, %v2761
      %v2780 = vpack.c.bf16 %v2764, %v2763
      %v2781 = vld [vmem:[%s5 + $0x180] sm:$0xf]
      %v2782 = vld [vmem:[%s5 + $0x184] sm:$0xf]
      %v2783 = vld [vmem:[%s5 + $0x188] sm:$0xf]
      %v2784 = vld [vmem:[%s5 + $0x18c] sm:$0xf]
      %v2785 = vld [vmem:[%s5 + $0x190] sm:$0xf]
      %v2786 = vld [vmem:[%s5 + $0x194] sm:$0xf]
      %v2787 = vld [vmem:[%s5 + $0x198] sm:$0xf]
      %v2788 = vld [vmem:[%s5 + $0x19c] sm:$0xf]
      %v2789 = vld [vmem:[%s5 + $0x1a0] sm:$0xf]
      %v2790 = vld [vmem:[%s5 + $0x1a4] sm:$0xf]
      %v2791 = vld [vmem:[%s5 + $0x1a8] sm:$0xf]
      %v2792 = vld [vmem:[%s5 + $0x1ac] sm:$0xf]
      %v2793 = vld [vmem:[%s5 + $0x1b0] sm:$0xf]
      %v2794 = vld [vmem:[%s5 + $0x1b4] sm:$0xf]
      %v2795 = vld [vmem:[%s5 + $0x1b8] sm:$0xf]
      %v2796 = vld [vmem:[%s5 + $0x1bc] sm:$0xf]
      %v2813 = vunpack.c.l.b16 %v2781
      %v2814 = vunpack.c.l.b16 %v2782
      %v2815 = vunpack.c.l.b16 %v2783
      %v2816 = vunpack.c.l.b16 %v2784
      %v2817 = vunpack.c.l.b16 %v2785
      %v2818 = vunpack.c.l.b16 %v2786
      %v2819 = vunpack.c.l.b16 %v2787
      %v2820 = vunpack.c.l.b16 %v2788
      %v2821 = vunpack.c.l.b16 %v2789
      %v2822 = vunpack.c.l.b16 %v2790
      %v2823 = vunpack.c.l.b16 %v2791
      %v2824 = vunpack.c.l.b16 %v2792
      %v2825 = vunpack.c.l.b16 %v2793
      %v2826 = vunpack.c.l.b16 %v2794
      %v2827 = vunpack.c.l.b16 %v2795
      %v2828 = vunpack.c.l.b16 %v2796
      %v2829 = vpack.c.b16 %v2814, %v2813
      %v2830 = vpack.c.b16 %v2816, %v2815
      %v2831 = vpack.c.b16 %v2818, %v2817
      %v2832 = vpack.c.b16 %v2820, %v2819
      %v2833 = vpack.c.b16 %v2822, %v2821
      %v2834 = vpack.c.b16 %v2824, %v2823
      %v2835 = vpack.c.b16 %v2826, %v2825
      %v2836 = vpack.c.b16 %v2828, %v2827
      %2845 = vmatprep.subr.bf16.mxu0 0
      %2846 = vmatpush1.bf16.msra.mxu0 %v2836
      %2847 = vmatprep.subr.bf16.mxu0 0
      %2848 = vmatpush1.bf16.msra.mxu0 %v2835
      %2849 = vmatprep.subr.bf16.mxu0 0
      %2850 = vmatpush1.bf16.msra.mxu0 %v2834
      %2851 = vmatprep.subr.bf16.mxu0 0
      %2852 = vmatpush1.bf16.msra.mxu0 %v2833
      %2853 = vmatprep.subr.bf16.mxu0 0
      %2854 = vmatpush1.bf16.msra.mxu0 %v2832
      %2855 = vmatprep.subr.bf16.mxu0 0
      %2856 = vmatpush1.bf16.msra.mxu0 %v2831
      %2857 = vmatprep.subr.bf16.mxu0 0
      %2858 = vmatpush1.bf16.msra.mxu0 %v2830
      %2859 = vmatprep.subr.bf16.mxu0 0
      %2860 = vmatpush1.bf16.msra.mxu0 %v2829
      %2861 = vmatprep.subr.bf16.mxu0 0
      %2862 = vmatpush2.bf16.msra.mxu0 0
      %2863 = vmatprep.subr.bf16.mxu0 0
      %2864 = vmatpush2.bf16.msra.mxu0 0
      %2865 = vmatprep.subr.bf16.mxu0 0
      %2866 = vmatpush2.bf16.msra.mxu0 0
      %2867 = vmatprep.subr.bf16.mxu0 0
      %2868 = vmatpush2.bf16.msra.mxu0 0
      %2869 = vmatprep.subr.bf16.mxu0 0
      %2870 = vmatpush2.bf16.msra.mxu0 0
      %2871 = vmatprep.subr.bf16.mxu0 0
      %2872 = vmatpush2.bf16.msra.mxu0 0
      %2873 = vmatprep.subr.bf16.mxu0 0
      %2874 = vmatpush2.bf16.msra.mxu0 0
      %2875 = vmatprep.subr.bf16.mxu0 0
      %2876 = vmatpush2.bf16.msra.mxu0 0
      %2877 = vmatprep.mubr.bf16.mxu0 0
      %2878 = vmatmul.mubr.bf16.gmra.mxu0 %v2765
      %v2879 = vpop.f32.mrf.mxu0
      %v2880 = vadd.f32 0.0, %v2879
      %v2881 = vpop.f32.mrf.mxu0
      %v2882 = vpop.f32.mrf.mxu0
      %v2883 = vadd.f32 0.0, %v2882
      %v2884 = vpop.f32.mrf.mxu0
      %2885 = vmatprep.mubr.bf16.mxu0 0
      %2886 = vmatmul.mubr.bf16.gmra.mxu0 %v2766
      %v2887 = vpop.f32.mrf.mxu0
      %v2888 = vadd.f32 0.0, %v2887
      %v2889 = vpop.f32.mrf.mxu0
      %v2890 = vpop.f32.mrf.mxu0
      %v2891 = vadd.f32 0.0, %v2890
      %v2892 = vpop.f32.mrf.mxu0
      %2893 = vmatprep.mubr.bf16.mxu0 0
      %2894 = vmatmul.mubr.bf16.gmra.mxu0 %v2767
      %v2895 = vpop.f32.mrf.mxu0
      %v2896 = vadd.f32 0.0, %v2895
      %v2897 = vpop.f32.mrf.mxu0
      %v2898 = vpop.f32.mrf.mxu0
      %v2899 = vadd.f32 0.0, %v2898
      %v2900 = vpop.f32.mrf.mxu0
      %2901 = vmatprep.mubr.bf16.mxu0 0
      %2902 = vmatmul.mubr.bf16.gmra.mxu0 %v2768
      %v2903 = vpop.f32.mrf.mxu0
      %v2904 = vadd.f32 0.0, %v2903
      %v2905 = vpop.f32.mrf.mxu0
      %v2906 = vpop.f32.mrf.mxu0
      %v2907 = vadd.f32 0.0, %v2906
      %v2908 = vpop.f32.mrf.mxu0
      %2909 = vmatprep.mubr.bf16.mxu0 0
      %2910 = vmatmul.mubr.bf16.gmra.mxu0 %v2769
      %v2911 = vpop.f32.mrf.mxu0
      %v2912 = vadd.f32 0.0, %v2911
      %v2913 = vpop.f32.mrf.mxu0
      %v2914 = vpop.f32.mrf.mxu0
      %v2915 = vadd.f32 0.0, %v2914
      %v2916 = vpop.f32.mrf.mxu0
      %2917 = vmatprep.mubr.bf16.mxu0 0
      %2918 = vmatmul.mubr.bf16.gmra.mxu0 %v2770
      %v2919 = vpop.f32.mrf.mxu0
      %v2920 = vadd.f32 0.0, %v2919
      %v2921 = vpop.f32.mrf.mxu0
      %v2922 = vpop.f32.mrf.mxu0
      %v2923 = vadd.f32 0.0, %v2922
      %v2924 = vpop.f32.mrf.mxu0
      %2925 = vmatprep.mubr.bf16.mxu0 0
      %2926 = vmatmul.mubr.bf16.gmra.mxu0 %v2771
      %v2927 = vpop.f32.mrf.mxu0
      %v2928 = vadd.f32 0.0, %v2927
      %v2929 = vpop.f32.mrf.mxu0
      %v2930 = vpop.f32.mrf.mxu0
      %v2931 = vadd.f32 0.0, %v2930
      %v2932 = vpop.f32.mrf.mxu0
      %2933 = vmatprep.mubr.bf16.mxu0 0
      %2934 = vmatmul.mubr.bf16.gmra.mxu0 %v2772
      %v2935 = vpop.f32.mrf.mxu0
      %v2936 = vadd.f32 0.0, %v2935
      %v2937 = vpop.f32.mrf.mxu0
      %v2938 = vpop.f32.mrf.mxu0
      %v2939 = vadd.f32 0.0, %v2938
      %v2940 = vpop.f32.mrf.mxu0
      %2941 = vmatprep.mubr.bf16.mxu0 0
      %2942 = vmatmul.mubr.bf16.gmra.mxu0 %v2773
      %v2943 = vpop.f32.mrf.mxu0
      %v2944 = vadd.f32 0.0, %v2943
      %v2945 = vpop.f32.mrf.mxu0
      %v2946 = vpop.f32.mrf.mxu0
      %v2947 = vadd.f32 0.0, %v2946
      %v2948 = vpop.f32.mrf.mxu0
      %2949 = vmatprep.mubr.bf16.mxu0 0
      %2950 = vmatmul.mubr.bf16.gmra.mxu0 %v2774
      %v2951 = vpop.f32.mrf.mxu0
      %v2952 = vadd.f32 0.0, %v2951
      %v2953 = vpop.f32.mrf.mxu0
      %v2954 = vpop.f32.mrf.mxu0
      %v2955 = vadd.f32 0.0, %v2954
      %v2956 = vpop.f32.mrf.mxu0
      %2957 = vmatprep.mubr.bf16.mxu0 0
      %2958 = vmatmul.mubr.bf16.gmra.mxu0 %v2775
      %v2959 = vpop.f32.mrf.mxu0
      %v2960 = vadd.f32 0.0, %v2959
      %v2961 = vpop.f32.mrf.mxu0
      %v2962 = vpop.f32.mrf.mxu0
      %v2963 = vadd.f32 0.0, %v2962
      %v2964 = vpop.f32.mrf.mxu0
      %2965 = vmatprep.mubr.bf16.mxu0 0
      %2966 = vmatmul.mubr.bf16.gmra.mxu0 %v2776
      %v2967 = vpop.f32.mrf.mxu0
      %v2968 = vadd.f32 0.0, %v2967
      %v2969 = vpop.f32.mrf.mxu0
      %v2970 = vpop.f32.mrf.mxu0
      %v2971 = vadd.f32 0.0, %v2970
      %v2972 = vpop.f32.mrf.mxu0
      %2973 = vmatprep.mubr.bf16.mxu0 0
      %2974 = vmatmul.mubr.bf16.gmra.mxu0 %v2777
      %v2975 = vpop.f32.mrf.mxu0
      %v2976 = vadd.f32 0.0, %v2975
      %v2977 = vpop.f32.mrf.mxu0
      %v2978 = vpop.f32.mrf.mxu0
      %v2979 = vadd.f32 0.0, %v2978
      %v2980 = vpop.f32.mrf.mxu0
      %2981 = vmatprep.mubr.bf16.mxu0 0
      %2982 = vmatmul.mubr.bf16.gmra.mxu0 %v2778
      %v2983 = vpop.f32.mrf.mxu0
      %v2984 = vadd.f32 0.0, %v2983
      %v2985 = vpop.f32.mrf.mxu0
      %v2986 = vpop.f32.mrf.mxu0
      %v2987 = vadd.f32 0.0, %v2986
      %v2988 = vpop.f32.mrf.mxu0
      %2989 = vmatprep.mubr.bf16.mxu0 0
      %2990 = vmatmul.mubr.bf16.gmra.mxu0 %v2779
      %v2991 = vpop.f32.mrf.mxu0
      %v2992 = vadd.f32 0.0, %v2991
      %v2993 = vpop.f32.mrf.mxu0
      %v2994 = vpop.f32.mrf.mxu0
      %v2995 = vadd.f32 0.0, %v2994
      %v2996 = vpop.f32.mrf.mxu0
      %2997 = vmatprep.mubr.bf16.mxu0 0
      %2998 = vmatmul.mubr.bf16.gmra.mxu0 %v2780
      %v2999 = vpop.f32.mrf.mxu0
      %v3000 = vadd.f32 0.0, %v2999
      %v3001 = vpop.f32.mrf.mxu0
      %v3002 = vpop.f32.mrf.mxu0
      %v3003 = vadd.f32 0.0, %v3002
      %v3004 = vpop.f32.mrf.mxu0
      %3005 = vdwg.mxu0
      %v3006 = vld [vmem:[#allocation3] sm:$0xff]
      %v3007 = vld [vmem:[#allocation3 + $0x8] sm:$0xff]
      %v3008 = vld [vmem:[#allocation3 + $0x10] sm:$0xff]
      %v3009 = vld [vmem:[#allocation3 + $0x18] sm:$0xff]
      %v3010 = vld [vmem:[#allocation3 + $0x20] sm:$0xff]
      %v3011 = vld [vmem:[#allocation3 + $0x28] sm:$0xff]
      %v3012 = vld [vmem:[#allocation3 + $0x30] sm:$0xff]
      %v3013 = vld [vmem:[#allocation3 + $0x38] sm:$0xff]
      %v3014 = vld [vmem:[#allocation3 + $0x40] sm:$0xff]
      %v3015 = vld [vmem:[#allocation3 + $0x48] sm:$0xff]
      %v3016 = vld [vmem:[#allocation3 + $0x50] sm:$0xff]
      %v3017 = vld [vmem:[#allocation3 + $0x58] sm:$0xff]
      %v3018 = vld [vmem:[#allocation3 + $0x60] sm:$0xff]
      %v3019 = vld [vmem:[#allocation3 + $0x68] sm:$0xff]
      %v3020 = vld [vmem:[#allocation3 + $0x70] sm:$0xff]
      %v3021 = vld [vmem:[#allocation3 + $0x78] sm:$0xff]
      %v3022 = vld [vmem:[#allocation3 + $0x80] sm:$0xff]
      %v3023 = vld [vmem:[#allocation3 + $0x88] sm:$0xff]
      %v3024 = vld [vmem:[#allocation3 + $0x90] sm:$0xff]
      %v3025 = vld [vmem:[#allocation3 + $0x98] sm:$0xff]
      %v3026 = vld [vmem:[#allocation3 + $0xa0] sm:$0xff]
      %v3027 = vld [vmem:[#allocation3 + $0xa8] sm:$0xff]
      %v3028 = vld [vmem:[#allocation3 + $0xb0] sm:$0xff]
      %v3029 = vld [vmem:[#allocation3 + $0xb8] sm:$0xff]
      %v3030 = vld [vmem:[#allocation3 + $0xc0] sm:$0xff]
      %v3031 = vld [vmem:[#allocation3 + $0xc8] sm:$0xff]
      %v3032 = vld [vmem:[#allocation3 + $0xd0] sm:$0xff]
      %v3033 = vld [vmem:[#allocation3 + $0xd8] sm:$0xff]
      %v3034 = vld [vmem:[#allocation3 + $0xe0] sm:$0xff]
      %v3035 = vld [vmem:[#allocation3 + $0xe8] sm:$0xff]
      %v3036 = vld [vmem:[#allocation3 + $0xf0] sm:$0xff]
      %v3037 = vld [vmem:[#allocation3 + $0xf8] sm:$0xff]
      %v3038 = vadd.f32 %v3006, %v2880
      %v3039 = vadd.f32 %v3007, %v2883
      %v3040 = vadd.f32 %v3008, %v2888
      %v3041 = vadd.f32 %v3009, %v2891
      %v3042 = vadd.f32 %v3010, %v2896
      %v3043 = vadd.f32 %v3011, %v2899
      %v3044 = vadd.f32 %v3012, %v2904
      %v3045 = vadd.f32 %v3013, %v2907
      %v3046 = vadd.f32 %v3014, %v2912
      %v3047 = vadd.f32 %v3015, %v2915
      %v3048 = vadd.f32 %v3016, %v2920
      %v3049 = vadd.f32 %v3017, %v2923
      %v3050 = vadd.f32 %v3018, %v2928
      %v3051 = vadd.f32 %v3019, %v2931
      %v3052 = vadd.f32 %v3020, %v2936
      %v3053 = vadd.f32 %v3021, %v2939
      %v3054 = vadd.f32 %v3022, %v2944
      %v3055 = vadd.f32 %v3023, %v2947
      %v3056 = vadd.f32 %v3024, %v2952
      %v3057 = vadd.f32 %v3025, %v2955
      %v3058 = vadd.f32 %v3026, %v2960
      %v3059 = vadd.f32 %v3027, %v2963
      %v3060 = vadd.f32 %v3028, %v2968
      %v3061 = vadd.f32 %v3029, %v2971
      %v3062 = vadd.f32 %v3030, %v2976
      %v3063 = vadd.f32 %v3031, %v2979
      %v3064 = vadd.f32 %v3032, %v2984
      %v3065 = vadd.f32 %v3033, %v2987
      %v3066 = vadd.f32 %v3034, %v2992
      %v3067 = vadd.f32 %v3035, %v2995
      %v3068 = vadd.f32 %v3036, %v3000
      %v3069 = vadd.f32 %v3037, %v3003
      %3070 = vst [vmem:[#allocation3] sm:$0xff] %v3038
      %3071 = vst [vmem:[#allocation3 + $0x8] sm:$0xff] %v3039
      %3072 = vst [vmem:[#allocation3 + $0x10] sm:$0xff] %v3040
      %3073 = vst [vmem:[#allocation3 + $0x18] sm:$0xff] %v3041
      %3074 = vst [vmem:[#allocation3 + $0x20] sm:$0xff] %v3042
      %3075 = vst [vmem:[#allocation3 + $0x28] sm:$0xff] %v3043
      %3076 = vst [vmem:[#allocation3 + $0x30] sm:$0xff] %v3044
      %3077 = vst [vmem:[#allocation3 + $0x38] sm:$0xff] %v3045
      %3078 = vst [vmem:[#allocation3 + $0x40] sm:$0xff] %v3046
      %3079 = vst [vmem:[#allocation3 + $0x48] sm:$0xff] %v3047
      %3080 = vst [vmem:[#allocation3 + $0x50] sm:$0xff] %v3048
      %3081 = vst [vmem:[#allocation3 + $0x58] sm:$0xff] %v3049
      %3082 = vst [vmem:[#allocation3 + $0x60] sm:$0xff] %v3050
      %3083 = vst [vmem:[#allocation3 + $0x68] sm:$0xff] %v3051
      %3084 = vst [vmem:[#allocation3 + $0x70] sm:$0xff] %v3052
      %3085 = vst [vmem:[#allocation3 + $0x78] sm:$0xff] %v3053
      %3086 = vst [vmem:[#allocation3 + $0x80] sm:$0xff] %v3054
      %3087 = vst [vmem:[#allocation3 + $0x88] sm:$0xff] %v3055
      %3088 = vst [vmem:[#allocation3 + $0x90] sm:$0xff] %v3056
      %3089 = vst [vmem:[#allocation3 + $0x98] sm:$0xff] %v3057
      %3090 = vst [vmem:[#allocation3 + $0xa0] sm:$0xff] %v3058
      %3091 = vst [vmem:[#allocation3 + $0xa8] sm:$0xff] %v3059
      %3092 = vst [vmem:[#allocation3 + $0xb0] sm:$0xff] %v3060
      %3093 = vst [vmem:[#allocation3 + $0xb8] sm:$0xff] %v3061
      %3094 = vst [vmem:[#allocation3 + $0xc0] sm:$0xff] %v3062
      %3095 = vst [vmem:[#allocation3 + $0xc8] sm:$0xff] %v3063
      %3096 = vst [vmem:[#allocation3 + $0xd0] sm:$0xff] %v3064
      %3097 = vst [vmem:[#allocation3 + $0xd8] sm:$0xff] %v3065
      %3098 = vst [vmem:[#allocation3 + $0xe0] sm:$0xff] %v3066
      %3099 = vst [vmem:[#allocation3 + $0xe8] sm:$0xff] %v3067
      %3100 = vst [vmem:[#allocation3 + $0xf0] sm:$0xff] %v3068
      %3101 = vst [vmem:[#allocation3 + $0xf8] sm:$0xff] %v3069
      %v3102 = vld [vmem:[%s2732 + $0x1] sm:$0xff]
      %v3103 = vld [vmem:[%s2732 + $0x9] sm:$0xff]
      %v3104 = vld [vmem:[%s2732 + $0x19] sm:$0xff]
      %v3105 = vld [vmem:[%s2732 + $0x21] sm:$0xff]
      %v3106 = vld [vmem:[%s2732 + $0x31] sm:$0xff]
      %v3107 = vld [vmem:[%s2732 + $0x39] sm:$0xff]
      %v3108 = vld [vmem:[%s2732 + $0x49] sm:$0xff]
      %v3109 = vld [vmem:[%s2732 + $0x51] sm:$0xff]
      %v3110 = vld [vmem:[%s2732 + $0x61] sm:$0xff]
      %v3111 = vld [vmem:[%s2732 + $0x69] sm:$0xff]
      %v3112 = vld [vmem:[%s2732 + $0x79] sm:$0xff]
      %v3113 = vld [vmem:[%s2732 + $0x81] sm:$0xff]
      %v3114 = vld [vmem:[%s2732 + $0x91] sm:$0xff]
      %v3115 = vld [vmem:[%s2732 + $0x99] sm:$0xff]
      %v3116 = vld [vmem:[%s2732 + $0xa9] sm:$0xff]
      %v3117 = vld [vmem:[%s2732 + $0xb1] sm:$0xff]
      %v3118 = vld [vmem:[%s2732 + $0xc1] sm:$0xff]
      %v3119 = vld [vmem:[%s2732 + $0xc9] sm:$0xff]
      %v3120 = vld [vmem:[%s2732 + $0xd9] sm:$0xff]
      %v3121 = vld [vmem:[%s2732 + $0xe1] sm:$0xff]
      %v3122 = vld [vmem:[%s2732 + $0xf1] sm:$0xff]
      %v3123 = vld [vmem:[%s2732 + $0xf9] sm:$0xff]
      %v3124 = vld [vmem:[%s2732 + $0x109] sm:$0xff]
      %v3125 = vld [vmem:[%s2732 + $0x111] sm:$0xff]
      %v3126 = vld [vmem:[%s2732 + $0x121] sm:$0xff]
      %v3127 = vld [vmem:[%s2732 + $0x129] sm:$0xff]
      %v3128 = vld [vmem:[%s2732 + $0x139] sm:$0xff]
      %v3129 = vld [vmem:[%s2732 + $0x141] sm:$0xff]
      %v3130 = vld [vmem:[%s2732 + $0x151] sm:$0xff]
      %v3131 = vld [vmem:[%s2732 + $0x159] sm:$0xff]
      %v3132 = vld [vmem:[%s2732 + $0x169] sm:$0xff]
      %v3133 = vld [vmem:[%s2732 + $0x171] sm:$0xff]
      %v3134 = vpack.c.bf16 %v3103, %v3102
      %v3135 = vpack.c.bf16 %v3105, %v3104
      %v3136 = vpack.c.bf16 %v3107, %v3106
      %v3137 = vpack.c.bf16 %v3109, %v3108
      %v3138 = vpack.c.bf16 %v3111, %v3110
      %v3139 = vpack.c.bf16 %v3113, %v3112
      %v3140 = vpack.c.bf16 %v3115, %v3114
      %v3141 = vpack.c.bf16 %v3117, %v3116
      %v3142 = vpack.c.bf16 %v3119, %v3118
      %v3143 = vpack.c.bf16 %v3121, %v3120
      %v3144 = vpack.c.bf16 %v3123, %v3122
      %v3145 = vpack.c.bf16 %v3125, %v3124
      %v3146 = vpack.c.bf16 %v3127, %v3126
      %v3147 = vpack.c.bf16 %v3129, %v3128
      %v3148 = vpack.c.bf16 %v3131, %v3130
      %v3149 = vpack.c.bf16 %v3133, %v3132
      %v3150 = vld [vmem:[%s5 + $0x1c0] sm:$0xf]
      %v3151 = vld [vmem:[%s5 + $0x1c4] sm:$0xf]
      %v3152 = vld [vmem:[%s5 + $0x1c8] sm:$0xf]
      %v3153 = vld [vmem:[%s5 + $0x1cc] sm:$0xf]
      %v3154 = vld [vmem:[%s5 + $0x1d0] sm:$0xf]
      %v3155 = vld [vmem:[%s5 + $0x1d4] sm:$0xf]
      %v3156 = vld [vmem:[%s5 + $0x1d8] sm:$0xf]
      %v3157 = vld [vmem:[%s5 + $0x1dc] sm:$0xf]
      %v3158 = vld [vmem:[%s5 + $0x1e0] sm:$0xf]
      %v3159 = vld [vmem:[%s5 + $0x1e4] sm:$0xf]
      %v3160 = vld [vmem:[%s5 + $0x1e8] sm:$0xf]
      %v3161 = vld [vmem:[%s5 + $0x1ec] sm:$0xf]
      %v3162 = vld [vmem:[%s5 + $0x1f0] sm:$0xf]
      %v3163 = vld [vmem:[%s5 + $0x1f4] sm:$0xf]
      %v3164 = vld [vmem:[%s5 + $0x1f8] sm:$0xf]
      %v3165 = vld [vmem:[%s5 + $0x1fc] sm:$0xf]
      %v3182 = vunpack.c.l.b16 %v3150
      %v3183 = vunpack.c.l.b16 %v3151
      %v3184 = vunpack.c.l.b16 %v3152
      %v3185 = vunpack.c.l.b16 %v3153
      %v3186 = vunpack.c.l.b16 %v3154
      %v3187 = vunpack.c.l.b16 %v3155
      %v3188 = vunpack.c.l.b16 %v3156
      %v3189 = vunpack.c.l.b16 %v3157
      %v3190 = vunpack.c.l.b16 %v3158
      %v3191 = vunpack.c.l.b16 %v3159
      %v3192 = vunpack.c.l.b16 %v3160
      %v3193 = vunpack.c.l.b16 %v3161
      %v3194 = vunpack.c.l.b16 %v3162
      %v3195 = vunpack.c.l.b16 %v3163
      %v3196 = vunpack.c.l.b16 %v3164
      %v3197 = vunpack.c.l.b16 %v3165
      %v3198 = vpack.c.b16 %v3183, %v3182
      %v3199 = vpack.c.b16 %v3185, %v3184
      %v3200 = vpack.c.b16 %v3187, %v3186
      %v3201 = vpack.c.b16 %v3189, %v3188
      %v3202 = vpack.c.b16 %v3191, %v3190
      %v3203 = vpack.c.b16 %v3193, %v3192
      %v3204 = vpack.c.b16 %v3195, %v3194
      %v3205 = vpack.c.b16 %v3197, %v3196
      %3214 = vmatprep.subr.bf16.mxu0 0
      %3215 = vmatpush1.bf16.msra.mxu0 %v3205
      %3216 = vmatprep.subr.bf16.mxu0 0
      %3217 = vmatpush1.bf16.msra.mxu0 %v3204
      %3218 = vmatprep.subr.bf16.mxu0 0
      %3219 = vmatpush1.bf16.msra.mxu0 %v3203
      %3220 = vmatprep.subr.bf16.mxu0 0
      %3221 = vmatpush1.bf16.msra.mxu0 %v3202
      %3222 = vmatprep.subr.bf16.mxu0 0
      %3223 = vmatpush1.bf16.msra.mxu0 %v3201
      %3224 = vmatprep.subr.bf16.mxu0 0
      %3225 = vmatpush1.bf16.msra.mxu0 %v3200
      %3226 = vmatprep.subr.bf16.mxu0 0
      %3227 = vmatpush1.bf16.msra.mxu0 %v3199
      %3228 = vmatprep.subr.bf16.mxu0 0
      %3229 = vmatpush1.bf16.msra.mxu0 %v3198
      %3230 = vmatprep.subr.bf16.mxu0 0
      %3231 = vmatpush2.bf16.msra.mxu0 0
      %3232 = vmatprep.subr.bf16.mxu0 0
      %3233 = vmatpush2.bf16.msra.mxu0 0
      %3234 = vmatprep.subr.bf16.mxu0 0
      %3235 = vmatpush2.bf16.msra.mxu0 0
      %3236 = vmatprep.subr.bf16.mxu0 0
      %3237 = vmatpush2.bf16.msra.mxu0 0
      %3238 = vmatprep.subr.bf16.mxu0 0
      %3239 = vmatpush2.bf16.msra.mxu0 0
      %3240 = vmatprep.subr.bf16.mxu0 0
      %3241 = vmatpush2.bf16.msra.mxu0 0
      %3242 = vmatprep.subr.bf16.mxu0 0
      %3243 = vmatpush2.bf16.msra.mxu0 0
      %3244 = vmatprep.subr.bf16.mxu0 0
      %3245 = vmatpush2.bf16.msra.mxu0 0
      %3246 = vmatprep.mubr.bf16.mxu0 0
      %3247 = vmatmul.mubr.bf16.gmra.mxu0 %v3134
      %v3248 = vpop.f32.mrf.mxu0
      %v3249 = vadd.f32 0.0, %v3248
      %v3250 = vpop.f32.mrf.mxu0
      %v3251 = vpop.f32.mrf.mxu0
      %v3252 = vadd.f32 0.0, %v3251
      %v3253 = vpop.f32.mrf.mxu0
      %3254 = vmatprep.mubr.bf16.mxu0 0
      %3255 = vmatmul.mubr.bf16.gmra.mxu0 %v3135
      %v3256 = vpop.f32.mrf.mxu0
      %v3257 = vadd.f32 0.0, %v3256
      %v3258 = vpop.f32.mrf.mxu0
      %v3259 = vpop.f32.mrf.mxu0
      %v3260 = vadd.f32 0.0, %v3259
      %v3261 = vpop.f32.mrf.mxu0
      %3262 = vmatprep.mubr.bf16.mxu0 0
      %3263 = vmatmul.mubr.bf16.gmra.mxu0 %v3136
      %v3264 = vpop.f32.mrf.mxu0
      %v3265 = vadd.f32 0.0, %v3264
      %v3266 = vpop.f32.mrf.mxu0
      %v3267 = vpop.f32.mrf.mxu0
      %v3268 = vadd.f32 0.0, %v3267
      %v3269 = vpop.f32.mrf.mxu0
      %3270 = vmatprep.mubr.bf16.mxu0 0
      %3271 = vmatmul.mubr.bf16.gmra.mxu0 %v3137
      %v3272 = vpop.f32.mrf.mxu0
      %v3273 = vadd.f32 0.0, %v3272
      %v3274 = vpop.f32.mrf.mxu0
      %v3275 = vpop.f32.mrf.mxu0
      %v3276 = vadd.f32 0.0, %v3275
      %v3277 = vpop.f32.mrf.mxu0
      %3278 = vmatprep.mubr.bf16.mxu0 0
      %3279 = vmatmul.mubr.bf16.gmra.mxu0 %v3138
      %v3280 = vpop.f32.mrf.mxu0
      %v3281 = vadd.f32 0.0, %v3280
      %v3282 = vpop.f32.mrf.mxu0
      %v3283 = vpop.f32.mrf.mxu0
      %v3284 = vadd.f32 0.0, %v3283
      %v3285 = vpop.f32.mrf.mxu0
      %3286 = vmatprep.mubr.bf16.mxu0 0
      %3287 = vmatmul.mubr.bf16.gmra.mxu0 %v3139
      %v3288 = vpop.f32.mrf.mxu0
      %v3289 = vadd.f32 0.0, %v3288
      %v3290 = vpop.f32.mrf.mxu0
      %v3291 = vpop.f32.mrf.mxu0
      %v3292 = vadd.f32 0.0, %v3291
      %v3293 = vpop.f32.mrf.mxu0
      %3294 = vmatprep.mubr.bf16.mxu0 0
      %3295 = vmatmul.mubr.bf16.gmra.mxu0 %v3140
      %v3296 = vpop.f32.mrf.mxu0
      %v3297 = vadd.f32 0.0, %v3296
      %v3298 = vpop.f32.mrf.mxu0
      %v3299 = vpop.f32.mrf.mxu0
      %v3300 = vadd.f32 0.0, %v3299
      %v3301 = vpop.f32.mrf.mxu0
      %3302 = vmatprep.mubr.bf16.mxu0 0
      %3303 = vmatmul.mubr.bf16.gmra.mxu0 %v3141
      %v3304 = vpop.f32.mrf.mxu0
      %v3305 = vadd.f32 0.0, %v3304
      %v3306 = vpop.f32.mrf.mxu0
      %v3307 = vpop.f32.mrf.mxu0
      %v3308 = vadd.f32 0.0, %v3307
      %v3309 = vpop.f32.mrf.mxu0
      %3310 = vmatprep.mubr.bf16.mxu0 0
      %3311 = vmatmul.mubr.bf16.gmra.mxu0 %v3142
      %v3312 = vpop.f32.mrf.mxu0
      %v3313 = vadd.f32 0.0, %v3312
      %v3314 = vpop.f32.mrf.mxu0
      %v3315 = vpop.f32.mrf.mxu0
      %v3316 = vadd.f32 0.0, %v3315
      %v3317 = vpop.f32.mrf.mxu0
      %3318 = vmatprep.mubr.bf16.mxu0 0
      %3319 = vmatmul.mubr.bf16.gmra.mxu0 %v3143
      %v3320 = vpop.f32.mrf.mxu0
      %v3321 = vadd.f32 0.0, %v3320
      %v3322 = vpop.f32.mrf.mxu0
      %v3323 = vpop.f32.mrf.mxu0
      %v3324 = vadd.f32 0.0, %v3323
      %v3325 = vpop.f32.mrf.mxu0
      %3326 = vmatprep.mubr.bf16.mxu0 0
      %3327 = vmatmul.mubr.bf16.gmra.mxu0 %v3144
      %v3328 = vpop.f32.mrf.mxu0
      %v3329 = vadd.f32 0.0, %v3328
      %v3330 = vpop.f32.mrf.mxu0
      %v3331 = vpop.f32.mrf.mxu0
      %v3332 = vadd.f32 0.0, %v3331
      %v3333 = vpop.f32.mrf.mxu0
      %3334 = vmatprep.mubr.bf16.mxu0 0
      %3335 = vmatmul.mubr.bf16.gmra.mxu0 %v3145
      %v3336 = vpop.f32.mrf.mxu0
      %v3337 = vadd.f32 0.0, %v3336
      %v3338 = vpop.f32.mrf.mxu0
      %v3339 = vpop.f32.mrf.mxu0
      %v3340 = vadd.f32 0.0, %v3339
      %v3341 = vpop.f32.mrf.mxu0
      %3342 = vmatprep.mubr.bf16.mxu0 0
      %3343 = vmatmul.mubr.bf16.gmra.mxu0 %v3146
      %v3344 = vpop.f32.mrf.mxu0
      %v3345 = vadd.f32 0.0, %v3344
      %v3346 = vpop.f32.mrf.mxu0
      %v3347 = vpop.f32.mrf.mxu0
      %v3348 = vadd.f32 0.0, %v3347
      %v3349 = vpop.f32.mrf.mxu0
      %3350 = vmatprep.mubr.bf16.mxu0 0
      %3351 = vmatmul.mubr.bf16.gmra.mxu0 %v3147
      %v3352 = vpop.f32.mrf.mxu0
      %v3353 = vadd.f32 0.0, %v3352
      %v3354 = vpop.f32.mrf.mxu0
      %v3355 = vpop.f32.mrf.mxu0
      %v3356 = vadd.f32 0.0, %v3355
      %v3357 = vpop.f32.mrf.mxu0
      %3358 = vmatprep.mubr.bf16.mxu0 0
      %3359 = vmatmul.mubr.bf16.gmra.mxu0 %v3148
      %v3360 = vpop.f32.mrf.mxu0
      %v3361 = vadd.f32 0.0, %v3360
      %v3362 = vpop.f32.mrf.mxu0
      %v3363 = vpop.f32.mrf.mxu0
      %v3364 = vadd.f32 0.0, %v3363
      %v3365 = vpop.f32.mrf.mxu0
      %3366 = vmatprep.mubr.bf16.mxu0 0
      %3367 = vmatmul.mubr.bf16.gmra.mxu0 %v3149
      %v3368 = vpop.f32.mrf.mxu0
      %v3369 = vadd.f32 0.0, %v3368
      %v3370 = vpop.f32.mrf.mxu0
      %v3371 = vpop.f32.mrf.mxu0
      %v3372 = vadd.f32 0.0, %v3371
      %v3373 = vpop.f32.mrf.mxu0
      %3374 = vdwg.mxu0
      %v3375 = vld [vmem:[#allocation3] sm:$0xff]
      %v3376 = vld [vmem:[#allocation3 + $0x8] sm:$0xff]
      %v3377 = vld [vmem:[#allocation3 + $0x10] sm:$0xff]
      %v3378 = vld [vmem:[#allocation3 + $0x18] sm:$0xff]
      %v3379 = vld [vmem:[#allocation3 + $0x20] sm:$0xff]
      %v3380 = vld [vmem:[#allocation3 + $0x28] sm:$0xff]
      %v3381 = vld [vmem:[#allocation3 + $0x30] sm:$0xff]
      %v3382 = vld [vmem:[#allocation3 + $0x38] sm:$0xff]
      %v3383 = vld [vmem:[#allocation3 + $0x40] sm:$0xff]
      %v3384 = vld [vmem:[#allocation3 + $0x48] sm:$0xff]
      %v3385 = vld [vmem:[#allocation3 + $0x50] sm:$0xff]
      %v3386 = vld [vmem:[#allocation3 + $0x58] sm:$0xff]
      %v3387 = vld [vmem:[#allocation3 + $0x60] sm:$0xff]
      %v3388 = vld [vmem:[#allocation3 + $0x68] sm:$0xff]
      %v3389 = vld [vmem:[#allocation3 + $0x70] sm:$0xff]
      %v3390 = vld [vmem:[#allocation3 + $0x78] sm:$0xff]
      %v3391 = vld [vmem:[#allocation3 + $0x80] sm:$0xff]
      %v3392 = vld [vmem:[#allocation3 + $0x88] sm:$0xff]
      %v3393 = vld [vmem:[#allocation3 + $0x90] sm:$0xff]
      %v3394 = vld [vmem:[#allocation3 + $0x98] sm:$0xff]
      %v3395 = vld [vmem:[#allocation3 + $0xa0] sm:$0xff]
      %v3396 = vld [vmem:[#allocation3 + $0xa8] sm:$0xff]
      %v3397 = vld [vmem:[#allocation3 + $0xb0] sm:$0xff]
      %v3398 = vld [vmem:[#allocation3 + $0xb8] sm:$0xff]
      %v3399 = vld [vmem:[#allocation3 + $0xc0] sm:$0xff]
      %v3400 = vld [vmem:[#allocation3 + $0xc8] sm:$0xff]
      %v3401 = vld [vmem:[#allocation3 + $0xd0] sm:$0xff]
      %v3402 = vld [vmem:[#allocation3 + $0xd8] sm:$0xff]
      %v3403 = vld [vmem:[#allocation3 + $0xe0] sm:$0xff]
      %v3404 = vld [vmem:[#allocation3 + $0xe8] sm:$0xff]
      %v3405 = vld [vmem:[#allocation3 + $0xf0] sm:$0xff]
      %v3406 = vld [vmem:[#allocation3 + $0xf8] sm:$0xff]
      %v3407 = vadd.f32 %v3375, %v3249
      %v3408 = vadd.f32 %v3376, %v3252
      %v3409 = vadd.f32 %v3377, %v3257
      %v3410 = vadd.f32 %v3378, %v3260
      %v3411 = vadd.f32 %v3379, %v3265
      %v3412 = vadd.f32 %v3380, %v3268
      %v3413 = vadd.f32 %v3381, %v3273
      %v3414 = vadd.f32 %v3382, %v3276
      %v3415 = vadd.f32 %v3383, %v3281
      %v3416 = vadd.f32 %v3384, %v3284
      %v3417 = vadd.f32 %v3385, %v3289
      %v3418 = vadd.f32 %v3386, %v3292
      %v3419 = vadd.f32 %v3387, %v3297
      %v3420 = vadd.f32 %v3388, %v3300
      %v3421 = vadd.f32 %v3389, %v3305
      %v3422 = vadd.f32 %v3390, %v3308
      %v3423 = vadd.f32 %v3391, %v3313
      %v3424 = vadd.f32 %v3392, %v3316
      %v3425 = vadd.f32 %v3393, %v3321
      %v3426 = vadd.f32 %v3394, %v3324
      %v3427 = vadd.f32 %v3395, %v3329
      %v3428 = vadd.f32 %v3396, %v3332
      %v3429 = vadd.f32 %v3397, %v3337
      %v3430 = vadd.f32 %v3398, %v3340
      %v3431 = vadd.f32 %v3399, %v3345
      %v3432 = vadd.f32 %v3400, %v3348
      %v3433 = vadd.f32 %v3401, %v3353
      %v3434 = vadd.f32 %v3402, %v3356
      %v3435 = vadd.f32 %v3403, %v3361
      %v3436 = vadd.f32 %v3404, %v3364
      %v3437 = vadd.f32 %v3405, %v3369
      %v3438 = vadd.f32 %v3406, %v3372
      %3439 = vst [vmem:[#allocation3] sm:$0xff] %v3407
      %3440 = vst [vmem:[#allocation3 + $0x8] sm:$0xff] %v3408
      %3441 = vst [vmem:[#allocation3 + $0x10] sm:$0xff] %v3409
      %3442 = vst [vmem:[#allocation3 + $0x18] sm:$0xff] %v3410
      %3443 = vst [vmem:[#allocation3 + $0x20] sm:$0xff] %v3411
      %3444 = vst [vmem:[#allocation3 + $0x28] sm:$0xff] %v3412
      %3445 = vst [vmem:[#allocation3 + $0x30] sm:$0xff] %v3413
      %3446 = vst [vmem:[#allocation3 + $0x38] sm:$0xff] %v3414
      %3447 = vst [vmem:[#allocation3 + $0x40] sm:$0xff] %v3415
      %3448 = vst [vmem:[#allocation3 + $0x48] sm:$0xff] %v3416
      %3449 = vst [vmem:[#allocation3 + $0x50] sm:$0xff] %v3417
      %3450 = vst [vmem:[#allocation3 + $0x58] sm:$0xff] %v3418
      %3451 = vst [vmem:[#allocation3 + $0x60] sm:$0xff] %v3419
      %3452 = vst [vmem:[#allocation3 + $0x68] sm:$0xff] %v3420
      %3453 = vst [vmem:[#allocation3 + $0x70] sm:$0xff] %v3421
      %3454 = vst [vmem:[#allocation3 + $0x78] sm:$0xff] %v3422
      %3455 = vst [vmem:[#allocation3 + $0x80] sm:$0xff] %v3423
      %3456 = vst [vmem:[#allocation3 + $0x88] sm:$0xff] %v3424
      %3457 = vst [vmem:[#allocation3 + $0x90] sm:$0xff] %v3425
      %3458 = vst [vmem:[#allocation3 + $0x98] sm:$0xff] %v3426
      %3459 = vst [vmem:[#allocation3 + $0xa0] sm:$0xff] %v3427
      %3460 = vst [vmem:[#allocation3 + $0xa8] sm:$0xff] %v3428
      %3461 = vst [vmem:[#allocation3 + $0xb0] sm:$0xff] %v3429
      %3462 = vst [vmem:[#allocation3 + $0xb8] sm:$0xff] %v3430
      %3463 = vst [vmem:[#allocation3 + $0xc0] sm:$0xff] %v3431
      %3464 = vst [vmem:[#allocation3 + $0xc8] sm:$0xff] %v3432
      %3465 = vst [vmem:[#allocation3 + $0xd0] sm:$0xff] %v3433
      %3466 = vst [vmem:[#allocation3 + $0xd8] sm:$0xff] %v3434
      %3467 = vst [vmem:[#allocation3 + $0xe0] sm:$0xff] %v3435
      %3468 = vst [vmem:[#allocation3 + $0xe8] sm:$0xff] %v3436
      %3469 = vst [vmem:[#allocation3 + $0xf0] sm:$0xff] %v3437
      %3470 = vst [vmem:[#allocation3 + $0xf8] sm:$0xff] %v3438
      %v3471 = vld [vmem:[%s2732 + $0x2] sm:$0xff]
      %v3472 = vld [vmem:[%s2732 + $0xa] sm:$0xff]
      %v3473 = vld [vmem:[%s2732 + $0x1a] sm:$0xff]
      %v3474 = vld [vmem:[%s2732 + $0x22] sm:$0xff]
      %v3475 = vld [vmem:[%s2732 + $0x32] sm:$0xff]
      %v3476 = vld [vmem:[%s2732 + $0x3a] sm:$0xff]
      %v3477 = vld [vmem:[%s2732 + $0x4a] sm:$0xff]
      %v3478 = vld [vmem:[%s2732 + $0x52] sm:$0xff]
      %v3479 = vld [vmem:[%s2732 + $0x62] sm:$0xff]
      %v3480 = vld [vmem:[%s2732 + $0x6a] sm:$0xff]
      %v3481 = vld [vmem:[%s2732 + $0x7a] sm:$0xff]
      %v3482 = vld [vmem:[%s2732 + $0x82] sm:$0xff]
      %v3483 = vld [vmem:[%s2732 + $0x92] sm:$0xff]
      %v3484 = vld [vmem:[%s2732 + $0x9a] sm:$0xff]
      %v3485 = vld [vmem:[%s2732 + $0xaa] sm:$0xff]
      %v3486 = vld [vmem:[%s2732 + $0xb2] sm:$0xff]
      %v3487 = vld [vmem:[%s2732 + $0xc2] sm:$0xff]
      %v3488 = vld [vmem:[%s2732 + $0xca] sm:$0xff]
      %v3489 = vld [vmem:[%s2732 + $0xda] sm:$0xff]
      %v3490 = vld [vmem:[%s2732 + $0xe2] sm:$0xff]
      %v3491 = vld [vmem:[%s2732 + $0xf2] sm:$0xff]
      %v3492 = vld [vmem:[%s2732 + $0xfa] sm:$0xff]
      %v3493 = vld [vmem:[%s2732 + $0x10a] sm:$0xff]
      %v3494 = vld [vmem:[%s2732 + $0x112] sm:$0xff]
      %v3495 = vld [vmem:[%s2732 + $0x122] sm:$0xff]
      %v3496 = vld [vmem:[%s2732 + $0x12a] sm:$0xff]
      %v3497 = vld [vmem:[%s2732 + $0x13a] sm:$0xff]
      %v3498 = vld [vmem:[%s2732 + $0x142] sm:$0xff]
      %v3499 = vld [vmem:[%s2732 + $0x152] sm:$0xff]
      %v3500 = vld [vmem:[%s2732 + $0x15a] sm:$0xff]
      %v3501 = vld [vmem:[%s2732 + $0x16a] sm:$0xff]
      %v3502 = vld [vmem:[%s2732 + $0x172] sm:$0xff]
      %v3503 = vpack.c.bf16 %v3472, %v3471
      %v3504 = vpack.c.bf16 %v3474, %v3473
      %v3505 = vpack.c.bf16 %v3476, %v3475
      %v3506 = vpack.c.bf16 %v3478, %v3477
      %v3507 = vpack.c.bf16 %v3480, %v3479
      %v3508 = vpack.c.bf16 %v3482, %v3481
      %v3509 = vpack.c.bf16 %v3484, %v3483
      %v3510 = vpack.c.bf16 %v3486, %v3485
      %v3511 = vpack.c.bf16 %v3488, %v3487
      %v3512 = vpack.c.bf16 %v3490, %v3489
      %v3513 = vpack.c.bf16 %v3492, %v3491
      %v3514 = vpack.c.bf16 %v3494, %v3493
      %v3515 = vpack.c.bf16 %v3496, %v3495
      %v3516 = vpack.c.bf16 %v3498, %v3497
      %v3517 = vpack.c.bf16 %v3500, %v3499
      %v3518 = vpack.c.bf16 %v3502, %v3501
      %v3519 = vld [vmem:[%s5 + $0x200] sm:$0xf]
      %v3520 = vld [vmem:[%s5 + $0x204] sm:$0xf]
      %v3521 = vld [vmem:[%s5 + $0x208] sm:$0xf]
      %v3522 = vld [vmem:[%s5 + $0x20c] sm:$0xf]
      %v3523 = vld [vmem:[%s5 + $0x210] sm:$0xf]
      %v3524 = vld [vmem:[%s5 + $0x214] sm:$0xf]
      %v3525 = vld [vmem:[%s5 + $0x218] sm:$0xf]
      %v3526 = vld [vmem:[%s5 + $0x21c] sm:$0xf]
      %v3527 = vld [vmem:[%s5 + $0x220] sm:$0xf]
      %v3528 = vld [vmem:[%s5 + $0x224] sm:$0xf]
      %v3529 = vld [vmem:[%s5 + $0x228] sm:$0xf]
      %v3530 = vld [vmem:[%s5 + $0x22c] sm:$0xf]
      %v3531 = vld [vmem:[%s5 + $0x230] sm:$0xf]
      %v3532 = vld [vmem:[%s5 + $0x234] sm:$0xf]
      %v3533 = vld [vmem:[%s5 + $0x238] sm:$0xf]
      %v3534 = vld [vmem:[%s5 + $0x23c] sm:$0xf]
      %v3551 = vunpack.c.l.b16 %v3519
      %v3552 = vunpack.c.l.b16 %v3520
      %v3553 = vunpack.c.l.b16 %v3521
      %v3554 = vunpack.c.l.b16 %v3522
      %v3555 = vunpack.c.l.b16 %v3523
      %v3556 = vunpack.c.l.b16 %v3524
      %v3557 = vunpack.c.l.b16 %v3525
      %v3558 = vunpack.c.l.b16 %v3526
      %v3559 = vunpack.c.l.b16 %v3527
      %v3560 = vunpack.c.l.b16 %v3528
      %v3561 = vunpack.c.l.b16 %v3529
      %v3562 = vunpack.c.l.b16 %v3530
      %v3563 = vunpack.c.l.b16 %v3531
      %v3564 = vunpack.c.l.b16 %v3532
      %v3565 = vunpack.c.l.b16 %v3533
      %v3566 = vunpack.c.l.b16 %v3534
      %v3567 = vpack.c.b16 %v3552, %v3551
      %v3568 = vpack.c.b16 %v3554, %v3553
      %v3569 = vpack.c.b16 %v3556, %v3555
      %v3570 = vpack.c.b16 %v3558, %v3557
      %v3571 = vpack.c.b16 %v3560, %v3559
      %v3572 = vpack.c.b16 %v3562, %v3561
      %v3573 = vpack.c.b16 %v3564, %v3563
      %v3574 = vpack.c.b16 %v3566, %v3565
      %3583 = vmatprep.subr.bf16.mxu0 0
      %3584 = vmatpush1.bf16.msra.mxu0 %v3574
      %3585 = vmatprep.subr.bf16.mxu0 0
      %3586 = vmatpush1.bf16.msra.mxu0 %v3573
      %3587 = vmatprep.subr.bf16.mxu0 0
      %3588 = vmatpush1.bf16.msra.mxu0 %v3572
      %3589 = vmatprep.subr.bf16.mxu0 0
      %3590 = vmatpush1.bf16.msra.mxu0 %v3571
      %3591 = vmatprep.subr.bf16.mxu0 0
      %3592 = vmatpush1.bf16.msra.mxu0 %v3570
      %3593 = vmatprep.subr.bf16.mxu0 0
      %3594 = vmatpush1.bf16.msra.mxu0 %v3569
      %3595 = vmatprep.subr.bf16.mxu0 0
      %3596 = vmatpush1.bf16.msra.mxu0 %v3568
      %3597 = vmatprep.subr.bf16.mxu0 0
      %3598 = vmatpush1.bf16.msra.mxu0 %v3567
      %3599 = vmatprep.subr.bf16.mxu0 0
      %3600 = vmatpush2.bf16.msra.mxu0 0
      %3601 = vmatprep.subr.bf16.mxu0 0
      %3602 = vmatpush2.bf16.msra.mxu0 0
      %3603 = vmatprep.subr.bf16.mxu0 0
      %3604 = vmatpush2.bf16.msra.mxu0 0
      %3605 = vmatprep.subr.bf16.mxu0 0
      %3606 = vmatpush2.bf16.msra.mxu0 0
      %3607 = vmatprep.subr.bf16.mxu0 0
      %3608 = vmatpush2.bf16.msra.mxu0 0
      %3609 = vmatprep.subr.bf16.mxu0 0
      %3610 = vmatpush2.bf16.msra.mxu0 0
      %3611 = vmatprep.subr.bf16.mxu0 0
      %3612 = vmatpush2.bf16.msra.mxu0 0
      %3613 = vmatprep.subr.bf16.mxu0 0
      %3614 = vmatpush2.bf16.msra.mxu0 0
      %3615 = vmatprep.mubr.bf16.mxu0 0
      %3616 = vmatmul.mubr.bf16.gmra.mxu0 %v3503
      %v3617 = vpop.f32.mrf.mxu0
      %v3618 = vadd.f32 0.0, %v3617
      %v3619 = vpop.f32.mrf.mxu0
      %v3620 = vpop.f32.mrf.mxu0
      %v3621 = vadd.f32 0.0, %v3620
      %v3622 = vpop.f32.mrf.mxu0
      %3623 = vmatprep.mubr.bf16.mxu0 0
      %3624 = vmatmul.mubr.bf16.gmra.mxu0 %v3504
      %v3625 = vpop.f32.mrf.mxu0
      %v3626 = vadd.f32 0.0, %v3625
      %v3627 = vpop.f32.mrf.mxu0
      %v3628 = vpop.f32.mrf.mxu0
      %v3629 = vadd.f32 0.0, %v3628
      %v3630 = vpop.f32.mrf.mxu0
      %3631 = vmatprep.mubr.bf16.mxu0 0
      %3632 = vmatmul.mubr.bf16.gmra.mxu0 %v3505
      %v3633 = vpop.f32.mrf.mxu0
      %v3634 = vadd.f32 0.0, %v3633
      %v3635 = vpop.f32.mrf.mxu0
      %v3636 = vpop.f32.mrf.mxu0
      %v3637 = vadd.f32 0.0, %v3636
      %v3638 = vpop.f32.mrf.mxu0
      %3639 = vmatprep.mubr.bf16.mxu0 0
      %3640 = vmatmul.mubr.bf16.gmra.mxu0 %v3506
      %v3641 = vpop.f32.mrf.mxu0
      %v3642 = vadd.f32 0.0, %v3641
      %v3643 = vpop.f32.mrf.mxu0
      %v3644 = vpop.f32.mrf.mxu0
      %v3645 = vadd.f32 0.0, %v3644
      %v3646 = vpop.f32.mrf.mxu0
      %3647 = vmatprep.mubr.bf16.mxu0 0
      %3648 = vmatmul.mubr.bf16.gmra.mxu0 %v3507
      %v3649 = vpop.f32.mrf.mxu0
      %v3650 = vadd.f32 0.0, %v3649
      %v3651 = vpop.f32.mrf.mxu0
      %v3652 = vpop.f32.mrf.mxu0
      %v3653 = vadd.f32 0.0, %v3652
      %v3654 = vpop.f32.mrf.mxu0
      %3655 = vmatprep.mubr.bf16.mxu0 0
      %3656 = vmatmul.mubr.bf16.gmra.mxu0 %v3508
      %v3657 = vpop.f32.mrf.mxu0
      %v3658 = vadd.f32 0.0, %v3657
      %v3659 = vpop.f32.mrf.mxu0
      %v3660 = vpop.f32.mrf.mxu0
      %v3661 = vadd.f32 0.0, %v3660
      %v3662 = vpop.f32.mrf.mxu0
      %3663 = vmatprep.mubr.bf16.mxu0 0
      %3664 = vmatmul.mubr.bf16.gmra.mxu0 %v3509
      %v3665 = vpop.f32.mrf.mxu0
      %v3666 = vadd.f32 0.0, %v3665
      %v3667 = vpop.f32.mrf.mxu0
      %v3668 = vpop.f32.mrf.mxu0
      %v3669 = vadd.f32 0.0, %v3668
      %v3670 = vpop.f32.mrf.mxu0
      %3671 = vmatprep.mubr.bf16.mxu0 0
      %3672 = vmatmul.mubr.bf16.gmra.mxu0 %v3510
      %v3673 = vpop.f32.mrf.mxu0
      %v3674 = vadd.f32 0.0, %v3673
      %v3675 = vpop.f32.mrf.mxu0
      %v3676 = vpop.f32.mrf.mxu0
      %v3677 = vadd.f32 0.0, %v3676
      %v3678 = vpop.f32.mrf.mxu0
      %3679 = vmatprep.mubr.bf16.mxu0 0
      %3680 = vmatmul.mubr.bf16.gmra.mxu0 %v3511
      %v3681 = vpop.f32.mrf.mxu0
      %v3682 = vadd.f32 0.0, %v3681
      %v3683 = vpop.f32.mrf.mxu0
      %v3684 = vpop.f32.mrf.mxu0
      %v3685 = vadd.f32 0.0, %v3684
      %v3686 = vpop.f32.mrf.mxu0
      %3687 = vmatprep.mubr.bf16.mxu0 0
      %3688 = vmatmul.mubr.bf16.gmra.mxu0 %v3512
      %v3689 = vpop.f32.mrf.mxu0
      %v3690 = vadd.f32 0.0, %v3689
      %v3691 = vpop.f32.mrf.mxu0
      %v3692 = vpop.f32.mrf.mxu0
      %v3693 = vadd.f32 0.0, %v3692
      %v3694 = vpop.f32.mrf.mxu0
      %3695 = vmatprep.mubr.bf16.mxu0 0
      %3696 = vmatmul.mubr.bf16.gmra.mxu0 %v3513
      %v3697 = vpop.f32.mrf.mxu0
      %v3698 = vadd.f32 0.0, %v3697
      %v3699 = vpop.f32.mrf.mxu0
      %v3700 = vpop.f32.mrf.mxu0
      %v3701 = vadd.f32 0.0, %v3700
      %v3702 = vpop.f32.mrf.mxu0
      %3703 = vmatprep.mubr.bf16.mxu0 0
      %3704 = vmatmul.mubr.bf16.gmra.mxu0 %v3514
      %v3705 = vpop.f32.mrf.mxu0
      %v3706 = vadd.f32 0.0, %v3705
      %v3707 = vpop.f32.mrf.mxu0
      %v3708 = vpop.f32.mrf.mxu0
      %v3709 = vadd.f32 0.0, %v3708
      %v3710 = vpop.f32.mrf.mxu0
      %3711 = vmatprep.mubr.bf16.mxu0 0
      %3712 = vmatmul.mubr.bf16.gmra.mxu0 %v3515
      %v3713 = vpop.f32.mrf.mxu0
      %v3714 = vadd.f32 0.0, %v3713
      %v3715 = vpop.f32.mrf.mxu0
      %v3716 = vpop.f32.mrf.mxu0
      %v3717 = vadd.f32 0.0, %v3716
      %v3718 = vpop.f32.mrf.mxu0
      %3719 = vmatprep.mubr.bf16.mxu0 0
      %3720 = vmatmul.mubr.bf16.gmra.mxu0 %v3516
      %v3721 = vpop.f32.mrf.mxu0
      %v3722 = vadd.f32 0.0, %v3721
      %v3723 = vpop.f32.mrf.mxu0
      %v3724 = vpop.f32.mrf.mxu0
      %v3725 = vadd.f32 0.0, %v3724
      %v3726 = vpop.f32.mrf.mxu0
      %3727 = vmatprep.mubr.bf16.mxu0 0
      %3728 = vmatmul.mubr.bf16.gmra.mxu0 %v3517
      %v3729 = vpop.f32.mrf.mxu0
      %v3730 = vadd.f32 0.0, %v3729
      %v3731 = vpop.f32.mrf.mxu0
      %v3732 = vpop.f32.mrf.mxu0
      %v3733 = vadd.f32 0.0, %v3732
      %v3734 = vpop.f32.mrf.mxu0
      %3735 = vmatprep.mubr.bf16.mxu0 0
      %3736 = vmatmul.mubr.bf16.gmra.mxu0 %v3518
      %v3737 = vpop.f32.mrf.mxu0
      %v3738 = vadd.f32 0.0, %v3737
      %v3739 = vpop.f32.mrf.mxu0
      %v3740 = vpop.f32.mrf.mxu0
      %v3741 = vadd.f32 0.0, %v3740
      %v3742 = vpop.f32.mrf.mxu0
      %3743 = vdwg.mxu0
      %v3744 = vld [vmem:[#allocation3] sm:$0xff]
      %v3745 = vld [vmem:[#allocation3 + $0x8] sm:$0xff]
      %v3746 = vld [vmem:[#allocation3 + $0x10] sm:$0xff]
      %v3747 = vld [vmem:[#allocation3 + $0x18] sm:$0xff]
      %v3748 = vld [vmem:[#allocation3 + $0x20] sm:$0xff]
      %v3749 = vld [vmem:[#allocation3 + $0x28] sm:$0xff]
      %v3750 = vld [vmem:[#allocation3 + $0x30] sm:$0xff]
      %v3751 = vld [vmem:[#allocation3 + $0x38] sm:$0xff]
      %v3752 = vld [vmem:[#allocation3 + $0x40] sm:$0xff]
      %v3753 = vld [vmem:[#allocation3 + $0x48] sm:$0xff]
      %v3754 = vld [vmem:[#allocation3 + $0x50] sm:$0xff]
      %v3755 = vld [vmem:[#allocation3 + $0x58] sm:$0xff]
      %v3756 = vld [vmem:[#allocation3 + $0x60] sm:$0xff]
      %v3757 = vld [vmem:[#allocation3 + $0x68] sm:$0xff]
      %v3758 = vld [vmem:[#allocation3 + $0x70] sm:$0xff]
      %v3759 = vld [vmem:[#allocation3 + $0x78] sm:$0xff]
      %v3760 = vld [vmem:[#allocation3 + $0x80] sm:$0xff]
      %v3761 = vld [vmem:[#allocation3 + $0x88] sm:$0xff]
      %v3762 = vld [vmem:[#allocation3 + $0x90] sm:$0xff]
      %v3763 = vld [vmem:[#allocation3 + $0x98] sm:$0xff]
      %v3764 = vld [vmem:[#allocation3 + $0xa0] sm:$0xff]
      %v3765 = vld [vmem:[#allocation3 + $0xa8] sm:$0xff]
      %v3766 = vld [vmem:[#allocation3 + $0xb0] sm:$0xff]
      %v3767 = vld [vmem:[#allocation3 + $0xb8] sm:$0xff]
      %v3768 = vld [vmem:[#allocation3 + $0xc0] sm:$0xff]
      %v3769 = vld [vmem:[#allocation3 + $0xc8] sm:$0xff]
      %v3770 = vld [vmem:[#allocation3 + $0xd0] sm:$0xff]
      %v3771 = vld [vmem:[#allocation3 + $0xd8] sm:$0xff]
      %v3772 = vld [vmem:[#allocation3 + $0xe0] sm:$0xff]
      %v3773 = vld [vmem:[#allocation3 + $0xe8] sm:$0xff]
      %v3774 = vld [vmem:[#allocation3 + $0xf0] sm:$0xff]
      %v3775 = vld [vmem:[#allocation3 + $0xf8] sm:$0xff]
      %v3776 = vadd.f32 %v3744, %v3618
      %v3777 = vadd.f32 %v3745, %v3621
      %v3778 = vadd.f32 %v3746, %v3626
      %v3779 = vadd.f32 %v3747, %v3629
      %v3780 = vadd.f32 %v3748, %v3634
      %v3781 = vadd.f32 %v3749, %v3637
      %v3782 = vadd.f32 %v3750, %v3642
      %v3783 = vadd.f32 %v3751, %v3645
      %v3784 = vadd.f32 %v3752, %v3650
      %v3785 = vadd.f32 %v3753, %v3653
      %v3786 = vadd.f32 %v3754, %v3658
      %v3787 = vadd.f32 %v3755, %v3661
      %v3788 = vadd.f32 %v3756, %v3666
      %v3789 = vadd.f32 %v3757, %v3669
      %v3790 = vadd.f32 %v3758, %v3674
      %v3791 = vadd.f32 %v3759, %v3677
      %v3792 = vadd.f32 %v3760, %v3682
      %v3793 = vadd.f32 %v3761, %v3685
      %v3794 = vadd.f32 %v3762, %v3690
      %v3795 = vadd.f32 %v3763, %v3693
      %v3796 = vadd.f32 %v3764, %v3698
      %v3797 = vadd.f32 %v3765, %v3701
      %v3798 = vadd.f32 %v3766, %v3706
      %v3799 = vadd.f32 %v3767, %v3709
      %v3800 = vadd.f32 %v3768, %v3714
      %v3801 = vadd.f32 %v3769, %v3717
      %v3802 = vadd.f32 %v3770, %v3722
      %v3803 = vadd.f32 %v3771, %v3725
      %v3804 = vadd.f32 %v3772, %v3730
      %v3805 = vadd.f32 %v3773, %v3733
      %v3806 = vadd.f32 %v3774, %v3738
      %v3807 = vadd.f32 %v3775, %v3741
      %3808 = vst [vmem:[#allocation3] sm:$0xff] %v3776
      %3809 = vst [vmem:[#allocation3 + $0x8] sm:$0xff] %v3777
      %3810 = vst [vmem:[#allocation3 + $0x10] sm:$0xff] %v3778
      %3811 = vst [vmem:[#allocation3 + $0x18] sm:$0xff] %v3779
      %3812 = vst [vmem:[#allocation3 + $0x20] sm:$0xff] %v3780
      %3813 = vst [vmem:[#allocation3 + $0x28] sm:$0xff] %v3781
      %3814 = vst [vmem:[#allocation3 + $0x30] sm:$0xff] %v3782
      %3815 = vst [vmem:[#allocation3 + $0x38] sm:$0xff] %v3783
      %3816 = vst [vmem:[#allocation3 + $0x40] sm:$0xff] %v3784
      %3817 = vst [vmem:[#allocation3 + $0x48] sm:$0xff] %v3785
      %3818 = vst [vmem:[#allocation3 + $0x50] sm:$0xff] %v3786
      %3819 = vst [vmem:[#allocation3 + $0x58] sm:$0xff] %v3787
      %3820 = vst [vmem:[#allocation3 + $0x60] sm:$0xff] %v3788
      %3821 = vst [vmem:[#allocation3 + $0x68] sm:$0xff] %v3789
      %3822 = vst [vmem:[#allocation3 + $0x70] sm:$0xff] %v3790
      %3823 = vst [vmem:[#allocation3 + $0x78] sm:$0xff] %v3791
      %3824 = vst [vmem:[#allocation3 + $0x80] sm:$0xff] %v3792
      %3825 = vst [vmem:[#allocation3 + $0x88] sm:$0xff] %v3793
      %3826 = vst [vmem:[#allocation3 + $0x90] sm:$0xff] %v3794
      %3827 = vst [vmem:[#allocation3 + $0x98] sm:$0xff] %v3795
      %3828 = vst [vmem:[#allocation3 + $0xa0] sm:$0xff] %v3796
      %3829 = vst [vmem:[#allocation3 + $0xa8] sm:$0xff] %v3797
      %3830 = vst [vmem:[#allocation3 + $0xb0] sm:$0xff] %v3798
      %3831 = vst [vmem:[#allocation3 + $0xb8] sm:$0xff] %v3799
      %3832 = vst [vmem:[#allocation3 + $0xc0] sm:$0xff] %v3800
      %3833 = vst [vmem:[#allocation3 + $0xc8] sm:$0xff] %v3801
      %3834 = vst [vmem:[#allocation3 + $0xd0] sm:$0xff] %v3802
      %3835 = vst [vmem:[#allocation3 + $0xd8] sm:$0xff] %v3803
      %3836 = vst [vmem:[#allocation3 + $0xe0] sm:$0xff] %v3804
      %3837 = vst [vmem:[#allocation3 + $0xe8] sm:$0xff] %v3805
      %3838 = vst [vmem:[#allocation3 + $0xf0] sm:$0xff] %v3806
      %3839 = vst [vmem:[#allocation3 + $0xf8] sm:$0xff] %v3807
      %v3840 = vld [vmem:[#allocation3] sm:$0xff]
      %v3841 = vld [vmem:[#allocation3 + $0x8] sm:$0xff]
      %v3842 = vld [vmem:[#allocation3 + $0x10] sm:$0xff]
      %v3843 = vld [vmem:[#allocation3 + $0x18] sm:$0xff]
      %v3844 = vld [vmem:[#allocation3 + $0x20] sm:$0xff]
      %v3845 = vld [vmem:[#allocation3 + $0x28] sm:$0xff]
      %v3846 = vld [vmem:[#allocation3 + $0x30] sm:$0xff]
      %v3847 = vld [vmem:[#allocation3 + $0x38] sm:$0xff]
      %v3848 = vld [vmem:[#allocation3 + $0x40] sm:$0xff]
      %v3849 = vld [vmem:[#allocation3 + $0x48] sm:$0xff]
      %v3850 = vld [vmem:[#allocation3 + $0x50] sm:$0xff]
      %v3851 = vld [vmem:[#allocation3 + $0x58] sm:$0xff]
      %v3852 = vld [vmem:[#allocation3 + $0x60] sm:$0xff]
      %v3853 = vld [vmem:[#allocation3 + $0x68] sm:$0xff]
      %v3854 = vld [vmem:[#allocation3 + $0x70] sm:$0xff]
      %v3855 = vld [vmem:[#allocation3 + $0x78] sm:$0xff]
      %v3856 = vld [vmem:[#allocation3 + $0x80] sm:$0xff]
      %v3857 = vld [vmem:[#allocation3 + $0x88] sm:$0xff]
      %v3858 = vld [vmem:[#allocation3 + $0x90] sm:$0xff]
      %v3859 = vld [vmem:[#allocation3 + $0x98] sm:$0xff]
      %v3860 = vld [vmem:[#allocation3 + $0xa0] sm:$0xff]
      %v3861 = vld [vmem:[#allocation3 + $0xa8] sm:$0xff]
      %v3862 = vld [vmem:[#allocation3 + $0xb0] sm:$0xff]
      %v3863 = vld [vmem:[#allocation3 + $0xb8] sm:$0xff]
      %v3864 = vld [vmem:[#allocation3 + $0xc0] sm:$0xff]
      %v3865 = vld [vmem:[#allocation3 + $0xc8] sm:$0xff]
      %v3866 = vld [vmem:[#allocation3 + $0xd0] sm:$0xff]
      %v3867 = vld [vmem:[#allocation3 + $0xd8] sm:$0xff]
      %v3868 = vld [vmem:[#allocation3 + $0xe0] sm:$0xff]
      %v3869 = vld [vmem:[#allocation3 + $0xe8] sm:$0xff]
      %v3870 = vld [vmem:[#allocation3 + $0xf0] sm:$0xff]
      %v3871 = vld [vmem:[#allocation3 + $0xf8] sm:$0xff]
      %v3872 = vpack.c.bf16 %v3841, %v3840
      %v3873 = vpack.c.bf16 %v3843, %v3842
      %v3874 = vpack.c.bf16 %v3845, %v3844
      %v3875 = vpack.c.bf16 %v3847, %v3846
      %v3876 = vpack.c.bf16 %v3849, %v3848
      %v3877 = vpack.c.bf16 %v3851, %v3850
      %v3878 = vpack.c.bf16 %v3853, %v3852
      %v3879 = vpack.c.bf16 %v3855, %v3854
      %v3880 = vpack.c.bf16 %v3857, %v3856
      %v3881 = vpack.c.bf16 %v3859, %v3858
      %v3882 = vpack.c.bf16 %v3861, %v3860
      %v3883 = vpack.c.bf16 %v3863, %v3862
      %v3884 = vpack.c.bf16 %v3865, %v3864
      %v3885 = vpack.c.bf16 %v3867, %v3866
      %v3886 = vpack.c.bf16 %v3869, %v3868
      %v3887 = vpack.c.bf16 %v3871, %v3870
      %v3904 = vunpack.c.l.b16 %v3872
      %v3905 = vunpack.c.h.b16 %v3872
      %v3906 = vunpack.c.l.b16 %v3873
      %v3907 = vunpack.c.h.b16 %v3873
      %v3908 = vunpack.c.l.b16 %v3874
      %v3909 = vunpack.c.h.b16 %v3874
      %v3910 = vunpack.c.l.b16 %v3875
      %v3911 = vunpack.c.h.b16 %v3875
      %v3912 = vunpack.c.l.b16 %v3876
      %v3913 = vunpack.c.h.b16 %v3876
      %v3914 = vunpack.c.l.b16 %v3877
      %v3915 = vunpack.c.h.b16 %v3877
      %v3916 = vunpack.c.l.b16 %v3878
      %v3917 = vunpack.c.h.b16 %v3878
      %v3918 = vunpack.c.l.b16 %v3879
      %v3919 = vunpack.c.h.b16 %v3879
      %v3920 = vunpack.c.l.b16 %v3880
      %v3921 = vunpack.c.h.b16 %v3880
      %v3922 = vunpack.c.l.b16 %v3881
      %v3923 = vunpack.c.h.b16 %v3881
      %v3924 = vunpack.c.l.b16 %v3882
      %v3925 = vunpack.c.h.b16 %v3882
      %v3926 = vunpack.c.l.b16 %v3883
      %v3927 = vunpack.c.h.b16 %v3883
      %v3928 = vunpack.c.l.b16 %v3884
      %v3929 = vunpack.c.h.b16 %v3884
      %v3930 = vunpack.c.l.b16 %v3885
      %v3931 = vunpack.c.h.b16 %v3885
      %v3932 = vunpack.c.l.b16 %v3886
      %v3933 = vunpack.c.h.b16 %v3886
      %v3934 = vunpack.c.l.b16 %v3887
      %v3935 = vunpack.c.h.b16 %v3887
      %v3936 = vpack.c.b16 %v3904, %v3904
      %v3937 = vpack.c.b16 %v3905, %v3905
      %v3938 = vpack.c.b16 %v3906, %v3906
      %v3939 = vpack.c.b16 %v3907, %v3907
      %v3940 = vpack.c.b16 %v3908, %v3908
      %v3941 = vpack.c.b16 %v3909, %v3909
      %v3942 = vpack.c.b16 %v3910, %v3910
      %v3943 = vpack.c.b16 %v3911, %v3911
      %v3944 = vpack.c.b16 %v3912, %v3912
      %v3945 = vpack.c.b16 %v3913, %v3913
      %v3946 = vpack.c.b16 %v3914, %v3914
      %v3947 = vpack.c.b16 %v3915, %v3915
      %v3948 = vpack.c.b16 %v3916, %v3916
      %v3949 = vpack.c.b16 %v3917, %v3917
      %v3950 = vpack.c.b16 %v3918, %v3918
      %v3951 = vpack.c.b16 %v3919, %v3919
      %v3952 = vpack.c.b16 %v3920, %v3920
      %v3953 = vpack.c.b16 %v3921, %v3921
      %v3954 = vpack.c.b16 %v3922, %v3922
      %v3955 = vpack.c.b16 %v3923, %v3923
      %v3956 = vpack.c.b16 %v3924, %v3924
      %v3957 = vpack.c.b16 %v3925, %v3925
      %v3958 = vpack.c.b16 %v3926, %v3926
      %v3959 = vpack.c.b16 %v3927, %v3927
      %v3960 = vpack.c.b16 %v3928, %v3928
      %v3961 = vpack.c.b16 %v3929, %v3929
      %v3962 = vpack.c.b16 %v3930, %v3930
      %v3963 = vpack.c.b16 %v3931, %v3931
      %v3964 = vpack.c.b16 %v3932, %v3932
      %v3965 = vpack.c.b16 %v3933, %v3933
      %v3966 = vpack.c.b16 %v3934, %v3934
      %v3967 = vpack.c.b16 %v3935, %v3935
      %4000 = vst [vmem:[%s316] sm:$0xf] %v3936
      %4001 = vst [vmem:[%s316 + $0x4] sm:$0xf] %v3937
      %4002 = vst [vmem:[%s316 + $0x8] sm:$0xf] %v3938
      %4003 = vst [vmem:[%s316 + $0xc] sm:$0xf] %v3939
      %4004 = vst [vmem:[%s316 + $0x10] sm:$0xf] %v3940
      %4005 = vst [vmem:[%s316 + $0x14] sm:$0xf] %v3941
      %4006 = vst [vmem:[%s316 + $0x18] sm:$0xf] %v3942
      %4007 = vst [vmem:[%s316 + $0x1c] sm:$0xf] %v3943
      %4008 = vst [vmem:[%s316 + $0x20] sm:$0xf] %v3944
      %4009 = vst [vmem:[%s316 + $0x24] sm:$0xf] %v3945
      %4010 = vst [vmem:[%s316 + $0x28] sm:$0xf] %v3946
      %4011 = vst [vmem:[%s316 + $0x2c] sm:$0xf] %v3947
      %4012 = vst [vmem:[%s316 + $0x30] sm:$0xf] %v3948
      %4013 = vst [vmem:[%s316 + $0x34] sm:$0xf] %v3949
      %4014 = vst [vmem:[%s316 + $0x38] sm:$0xf] %v3950
      %4015 = vst [vmem:[%s316 + $0x3c] sm:$0xf] %v3951
      %4016 = vst [vmem:[%s316 + $0x40] sm:$0xf] %v3952
      %4017 = vst [vmem:[%s316 + $0x44] sm:$0xf] %v3953
      %4018 = vst [vmem:[%s316 + $0x48] sm:$0xf] %v3954
      %4019 = vst [vmem:[%s316 + $0x4c] sm:$0xf] %v3955
      %4020 = vst [vmem:[%s316 + $0x50] sm:$0xf] %v3956
      %4021 = vst [vmem:[%s316 + $0x54] sm:$0xf] %v3957
      %4022 = vst [vmem:[%s316 + $0x58] sm:$0xf] %v3958
      %4023 = vst [vmem:[%s316 + $0x5c] sm:$0xf] %v3959
      %4024 = vst [vmem:[%s316 + $0x60] sm:$0xf] %v3960
      %4025 = vst [vmem:[%s316 + $0x64] sm:$0xf] %v3961
      %4026 = vst [vmem:[%s316 + $0x68] sm:$0xf] %v3962
      %4027 = vst [vmem:[%s316 + $0x6c] sm:$0xf] %v3963
      %4028 = vst [vmem:[%s316 + $0x70] sm:$0xf] %v3964
      %4029 = vst [vmem:[%s316 + $0x74] sm:$0xf] %v3965
      %4030 = vst [vmem:[%s316 + $0x78] sm:$0xf] %v3966
      %4031 = vst [vmem:[%s316 + $0x7c] sm:$0xf] %v3967
      %v4032 = vadd.f32 %v3840, %v3841
      %v4033 = vadd.f32 %v4032, %v3842
      %v4034 = vadd.f32 %v4033, %v3843
      %v4035 = vadd.f32 %v4034, %v3844
      %v4036 = vadd.f32 %v4035, %v3845
      %v4037 = vadd.f32 %v4036, %v3846
      %v4038 = vadd.f32 %v4037, %v3847
      %v4039 = vadd.f32 %v4038, %v3848
      %v4040 = vadd.f32 %v4039, %v3849
      %v4041 = vadd.f32 %v4040, %v3850
      %v4042 = vadd.f32 %v4041, %v3851
      %v4043 = vadd.f32 %v4042, %v3852
      %v4044 = vadd.f32 %v4043, %v3853
      %v4045 = vadd.f32 %v4044, %v3854
      %v4046 = vadd.f32 %v4045, %v3855
      %v4047 = vadd.f32 %v4046, %v3856
      %v4048 = vadd.f32 %v4047, %v3857
      %v4049 = vadd.f32 %v4048, %v3858
      %v4050 = vadd.f32 %v4049, %v3859
      %v4051 = vadd.f32 %v4050, %v3860
      %v4052 = vadd.f32 %v4051, %v3861
      %v4053 = vadd.f32 %v4052, %v3862
      %v4054 = vadd.f32 %v4053, %v3863
      %v4055 = vadd.f32 %v4054, %v3864
      %v4056 = vadd.f32 %v4055, %v3865
      %v4057 = vadd.f32 %v4056, %v3866
      %v4058 = vadd.f32 %v4057, %v3867
      %v4059 = vadd.f32 %v4058, %v3868
      %v4060 = vadd.f32 %v4059, %v3869
      %v4061 = vadd.f32 %v4060, %v3870
      %v4062 = vadd.f32 %v4061, %v3871
      %v4063 = vrot.slane %v4062, 4
      %v4064 = vadd.f32 %v4062, %v4063
      %v4065 = vrot.slane %v4064, 2
      %v4066 = vadd.f32 %v4064, %v4065
      %v4067 = vrot.slane %v4066, 1
      %v4068 = vadd.f32 %v4066, %v4067
      %4069 = vst [vmem:[%s319] sm:$0x1] %v4068
      %v4070 = vmul.f32 %v3840, %v3840
      %v4071 = vmul.f32 %v3841, %v3841
      %v4072 = vmul.f32 %v3842, %v3842
      %v4073 = vmul.f32 %v3843, %v3843
      %v4074 = vmul.f32 %v3844, %v3844
      %v4075 = vmul.f32 %v3845, %v3845
      %v4076 = vmul.f32 %v3846, %v3846
      %v4077 = vmul.f32 %v3847, %v3847
      %v4078 = vmul.f32 %v3848, %v3848
      %v4079 = vmul.f32 %v3849, %v3849
      %v4080 = vmul.f32 %v3850, %v3850
      %v4081 = vmul.f32 %v3851, %v3851
      %v4082 = vmul.f32 %v3852, %v3852
      %v4083 = vmul.f32 %v3853, %v3853
      %v4084 = vmul.f32 %v3854, %v3854
      %v4085 = vmul.f32 %v3855, %v3855
      %v4086 = vmul.f32 %v3856, %v3856
      %v4087 = vmul.f32 %v3857, %v3857
      %v4088 = vmul.f32 %v3858, %v3858
      %v4089 = vmul.f32 %v3859, %v3859
      %v4090 = vmul.f32 %v3860, %v3860
      %v4091 = vmul.f32 %v3861, %v3861
      %v4092 = vmul.f32 %v3862, %v3862
      %v4093 = vmul.f32 %v3863, %v3863
      %v4094 = vmul.f32 %v3864, %v3864
      %v4095 = vmul.f32 %v3865, %v3865
      %v4096 = vmul.f32 %v3866, %v3866
      %v4097 = vmul.f32 %v3867, %v3867
      %v4098 = vmul.f32 %v3868, %v3868
      %v4099 = vmul.f32 %v3869, %v3869
      %v4100 = vmul.f32 %v3870, %v3870
      %v4101 = vmul.f32 %v3871, %v3871
      %v4102 = vadd.f32 %v4070, %v4071
      %v4103 = vadd.f32 %v4102, %v4072
      %v4104 = vadd.f32 %v4103, %v4073
      %v4105 = vadd.f32 %v4104, %v4074
      %v4106 = vadd.f32 %v4105, %v4075
      %v4107 = vadd.f32 %v4106, %v4076
      %v4108 = vadd.f32 %v4107, %v4077
      %v4109 = vadd.f32 %v4108, %v4078
      %v4110 = vadd.f32 %v4109, %v4079
      %v4111 = vadd.f32 %v4110, %v4080
      %v4112 = vadd.f32 %v4111, %v4081
      %v4113 = vadd.f32 %v4112, %v4082
      %v4114 = vadd.f32 %v4113, %v4083
      %v4115 = vadd.f32 %v4114, %v4084
      %v4116 = vadd.f32 %v4115, %v4085
      %v4117 = vadd.f32 %v4116, %v4086
      %v4118 = vadd.f32 %v4117, %v4087
      %v4119 = vadd.f32 %v4118, %v4088
      %v4120 = vadd.f32 %v4119, %v4089
      %v4121 = vadd.f32 %v4120, %v4090
      %v4122 = vadd.f32 %v4121, %v4091
      %v4123 = vadd.f32 %v4122, %v4092
      %v4124 = vadd.f32 %v4123, %v4093
      %v4125 = vadd.f32 %v4124, %v4094
      %v4126 = vadd.f32 %v4125, %v4095
      %v4127 = vadd.f32 %v4126, %v4096
      %v4128 = vadd.f32 %v4127, %v4097
      %v4129 = vadd.f32 %v4128, %v4098
      %v4130 = vadd.f32 %v4129, %v4099
      %v4131 = vadd.f32 %v4130, %v4100
      %v4132 = vadd.f32 %v4131, %v4101
      %v4133 = vrot.slane %v4132, 4
      %v4134 = vadd.f32 %v4132, %v4133
      %v4135 = vrot.slane %v4134, 2
      %v4136 = vadd.f32 %v4134, %v4135
      %v4137 = vrot.slane %v4136, 1
      %v4138 = vadd.f32 %v4136, %v4137
      %4139 = vst [vmem:[%s322] sm:$0x1] %v4138
      %p4140 = scmp.lt.s32.totalorder %s20, 1
      %s4141 = scalar_select %p4140, %s20, 1
      %s4142 = smul.addr %s4141, 32
      %s4143 = smul.addr %s4142, 4
      %s4144 = scalar_lea.vmem %s6, %s4143
      %p4145 = scmp.lt.s32.totalorder %s20, 1
      %s4146 = scalar_select %p4145, %s20, 1
      %s4147 = scalar_lea.vmem %s7, %s4146
      %p4148 = scmp.lt.s32.totalorder %s20, 1
      %s4149 = scalar_select %p4148, %s20, 1
      %s4150 = scalar_lea.vmem %s8, %s4149
      // Predicated region
      $region45: #{bottleneck_forward.5} parent=43 // pred_check
        %p4151 = pneg %p169
      $region46: #{bottleneck_forward.5} parent=43 // pred_check_branch
        %4153 = sbr.rel (%p4151) target = $region48
      $region47: #{bottleneck_forward.5} parent=43 // pred_region
        _
      $region48: #{bottleneck_forward.5} parent=43 // pred_fallthru
        _
      // Predicated region
      $region49: #{bottleneck_forward.5} parent=43 // pred_check
        %p4154 = pneg %p195
      $region50: #{bottleneck_forward.5} parent=43 // pred_check_branch
        %4156 = sbr.rel (%p4154) target = $region52
      $region51: #{bottleneck_forward.5} parent=43 // pred_region
        _
      $region52: #{bottleneck_forward.5} parent=43 // pred_fallthru
        _
      // Predicated region
      $region53: #{bottleneck_forward.5} parent=43 // pred_check
        %p4157 = pneg %p221
      $region54: #{bottleneck_forward.5} parent=43 // pred_check_branch
        %4159 = sbr.rel (%p4157) target = $region56
      $region55: #{bottleneck_forward.5} parent=43 // pred_region
        _
      $region56: #{bottleneck_forward.5} parent=43 // pred_fallthru
        _
    $region44: #{bottleneck_forward.5} parent=5 // pred_fallthru
      _
    %p4160 = scmp.le.s32.totalorder 2, %s15
    // Predicated region
    $region57: #{bottleneck_forward.5} parent=5 // pred_check
      %p4161 = pneg %p4160
    $region58: #{bottleneck_forward.5} parent=5 // pred_check_branch
      %4163 = sbr.rel (%p4161) target = $region60
    $region59: #{bottleneck_forward.5} parent=5 // pred_region
      %s4164 = ssub.s32 %s15, 2
      // Predicated region
      $region61: #{bottleneck_forward.5} parent=59 // pred_check
        %p4165 = pneg %p175
      $region62: #{bottleneck_forward.5} parent=59 // pred_check_branch
        %4167 = sbr.rel (%p4165) target = $region64
      $region63: #{bottleneck_forward.5} parent=59 // pred_region
        %p4168 = scmp.lt.s32.totalorder %s21, 1
        %s4169 = scalar_select %p4168, %s21, 1
        %s4170 = smul.addr %s4169, 32
        %s4171 = smul.addr %s4170, 4
        %s4172 = scalar_lea.vmem %s6, %s4171
      $region64: #{bottleneck_forward.5} parent=59 // pred_fallthru
        _
      // Predicated region
      $region65: #{bottleneck_forward.5} parent=59 // pred_check
        %p4173 = pneg %p201
      $region66: #{bottleneck_forward.5} parent=59 // pred_check_branch
        %4175 = sbr.rel (%p4173) target = $region68
      $region67: #{bottleneck_forward.5} parent=59 // pred_region
        %p4176 = scmp.lt.s32.totalorder %s21, 1
        %s4177 = scalar_select %p4176, %s21, 1
        %s4178 = scalar_lea.vmem %s7, %s4177
      $region68: #{bottleneck_forward.5} parent=59 // pred_fallthru
        _
      // Predicated region
      $region69: #{bottleneck_forward.5} parent=59 // pred_check
        %p4179 = pneg %p227
      $region70: #{bottleneck_forward.5} parent=59 // pred_check_branch
        %4181 = sbr.rel (%p4179) target = $region72
      $region71: #{bottleneck_forward.5} parent=59 // pred_region
        %p4182 = scmp.lt.s32.totalorder %s21, 1
        %s4183 = scalar_select %p4182, %s21, 1
        %s4184 = scalar_lea.vmem %s8, %s4183
      $region72: #{bottleneck_forward.5} parent=59 // pred_fallthru
        _
    $region60: #{bottleneck_forward.5} parent=5 // pred_fallthru
      _
  $region6: #{bottleneck_forward.5} parent=0 // loop_footer
    %s19 = sadd.s32 1, %s15
  $region7: #{bottleneck_forward.5} parent=0 // loop_footer_branch
    %14 = sbr.rel target = $region3
  $region8: #{bottleneck_forward.5} parent=0 // loop_exit
    _

</llo_original>
